<compile_context>
chip_gen: v7x
topology: tpu7x:2x2x1
jax: 0.10.0
libtpu: 0.0.40
codegen_flags: <defaults>
</compile_context>

<pallas_src>
import functools

import jax
import jax.numpy as jnp
from jax.experimental import pallas as pl
from jax.experimental.pallas import tpu as pltpu

F32 = jnp.float32
VMEM = pl.BlockSpec(memory_space=pltpu.MemorySpace.VMEM)


def _elu(z):
    # F.elu, alpha=1; clamp before exp so the masked branch can't overflow
    return jnp.where(z > 0.0, z, jnp.exp(jnp.minimum(z, 0.0)) - 1.0)


# ---------------------------------------------------------------------------
# Single fused forward kernel
# ---------------------------------------------------------------------------
def _fused_forward_kernel(
    envs_ref, states_ref,
    env_w, env_b, st_w, st_b,
    wih0e, wih0s, whh0, bih0, bhh0,
    wih1, whh1, bih1, bhh1,
    mlp_w1, mlp_b1, mlp_w2, mlp_b2,
    col_w0e, col_w0s, col_b0, col_wm, col_bm, col_w5, col_b5,
    p_ref, v_ref, nt_ref, col_ref,
):
    B, T, S = states_ref.shape
    H = whh0.shape[-1]
    n_mid = col_wm.shape[0]

    dot = functools.partial(jnp.dot, preferred_element_type=F32)

    # ---- env embedding: h_env = relu(envs @ Wenv + benv)  (B, env_embed) ----
    h_env = jnp.maximum(dot(envs_ref[...], env_w[...]) + env_b[...], 0.0)

    # ---- hoisted, time-invariant pieces of the folded layer-0 input gates ----
    #   gi0[b, t, g] = states[b, t] @ (st_w @ Wih0_state[g])        (precomputed, all t)
    #               + h_env[b] @ Wih0_env[g] + st_b @ Wih0_state[g] + b_ih0[g]
    # (the state embedder has NO activation -> folding is exact)
    wfold = []          # [g] -> (S, H)
    envbias = []        # [g] -> (B, H)   (includes b_ih0)
    for g in range(3):
        w_sg = wih0s[g]                                   # (state_embed, H)
        wfold.append(dot(st_w[...], w_sg))
        envbias.append(dot(h_env, wih0e[g]) + dot(st_b[...], w_sg) + bih0[g])

    # env half of the collision-classifier layer 0 (time-invariant per batch elem)
    col_env = dot(envs_ref[...], col_w0e[...]) + col_b0[...]          # (B, 32)

    # ---- per-batch-element: next_t, collision classifier, gi0 precompute ----
    # (B is tiny & static; keeping every op a plain 2-D matmul / static slice.)
    gi0 = [[None] * 3 for _ in range(B)]                  # gi0[b][g] : (T, H)
    for b in range(B):
        sb = states_ref[b]                                # (T, S)

        # next_t = states[:, :, -1] + 1
        nt_ref[b] = sb[:, S - 1:S] + 1.0

        # collision classifier on [env | state[:, :4]], batch-major rows
        h = _elu(dot(sb[:, 0:4], col_w0s[...]) + col_env[b:b + 1, :])
        for l in range(n_mid):
            h = _elu(dot(h, col_wm[l]) + col_bm[l])
        col_ref[pl.ds(b * T, T), :] = dot(h, col_w5[...]) + col_b5[...]
        # TODO(synk): col_pred = argmax(col_output) is computed in the torch module
        # but unused on the predict_t == 0 return path, so it is omitted here.

        # folded layer-0 input gates for every timestep of this batch element
        for g in range(3):
            gi0[b][g] = dot(sb, wfold[g]) + envbias[g][b:b + 1, :]    # (T, H)

    # ---- 2-layer GRU recurrence, fully unrolled static time loop ----
    # hoist the small per-gate bias rows (avoid re-broadcasting every step)
    bhh0_g = [bhh0[g] for g in range(3)]
    bih1_g = [bih1[g] for g in range(3)]
    bhh1_g = [bhh1[g] for g in range(3)]

    h0 = jnp.zeros((B, H), F32)
    h1 = jnp.zeros((B, H), F32)
    h1_steps = []
    for t in range(T):
        # layer 0: input-side gates precomputed; only h-dependent matmuls here
        gi_r = jnp.concatenate([gi0[b][0][t:t + 1, :] for b in range(B)], axis=0)
        gi_z = jnp.concatenate([gi0[b][1][t:t + 1, :] for b in range(B)], axis=0)
        gi_n = jnp.concatenate([gi0[b][2][t:t + 1, :] for b in range(B)], axis=0)
        gh_r = dot(h0, whh0[0]) + bhh0_g[0]
        gh_z = dot(h0, whh0[1]) + bhh0_g[1]
        gh_n = dot(h0, whh0[2]) + bhh0_g[2]
        r = jax.nn.sigmoid(gi_r + gh_r)
        z = jax.nn.sigmoid(gi_z + gh_z)
        n = jnp.tanh(gi_n + r * gh_n)
        h0 = (1.0 - z) * n + z * h0

        # layer 1 (input = fresh layer-0 output, so it cannot be precomputed)
        gi1_r = dot(h0, wih1[0]) + bih1_g[0]
        gi1_z = dot(h0, wih1[1]) + bih1_g[1]
        gi1_n = dot(h0, wih1[2]) + bih1_g[2]
        gh1_r = dot(h1, whh1[0]) + bhh1_g[0]
        gh1_z = dot(h1, whh1[1]) + bhh1_g[1]
        gh1_n = dot(h1, whh1[2]) + bhh1_g[2]
        r1 = jax.nn.sigmoid(gi1_r + gh1_r)
        z1 = jax.nn.sigmoid(gi1_z + gh1_z)
        n1 = jnp.tanh(gi1_n + r1 * gh1_n)
        h1 = (1.0 - z1) * n1 + z1 * h1
        h1_steps.append(h1)

    # ---- output MLP heads (merged p|v weight), written batch-major (B, T, 2) ----
    for b in range(B):
        hb = jnp.concatenate([h[b:b + 1, :] for h in h1_steps], axis=0)   # (T, H)
        hid = jnp.maximum(dot(hb, mlp_w1[...]) + mlp_b1[...], 0.0)
        out = dot(hid, mlp_w2[...]) + mlp_b2[...]                          # (T, 4)
        p_ref[b] = out[:, 0:2]
        v_ref[b] = out[:, 2:4]


# ---------------------------------------------------------------------------
# Wrapper: one pallas_call, no XLA glue ops
# ---------------------------------------------------------------------------
def gru_predictor_forward(params, envs, states):
    B, T, _ = states.shape
    ncol = params["col_w5"].shape[1]
    args = (
        envs, states,
        params["env_w"], params["env_b"], params["st_w"], params["st_b"],
        params["wih0e"], params["wih0s"], params["whh0"], params["bih0"], params["bhh0"],
        params["wih1"], params["whh1"], params["bih1"], params["bhh1"],
        params["mlp_w1"], params["mlp_b1"], params["mlp_w2"], params["mlp_b2"],
        params["col_w0e"], params["col_w0s"], params["col_b0"],
        params["col_wm"], params["col_bm"], params["col_w5"], params["col_b5"],
    )
    out_shape = (
        jax.ShapeDtypeStruct((B, T, 2), F32),      # p
        jax.ShapeDtypeStruct((B, T, 2), F32),      # v
        jax.ShapeDtypeStruct((B, T, 1), F32),      # next_t
        jax.ShapeDtypeStruct((B * T, ncol), F32),  # col_output (batch-major rows)
    )
    # TODO(synk): on v7x the independent collision branch could run on the second
    # TensorCore via core_map; kept fused on one core here for simplicity.
    return pl.pallas_call(
        _fused_forward_kernel,
        out_shape=out_shape,
        in_specs=[VMEM] * len(args),
        out_specs=(VMEM, VMEM, VMEM, VMEM),
    )(*args)
    # TODO(synk): predict_t > 0 (autoregressive sampled rollout) not implemented.


# ---------------------------------------------------------------------------
# Deterministic parameter init (PyTorch-style uniform(-1/sqrt(fan), +1/sqrt(fan)))
# GRU weights are stored per-gate [r, z, n], shape (3, in, H); layer-0 W_ih is
# additionally split into its env-embed / state-embed input halves.
# ---------------------------------------------------------------------------
def init_params(key, env_size, state_size, env_embed=32, state_embed=32, hidden=64):
    keys = iter(jax.random.split(key, 40))

    def u(shape, fan_in):
        k = 1.0 / float(fan_in) ** 0.5
        return jax.random.uniform(next(keys), shape, F32, -k, k)

    p = {}
    # env / state embedders: single Linear each (hidden_layer_size=None, no act)
    p["env_w"] = u((env_size, env_embed), env_size)
    p["env_b"] = u((1, env_embed), env_size)
    p["st_w"] = u((state_size, state_embed), state_size)
    p["st_b"] = u((1, state_embed), state_size)
    # 2-layer GRU, input = env_embed + state_embed, hidden = 64, gates [r, z, n]
    p["wih0e"] = u((3, env_embed, hidden), hidden)
    p["wih0s"] = u((3, state_embed, hidden), hidden)
    p["whh0"] = u((3, hidden, hidden), hidden)
    p["bih0"] = u((3, 1, hidden), hidden)
    p["bhh0"] = u((3, 1, hidden), hidden)
    p["wih1"] = u((3, hidden, hidden), hidden)
    p["whh1"] = u((3, hidden, hidden), hidden)
    p["bih1"] = u((3, 1, hidden), hidden)
    p["bhh1"] = u((3, 1, hidden), hidden)
    # output MLP: hidden(relu) -> merged heads [p(2) | v(2)]
    p["mlp_w1"] = u((hidden, hidden), hidden)
    p["mlp_b1"] = u((1, hidden), hidden)
    p["mlp_w2"] = u((hidden, 4), hidden)
    p["mlp_b2"] = u((1, 4), hidden)
    # collision classifier: [env | state[:4]] -> 5 x elu(32) -> 7 (layer 0 split)
    cin = env_size + (state_size - 2)
    p["col_w0e"] = u((env_size, 32), cin)
    p["col_w0s"] = u((state_size - 2, 32), cin)
    p["col_b0"] = u((1, 32), cin)
    p["col_wm"] = u((4, 32, 32), 32)
    p["col_bm"] = u((4, 1, 32), 32)
    p["col_w5"] = u((32, 7), 32)
    p["col_b5"] = u((1, 7), 32)
    return p


# ---------------------------------------------------------------------------
# Pure-JAX reference (same param layout) for a correctness check
# ---------------------------------------------------------------------------
def _reference_forward(params, envs, states):
    B, T, S = states.shape
    H = params["whh0"].shape[-1]
    h_env = jax.nn.relu(envs @ params["env_w"] + params["env_b"])
    st_flat = states.reshape(B * T, S)
    # collision classifier
    h = jnp.repeat(envs @ params["col_w0e"] + params["col_b0"], T, axis=0)
    h = jax.nn.elu(h + st_flat[:, :4] @ params["col_w0s"])
    for l in range(params["col_wm"].shape[0]):
        h = jax.nn.elu(h @ params["col_wm"][l] + params["col_bm"][l])
    col = h @ params["col_w5"] + params["col_b5"]
    next_t = states[:, :, -1:] + 1.0
    # GRU
    st_emb = states @ params["st_w"] + params["st_b"]
    h0 = jnp.zeros((B, H), F32)
    h1 = jnp.zeros((B, H), F32)
    outs = []
    for t in range(T):
        xs = st_emb[:, t, :]
        gi = [h_env @ params["wih0e"][g] + xs @ params["wih0s"][g] + params["bih0"][g]
              for g in range(3)]
        gh = [h0 @ params["whh0"][g] + params["bhh0"][g] for g in range(3)]
        r = jax.nn.sigmoid(gi[0] + gh[0])
        z = jax.nn.sigmoid(gi[1] + gh[1])
        n = jnp.tanh(gi[2] + r * gh[2])
        h0 = (1.0 - z) * n + z * h0
        gi1 = [h0 @ params["wih1"][g] + params["bih1"][g] for g in range(3)]
        gh1 = [h1 @ params["whh1"][g] + params["bhh1"][g] for g in range(3)]
        r1 = jax.nn.sigmoid(gi1[0] + gh1[0])
        z1 = jax.nn.sigmoid(gi1[1] + gh1[1])
        n1 = jnp.tanh(gi1[2] + r1 * gh1[2])
        h1 = (1.0 - z1) * n1 + z1 * h1
        outs.append(h1)
    hseq = jnp.stack(outs, axis=0)                                   # (T, B, H)
    hid = jax.nn.relu(hseq @ params["mlp_w1"] + params["mlp_b1"])
    out = hid @ params["mlp_w2"] + params["mlp_b2"]                  # (T, B, 4)
    p = jnp.transpose(out[..., 0:2], (1, 0, 2))
    v = jnp.transpose(out[..., 2:4], (1, 0, 2))
    return p, v, next_t, col


if __name__ == "__main__":
    env_size, state_size = 16, 6           # state = [p(2), v(2), col_pred(1), t(1)]
    B, T = 2, 8

    params = init_params(jax.random.PRNGKey(0), env_size, state_size)

    k_env, k_state = jax.random.split(jax.random.PRNGKey(0), 2)
    envs = jax.random.normal(k_env, (B, env_size), F32)
    states = jax.random.normal(k_state, (B, T, state_size), F32)

    fwd = jax.jit(gru_predictor_forward)
    p, v, next_t, col_output = fwd(params, envs, states)
    jax.block_until_ready((p, v, next_t, col_output))

    assert p.shape == (B, T, 2)
    assert v.shape == (B, T, 2)
    assert next_t.shape == (B, T, 1)
    assert col_output.shape == (B * T, 7)

    # numeric check against the pure-JAX reference
    p_r, v_r, nt_r, col_r = _reference_forward(params, envs, states)
    assert bool(jnp.allclose(p, p_r, atol=1e-3, rtol=1e-3))
    assert bool(jnp.allclose(v, v_r, atol=1e-3, rtol=1e-3))
    assert bool(jnp.allclose(next_t, nt_r, atol=1e-3, rtol=1e-3))
    assert bool(jnp.allclose(col_output, col_r, atol=1e-3, rtol=1e-3))

    print("KERNEL_OK")
</pallas_src>

<mosaic_0001>
module attributes {stable_mosaic.version = 11 : i64} {
  func.func @_fused_forward_kernel(%arg0: memref<2x16xf32, #tpu.memory_space<vmem>>, %arg1: memref<2x8x6xf32, #tpu.memory_space<vmem>>, %arg2: memref<16x32xf32, #tpu.memory_space<vmem>>, %arg3: memref<1x32xf32, #tpu.memory_space<vmem>>, %arg4: memref<6x32xf32, #tpu.memory_space<vmem>>, %arg5: memref<1x32xf32, #tpu.memory_space<vmem>>, %arg6: memref<3x32x64xf32, #tpu.memory_space<vmem>>, %arg7: memref<3x32x64xf32, #tpu.memory_space<vmem>>, %arg8: memref<3x64x64xf32, #tpu.memory_space<vmem>>, %arg9: memref<3x1x64xf32, #tpu.memory_space<vmem>>, %arg10: memref<3x1x64xf32, #tpu.memory_space<vmem>>, %arg11: memref<3x64x64xf32, #tpu.memory_space<vmem>>, %arg12: memref<3x64x64xf32, #tpu.memory_space<vmem>>, %arg13: memref<3x1x64xf32, #tpu.memory_space<vmem>>, %arg14: memref<3x1x64xf32, #tpu.memory_space<vmem>>, %arg15: memref<64x64xf32, #tpu.memory_space<vmem>>, %arg16: memref<1x64xf32, #tpu.memory_space<vmem>>, %arg17: memref<64x4xf32, #tpu.memory_space<vmem>>, %arg18: memref<1x4xf32, #tpu.memory_space<vmem>>, %arg19: memref<16x32xf32, #tpu.memory_space<vmem>>, %arg20: memref<4x32xf32, #tpu.memory_space<vmem>>, %arg21: memref<1x32xf32, #tpu.memory_space<vmem>>, %arg22: memref<4x32x32xf32, #tpu.memory_space<vmem>>, %arg23: memref<4x1x32xf32, #tpu.memory_space<vmem>>, %arg24: memref<32x7xf32, #tpu.memory_space<vmem>>, %arg25: memref<1x7xf32, #tpu.memory_space<vmem>>, %arg26: memref<2x8x2xf32, #tpu.memory_space<vmem>>, %arg27: memref<2x8x2xf32, #tpu.memory_space<vmem>>, %arg28: memref<2x8x1xf32, #tpu.memory_space<vmem>>, %arg29: memref<16x7xf32, #tpu.memory_space<vmem>>) attributes {dimension_semantics = [], scalar_prefetch = 0 : i64, scratch_operands = 0 : i64, tpu.core_type = #tpu.core_type<tc>} {
    %c0 = arith.constant 0 : index
    %c0_0 = arith.constant 0 : index
    %0 = vector.load %arg0[%c0, %c0_0] : memref<2x16xf32, #tpu.memory_space<vmem>>, vector<2x16xf32>
    %c0_1 = arith.constant 0 : index
    %c0_2 = arith.constant 0 : index
    %1 = vector.load %arg2[%c0_1, %c0_2] : memref<16x32xf32, #tpu.memory_space<vmem>>, vector<16x32xf32>
    %cst = arith.constant dense<0.000000e+00> : vector<2x32xf32>
    %2 = tpu.matmul %0, %1, %cst {dimension_numbers = #tpu.dot_dimension_numbers<[1], [0], [0], [1], [0, 0, 1, 1], [], []>} : vector<2x16xf32>, vector<16x32xf32>, vector<2x32xf32> -> vector<2x32xf32>
    %c0_3 = arith.constant 0 : index
    %c0_4 = arith.constant 0 : index
    %3 = vector.load %arg3[%c0_3, %c0_4] : memref<1x32xf32, #tpu.memory_space<vmem>>, vector<1x32xf32>
    %4 = vector.broadcast %3 : vector<1x32xf32> to vector<2x32xf32>
    %5 = arith.addf %2, %4 : vector<2x32xf32>
    %cst_5 = arith.constant 0.000000e+00 : f32
    %6 = vector.broadcast %cst_5 : f32 to vector<2x32xf32>
    %7 = arith.maximumf %5, %6 : vector<2x32xf32>
    %c0_6 = arith.constant 0 : index
    %c0_7 = arith.constant 0 : index
    %c0_8 = arith.constant 0 : index
    %8 = vector.load %arg7[%c0_6, %c0_7, %c0_8] : memref<3x32x64xf32, #tpu.memory_space<vmem>>, vector<1x32x64xf32>
    %9 = vector.shape_cast %8 : vector<1x32x64xf32> to vector<32x64xf32>
    %c0_9 = arith.constant 0 : index
    %c0_10 = arith.constant 0 : index
    %10 = vector.load %arg4[%c0_9, %c0_10] : memref<6x32xf32, #tpu.memory_space<vmem>>, vector<6x32xf32>
    %cst_11 = arith.constant dense<0.000000e+00> : vector<6x64xf32>
    %11 = tpu.matmul %10, %9, %cst_11 {dimension_numbers = #tpu.dot_dimension_numbers<[1], [0], [0], [1], [0, 0, 1, 1], [], []>} : vector<6x32xf32>, vector<32x64xf32>, vector<6x64xf32> -> vector<6x64xf32>
    %c0_12 = arith.constant 0 : index
    %c0_13 = arith.constant 0 : index
    %c0_14 = arith.constant 0 : index
    %12 = vector.load %arg6[%c0_12, %c0_13, %c0_14] : memref<3x32x64xf32, #tpu.memory_space<vmem>>, vector<1x32x64xf32>
    %13 = vector.shape_cast %12 : vector<1x32x64xf32> to vector<32x64xf32>
    %cst_15 = arith.constant dense<0.000000e+00> : vector<2x64xf32>
    %14 = tpu.matmul %7, %13, %cst_15 {dimension_numbers = #tpu.dot_dimension_numbers<[1], [0], [0], [1], [0, 0, 1, 1], [], []>} : vector<2x32xf32>, vector<32x64xf32>, vector<2x64xf32> -> vector<2x64xf32>
    %c0_16 = arith.constant 0 : index
    %c0_17 = arith.constant 0 : index
    %15 = vector.load %arg5[%c0_16, %c0_17] : memref<1x32xf32, #tpu.memory_space<vmem>>, vector<1x32xf32>
    %cst_18 = arith.constant dense<0.000000e+00> : vector<1x64xf32>
    %16 = tpu.matmul %15, %9, %cst_18 {dimension_numbers = #tpu.dot_dimension_numbers<[1], [0], [0], [1], [0, 0, 1, 1], [], []>} : vector<1x32xf32>, vector<32x64xf32>, vector<1x64xf32> -> vector<1x64xf32>
    %17 = vector.broadcast %16 : vector<1x64xf32> to vector<2x64xf32>
    %18 = arith.addf %14, %17 : vector<2x64xf32>
    %c0_19 = arith.constant 0 : index
    %c0_20 = arith.constant 0 : index
    %c0_21 = arith.constant 0 : index
    %19 = vector.load %arg9[%c0_19, %c0_20, %c0_21] : memref<3x1x64xf32, #tpu.memory_space<vmem>>, vector<1x1x64xf32>
    %20 = vector.shape_cast %19 : vector<1x1x64xf32> to vector<1x64xf32>
    %21 = vector.broadcast %20 : vector<1x64xf32> to vector<2x64xf32>
    %22 = arith.addf %18, %21 : vector<2x64xf32>
    %c1 = arith.constant 1 : index
    %c0_22 = arith.constant 0 : index
    %c0_23 = arith.constant 0 : index
    %23 = vector.load %arg7[%c1, %c0_22, %c0_23] : memref<3x32x64xf32, #tpu.memory_space<vmem>>, vector<1x32x64xf32>
    %24 = vector.shape_cast %23 : vector<1x32x64xf32> to vector<32x64xf32>
    %c0_24 = arith.constant 0 : index
    %c0_25 = arith.constant 0 : index
    %25 = vector.load %arg4[%c0_24, %c0_25] : memref<6x32xf32, #tpu.memory_space<vmem>>, vector<6x32xf32>
    %cst_26 = arith.constant dense<0.000000e+00> : vector<6x64xf32>
    %26 = tpu.matmul %25, %24, %cst_26 {dimension_numbers = #tpu.dot_dimension_numbers<[1], [0], [0], [1], [0, 0, 1, 1], [], []>} : vector<6x32xf32>, vector<32x64xf32>, vector<6x64xf32> -> vector<6x64xf32>
    %c1_27 = arith.constant 1 : index
    %c0_28 = arith.constant 0 : index
    %c0_29 = arith.constant 0 : index
    %27 = vector.load %arg6[%c1_27, %c0_28, %c0_29] : memref<3x32x64xf32, #tpu.memory_space<vmem>>, vector<1x32x64xf32>
    %28 = vector.shape_cast %27 : vector<1x32x64xf32> to vector<32x64xf32>
    %cst_30 = arith.constant dense<0.000000e+00> : vector<2x64xf32>
    %29 = tpu.matmul %7, %28, %cst_30 {dimension_numbers = #tpu.dot_dimension_numbers<[1], [0], [0], [1], [0, 0, 1, 1], [], []>} : vector<2x32xf32>, vector<32x64xf32>, vector<2x64xf32> -> vector<2x64xf32>
    %c0_31 = arith.constant 0 : index
    %c0_32 = arith.constant 0 : index
    %30 = vector.load %arg5[%c0_31, %c0_32] : memref<1x32xf32, #tpu.memory_space<vmem>>, vector<1x32xf32>
    %cst_33 = arith.constant dense<0.000000e+00> : vector<1x64xf32>
    %31 = tpu.matmul %30, %24, %cst_33 {dimension_numbers = #tpu.dot_dimension_numbers<[1], [0], [0], [1], [0, 0, 1, 1], [], []>} : vector<1x32xf32>, vector<32x64xf32>, vector<1x64xf32> -> vector<1x64xf32>
    %32 = vector.broadcast %31 : vector<1x64xf32> to vector<2x64xf32>
    %33 = arith.addf %29, %32 : vector<2x64xf32>
    %c1_34 = arith.constant 1 : index
    %c0_35 = arith.constant 0 : index
    %c0_36 = arith.constant 0 : index
    %34 = vector.load %arg9[%c1_34, %c0_35, %c0_36] : memref<3x1x64xf32, #tpu.memory_space<vmem>>, vector<1x1x64xf32>
    %35 = vector.shape_cast %34 : vector<1x1x64xf32> to vector<1x64xf32>
    %36 = vector.broadcast %35 : vector<1x64xf32> to vector<2x64xf32>
    %37 = arith.addf %33, %36 : vector<2x64xf32>
    %c2 = arith.constant 2 : index
    %c0_37 = arith.constant 0 : index
    %c0_38 = arith.constant 0 : index
    %38 = vector.load %arg7[%c2, %c0_37, %c0_38] : memref<3x32x64xf32, #tpu.memory_space<vmem>>, vector<1x32x64xf32>
    %39 = vector.shape_cast %38 : vector<1x32x64xf32> to vector<32x64xf32>
    %c0_39 = arith.constant 0 : index
    %c0_40 = arith.constant 0 : index
    %40 = vector.load %arg4[%c0_39, %c0_40] : memref<6x32xf32, #tpu.memory_space<vmem>>, vector<6x32xf32>
    %cst_41 = arith.constant dense<0.000000e+00> : vector<6x64xf32>
    %41 = tpu.matmul %40, %39, %cst_41 {dimension_numbers = #tpu.dot_dimension_numbers<[1], [0], [0], [1], [0, 0, 1, 1], [], []>} : vector<6x32xf32>, vector<32x64xf32>, vector<6x64xf32> -> vector<6x64xf32>
    %c2_42 = arith.constant 2 : index
    %c0_43 = arith.constant 0 : index
    %c0_44 = arith.constant 0 : index
    %42 = vector.load %arg6[%c2_42, %c0_43, %c0_44] : memref<3x32x64xf32, #tpu.memory_space<vmem>>, vector<1x32x64xf32>
    %43 = vector.shape_cast %42 : vector<1x32x64xf32> to vector<32x64xf32>
    %cst_45 = arith.constant dense<0.000000e+00> : vector<2x64xf32>
    %44 = tpu.matmul %7, %43, %cst_45 {dimension_numbers = #tpu.dot_dimension_numbers<[1], [0], [0], [1], [0, 0, 1, 1], [], []>} : vector<2x32xf32>, vector<32x64xf32>, vector<2x64xf32> -> vector<2x64xf32>
    %c0_46 = arith.constant 0 : index
    %c0_47 = arith.constant 0 : index
    %45 = vector.load %arg5[%c0_46, %c0_47] : memref<1x32xf32, #tpu.memory_space<vmem>>, vector<1x32xf32>
    %cst_48 = arith.constant dense<0.000000e+00> : vector<1x64xf32>
    %46 = tpu.matmul %45, %39, %cst_48 {dimension_numbers = #tpu.dot_dimension_numbers<[1], [0], [0], [1], [0, 0, 1, 1], [], []>} : vector<1x32xf32>, vector<32x64xf32>, vector<1x64xf32> -> vector<1x64xf32>
    %47 = vector.broadcast %46 : vector<1x64xf32> to vector<2x64xf32>
    %48 = arith.addf %44, %47 : vector<2x64xf32>
    %c2_49 = arith.constant 2 : index
    %c0_50 = arith.constant 0 : index
    %c0_51 = arith.constant 0 : index
    %49 = vector.load %arg9[%c2_49, %c0_50, %c0_51] : memref<3x1x64xf32, #tpu.memory_space<vmem>>, vector<1x1x64xf32>
    %50 = vector.shape_cast %49 : vector<1x1x64xf32> to vector<1x64xf32>
    %51 = vector.broadcast %50 : vector<1x64xf32> to vector<2x64xf32>
    %52 = arith.addf %48, %51 : vector<2x64xf32>
    %c0_52 = arith.constant 0 : index
    %c0_53 = arith.constant 0 : index
    %53 = vector.load %arg0[%c0_52, %c0_53] : memref<2x16xf32, #tpu.memory_space<vmem>>, vector<2x16xf32>
    %c0_54 = arith.constant 0 : index
    %c0_55 = arith.constant 0 : index
    %54 = vector.load %arg19[%c0_54, %c0_55] : memref<16x32xf32, #tpu.memory_space<vmem>>, vector<16x32xf32>
    %cst_56 = arith.constant dense<0.000000e+00> : vector<2x32xf32>
    %55 = tpu.matmul %53, %54, %cst_56 {dimension_numbers = #tpu.dot_dimension_numbers<[1], [0], [0], [1], [0, 0, 1, 1], [], []>} : vector<2x16xf32>, vector<16x32xf32>, vector<2x32xf32> -> vector<2x32xf32>
    %c0_57 = arith.constant 0 : index
    %c0_58 = arith.constant 0 : index
    %56 = vector.load %arg21[%c0_57, %c0_58] : memref<1x32xf32, #tpu.memory_space<vmem>>, vector<1x32xf32>
    %57 = vector.broadcast %56 : vector<1x32xf32> to vector<2x32xf32>
    %58 = arith.addf %55, %57 : vector<2x32xf32>
    %c0_59 = arith.constant 0 : index
    %c0_60 = arith.constant 0 : index
    %c0_61 = arith.constant 0 : index
    %59 = vector.load %arg1[%c0_59, %c0_60, %c0_61] : memref<2x8x6xf32, #tpu.memory_space<vmem>>, vector<1x8x6xf32>
    %60 = vector.shape_cast %59 : vector<1x8x6xf32> to vector<8x6xf32>
    %61 = vector.extract_strided_slice %60 {offsets = [0, 5], sizes = [8, 1], strides = [1, 1]} : vector<8x6xf32> to vector<8x1xf32>
    %cst_62 = arith.constant 1.000000e+00 : f32
    %62 = vector.broadcast %cst_62 : f32 to vector<8x1xf32>
    %63 = arith.addf %61, %62 : vector<8x1xf32>
    %c0_63 = arith.constant 0 : index
    %c0_64 = arith.constant 0 : index
    %c0_65 = arith.constant 0 : index
    %64 = vector.load %arg28[%c0_63, %c0_64, %c0_65] : memref<2x8x1xf32, #tpu.memory_space<vmem>>, vector<1x8x1xf32>
    %65 = vector.shape_cast %64 : vector<1x8x1xf32> to vector<8x1xf32>
    %66 = vector.shape_cast %63 : vector<8x1xf32> to vector<1x8x1xf32>
    tpu.vector_store %arg28[%c0_63, %c0_64, %c0_65], %66 {strides = array<i32>} : memref<2x8x1xf32, #tpu.memory_space<vmem>>, vector<1x8x1xf32>,
    %67 = vector.extract_strided_slice %60 {offsets = [0, 0], sizes = [8, 4], strides = [1, 1]} : vector<8x6xf32> to vector<8x4xf32>
    %c0_66 = arith.constant 0 : index
    %c0_67 = arith.constant 0 : index
    %68 = vector.load %arg20[%c0_66, %c0_67] : memref<4x32xf32, #tpu.memory_space<vmem>>, vector<4x32xf32>
    %cst_68 = arith.constant dense<0.000000e+00> : vector<8x32xf32>
    %69 = tpu.matmul %67, %68, %cst_68 {dimension_numbers = #tpu.dot_dimension_numbers<[1], [0], [0], [1], [0, 0, 1, 1], [], []>} : vector<8x4xf32>, vector<4x32xf32>, vector<8x32xf32> -> vector<8x32xf32>
    %70 = vector.extract_strided_slice %58 {offsets = [0, 0], sizes = [1, 32], strides = [1, 1]} : vector<2x32xf32> to vector<1x32xf32>
    %71 = vector.broadcast %70 : vector<1x32xf32> to vector<8x32xf32>
    %72 = arith.addf %69, %71 : vector<8x32xf32>
    %cst_69 = arith.constant 0.000000e+00 : f32
    %73 = vector.broadcast %cst_69 : f32 to vector<8x32xf32>
    %74 = arith.cmpf ogt, %72, %73 : vector<8x32xf32>
    %cst_70 = arith.constant 0.000000e+00 : f32
    %75 = vector.broadcast %cst_70 : f32 to vector<8x32xf32>
    %76 = arith.minimumf %72, %75 : vector<8x32xf32>
    %77 = math.exp %76 : vector<8x32xf32>
    %cst_71 = arith.constant 1.000000e+00 : f32
    %78 = vector.broadcast %cst_71 : f32 to vector<8x32xf32>
    %79 = arith.subf %77, %78 : vector<8x32xf32>
    %80 = arith.select %74, %72, %79 : vector<8x32xi1>, vector<8x32xf32>
    %c0_72 = arith.constant 0 : index
    %c0_73 = arith.constant 0 : index
    %c0_74 = arith.constant 0 : index
    %81 = vector.load %arg22[%c0_72, %c0_73, %c0_74] : memref<4x32x32xf32, #tpu.memory_space<vmem>>, vector<1x32x32xf32>
    %82 = vector.shape_cast %81 : vector<1x32x32xf32> to vector<32x32xf32>
    %cst_75 = arith.constant dense<0.000000e+00> : vector<8x32xf32>
    %83 = tpu.matmul %80, %82, %cst_75 {dimension_numbers = #tpu.dot_dimension_numbers<[1], [0], [0], [1], [0, 0, 1, 1], [], []>} : vector<8x32xf32>, vector<32x32xf32>, vector<8x32xf32> -> vector<8x32xf32>
    %c0_76 = arith.constant 0 : index
    %c0_77 = arith.constant 0 : index
    %c0_78 = arith.constant 0 : index
    %84 = vector.load %arg23[%c0_76, %c0_77, %c0_78] : memref<4x1x32xf32, #tpu.memory_space<vmem>>, vector<1x1x32xf32>
    %85 = vector.shape_cast %84 : vector<1x1x32xf32> to vector<1x32xf32>
    %86 = vector.broadcast %85 : vector<1x32xf32> to vector<8x32xf32>
    %87 = arith.addf %83, %86 : vector<8x32xf32>
    %cst_79 = arith.constant 0.000000e+00 : f32
    %88 = vector.broadcast %cst_79 : f32 to vector<8x32xf32>
    %89 = arith.cmpf ogt, %87, %88 : vector<8x32xf32>
    %cst_80 = arith.constant 0.000000e+00 : f32
    %90 = vector.broadcast %cst_80 : f32 to vector<8x32xf32>
    %91 = arith.minimumf %87, %90 : vector<8x32xf32>
    %92 = math.exp %91 : vector<8x32xf32>
    %cst_81 = arith.constant 1.000000e+00 : f32
    %93 = vector.broadcast %cst_81 : f32 to vector<8x32xf32>
    %94 = arith.subf %92, %93 : vector<8x32xf32>
    %95 = arith.select %89, %87, %94 : vector<8x32xi1>, vector<8x32xf32>
    %c1_82 = arith.constant 1 : index
    %c0_83 = arith.constant 0 : index
    %c0_84 = arith.constant 0 : index
    %96 = vector.load %arg22[%c1_82, %c0_83, %c0_84] : memref<4x32x32xf32, #tpu.memory_space<vmem>>, vector<1x32x32xf32>
    %97 = vector.shape_cast %96 : vector<1x32x32xf32> to vector<32x32xf32>
    %cst_85 = arith.constant dense<0.000000e+00> : vector<8x32xf32>
    %98 = tpu.matmul %95, %97, %cst_85 {dimension_numbers = #tpu.dot_dimension_numbers<[1], [0], [0], [1], [0, 0, 1, 1], [], []>} : vector<8x32xf32>, vector<32x32xf32>, vector<8x32xf32> -> vector<8x32xf32>
    %c1_86 = arith.constant 1 : index
    %c0_87 = arith.constant 0 : index
    %c0_88 = arith.constant 0 : index
    %99 = vector.load %arg23[%c1_86, %c0_87, %c0_88] : memref<4x1x32xf32, #tpu.memory_space<vmem>>, vector<1x1x32xf32>
    %100 = vector.shape_cast %99 : vector<1x1x32xf32> to vector<1x32xf32>
    %101 = vector.broadcast %100 : vector<1x32xf32> to vector<8x32xf32>
    %102 = arith.addf %98, %101 : vector<8x32xf32>
    %cst_89 = arith.constant 0.000000e+00 : f32
    %103 = vector.broadcast %cst_89 : f32 to vector<8x32xf32>
    %104 = arith.cmpf ogt, %102, %103 : vector<8x32xf32>
    %cst_90 = arith.constant 0.000000e+00 : f32
    %105 = vector.broadcast %cst_90 : f32 to vector<8x32xf32>
    %106 = arith.minimumf %102, %105 : vector<8x32xf32>
    %107 = math.exp %106 : vector<8x32xf32>
    %cst_91 = arith.constant 1.000000e+00 : f32
    %108 = vector.broadcast %cst_91 : f32 to vector<8x32xf32>
    %109 = arith.subf %107, %108 : vector<8x32xf32>
    %110 = arith.select %104, %102, %109 : vector<8x32xi1>, vector<8x32xf32>
    %c2_92 = arith.constant 2 : index
    %c0_93 = arith.constant 0 : index
    %c0_94 = arith.constant 0 : index
    %111 = vector.load %arg22[%c2_92, %c0_93, %c0_94] : memref<4x32x32xf32, #tpu.memory_space<vmem>>, vector<1x32x32xf32>
    %112 = vector.shape_cast %111 : vector<1x32x32xf32> to vector<32x32xf32>
    %cst_95 = arith.constant dense<0.000000e+00> : vector<8x32xf32>
    %113 = tpu.matmul %110, %112, %cst_95 {dimension_numbers = #tpu.dot_dimension_numbers<[1], [0], [0], [1], [0, 0, 1, 1], [], []>} : vector<8x32xf32>, vector<32x32xf32>, vector<8x32xf32> -> vector<8x32xf32>
    %c2_96 = arith.constant 2 : index
    %c0_97 = arith.constant 0 : index
    %c0_98 = arith.constant 0 : index
    %114 = vector.load %arg23[%c2_96, %c0_97, %c0_98] : memref<4x1x32xf32, #tpu.memory_space<vmem>>, vector<1x1x32xf32>
    %115 = vector.shape_cast %114 : vector<1x1x32xf32> to vector<1x32xf32>
    %116 = vector.broadcast %115 : vector<1x32xf32> to vector<8x32xf32>
    %117 = arith.addf %113, %116 : vector<8x32xf32>
    %cst_99 = arith.constant 0.000000e+00 : f32
    %118 = vector.broadcast %cst_99 : f32 to vector<8x32xf32>
    %119 = arith.cmpf ogt, %117, %118 : vector<8x32xf32>
    %cst_100 = arith.constant 0.000000e+00 : f32
    %120 = vector.broadcast %cst_100 : f32 to vector<8x32xf32>
    %121 = arith.minimumf %117, %120 : vector<8x32xf32>
    %122 = math.exp %121 : vector<8x32xf32>
    %cst_101 = arith.constant 1.000000e+00 : f32
    %123 = vector.broadcast %cst_101 : f32 to vector<8x32xf32>
    %124 = arith.subf %122, %123 : vector<8x32xf32>
    %125 = arith.select %119, %117, %124 : vector<8x32xi1>, vector<8x32xf32>
    %c3 = arith.constant 3 : index
    %c0_102 = arith.constant 0 : index
    %c0_103 = arith.constant 0 : index
    %126 = vector.load %arg22[%c3, %c0_102, %c0_103] : memref<4x32x32xf32, #tpu.memory_space<vmem>>, vector<1x32x32xf32>
    %127 = vector.shape_cast %126 : vector<1x32x32xf32> to vector<32x32xf32>
    %cst_104 = arith.constant dense<0.000000e+00> : vector<8x32xf32>
    %128 = tpu.matmul %125, %127, %cst_104 {dimension_numbers = #tpu.dot_dimension_numbers<[1], [0], [0], [1], [0, 0, 1, 1], [], []>} : vector<8x32xf32>, vector<32x32xf32>, vector<8x32xf32> -> vector<8x32xf32>
    %c3_105 = arith.constant 3 : index
    %c0_106 = arith.constant 0 : index
    %c0_107 = arith.constant 0 : index
    %129 = vector.load %arg23[%c3_105, %c0_106, %c0_107] : memref<4x1x32xf32, #tpu.memory_space<vmem>>, vector<1x1x32xf32>
    %130 = vector.shape_cast %129 : vector<1x1x32xf32> to vector<1x32xf32>
    %131 = vector.broadcast %130 : vector<1x32xf32> to vector<8x32xf32>
    %132 = arith.addf %128, %131 : vector<8x32xf32>
    %cst_108 = arith.constant 0.000000e+00 : f32
    %133 = vector.broadcast %cst_108 : f32 to vector<8x32xf32>
    %134 = arith.cmpf ogt, %132, %133 : vector<8x32xf32>
    %cst_109 = arith.constant 0.000000e+00 : f32
    %135 = vector.broadcast %cst_109 : f32 to vector<8x32xf32>
    %136 = arith.minimumf %132, %135 : vector<8x32xf32>
    %137 = math.exp %136 : vector<8x32xf32>
    %cst_110 = arith.constant 1.000000e+00 : f32
    %138 = vector.broadcast %cst_110 : f32 to vector<8x32xf32>
    %139 = arith.subf %137, %138 : vector<8x32xf32>
    %140 = arith.select %134, %132, %139 : vector<8x32xi1>, vector<8x32xf32>
    %c0_111 = arith.constant 0 : index
    %c0_112 = arith.constant 0 : index
    %141 = vector.load %arg24[%c0_111, %c0_112] : memref<32x7xf32, #tpu.memory_space<vmem>>, vector<32x7xf32>
    %cst_113 = arith.constant dense<0.000000e+00> : vector<8x7xf32>
    %142 = tpu.matmul %140, %141, %cst_113 {dimension_numbers = #tpu.dot_dimension_numbers<[1], [0], [0], [1], [0, 0, 1, 1], [], []>} : vector<8x32xf32>, vector<32x7xf32>, vector<8x7xf32> -> vector<8x7xf32>
    %c0_114 = arith.constant 0 : index
    %c0_115 = arith.constant 0 : index
    %143 = vector.load %arg25[%c0_114, %c0_115] : memref<1x7xf32, #tpu.memory_space<vmem>>, vector<1x7xf32>
    %144 = vector.broadcast %143 : vector<1x7xf32> to vector<8x7xf32>
    %145 = arith.addf %142, %144 : vector<8x7xf32>
    %c0_116 = arith.constant 0 : index
    %c0_117 = arith.constant 0 : index
    %146 = vector.load %arg29[%c0_116, %c0_117] : memref<16x7xf32, #tpu.memory_space<vmem>>, vector<8x7xf32>
    tpu.vector_store %arg29[%c0_116, %c0_117], %145 {strides = array<i32>} : memref<16x7xf32, #tpu.memory_space<vmem>>, vector<8x7xf32>,
    %cst_118 = arith.constant dense<0.000000e+00> : vector<8x64xf32>
    %147 = tpu.matmul %60, %11, %cst_118 {dimension_numbers = #tpu.dot_dimension_numbers<[1], [0], [0], [1], [0, 0, 1, 1], [], []>} : vector<8x6xf32>, vector<6x64xf32>, vector<8x64xf32> -> vector<8x64xf32>
    %148 = vector.extract_strided_slice %22 {offsets = [0, 0], sizes = [1, 64], strides = [1, 1]} : vector<2x64xf32> to vector<1x64xf32>
    %149 = vector.broadcast %148 : vector<1x64xf32> to vector<8x64xf32>
    %150 = arith.addf %147, %149 : vector<8x64xf32>
    %cst_119 = arith.constant dense<0.000000e+00> : vector<8x64xf32>
    %151 = tpu.matmul %60, %26, %cst_119 {dimension_numbers = #tpu.dot_dimension_numbers<[1], [0], [0], [1], [0, 0, 1, 1], [], []>} : vector<8x6xf32>, vector<6x64xf32>, vector<8x64xf32> -> vector<8x64xf32>
    %152 = vector.extract_strided_slice %37 {offsets = [0, 0], sizes = [1, 64], strides = [1, 1]} : vector<2x64xf32> to vector<1x64xf32>
    %153 = vector.broadcast %152 : vector<1x64xf32> to vector<8x64xf32>
    %154 = arith.addf %151, %153 : vector<8x64xf32>
    %cst_120 = arith.constant dense<0.000000e+00> : vector<8x64xf32>
    %155 = tpu.matmul %60, %41, %cst_120 {dimension_numbers = #tpu.dot_dimension_numbers<[1], [0], [0], [1], [0, 0, 1, 1], [], []>} : vector<8x6xf32>, vector<6x64xf32>, vector<8x64xf32> -> vector<8x64xf32>
    %156 = vector.extract_strided_slice %52 {offsets = [0, 0], sizes = [1, 64], strides = [1, 1]} : vector<2x64xf32> to vector<1x64xf32>
    %157 = vector.broadcast %156 : vector<1x64xf32> to vector<8x64xf32>
    %158 = arith.addf %155, %157 : vector<8x64xf32>
    %c1_121 = arith.constant 1 : index
    %c0_122 = arith.constant 0 : index
    %c0_123 = arith.constant 0 : index
    %159 = vector.load %arg1[%c1_121, %c0_122, %c0_123] : memref<2x8x6xf32, #tpu.memory_space<vmem>>, vector<1x8x6xf32>
    %160 = vector.shape_cast %159 : vector<1x8x6xf32> to vector<8x6xf32>
    %161 = vector.extract_strided_slice %160 {offsets = [0, 5], sizes = [8, 1], strides = [1, 1]} : vector<8x6xf32> to vector<8x1xf32>
    %cst_124 = arith.constant 1.000000e+00 : f32
    %162 = vector.broadcast %cst_124 : f32 to vector<8x1xf32>
    %163 = arith.addf %161, %162 : vector<8x1xf32>
    %c1_125 = arith.constant 1 : index
    %c0_126 = arith.constant 0 : index
    %c0_127 = arith.constant 0 : index
    %164 = vector.load %arg28[%c1_125, %c0_126, %c0_127] : memref<2x8x1xf32, #tpu.memory_space<vmem>>, vector<1x8x1xf32>
    %165 = vector.shape_cast %164 : vector<1x8x1xf32> to vector<8x1xf32>
    %166 = vector.shape_cast %163 : vector<8x1xf32> to vector<1x8x1xf32>
    tpu.vector_store %arg28[%c1_125, %c0_126, %c0_127], %166 {strides = array<i32>} : memref<2x8x1xf32, #tpu.memory_space<vmem>>, vector<1x8x1xf32>,
    %167 = vector.extract_strided_slice %160 {offsets = [0, 0], sizes = [8, 4], strides = [1, 1]} : vector<8x6xf32> to vector<8x4xf32>
    %c0_128 = arith.constant 0 : index
    %c0_129 = arith.constant 0 : index
    %168 = vector.load %arg20[%c0_128, %c0_129] : memref<4x32xf32, #tpu.memory_space<vmem>>, vector<4x32xf32>
    %cst_130 = arith.constant dense<0.000000e+00> : vector<8x32xf32>
    %169 = tpu.matmul %167, %168, %cst_130 {dimension_numbers = #tpu.dot_dimension_numbers<[1], [0], [0], [1], [0, 0, 1, 1], [], []>} : vector<8x4xf32>, vector<4x32xf32>, vector<8x32xf32> -> vector<8x32xf32>
    %170 = vector.extract_strided_slice %58 {offsets = [1, 0], sizes = [1, 32], strides = [1, 1]} : vector<2x32xf32> to vector<1x32xf32>
    %171 = vector.broadcast %170 : vector<1x32xf32> to vector<8x32xf32>
    %172 = arith.addf %169, %171 : vector<8x32xf32>
    %cst_131 = arith.constant 0.000000e+00 : f32
    %173 = vector.broadcast %cst_131 : f32 to vector<8x32xf32>
    %174 = arith.cmpf ogt, %172, %173 : vector<8x32xf32>
    %cst_132 = arith.constant 0.000000e+00 : f32
    %175 = vector.broadcast %cst_132 : f32 to vector<8x32xf32>
    %176 = arith.minimumf %172, %175 : vector<8x32xf32>
    %177 = math.exp %176 : vector<8x32xf32>
    %cst_133 = arith.constant 1.000000e+00 : f32
    %178 = vector.broadcast %cst_133 : f32 to vector<8x32xf32>
    %179 = arith.subf %177, %178 : vector<8x32xf32>
    %180 = arith.select %174, %172, %179 : vector<8x32xi1>, vector<8x32xf32>
    %c0_134 = arith.constant 0 : index
    %c0_135 = arith.constant 0 : index
    %c0_136 = arith.constant 0 : index
    %181 = vector.load %arg22[%c0_134, %c0_135, %c0_136] : memref<4x32x32xf32, #tpu.memory_space<vmem>>, vector<1x32x32xf32>
    %182 = vector.shape_cast %181 : vector<1x32x32xf32> to vector<32x32xf32>
    %cst_137 = arith.constant dense<0.000000e+00> : vector<8x32xf32>
    %183 = tpu.matmul %180, %182, %cst_137 {dimension_numbers = #tpu.dot_dimension_numbers<[1], [0], [0], [1], [0, 0, 1, 1], [], []>} : vector<8x32xf32>, vector<32x32xf32>, vector<8x32xf32> -> vector<8x32xf32>
    %c0_138 = arith.constant 0 : index
    %c0_139 = arith.constant 0 : index
    %c0_140 = arith.constant 0 : index
    %184 = vector.load %arg23[%c0_138, %c0_139, %c0_140] : memref<4x1x32xf32, #tpu.memory_space<vmem>>, vector<1x1x32xf32>
    %185 = vector.shape_cast %184 : vector<1x1x32xf32> to vector<1x32xf32>
    %186 = vector.broadcast %185 : vector<1x32xf32> to vector<8x32xf32>
    %187 = arith.addf %183, %186 : vector<8x32xf32>
    %cst_141 = arith.constant 0.000000e+00 : f32
    %188 = vector.broadcast %cst_141 : f32 to vector<8x32xf32>
    %189 = arith.cmpf ogt, %187, %188 : vector<8x32xf32>
    %cst_142 = arith.constant 0.000000e+00 : f32
    %190 = vector.broadcast %cst_142 : f32 to vector<8x32xf32>
    %191 = arith.minimumf %187, %190 : vector<8x32xf32>
    %192 = math.exp %191 : vector<8x32xf32>
    %cst_143 = arith.constant 1.000000e+00 : f32
    %193 = vector.broadcast %cst_143 : f32 to vector<8x32xf32>
    %194 = arith.subf %192, %193 : vector<8x32xf32>
    %195 = arith.select %189, %187, %194 : vector<8x32xi1>, vector<8x32xf32>
    %c1_144 = arith.constant 1 : index
    %c0_145 = arith.constant 0 : index
    %c0_146 = arith.constant 0 : index
    %196 = vector.load %arg22[%c1_144, %c0_145, %c0_146] : memref<4x32x32xf32, #tpu.memory_space<vmem>>, vector<1x32x32xf32>
    %197 = vector.shape_cast %196 : vector<1x32x32xf32> to vector<32x32xf32>
    %cst_147 = arith.constant dense<0.000000e+00> : vector<8x32xf32>
    %198 = tpu.matmul %195, %197, %cst_147 {dimension_numbers = #tpu.dot_dimension_numbers<[1], [0], [0], [1], [0, 0, 1, 1], [], []>} : vector<8x32xf32>, vector<32x32xf32>, vector<8x32xf32> -> vector<8x32xf32>
    %c1_148 = arith.constant 1 : index
    %c0_149 = arith.constant 0 : index
    %c0_150 = arith.constant 0 : index
    %199 = vector.load %arg23[%c1_148, %c0_149, %c0_150] : memref<4x1x32xf32, #tpu.memory_space<vmem>>, vector<1x1x32xf32>
    %200 = vector.shape_cast %199 : vector<1x1x32xf32> to vector<1x32xf32>
    %201 = vector.broadcast %200 : vector<1x32xf32> to vector<8x32xf32>
    %202 = arith.addf %198, %201 : vector<8x32xf32>
    %cst_151 = arith.constant 0.000000e+00 : f32
    %203 = vector.broadcast %cst_151 : f32 to vector<8x32xf32>
    %204 = arith.cmpf ogt, %202, %203 : vector<8x32xf32>
    %cst_152 = arith.constant 0.000000e+00 : f32
    %205 = vector.broadcast %cst_152 : f32 to vector<8x32xf32>
    %206 = arith.minimumf %202, %205 : vector<8x32xf32>
    %207 = math.exp %206 : vector<8x32xf32>
    %cst_153 = arith.constant 1.000000e+00 : f32
    %208 = vector.broadcast %cst_153 : f32 to vector<8x32xf32>
    %209 = arith.subf %207, %208 : vector<8x32xf32>
    %210 = arith.select %204, %202, %209 : vector<8x32xi1>, vector<8x32xf32>
    %c2_154 = arith.constant 2 : index
    %c0_155 = arith.constant 0 : index
    %c0_156 = arith.constant 0 : index
    %211 = vector.load %arg22[%c2_154, %c0_155, %c0_156] : memref<4x32x32xf32, #tpu.memory_space<vmem>>, vector<1x32x32xf32>
    %212 = vector.shape_cast %211 : vector<1x32x32xf32> to vector<32x32xf32>
    %cst_157 = arith.constant dense<0.000000e+00> : vector<8x32xf32>
    %213 = tpu.matmul %210, %212, %cst_157 {dimension_numbers = #tpu.dot_dimension_numbers<[1], [0], [0], [1], [0, 0, 1, 1], [], []>} : vector<8x32xf32>, vector<32x32xf32>, vector<8x32xf32> -> vector<8x32xf32>
    %c2_158 = arith.constant 2 : index
    %c0_159 = arith.constant 0 : index
    %c0_160 = arith.constant 0 : index
    %214 = vector.load %arg23[%c2_158, %c0_159, %c0_160] : memref<4x1x32xf32, #tpu.memory_space<vmem>>, vector<1x1x32xf32>
    %215 = vector.shape_cast %214 : vector<1x1x32xf32> to vector<1x32xf32>
    %216 = vector.broadcast %215 : vector<1x32xf32> to vector<8x32xf32>
    %217 = arith.addf %213, %216 : vector<8x32xf32>
    %cst_161 = arith.constant 0.000000e+00 : f32
    %218 = vector.broadcast %cst_161 : f32 to vector<8x32xf32>
    %219 = arith.cmpf ogt, %217, %218 : vector<8x32xf32>
    %cst_162 = arith.constant 0.000000e+00 : f32
    %220 = vector.broadcast %cst_162 : f32 to vector<8x32xf32>
    %221 = arith.minimumf %217, %220 : vector<8x32xf32>
    %222 = math.exp %221 : vector<8x32xf32>
    %cst_163 = arith.constant 1.000000e+00 : f32
    %223 = vector.broadcast %cst_163 : f32 to vector<8x32xf32>
    %224 = arith.subf %222, %223 : vector<8x32xf32>
    %225 = arith.select %219, %217, %224 : vector<8x32xi1>, vector<8x32xf32>
    %c3_164 = arith.constant 3 : index
    %c0_165 = arith.constant 0 : index
    %c0_166 = arith.constant 0 : index
    %226 = vector.load %arg22[%c3_164, %c0_165, %c0_166] : memref<4x32x32xf32, #tpu.memory_space<vmem>>, vector<1x32x32xf32>
    %227 = vector.shape_cast %226 : vector<1x32x32xf32> to vector<32x32xf32>
    %cst_167 = arith.constant dense<0.000000e+00> : vector<8x32xf32>
    %228 = tpu.matmul %225, %227, %cst_167 {dimension_numbers = #tpu.dot_dimension_numbers<[1], [0], [0], [1], [0, 0, 1, 1], [], []>} : vector<8x32xf32>, vector<32x32xf32>, vector<8x32xf32> -> vector<8x32xf32>
    %c3_168 = arith.constant 3 : index
    %c0_169 = arith.constant 0 : index
    %c0_170 = arith.constant 0 : index
    %229 = vector.load %arg23[%c3_168, %c0_169, %c0_170] : memref<4x1x32xf32, #tpu.memory_space<vmem>>, vector<1x1x32xf32>
    %230 = vector.shape_cast %229 : vector<1x1x32xf32> to vector<1x32xf32>
    %231 = vector.broadcast %230 : vector<1x32xf32> to vector<8x32xf32>
    %232 = arith.addf %228, %231 : vector<8x32xf32>
    %cst_171 = arith.constant 0.000000e+00 : f32
    %233 = vector.broadcast %cst_171 : f32 to vector<8x32xf32>
    %234 = arith.cmpf ogt, %232, %233 : vector<8x32xf32>
    %cst_172 = arith.constant 0.000000e+00 : f32
    %235 = vector.broadcast %cst_172 : f32 to vector<8x32xf32>
    %236 = arith.minimumf %232, %235 : vector<8x32xf32>
    %237 = math.exp %236 : vector<8x32xf32>
    %cst_173 = arith.constant 1.000000e+00 : f32
    %238 = vector.broadcast %cst_173 : f32 to vector<8x32xf32>
    %239 = arith.subf %237, %238 : vector<8x32xf32>
    %240 = arith.select %234, %232, %239 : vector<8x32xi1>, vector<8x32xf32>
    %c0_174 = arith.constant 0 : index
    %c0_175 = arith.constant 0 : index
    %241 = vector.load %arg24[%c0_174, %c0_175] : memref<32x7xf32, #tpu.memory_space<vmem>>, vector<32x7xf32>
    %cst_176 = arith.constant dense<0.000000e+00> : vector<8x7xf32>
    %242 = tpu.matmul %240, %241, %cst_176 {dimension_numbers = #tpu.dot_dimension_numbers<[1], [0], [0], [1], [0, 0, 1, 1], [], []>} : vector<8x32xf32>, vector<32x7xf32>, vector<8x7xf32> -> vector<8x7xf32>
    %c0_177 = arith.constant 0 : index
    %c0_178 = arith.constant 0 : index
    %243 = vector.load %arg25[%c0_177, %c0_178] : memref<1x7xf32, #tpu.memory_space<vmem>>, vector<1x7xf32>
    %244 = vector.broadcast %243 : vector<1x7xf32> to vector<8x7xf32>
    %245 = arith.addf %242, %244 : vector<8x7xf32>
    %c8 = arith.constant 8 : index
    %c0_179 = arith.constant 0 : index
    %246 = vector.load %arg29[%c8, %c0_179] : memref<16x7xf32, #tpu.memory_space<vmem>>, vector<8x7xf32>
    tpu.vector_store %arg29[%c8, %c0_179], %245 {strides = array<i32>} : memref<16x7xf32, #tpu.memory_space<vmem>>, vector<8x7xf32>,
    %cst_180 = arith.constant dense<0.000000e+00> : vector<8x64xf32>
    %247 = tpu.matmul %160, %11, %cst_180 {dimension_numbers = #tpu.dot_dimension_numbers<[1], [0], [0], [1], [0, 0, 1, 1], [], []>} : vector<8x6xf32>, vector<6x64xf32>, vector<8x64xf32> -> vector<8x64xf32>
    %248 = vector.extract_strided_slice %22 {offsets = [1, 0], sizes = [1, 64], strides = [1, 1]} : vector<2x64xf32> to vector<1x64xf32>
    %249 = vector.broadcast %248 : vector<1x64xf32> to vector<8x64xf32>
    %250 = arith.addf %247, %249 : vector<8x64xf32>
    %cst_181 = arith.constant dense<0.000000e+00> : vector<8x64xf32>
    %251 = tpu.matmul %160, %26, %cst_181 {dimension_numbers = #tpu.dot_dimension_numbers<[1], [0], [0], [1], [0, 0, 1, 1], [], []>} : vector<8x6xf32>, vector<6x64xf32>, vector<8x64xf32> -> vector<8x64xf32>
    %252 = vector.extract_strided_slice %37 {offsets = [1, 0], sizes = [1, 64], strides = [1, 1]} : vector<2x64xf32> to vector<1x64xf32>
    %253 = vector.broadcast %252 : vector<1x64xf32> to vector<8x64xf32>
    %254 = arith.addf %251, %253 : vector<8x64xf32>
    %cst_182 = arith.constant dense<0.000000e+00> : vector<8x64xf32>
    %255 = tpu.matmul %160, %41, %cst_182 {dimension_numbers = #tpu.dot_dimension_numbers<[1], [0], [0], [1], [0, 0, 1, 1], [], []>} : vector<8x6xf32>, vector<6x64xf32>, vector<8x64xf32> -> vector<8x64xf32>
    %256 = vector.extract_strided_slice %52 {offsets = [1, 0], sizes = [1, 64], strides = [1, 1]} : vector<2x64xf32> to vector<1x64xf32>
    %257 = vector.broadcast %256 : vector<1x64xf32> to vector<8x64xf32>
    %258 = arith.addf %255, %257 : vector<8x64xf32>
    %c0_183 = arith.constant 0 : index
    %c0_184 = arith.constant 0 : index
    %c0_185 = arith.constant 0 : index
    %259 = vector.load %arg10[%c0_183, %c0_184, %c0_185] : memref<3x1x64xf32, #tpu.memory_space<vmem>>, vector<1x1x64xf32>
    %260 = vector.shape_cast %259 : vector<1x1x64xf32> to vector<1x64xf32>
    %c1_186 = arith.constant 1 : index
    %c0_187 = arith.constant 0 : index
    %c0_188 = arith.constant 0 : index
    %261 = vector.load %arg10[%c1_186, %c0_187, %c0_188] : memref<3x1x64xf32, #tpu.memory_space<vmem>>, vector<1x1x64xf32>
    %262 = vector.shape_cast %261 : vector<1x1x64xf32> to vector<1x64xf32>
    %c2_189 = arith.constant 2 : index
    %c0_190 = arith.constant 0 : index
    %c0_191 = arith.constant 0 : index
    %263 = vector.load %arg10[%c2_189, %c0_190, %c0_191] : memref<3x1x64xf32, #tpu.memory_space<vmem>>, vector<1x1x64xf32>
    %264 = vector.shape_cast %263 : vector<1x1x64xf32> to vector<1x64xf32>
    %c0_192 = arith.constant 0 : index
    %c0_193 = arith.constant 0 : index
    %c0_194 = arith.constant 0 : index
    %265 = vector.load %arg13[%c0_192, %c0_193, %c0_194] : memref<3x1x64xf32, #tpu.memory_space<vmem>>, vector<1x1x64xf32>
    %266 = vector.shape_cast %265 : vector<1x1x64xf32> to vector<1x64xf32>
    %c1_195 = arith.constant 1 : index
    %c0_196 = arith.constant 0 : index
    %c0_197 = arith.constant 0 : index
    %267 = vector.load %arg13[%c1_195, %c0_196, %c0_197] : memref<3x1x64xf32, #tpu.memory_space<vmem>>, vector<1x1x64xf32>
    %268 = vector.shape_cast %267 : vector<1x1x64xf32> to vector<1x64xf32>
    %c2_198 = arith.constant 2 : index
    %c0_199 = arith.constant 0 : index
    %c0_200 = arith.constant 0 : index
    %269 = vector.load %arg13[%c2_198, %c0_199, %c0_200] : memref<3x1x64xf32, #tpu.memory_space<vmem>>, vector<1x1x64xf32>
    %270 = vector.shape_cast %269 : vector<1x1x64xf32> to vector<1x64xf32>
    %c0_201 = arith.constant 0 : index
    %c0_202 = arith.constant 0 : index
    %c0_203 = arith.constant 0 : index
    %271 = vector.load %arg14[%c0_201, %c0_202, %c0_203] : memref<3x1x64xf32, #tpu.memory_space<vmem>>, vector<1x1x64xf32>
    %272 = vector.shape_cast %271 : vector<1x1x64xf32> to vector<1x64xf32>
    %c1_204 = arith.constant 1 : index
    %c0_205 = arith.constant 0 : index
    %c0_206 = arith.constant 0 : index
    %273 = vector.load %arg14[%c1_204, %c0_205, %c0_206] : memref<3x1x64xf32, #tpu.memory_space<vmem>>, vector<1x1x64xf32>
    %274 = vector.shape_cast %273 : vector<1x1x64xf32> to vector<1x64xf32>
    %c2_207 = arith.constant 2 : index
    %c0_208 = arith.constant 0 : index
    %c0_209 = arith.constant 0 : index
    %275 = vector.load %arg14[%c2_207, %c0_208, %c0_209] : memref<3x1x64xf32, #tpu.memory_space<vmem>>, vector<1x1x64xf32>
    %276 = vector.shape_cast %275 : vector<1x1x64xf32> to vector<1x64xf32>
    %cst_210 = arith.constant 0.000000e+00 : f32
    %277 = vector.broadcast %cst_210 : f32 to vector<2x64xf32>
    %cst_211 = arith.constant 0.000000e+00 : f32
    %278 = vector.broadcast %cst_211 : f32 to vector<2x64xf32>
    %279 = vector.extract_strided_slice %150 {offsets = [0, 0], sizes = [1, 64], strides = [1, 1]} : vector<8x64xf32> to vector<1x64xf32>
    %280 = vector.extract_strided_slice %250 {offsets = [0, 0], sizes = [1, 64], strides = [1, 1]} : vector<8x64xf32> to vector<1x64xf32>
    %281 = tpu.concatenate %279, %280 in 0 : vector<1x64xf32>, vector<1x64xf32> -> vector<2x64xf32>
    %282 = vector.extract_strided_slice %154 {offsets = [0, 0], sizes = [1, 64], strides = [1, 1]} : vector<8x64xf32> to vector<1x64xf32>
    %283 = vector.extract_strided_slice %254 {offsets = [0, 0], sizes = [1, 64], strides = [1, 1]} : vector<8x64xf32> to vector<1x64xf32>
    %284 = tpu.concatenate %282, %283 in 0 : vector<1x64xf32>, vector<1x64xf32> -> vector<2x64xf32>
    %285 = vector.extract_strided_slice %158 {offsets = [0, 0], sizes = [1, 64], strides = [1, 1]} : vector<8x64xf32> to vector<1x64xf32>
    %286 = vector.extract_strided_slice %258 {offsets = [0, 0], sizes = [1, 64], strides = [1, 1]} : vector<8x64xf32> to vector<1x64xf32>
    %287 = tpu.concatenate %285, %286 in 0 : vector<1x64xf32>, vector<1x64xf32> -> vector<2x64xf32>
    %c0_212 = arith.constant 0 : index
    %c0_213 = arith.constant 0 : index
    %c0_214 = arith.constant 0 : index
    %288 = vector.load %arg8[%c0_212, %c0_213, %c0_214] : memref<3x64x64xf32, #tpu.memory_space<vmem>>, vector<1x64x64xf32>
    %289 = vector.shape_cast %288 : vector<1x64x64xf32> to vector<64x64xf32>
    %cst_215 = arith.constant dense<0.000000e+00> : vector<2x64xf32>
    %290 = tpu.matmul %277, %289, %cst_215 {dimension_numbers = #tpu.dot_dimension_numbers<[1], [0], [0], [1], [0, 0, 1, 1], [], []>} : vector<2x64xf32>, vector<64x64xf32>, vector<2x64xf32> -> vector<2x64xf32>
    %291 = vector.broadcast %260 : vector<1x64xf32> to vector<2x64xf32>
    %292 = arith.addf %290, %291 : vector<2x64xf32>
    %c1_216 = arith.constant 1 : index
    %c0_217 = arith.constant 0 : index
    %c0_218 = arith.constant 0 : index
    %293 = vector.load %arg8[%c1_216, %c0_217, %c0_218] : memref<3x64x64xf32, #tpu.memory_space<vmem>>, vector<1x64x64xf32>
    %294 = vector.shape_cast %293 : vector<1x64x64xf32> to vector<64x64xf32>
    %cst_219 = arith.constant dense<0.000000e+00> : vector<2x64xf32>
    %295 = tpu.matmul %277, %294, %cst_219 {dimension_numbers = #tpu.dot_dimension_numbers<[1], [0], [0], [1], [0, 0, 1, 1], [], []>} : vector<2x64xf32>, vector<64x64xf32>, vector<2x64xf32> -> vector<2x64xf32>
    %296 = vector.broadcast %262 : vector<1x64xf32> to vector<2x64xf32>
    %297 = arith.addf %295, %296 : vector<2x64xf32>
    %c2_220 = arith.constant 2 : index
    %c0_221 = arith.constant 0 : index
    %c0_222 = arith.constant 0 : index
    %298 = vector.load %arg8[%c2_220, %c0_221, %c0_222] : memref<3x64x64xf32, #tpu.memory_space<vmem>>, vector<1x64x64xf32>
    %299 = vector.shape_cast %298 : vector<1x64x64xf32> to vector<64x64xf32>
    %cst_223 = arith.constant dense<0.000000e+00> : vector<2x64xf32>
    %300 = tpu.matmul %277, %299, %cst_223 {dimension_numbers = #tpu.dot_dimension_numbers<[1], [0], [0], [1], [0, 0, 1, 1], [], []>} : vector<2x64xf32>, vector<64x64xf32>, vector<2x64xf32> -> vector<2x64xf32>
    %301 = vector.broadcast %264 : vector<1x64xf32> to vector<2x64xf32>
    %302 = arith.addf %300, %301 : vector<2x64xf32>
    %303 = arith.addf %281, %292 : vector<2x64xf32>
    %304 = arith.negf %303 : vector<2x64xf32>
    %305 = math.exp %304 : vector<2x64xf32>
    %cst_224 = arith.constant 1.000000e+00 : f32
    %306 = vector.broadcast %cst_224 : f32 to vector<2x64xf32>
    %307 = arith.addf %306, %305 : vector<2x64xf32>
    %308 = arith.divf %306, %307 : vector<2x64xf32>
    %309 = arith.addf %284, %297 : vector<2x64xf32>
    %310 = arith.negf %309 : vector<2x64xf32>
    %311 = math.exp %310 : vector<2x64xf32>
    %cst_225 = arith.constant 1.000000e+00 : f32
    %312 = vector.broadcast %cst_225 : f32 to vector<2x64xf32>
    %313 = arith.addf %312, %311 : vector<2x64xf32>
    %314 = arith.divf %312, %313 : vector<2x64xf32>
    %315 = arith.mulf %308, %302 : vector<2x64xf32>
    %316 = arith.addf %287, %315 : vector<2x64xf32>
    %317 = math.tanh %316 : vector<2x64xf32>
    %cst_226 = arith.constant 1.000000e+00 : f32
    %318 = vector.broadcast %cst_226 : f32 to vector<2x64xf32>
    %319 = arith.subf %318, %314 : vector<2x64xf32>
    %320 = arith.mulf %319, %317 : vector<2x64xf32>
    %321 = arith.mulf %314, %277 : vector<2x64xf32>
    %322 = arith.addf %320, %321 : vector<2x64xf32>
    %c0_227 = arith.constant 0 : index
    %c0_228 = arith.constant 0 : index
    %c0_229 = arith.constant 0 : index
    %323 = vector.load %arg11[%c0_227, %c0_228, %c0_229] : memref<3x64x64xf32, #tpu.memory_space<vmem>>, vector<1x64x64xf32>
    %324 = vector.shape_cast %323 : vector<1x64x64xf32> to vector<64x64xf32>
    %cst_230 = arith.constant dense<0.000000e+00> : vector<2x64xf32>
    %325 = tpu.matmul %322, %324, %cst_230 {dimension_numbers = #tpu.dot_dimension_numbers<[1], [0], [0], [1], [0, 0, 1, 1], [], []>} : vector<2x64xf32>, vector<64x64xf32>, vector<2x64xf32> -> vector<2x64xf32>
    %326 = vector.broadcast %266 : vector<1x64xf32> to vector<2x64xf32>
    %327 = arith.addf %325, %326 : vector<2x64xf32>
    %c1_231 = arith.constant 1 : index
    %c0_232 = arith.constant 0 : index
    %c0_233 = arith.constant 0 : index
    %328 = vector.load %arg11[%c1_231, %c0_232, %c0_233] : memref<3x64x64xf32, #tpu.memory_space<vmem>>, vector<1x64x64xf32>
    %329 = vector.shape_cast %328 : vector<1x64x64xf32> to vector<64x64xf32>
    %cst_234 = arith.constant dense<0.000000e+00> : vector<2x64xf32>
    %330 = tpu.matmul %322, %329, %cst_234 {dimension_numbers = #tpu.dot_dimension_numbers<[1], [0], [0], [1], [0, 0, 1, 1], [], []>} : vector<2x64xf32>, vector<64x64xf32>, vector<2x64xf32> -> vector<2x64xf32>
    %331 = vector.broadcast %268 : vector<1x64xf32> to vector<2x64xf32>
    %332 = arith.addf %330, %331 : vector<2x64xf32>
    %c2_235 = arith.constant 2 : index
    %c0_236 = arith.constant 0 : index
    %c0_237 = arith.constant 0 : index
    %333 = vector.load %arg11[%c2_235, %c0_236, %c0_237] : memref<3x64x64xf32, #tpu.memory_space<vmem>>, vector<1x64x64xf32>
    %334 = vector.shape_cast %333 : vector<1x64x64xf32> to vector<64x64xf32>
    %cst_238 = arith.constant dense<0.000000e+00> : vector<2x64xf32>
    %335 = tpu.matmul %322, %334, %cst_238 {dimension_numbers = #tpu.dot_dimension_numbers<[1], [0], [0], [1], [0, 0, 1, 1], [], []>} : vector<2x64xf32>, vector<64x64xf32>, vector<2x64xf32> -> vector<2x64xf32>
    %336 = vector.broadcast %270 : vector<1x64xf32> to vector<2x64xf32>
    %337 = arith.addf %335, %336 : vector<2x64xf32>
    %c0_239 = arith.constant 0 : index
    %c0_240 = arith.constant 0 : index
    %c0_241 = arith.constant 0 : index
    %338 = vector.load %arg12[%c0_239, %c0_240, %c0_241] : memref<3x64x64xf32, #tpu.memory_space<vmem>>, vector<1x64x64xf32>
    %339 = vector.shape_cast %338 : vector<1x64x64xf32> to vector<64x64xf32>
    %cst_242 = arith.constant dense<0.000000e+00> : vector<2x64xf32>
    %340 = tpu.matmul %278, %339, %cst_242 {dimension_numbers = #tpu.dot_dimension_numbers<[1], [0], [0], [1], [0, 0, 1, 1], [], []>} : vector<2x64xf32>, vector<64x64xf32>, vector<2x64xf32> -> vector<2x64xf32>
    %341 = vector.broadcast %272 : vector<1x64xf32> to vector<2x64xf32>
    %342 = arith.addf %340, %341 : vector<2x64xf32>
    %c1_243 = arith.constant 1 : index
    %c0_244 = arith.constant 0 : index
    %c0_245 = arith.constant 0 : index
    %343 = vector.load %arg12[%c1_243, %c0_244, %c0_245] : memref<3x64x64xf32, #tpu.memory_space<vmem>>, vector<1x64x64xf32>
    %344 = vector.shape_cast %343 : vector<1x64x64xf32> to vector<64x64xf32>
    %cst_246 = arith.constant dense<0.000000e+00> : vector<2x64xf32>
    %345 = tpu.matmul %278, %344, %cst_246 {dimension_numbers = #tpu.dot_dimension_numbers<[1], [0], [0], [1], [0, 0, 1, 1], [], []>} : vector<2x64xf32>, vector<64x64xf32>, vector<2x64xf32> -> vector<2x64xf32>
    %346 = vector.broadcast %274 : vector<1x64xf32> to vector<2x64xf32>
    %347 = arith.addf %345, %346 : vector<2x64xf32>
    %c2_247 = arith.constant 2 : index
    %c0_248 = arith.constant 0 : index
    %c0_249 = arith.constant 0 : index
    %348 = vector.load %arg12[%c2_247, %c0_248, %c0_249] : memref<3x64x64xf32, #tpu.memory_space<vmem>>, vector<1x64x64xf32>
    %349 = vector.shape_cast %348 : vector<1x64x64xf32> to vector<64x64xf32>
    %cst_250 = arith.constant dense<0.000000e+00> : vector<2x64xf32>
    %350 = tpu.matmul %278, %349, %cst_250 {dimension_numbers = #tpu.dot_dimension_numbers<[1], [0], [0], [1], [0, 0, 1, 1], [], []>} : vector<2x64xf32>, vector<64x64xf32>, vector<2x64xf32> -> vector<2x64xf32>
    %351 = vector.broadcast %276 : vector<1x64xf32> to vector<2x64xf32>
    %352 = arith.addf %350, %351 : vector<2x64xf32>
    %353 = arith.addf %327, %342 : vector<2x64xf32>
    %354 = arith.negf %353 : vector<2x64xf32>
    %355 = math.exp %354 : vector<2x64xf32>
    %cst_251 = arith.constant 1.000000e+00 : f32
    %356 = vector.broadcast %cst_251 : f32 to vector<2x64xf32>
    %357 = arith.addf %356, %355 : vector<2x64xf32>
    %358 = arith.divf %356, %357 : vector<2x64xf32>
    %359 = arith.addf %332, %347 : vector<2x64xf32>
    %360 = arith.negf %359 : vector<2x64xf32>
    %361 = math.exp %360 : vector<2x64xf32>
    %cst_252 = arith.constant 1.000000e+00 : f32
    %362 = vector.broadcast %cst_252 : f32 to vector<2x64xf32>
    %363 = arith.addf %362, %361 : vector<2x64xf32>
    %364 = arith.divf %362, %363 : vector<2x64xf32>
    %365 = arith.mulf %358, %352 : vector<2x64xf32>
    %366 = arith.addf %337, %365 : vector<2x64xf32>
    %367 = math.tanh %366 : vector<2x64xf32>
    %cst_253 = arith.constant 1.000000e+00 : f32
    %368 = vector.broadcast %cst_253 : f32 to vector<2x64xf32>
    %369 = arith.subf %368, %364 : vector<2x64xf32>
    %370 = arith.mulf %369, %367 : vector<2x64xf32>
    %371 = arith.mulf %364, %278 : vector<2x64xf32>
    %372 = arith.addf %370, %371 : vector<2x64xf32>
    %373 = vector.extract_strided_slice %150 {offsets = [1, 0], sizes = [1, 64], strides = [1, 1]} : vector<8x64xf32> to vector<1x64xf32>
    %374 = vector.extract_strided_slice %250 {offsets = [1, 0], sizes = [1, 64], strides = [1, 1]} : vector<8x64xf32> to vector<1x64xf32>
    %375 = tpu.concatenate %373, %374 in 0 : vector<1x64xf32>, vector<1x64xf32> -> vector<2x64xf32>
    %376 = vector.extract_strided_slice %154 {offsets = [1, 0], sizes = [1, 64], strides = [1, 1]} : vector<8x64xf32> to vector<1x64xf32>
    %377 = vector.extract_strided_slice %254 {offsets = [1, 0], sizes = [1, 64], strides = [1, 1]} : vector<8x64xf32> to vector<1x64xf32>
    %378 = tpu.concatenate %376, %377 in 0 : vector<1x64xf32>, vector<1x64xf32> -> vector<2x64xf32>
    %379 = vector.extract_strided_slice %158 {offsets = [1, 0], sizes = [1, 64], strides = [1, 1]} : vector<8x64xf32> to vector<1x64xf32>
    %380 = vector.extract_strided_slice %258 {offsets = [1, 0], sizes = [1, 64], strides = [1, 1]} : vector<8x64xf32> to vector<1x64xf32>
    %381 = tpu.concatenate %379, %380 in 0 : vector<1x64xf32>, vector<1x64xf32> -> vector<2x64xf32>
    %c0_254 = arith.constant 0 : index
    %c0_255 = arith.constant 0 : index
    %c0_256 = arith.constant 0 : index
    %382 = vector.load %arg8[%c0_254, %c0_255, %c0_256] : memref<3x64x64xf32, #tpu.memory_space<vmem>>, vector<1x64x64xf32>
    %383 = vector.shape_cast %382 : vector<1x64x64xf32> to vector<64x64xf32>
    %cst_257 = arith.constant dense<0.000000e+00> : vector<2x64xf32>
    %384 = tpu.matmul %322, %383, %cst_257 {dimension_numbers = #tpu.dot_dimension_numbers<[1], [0], [0], [1], [0, 0, 1, 1], [], []>} : vector<2x64xf32>, vector<64x64xf32>, vector<2x64xf32> -> vector<2x64xf32>
    %385 = vector.broadcast %260 : vector<1x64xf32> to vector<2x64xf32>
    %386 = arith.addf %384, %385 : vector<2x64xf32>
    %c1_258 = arith.constant 1 : index
    %c0_259 = arith.constant 0 : index
    %c0_260 = arith.constant 0 : index
    %387 = vector.load %arg8[%c1_258, %c0_259, %c0_260] : memref<3x64x64xf32, #tpu.memory_space<vmem>>, vector<1x64x64xf32>
    %388 = vector.shape_cast %387 : vector<1x64x64xf32> to vector<64x64xf32>
    %cst_261 = arith.constant dense<0.000000e+00> : vector<2x64xf32>
    %389 = tpu.matmul %322, %388, %cst_261 {dimension_numbers = #tpu.dot_dimension_numbers<[1], [0], [0], [1], [0, 0, 1, 1], [], []>} : vector<2x64xf32>, vector<64x64xf32>, vector<2x64xf32> -> vector<2x64xf32>
    %390 = vector.broadcast %262 : vector<1x64xf32> to vector<2x64xf32>
    %391 = arith.addf %389, %390 : vector<2x64xf32>
    %c2_262 = arith.constant 2 : index
    %c0_263 = arith.constant 0 : index
    %c0_264 = arith.constant 0 : index
    %392 = vector.load %arg8[%c2_262, %c0_263, %c0_264] : memref<3x64x64xf32, #tpu.memory_space<vmem>>, vector<1x64x64xf32>
    %393 = vector.shape_cast %392 : vector<1x64x64xf32> to vector<64x64xf32>
    %cst_265 = arith.constant dense<0.000000e+00> : vector<2x64xf32>
    %394 = tpu.matmul %322, %393, %cst_265 {dimension_numbers = #tpu.dot_dimension_numbers<[1], [0], [0], [1], [0, 0, 1, 1], [], []>} : vector<2x64xf32>, vector<64x64xf32>, vector<2x64xf32> -> vector<2x64xf32>
    %395 = vector.broadcast %264 : vector<1x64xf32> to vector<2x64xf32>
    %396 = arith.addf %394, %395 : vector<2x64xf32>
    %397 = arith.addf %375, %386 : vector<2x64xf32>
    %398 = arith.negf %397 : vector<2x64xf32>
    %399 = math.exp %398 : vector<2x64xf32>
    %cst_266 = arith.constant 1.000000e+00 : f32
    %400 = vector.broadcast %cst_266 : f32 to vector<2x64xf32>
    %401 = arith.addf %400, %399 : vector<2x64xf32>
    %402 = arith.divf %400, %401 : vector<2x64xf32>
    %403 = arith.addf %378, %391 : vector<2x64xf32>
    %404 = arith.negf %403 : vector<2x64xf32>
    %405 = math.exp %404 : vector<2x64xf32>
    %cst_267 = arith.constant 1.000000e+00 : f32
    %406 = vector.broadcast %cst_267 : f32 to vector<2x64xf32>
    %407 = arith.addf %406, %405 : vector<2x64xf32>
    %408 = arith.divf %406, %407 : vector<2x64xf32>
    %409 = arith.mulf %402, %396 : vector<2x64xf32>
    %410 = arith.addf %381, %409 : vector<2x64xf32>
    %411 = math.tanh %410 : vector<2x64xf32>
    %cst_268 = arith.constant 1.000000e+00 : f32
    %412 = vector.broadcast %cst_268 : f32 to vector<2x64xf32>
    %413 = arith.subf %412, %408 : vector<2x64xf32>
    %414 = arith.mulf %413, %411 : vector<2x64xf32>
    %415 = arith.mulf %408, %322 : vector<2x64xf32>
    %416 = arith.addf %414, %415 : vector<2x64xf32>
    %c0_269 = arith.constant 0 : index
    %c0_270 = arith.constant 0 : index
    %c0_271 = arith.constant 0 : index
    %417 = vector.load %arg11[%c0_269, %c0_270, %c0_271] : memref<3x64x64xf32, #tpu.memory_space<vmem>>, vector<1x64x64xf32>
    %418 = vector.shape_cast %417 : vector<1x64x64xf32> to vector<64x64xf32>
    %cst_272 = arith.constant dense<0.000000e+00> : vector<2x64xf32>
    %419 = tpu.matmul %416, %418, %cst_272 {dimension_numbers = #tpu.dot_dimension_numbers<[1], [0], [0], [1], [0, 0, 1, 1], [], []>} : vector<2x64xf32>, vector<64x64xf32>, vector<2x64xf32> -> vector<2x64xf32>
    %420 = vector.broadcast %266 : vector<1x64xf32> to vector<2x64xf32>
    %421 = arith.addf %419, %420 : vector<2x64xf32>
    %c1_273 = arith.constant 1 : index
    %c0_274 = arith.constant 0 : index
    %c0_275 = arith.constant 0 : index
    %422 = vector.load %arg11[%c1_273, %c0_274, %c0_275] : memref<3x64x64xf32, #tpu.memory_space<vmem>>, vector<1x64x64xf32>
    %423 = vector.shape_cast %422 : vector<1x64x64xf32> to vector<64x64xf32>
    %cst_276 = arith.constant dense<0.000000e+00> : vector<2x64xf32>
    %424 = tpu.matmul %416, %423, %cst_276 {dimension_numbers = #tpu.dot_dimension_numbers<[1], [0], [0], [1], [0, 0, 1, 1], [], []>} : vector<2x64xf32>, vector<64x64xf32>, vector<2x64xf32> -> vector<2x64xf32>
    %425 = vector.broadcast %268 : vector<1x64xf32> to vector<2x64xf32>
    %426 = arith.addf %424, %425 : vector<2x64xf32>
    %c2_277 = arith.constant 2 : index
    %c0_278 = arith.constant 0 : index
    %c0_279 = arith.constant 0 : index
    %427 = vector.load %arg11[%c2_277, %c0_278, %c0_279] : memref<3x64x64xf32, #tpu.memory_space<vmem>>, vector<1x64x64xf32>
    %428 = vector.shape_cast %427 : vector<1x64x64xf32> to vector<64x64xf32>
    %cst_280 = arith.constant dense<0.000000e+00> : vector<2x64xf32>
    %429 = tpu.matmul %416, %428, %cst_280 {dimension_numbers = #tpu.dot_dimension_numbers<[1], [0], [0], [1], [0, 0, 1, 1], [], []>} : vector<2x64xf32>, vector<64x64xf32>, vector<2x64xf32> -> vector<2x64xf32>
    %430 = vector.broadcast %270 : vector<1x64xf32> to vector<2x64xf32>
    %431 = arith.addf %429, %430 : vector<2x64xf32>
    %c0_281 = arith.constant 0 : index
    %c0_282 = arith.constant 0 : index
    %c0_283 = arith.constant 0 : index
    %432 = vector.load %arg12[%c0_281, %c0_282, %c0_283] : memref<3x64x64xf32, #tpu.memory_space<vmem>>, vector<1x64x64xf32>
    %433 = vector.shape_cast %432 : vector<1x64x64xf32> to vector<64x64xf32>
    %cst_284 = arith.constant dense<0.000000e+00> : vector<2x64xf32>
    %434 = tpu.matmul %372, %433, %cst_284 {dimension_numbers = #tpu.dot_dimension_numbers<[1], [0], [0], [1], [0, 0, 1, 1], [], []>} : vector<2x64xf32>, vector<64x64xf32>, vector<2x64xf32> -> vector<2x64xf32>
    %435 = vector.broadcast %272 : vector<1x64xf32> to vector<2x64xf32>
    %436 = arith.addf %434, %435 : vector<2x64xf32>
    %c1_285 = arith.constant 1 : index
    %c0_286 = arith.constant 0 : index
    %c0_287 = arith.constant 0 : index
    %437 = vector.load %arg12[%c1_285, %c0_286, %c0_287] : memref<3x64x64xf32, #tpu.memory_space<vmem>>, vector<1x64x64xf32>
    %438 = vector.shape_cast %437 : vector<1x64x64xf32> to vector<64x64xf32>
    %cst_288 = arith.constant dense<0.000000e+00> : vector<2x64xf32>
    %439 = tpu.matmul %372, %438, %cst_288 {dimension_numbers = #tpu.dot_dimension_numbers<[1], [0], [0], [1], [0, 0, 1, 1], [], []>} : vector<2x64xf32>, vector<64x64xf32>, vector<2x64xf32> -> vector<2x64xf32>
    %440 = vector.broadcast %274 : vector<1x64xf32> to vector<2x64xf32>
    %441 = arith.addf %439, %440 : vector<2x64xf32>
    %c2_289 = arith.constant 2 : index
    %c0_290 = arith.constant 0 : index
    %c0_291 = arith.constant 0 : index
    %442 = vector.load %arg12[%c2_289, %c0_290, %c0_291] : memref<3x64x64xf32, #tpu.memory_space<vmem>>, vector<1x64x64xf32>
    %443 = vector.shape_cast %442 : vector<1x64x64xf32> to vector<64x64xf32>
    %cst_292 = arith.constant dense<0.000000e+00> : vector<2x64xf32>
    %444 = tpu.matmul %372, %443, %cst_292 {dimension_numbers = #tpu.dot_dimension_numbers<[1], [0], [0], [1], [0, 0, 1, 1], [], []>} : vector<2x64xf32>, vector<64x64xf32>, vector<2x64xf32> -> vector<2x64xf32>
    %445 = vector.broadcast %276 : vector<1x64xf32> to vector<2x64xf32>
    %446 = arith.addf %444, %445 : vector<2x64xf32>
    %447 = arith.addf %421, %436 : vector<2x64xf32>
    %448 = arith.negf %447 : vector<2x64xf32>
    %449 = math.exp %448 : vector<2x64xf32>
    %cst_293 = arith.constant 1.000000e+00 : f32
    %450 = vector.broadcast %cst_293 : f32 to vector<2x64xf32>
    %451 = arith.addf %450, %449 : vector<2x64xf32>
    %452 = arith.divf %450, %451 : vector<2x64xf32>
    %453 = arith.addf %426, %441 : vector<2x64xf32>
    %454 = arith.negf %453 : vector<2x64xf32>
    %455 = math.exp %454 : vector<2x64xf32>
    %cst_294 = arith.constant 1.000000e+00 : f32
    %456 = vector.broadcast %cst_294 : f32 to vector<2x64xf32>
    %457 = arith.addf %456, %455 : vector<2x64xf32>
    %458 = arith.divf %456, %457 : vector<2x64xf32>
    %459 = arith.mulf %452, %446 : vector<2x64xf32>
    %460 = arith.addf %431, %459 : vector<2x64xf32>
    %461 = math.tanh %460 : vector<2x64xf32>
    %cst_295 = arith.constant 1.000000e+00 : f32
    %462 = vector.broadcast %cst_295 : f32 to vector<2x64xf32>
    %463 = arith.subf %462, %458 : vector<2x64xf32>
    %464 = arith.mulf %463, %461 : vector<2x64xf32>
    %465 = arith.mulf %458, %372 : vector<2x64xf32>
    %466 = arith.addf %464, %465 : vector<2x64xf32>
    %467 = vector.extract_strided_slice %150 {offsets = [2, 0], sizes = [1, 64], strides = [1, 1]} : vector<8x64xf32> to vector<1x64xf32>
    %468 = vector.extract_strided_slice %250 {offsets = [2, 0], sizes = [1, 64], strides = [1, 1]} : vector<8x64xf32> to vector<1x64xf32>
    %469 = tpu.concatenate %467, %468 in 0 : vector<1x64xf32>, vector<1x64xf32> -> vector<2x64xf32>
    %470 = vector.extract_strided_slice %154 {offsets = [2, 0], sizes = [1, 64], strides = [1, 1]} : vector<8x64xf32> to vector<1x64xf32>
    %471 = vector.extract_strided_slice %254 {offsets = [2, 0], sizes = [1, 64], strides = [1, 1]} : vector<8x64xf32> to vector<1x64xf32>
    %472 = tpu.concatenate %470, %471 in 0 : vector<1x64xf32>, vector<1x64xf32> -> vector<2x64xf32>
    %473 = vector.extract_strided_slice %158 {offsets = [2, 0], sizes = [1, 64], strides = [1, 1]} : vector<8x64xf32> to vector<1x64xf32>
    %474 = vector.extract_strided_slice %258 {offsets = [2, 0], sizes = [1, 64], strides = [1, 1]} : vector<8x64xf32> to vector<1x64xf32>
    %475 = tpu.concatenate %473, %474 in 0 : vector<1x64xf32>, vector<1x64xf32> -> vector<2x64xf32>
    %c0_296 = arith.constant 0 : index
    %c0_297 = arith.constant 0 : index
    %c0_298 = arith.constant 0 : index
    %476 = vector.load %arg8[%c0_296, %c0_297, %c0_298] : memref<3x64x64xf32, #tpu.memory_space<vmem>>, vector<1x64x64xf32>
    %477 = vector.shape_cast %476 : vector<1x64x64xf32> to vector<64x64xf32>
    %cst_299 = arith.constant dense<0.000000e+00> : vector<2x64xf32>
    %478 = tpu.matmul %416, %477, %cst_299 {dimension_numbers = #tpu.dot_dimension_numbers<[1], [0], [0], [1], [0, 0, 1, 1], [], []>} : vector<2x64xf32>, vector<64x64xf32>, vector<2x64xf32> -> vector<2x64xf32>
    %479 = vector.broadcast %260 : vector<1x64xf32> to vector<2x64xf32>
    %480 = arith.addf %478, %479 : vector<2x64xf32>
    %c1_300 = arith.constant 1 : index
    %c0_301 = arith.constant 0 : index
    %c0_302 = arith.constant 0 : index
    %481 = vector.load %arg8[%c1_300, %c0_301, %c0_302] : memref<3x64x64xf32, #tpu.memory_space<vmem>>, vector<1x64x64xf32>
    %482 = vector.shape_cast %481 : vector<1x64x64xf32> to vector<64x64xf32>
    %cst_303 = arith.constant dense<0.000000e+00> : vector<2x64xf32>
    %483 = tpu.matmul %416, %482, %cst_303 {dimension_numbers = #tpu.dot_dimension_numbers<[1], [0], [0], [1], [0, 0, 1, 1], [], []>} : vector<2x64xf32>, vector<64x64xf32>, vector<2x64xf32> -> vector<2x64xf32>
    %484 = vector.broadcast %262 : vector<1x64xf32> to vector<2x64xf32>
    %485 = arith.addf %483, %484 : vector<2x64xf32>
    %c2_304 = arith.constant 2 : index
    %c0_305 = arith.constant 0 : index
    %c0_306 = arith.constant 0 : index
    %486 = vector.load %arg8[%c2_304, %c0_305, %c0_306] : memref<3x64x64xf32, #tpu.memory_space<vmem>>, vector<1x64x64xf32>
    %487 = vector.shape_cast %486 : vector<1x64x64xf32> to vector<64x64xf32>
    %cst_307 = arith.constant dense<0.000000e+00> : vector<2x64xf32>
    %488 = tpu.matmul %416, %487, %cst_307 {dimension_numbers = #tpu.dot_dimension_numbers<[1], [0], [0], [1], [0, 0, 1, 1], [], []>} : vector<2x64xf32>, vector<64x64xf32>, vector<2x64xf32> -> vector<2x64xf32>
    %489 = vector.broadcast %264 : vector<1x64xf32> to vector<2x64xf32>
    %490 = arith.addf %488, %489 : vector<2x64xf32>
    %491 = arith.addf %469, %480 : vector<2x64xf32>
    %492 = arith.negf %491 : vector<2x64xf32>
    %493 = math.exp %492 : vector<2x64xf32>
    %cst_308 = arith.constant 1.000000e+00 : f32
    %494 = vector.broadcast %cst_308 : f32 to vector<2x64xf32>
    %495 = arith.addf %494, %493 : vector<2x64xf32>
    %496 = arith.divf %494, %495 : vector<2x64xf32>
    %497 = arith.addf %472, %485 : vector<2x64xf32>
    %498 = arith.negf %497 : vector<2x64xf32>
    %499 = math.exp %498 : vector<2x64xf32>
    %cst_309 = arith.constant 1.000000e+00 : f32
    %500 = vector.broadcast %cst_309 : f32 to vector<2x64xf32>
    %501 = arith.addf %500, %499 : vector<2x64xf32>
    %502 = arith.divf %500, %501 : vector<2x64xf32>
    %503 = arith.mulf %496, %490 : vector<2x64xf32>
    %504 = arith.addf %475, %503 : vector<2x64xf32>
    %505 = math.tanh %504 : vector<2x64xf32>
    %cst_310 = arith.constant 1.000000e+00 : f32
    %506 = vector.broadcast %cst_310 : f32 to vector<2x64xf32>
    %507 = arith.subf %506, %502 : vector<2x64xf32>
    %508 = arith.mulf %507, %505 : vector<2x64xf32>
    %509 = arith.mulf %502, %416 : vector<2x64xf32>
    %510 = arith.addf %508, %509 : vector<2x64xf32>
    %c0_311 = arith.constant 0 : index
    %c0_312 = arith.constant 0 : index
    %c0_313 = arith.constant 0 : index
    %511 = vector.load %arg11[%c0_311, %c0_312, %c0_313] : memref<3x64x64xf32, #tpu.memory_space<vmem>>, vector<1x64x64xf32>
    %512 = vector.shape_cast %511 : vector<1x64x64xf32> to vector<64x64xf32>
    %cst_314 = arith.constant dense<0.000000e+00> : vector<2x64xf32>
    %513 = tpu.matmul %510, %512, %cst_314 {dimension_numbers = #tpu.dot_dimension_numbers<[1], [0], [0], [1], [0, 0, 1, 1], [], []>} : vector<2x64xf32>, vector<64x64xf32>, vector<2x64xf32> -> vector<2x64xf32>
    %514 = vector.broadcast %266 : vector<1x64xf32> to vector<2x64xf32>
    %515 = arith.addf %513, %514 : vector<2x64xf32>
    %c1_315 = arith.constant 1 : index
    %c0_316 = arith.constant 0 : index
    %c0_317 = arith.constant 0 : index
    %516 = vector.load %arg11[%c1_315, %c0_316, %c0_317] : memref<3x64x64xf32, #tpu.memory_space<vmem>>, vector<1x64x64xf32>
    %517 = vector.shape_cast %516 : vector<1x64x64xf32> to vector<64x64xf32>
    %cst_318 = arith.constant dense<0.000000e+00> : vector<2x64xf32>
    %518 = tpu.matmul %510, %517, %cst_318 {dimension_numbers = #tpu.dot_dimension_numbers<[1], [0], [0], [1], [0, 0, 1, 1], [], []>} : vector<2x64xf32>, vector<64x64xf32>, vector<2x64xf32> -> vector<2x64xf32>
    %519 = vector.broadcast %268 : vector<1x64xf32> to vector<2x64xf32>
    %520 = arith.addf %518, %519 : vector<2x64xf32>
    %c2_319 = arith.constant 2 : index
    %c0_320 = arith.constant 0 : index
    %c0_321 = arith.constant 0 : index
    %521 = vector.load %arg11[%c2_319, %c0_320, %c0_321] : memref<3x64x64xf32, #tpu.memory_space<vmem>>, vector<1x64x64xf32>
    %522 = vector.shape_cast %521 : vector<1x64x64xf32> to vector<64x64xf32>
    %cst_322 = arith.constant dense<0.000000e+00> : vector<2x64xf32>
    %523 = tpu.matmul %510, %522, %cst_322 {dimension_numbers = #tpu.dot_dimension_numbers<[1], [0], [0], [1], [0, 0, 1, 1], [], []>} : vector<2x64xf32>, vector<64x64xf32>, vector<2x64xf32> -> vector<2x64xf32>
    %524 = vector.broadcast %270 : vector<1x64xf32> to vector<2x64xf32>
    %525 = arith.addf %523, %524 : vector<2x64xf32>
    %c0_323 = arith.constant 0 : index
    %c0_324 = arith.constant 0 : index
    %c0_325 = arith.constant 0 : index
    %526 = vector.load %arg12[%c0_323, %c0_324, %c0_325] : memref<3x64x64xf32, #tpu.memory_space<vmem>>, vector<1x64x64xf32>
    %527 = vector.shape_cast %526 : vector<1x64x64xf32> to vector<64x64xf32>
    %cst_326 = arith.constant dense<0.000000e+00> : vector<2x64xf32>
    %528 = tpu.matmul %466, %527, %cst_326 {dimension_numbers = #tpu.dot_dimension_numbers<[1], [0], [0], [1], [0, 0, 1, 1], [], []>} : vector<2x64xf32>, vector<64x64xf32>, vector<2x64xf32> -> vector<2x64xf32>
    %529 = vector.broadcast %272 : vector<1x64xf32> to vector<2x64xf32>
    %530 = arith.addf %528, %529 : vector<2x64xf32>
    %c1_327 = arith.constant 1 : index
    %c0_328 = arith.constant 0 : index
    %c0_329 = arith.constant 0 : index
    %531 = vector.load %arg12[%c1_327, %c0_328, %c0_329] : memref<3x64x64xf32, #tpu.memory_space<vmem>>, vector<1x64x64xf32>
    %532 = vector.shape_cast %531 : vector<1x64x64xf32> to vector<64x64xf32>
    %cst_330 = arith.constant dense<0.000000e+00> : vector<2x64xf32>
    %533 = tpu.matmul %466, %532, %cst_330 {dimension_numbers = #tpu.dot_dimension_numbers<[1], [0], [0], [1], [0, 0, 1, 1], [], []>} : vector<2x64xf32>, vector<64x64xf32>, vector<2x64xf32> -> vector<2x64xf32>
    %534 = vector.broadcast %274 : vector<1x64xf32> to vector<2x64xf32>
    %535 = arith.addf %533, %534 : vector<2x64xf32>
    %c2_331 = arith.constant 2 : index
    %c0_332 = arith.constant 0 : index
    %c0_333 = arith.constant 0 : index
    %536 = vector.load %arg12[%c2_331, %c0_332, %c0_333] : memref<3x64x64xf32, #tpu.memory_space<vmem>>, vector<1x64x64xf32>
    %537 = vector.shape_cast %536 : vector<1x64x64xf32> to vector<64x64xf32>
    %cst_334 = arith.constant dense<0.000000e+00> : vector<2x64xf32>
    %538 = tpu.matmul %466, %537, %cst_334 {dimension_numbers = #tpu.dot_dimension_numbers<[1], [0], [0], [1], [0, 0, 1, 1], [], []>} : vector<2x64xf32>, vector<64x64xf32>, vector<2x64xf32> -> vector<2x64xf32>
    %539 = vector.broadcast %276 : vector<1x64xf32> to vector<2x64xf32>
    %540 = arith.addf %538, %539 : vector<2x64xf32>
    %541 = arith.addf %515, %530 : vector<2x64xf32>
    %542 = arith.negf %541 : vector<2x64xf32>
    %543 = math.exp %542 : vector<2x64xf32>
    %cst_335 = arith.constant 1.000000e+00 : f32
    %544 = vector.broadcast %cst_335 : f32 to vector<2x64xf32>
    %545 = arith.addf %544, %543 : vector<2x64xf32>
    %546 = arith.divf %544, %545 : vector<2x64xf32>
    %547 = arith.addf %520, %535 : vector<2x64xf32>
    %548 = arith.negf %547 : vector<2x64xf32>
    %549 = math.exp %548 : vector<2x64xf32>
    %cst_336 = arith.constant 1.000000e+00 : f32
    %550 = vector.broadcast %cst_336 : f32 to vector<2x64xf32>
    %551 = arith.addf %550, %549 : vector<2x64xf32>
    %552 = arith.divf %550, %551 : vector<2x64xf32>
    %553 = arith.mulf %546, %540 : vector<2x64xf32>
    %554 = arith.addf %525, %553 : vector<2x64xf32>
    %555 = math.tanh %554 : vector<2x64xf32>
    %cst_337 = arith.constant 1.000000e+00 : f32
    %556 = vector.broadcast %cst_337 : f32 to vector<2x64xf32>
    %557 = arith.subf %556, %552 : vector<2x64xf32>
    %558 = arith.mulf %557, %555 : vector<2x64xf32>
    %559 = arith.mulf %552, %466 : vector<2x64xf32>
    %560 = arith.addf %558, %559 : vector<2x64xf32>
    %561 = vector.extract_strided_slice %150 {offsets = [3, 0], sizes = [1, 64], strides = [1, 1]} : vector<8x64xf32> to vector<1x64xf32>
    %562 = vector.extract_strided_slice %250 {offsets = [3, 0], sizes = [1, 64], strides = [1, 1]} : vector<8x64xf32> to vector<1x64xf32>
    %563 = tpu.concatenate %561, %562 in 0 : vector<1x64xf32>, vector<1x64xf32> -> vector<2x64xf32>
    %564 = vector.extract_strided_slice %154 {offsets = [3, 0], sizes = [1, 64], strides = [1, 1]} : vector<8x64xf32> to vector<1x64xf32>
    %565 = vector.extract_strided_slice %254 {offsets = [3, 0], sizes = [1, 64], strides = [1, 1]} : vector<8x64xf32> to vector<1x64xf32>
    %566 = tpu.concatenate %564, %565 in 0 : vector<1x64xf32>, vector<1x64xf32> -> vector<2x64xf32>
    %567 = vector.extract_strided_slice %158 {offsets = [3, 0], sizes = [1, 64], strides = [1, 1]} : vector<8x64xf32> to vector<1x64xf32>
    %568 = vector.extract_strided_slice %258 {offsets = [3, 0], sizes = [1, 64], strides = [1, 1]} : vector<8x64xf32> to vector<1x64xf32>
    %569 = tpu.concatenate %567, %568 in 0 : vector<1x64xf32>, vector<1x64xf32> -> vector<2x64xf32>
    %c0_338 = arith.constant 0 : index
    %c0_339 = arith.constant 0 : index
    %c0_340 = arith.constant 0 : index
    %570 = vector.load %arg8[%c0_338, %c0_339, %c0_340] : memref<3x64x64xf32, #tpu.memory_space<vmem>>, vector<1x64x64xf32>
    %571 = vector.shape_cast %570 : vector<1x64x64xf32> to vector<64x64xf32>
    %cst_341 = arith.constant dense<0.000000e+00> : vector<2x64xf32>
    %572 = tpu.matmul %510, %571, %cst_341 {dimension_numbers = #tpu.dot_dimension_numbers<[1], [0], [0], [1], [0, 0, 1, 1], [], []>} : vector<2x64xf32>, vector<64x64xf32>, vector<2x64xf32> -> vector<2x64xf32>
    %573 = vector.broadcast %260 : vector<1x64xf32> to vector<2x64xf32>
    %574 = arith.addf %572, %573 : vector<2x64xf32>
    %c1_342 = arith.constant 1 : index
    %c0_343 = arith.constant 0 : index
    %c0_344 = arith.constant 0 : index
    %575 = vector.load %arg8[%c1_342, %c0_343, %c0_344] : memref<3x64x64xf32, #tpu.memory_space<vmem>>, vector<1x64x64xf32>
    %576 = vector.shape_cast %575 : vector<1x64x64xf32> to vector<64x64xf32>
    %cst_345 = arith.constant dense<0.000000e+00> : vector<2x64xf32>
    %577 = tpu.matmul %510, %576, %cst_345 {dimension_numbers = #tpu.dot_dimension_numbers<[1], [0], [0], [1], [0, 0, 1, 1], [], []>} : vector<2x64xf32>, vector<64x64xf32>, vector<2x64xf32> -> vector<2x64xf32>
    %578 = vector.broadcast %262 : vector<1x64xf32> to vector<2x64xf32>
    %579 = arith.addf %577, %578 : vector<2x64xf32>
    %c2_346 = arith.constant 2 : index
    %c0_347 = arith.constant 0 : index
    %c0_348 = arith.constant 0 : index
    %580 = vector.load %arg8[%c2_346, %c0_347, %c0_348] : memref<3x64x64xf32, #tpu.memory_space<vmem>>, vector<1x64x64xf32>
    %581 = vector.shape_cast %580 : vector<1x64x64xf32> to vector<64x64xf32>
    %cst_349 = arith.constant dense<0.000000e+00> : vector<2x64xf32>
    %582 = tpu.matmul %510, %581, %cst_349 {dimension_numbers = #tpu.dot_dimension_numbers<[1], [0], [0], [1], [0, 0, 1, 1], [], []>} : vector<2x64xf32>, vector<64x64xf32>, vector<2x64xf32> -> vector<2x64xf32>
    %583 = vector.broadcast %264 : vector<1x64xf32> to vector<2x64xf32>
    %584 = arith.addf %582, %583 : vector<2x64xf32>
    %585 = arith.addf %563, %574 : vector<2x64xf32>
    %586 = arith.negf %585 : vector<2x64xf32>
    %587 = math.exp %586 : vector<2x64xf32>
    %cst_350 = arith.constant 1.000000e+00 : f32
    %588 = vector.broadcast %cst_350 : f32 to vector<2x64xf32>
    %589 = arith.addf %588, %587 : vector<2x64xf32>
    %590 = arith.divf %588, %589 : vector<2x64xf32>
    %591 = arith.addf %566, %579 : vector<2x64xf32>
    %592 = arith.negf %591 : vector<2x64xf32>
    %593 = math.exp %592 : vector<2x64xf32>
    %cst_351 = arith.constant 1.000000e+00 : f32
    %594 = vector.broadcast %cst_351 : f32 to vector<2x64xf32>
    %595 = arith.addf %594, %593 : vector<2x64xf32>
    %596 = arith.divf %594, %595 : vector<2x64xf32>
    %597 = arith.mulf %590, %584 : vector<2x64xf32>
    %598 = arith.addf %569, %597 : vector<2x64xf32>
    %599 = math.tanh %598 : vector<2x64xf32>
    %cst_352 = arith.constant 1.000000e+00 : f32
    %600 = vector.broadcast %cst_352 : f32 to vector<2x64xf32>
    %601 = arith.subf %600, %596 : vector<2x64xf32>
    %602 = arith.mulf %601, %599 : vector<2x64xf32>
    %603 = arith.mulf %596, %510 : vector<2x64xf32>
    %604 = arith.addf %602, %603 : vector<2x64xf32>
    %c0_353 = arith.constant 0 : index
    %c0_354 = arith.constant 0 : index
    %c0_355 = arith.constant 0 : index
    %605 = vector.load %arg11[%c0_353, %c0_354, %c0_355] : memref<3x64x64xf32, #tpu.memory_space<vmem>>, vector<1x64x64xf32>
    %606 = vector.shape_cast %605 : vector<1x64x64xf32> to vector<64x64xf32>
    %cst_356 = arith.constant dense<0.000000e+00> : vector<2x64xf32>
    %607 = tpu.matmul %604, %606, %cst_356 {dimension_numbers = #tpu.dot_dimension_numbers<[1], [0], [0], [1], [0, 0, 1, 1], [], []>} : vector<2x64xf32>, vector<64x64xf32>, vector<2x64xf32> -> vector<2x64xf32>
    %608 = vector.broadcast %266 : vector<1x64xf32> to vector<2x64xf32>
    %609 = arith.addf %607, %608 : vector<2x64xf32>
    %c1_357 = arith.constant 1 : index
    %c0_358 = arith.constant 0 : index
    %c0_359 = arith.constant 0 : index
    %610 = vector.load %arg11[%c1_357, %c0_358, %c0_359] : memref<3x64x64xf32, #tpu.memory_space<vmem>>, vector<1x64x64xf32>
    %611 = vector.shape_cast %610 : vector<1x64x64xf32> to vector<64x64xf32>
    %cst_360 = arith.constant dense<0.000000e+00> : vector<2x64xf32>
    %612 = tpu.matmul %604, %611, %cst_360 {dimension_numbers = #tpu.dot_dimension_numbers<[1], [0], [0], [1], [0, 0, 1, 1], [], []>} : vector<2x64xf32>, vector<64x64xf32>, vector<2x64xf32> -> vector<2x64xf32>
    %613 = vector.broadcast %268 : vector<1x64xf32> to vector<2x64xf32>
    %614 = arith.addf %612, %613 : vector<2x64xf32>
    %c2_361 = arith.constant 2 : index
    %c0_362 = arith.constant 0 : index
    %c0_363 = arith.constant 0 : index
    %615 = vector.load %arg11[%c2_361, %c0_362, %c0_363] : memref<3x64x64xf32, #tpu.memory_space<vmem>>, vector<1x64x64xf32>
    %616 = vector.shape_cast %615 : vector<1x64x64xf32> to vector<64x64xf32>
    %cst_364 = arith.constant dense<0.000000e+00> : vector<2x64xf32>
    %617 = tpu.matmul %604, %616, %cst_364 {dimension_numbers = #tpu.dot_dimension_numbers<[1], [0], [0], [1], [0, 0, 1, 1], [], []>} : vector<2x64xf32>, vector<64x64xf32>, vector<2x64xf32> -> vector<2x64xf32>
    %618 = vector.broadcast %270 : vector<1x64xf32> to vector<2x64xf32>
    %619 = arith.addf %617, %618 : vector<2x64xf32>
    %c0_365 = arith.constant 0 : index
    %c0_366 = arith.constant 0 : index
    %c0_367 = arith.constant 0 : index
    %620 = vector.load %arg12[%c0_365, %c0_366, %c0_367] : memref<3x64x64xf32, #tpu.memory_space<vmem>>, vector<1x64x64xf32>
    %621 = vector.shape_cast %620 : vector<1x64x64xf32> to vector<64x64xf32>
    %cst_368 = arith.constant dense<0.000000e+00> : vector<2x64xf32>
    %622 = tpu.matmul %560, %621, %cst_368 {dimension_numbers = #tpu.dot_dimension_numbers<[1], [0], [0], [1], [0, 0, 1, 1], [], []>} : vector<2x64xf32>, vector<64x64xf32>, vector<2x64xf32> -> vector<2x64xf32>
    %623 = vector.broadcast %272 : vector<1x64xf32> to vector<2x64xf32>
    %624 = arith.addf %622, %623 : vector<2x64xf32>
    %c1_369 = arith.constant 1 : index
    %c0_370 = arith.constant 0 : index
    %c0_371 = arith.constant 0 : index
    %625 = vector.load %arg12[%c1_369, %c0_370, %c0_371] : memref<3x64x64xf32, #tpu.memory_space<vmem>>, vector<1x64x64xf32>
    %626 = vector.shape_cast %625 : vector<1x64x64xf32> to vector<64x64xf32>
    %cst_372 = arith.constant dense<0.000000e+00> : vector<2x64xf32>
    %627 = tpu.matmul %560, %626, %cst_372 {dimension_numbers = #tpu.dot_dimension_numbers<[1], [0], [0], [1], [0, 0, 1, 1], [], []>} : vector<2x64xf32>, vector<64x64xf32>, vector<2x64xf32> -> vector<2x64xf32>
    %628 = vector.broadcast %274 : vector<1x64xf32> to vector<2x64xf32>
    %629 = arith.addf %627, %628 : vector<2x64xf32>
    %c2_373 = arith.constant 2 : index
    %c0_374 = arith.constant 0 : index
    %c0_375 = arith.constant 0 : index
    %630 = vector.load %arg12[%c2_373, %c0_374, %c0_375] : memref<3x64x64xf32, #tpu.memory_space<vmem>>, vector<1x64x64xf32>
    %631 = vector.shape_cast %630 : vector<1x64x64xf32> to vector<64x64xf32>
    %cst_376 = arith.constant dense<0.000000e+00> : vector<2x64xf32>
    %632 = tpu.matmul %560, %631, %cst_376 {dimension_numbers = #tpu.dot_dimension_numbers<[1], [0], [0], [1], [0, 0, 1, 1], [], []>} : vector<2x64xf32>, vector<64x64xf32>, vector<2x64xf32> -> vector<2x64xf32>
    %633 = vector.broadcast %276 : vector<1x64xf32> to vector<2x64xf32>
    %634 = arith.addf %632, %633 : vector<2x64xf32>
    %635 = arith.addf %609, %624 : vector<2x64xf32>
    %636 = arith.negf %635 : vector<2x64xf32>
    %637 = math.exp %636 : vector<2x64xf32>
    %cst_377 = arith.constant 1.000000e+00 : f32
    %638 = vector.broadcast %cst_377 : f32 to vector<2x64xf32>
    %639 = arith.addf %638, %637 : vector<2x64xf32>
    %640 = arith.divf %638, %639 : vector<2x64xf32>
    %641 = arith.addf %614, %629 : vector<2x64xf32>
    %642 = arith.negf %641 : vector<2x64xf32>
    %643 = math.exp %642 : vector<2x64xf32>
    %cst_378 = arith.constant 1.000000e+00 : f32
    %644 = vector.broadcast %cst_378 : f32 to vector<2x64xf32>
    %645 = arith.addf %644, %643 : vector<2x64xf32>
    %646 = arith.divf %644, %645 : vector<2x64xf32>
    %647 = arith.mulf %640, %634 : vector<2x64xf32>
    %648 = arith.addf %619, %647 : vector<2x64xf32>
    %649 = math.tanh %648 : vector<2x64xf32>
    %cst_379 = arith.constant 1.000000e+00 : f32
    %650 = vector.broadcast %cst_379 : f32 to vector<2x64xf32>
    %651 = arith.subf %650, %646 : vector<2x64xf32>
    %652 = arith.mulf %651, %649 : vector<2x64xf32>
    %653 = arith.mulf %646, %560 : vector<2x64xf32>
    %654 = arith.addf %652, %653 : vector<2x64xf32>
    %655 = vector.extract_strided_slice %150 {offsets = [4, 0], sizes = [1, 64], strides = [1, 1]} : vector<8x64xf32> to vector<1x64xf32>
    %656 = vector.extract_strided_slice %250 {offsets = [4, 0], sizes = [1, 64], strides = [1, 1]} : vector<8x64xf32> to vector<1x64xf32>
    %657 = tpu.concatenate %655, %656 in 0 : vector<1x64xf32>, vector<1x64xf32> -> vector<2x64xf32>
    %658 = vector.extract_strided_slice %154 {offsets = [4, 0], sizes = [1, 64], strides = [1, 1]} : vector<8x64xf32> to vector<1x64xf32>
    %659 = vector.extract_strided_slice %254 {offsets = [4, 0], sizes = [1, 64], strides = [1, 1]} : vector<8x64xf32> to vector<1x64xf32>
    %660 = tpu.concatenate %658, %659 in 0 : vector<1x64xf32>, vector<1x64xf32> -> vector<2x64xf32>
    %661 = vector.extract_strided_slice %158 {offsets = [4, 0], sizes = [1, 64], strides = [1, 1]} : vector<8x64xf32> to vector<1x64xf32>
    %662 = vector.extract_strided_slice %258 {offsets = [4, 0], sizes = [1, 64], strides = [1, 1]} : vector<8x64xf32> to vector<1x64xf32>
    %663 = tpu.concatenate %661, %662 in 0 : vector<1x64xf32>, vector<1x64xf32> -> vector<2x64xf32>
    %c0_380 = arith.constant 0 : index
    %c0_381 = arith.constant 0 : index
    %c0_382 = arith.constant 0 : index
    %664 = vector.load %arg8[%c0_380, %c0_381, %c0_382] : memref<3x64x64xf32, #tpu.memory_space<vmem>>, vector<1x64x64xf32>
    %665 = vector.shape_cast %664 : vector<1x64x64xf32> to vector<64x64xf32>
    %cst_383 = arith.constant dense<0.000000e+00> : vector<2x64xf32>
    %666 = tpu.matmul %604, %665, %cst_383 {dimension_numbers = #tpu.dot_dimension_numbers<[1], [0], [0], [1], [0, 0, 1, 1], [], []>} : vector<2x64xf32>, vector<64x64xf32>, vector<2x64xf32> -> vector<2x64xf32>
    %667 = vector.broadcast %260 : vector<1x64xf32> to vector<2x64xf32>
    %668 = arith.addf %666, %667 : vector<2x64xf32>
    %c1_384 = arith.constant 1 : index
    %c0_385 = arith.constant 0 : index
    %c0_386 = arith.constant 0 : index
    %669 = vector.load %arg8[%c1_384, %c0_385, %c0_386] : memref<3x64x64xf32, #tpu.memory_space<vmem>>, vector<1x64x64xf32>
    %670 = vector.shape_cast %669 : vector<1x64x64xf32> to vector<64x64xf32>
    %cst_387 = arith.constant dense<0.000000e+00> : vector<2x64xf32>
    %671 = tpu.matmul %604, %670, %cst_387 {dimension_numbers = #tpu.dot_dimension_numbers<[1], [0], [0], [1], [0, 0, 1, 1], [], []>} : vector<2x64xf32>, vector<64x64xf32>, vector<2x64xf32> -> vector<2x64xf32>
    %672 = vector.broadcast %262 : vector<1x64xf32> to vector<2x64xf32>
    %673 = arith.addf %671, %672 : vector<2x64xf32>
    %c2_388 = arith.constant 2 : index
    %c0_389 = arith.constant 0 : index
    %c0_390 = arith.constant 0 : index
    %674 = vector.load %arg8[%c2_388, %c0_389, %c0_390] : memref<3x64x64xf32, #tpu.memory_space<vmem>>, vector<1x64x64xf32>
    %675 = vector.shape_cast %674 : vector<1x64x64xf32> to vector<64x64xf32>
    %cst_391 = arith.constant dense<0.000000e+00> : vector<2x64xf32>
    %676 = tpu.matmul %604, %675, %cst_391 {dimension_numbers = #tpu.dot_dimension_numbers<[1], [0], [0], [1], [0, 0, 1, 1], [], []>} : vector<2x64xf32>, vector<64x64xf32>, vector<2x64xf32> -> vector<2x64xf32>
    %677 = vector.broadcast %264 : vector<1x64xf32> to vector<2x64xf32>
    %678 = arith.addf %676, %677 : vector<2x64xf32>
    %679 = arith.addf %657, %668 : vector<2x64xf32>
    %680 = arith.negf %679 : vector<2x64xf32>
    %681 = math.exp %680 : vector<2x64xf32>
    %cst_392 = arith.constant 1.000000e+00 : f32
    %682 = vector.broadcast %cst_392 : f32 to vector<2x64xf32>
    %683 = arith.addf %682, %681 : vector<2x64xf32>
    %684 = arith.divf %682, %683 : vector<2x64xf32>
    %685 = arith.addf %660, %673 : vector<2x64xf32>
    %686 = arith.negf %685 : vector<2x64xf32>
    %687 = math.exp %686 : vector<2x64xf32>
    %cst_393 = arith.constant 1.000000e+00 : f32
    %688 = vector.broadcast %cst_393 : f32 to vector<2x64xf32>
    %689 = arith.addf %688, %687 : vector<2x64xf32>
    %690 = arith.divf %688, %689 : vector<2x64xf32>
    %691 = arith.mulf %684, %678 : vector<2x64xf32>
    %692 = arith.addf %663, %691 : vector<2x64xf32>
    %693 = math.tanh %692 : vector<2x64xf32>
    %cst_394 = arith.constant 1.000000e+00 : f32
    %694 = vector.broadcast %cst_394 : f32 to vector<2x64xf32>
    %695 = arith.subf %694, %690 : vector<2x64xf32>
    %696 = arith.mulf %695, %693 : vector<2x64xf32>
    %697 = arith.mulf %690, %604 : vector<2x64xf32>
    %698 = arith.addf %696, %697 : vector<2x64xf32>
    %c0_395 = arith.constant 0 : index
    %c0_396 = arith.constant 0 : index
    %c0_397 = arith.constant 0 : index
    %699 = vector.load %arg11[%c0_395, %c0_396, %c0_397] : memref<3x64x64xf32, #tpu.memory_space<vmem>>, vector<1x64x64xf32>
    %700 = vector.shape_cast %699 : vector<1x64x64xf32> to vector<64x64xf32>
    %cst_398 = arith.constant dense<0.000000e+00> : vector<2x64xf32>
    %701 = tpu.matmul %698, %700, %cst_398 {dimension_numbers = #tpu.dot_dimension_numbers<[1], [0], [0], [1], [0, 0, 1, 1], [], []>} : vector<2x64xf32>, vector<64x64xf32>, vector<2x64xf32> -> vector<2x64xf32>
    %702 = vector.broadcast %266 : vector<1x64xf32> to vector<2x64xf32>
    %703 = arith.addf %701, %702 : vector<2x64xf32>
    %c1_399 = arith.constant 1 : index
    %c0_400 = arith.constant 0 : index
    %c0_401 = arith.constant 0 : index
    %704 = vector.load %arg11[%c1_399, %c0_400, %c0_401] : memref<3x64x64xf32, #tpu.memory_space<vmem>>, vector<1x64x64xf32>
    %705 = vector.shape_cast %704 : vector<1x64x64xf32> to vector<64x64xf32>
    %cst_402 = arith.constant dense<0.000000e+00> : vector<2x64xf32>
    %706 = tpu.matmul %698, %705, %cst_402 {dimension_numbers = #tpu.dot_dimension_numbers<[1], [0], [0], [1], [0, 0, 1, 1], [], []>} : vector<2x64xf32>, vector<64x64xf32>, vector<2x64xf32> -> vector<2x64xf32>
    %707 = vector.broadcast %268 : vector<1x64xf32> to vector<2x64xf32>
    %708 = arith.addf %706, %707 : vector<2x64xf32>
    %c2_403 = arith.constant 2 : index
    %c0_404 = arith.constant 0 : index
    %c0_405 = arith.constant 0 : index
    %709 = vector.load %arg11[%c2_403, %c0_404, %c0_405] : memref<3x64x64xf32, #tpu.memory_space<vmem>>, vector<1x64x64xf32>
    %710 = vector.shape_cast %709 : vector<1x64x64xf32> to vector<64x64xf32>
    %cst_406 = arith.constant dense<0.000000e+00> : vector<2x64xf32>
    %711 = tpu.matmul %698, %710, %cst_406 {dimension_numbers = #tpu.dot_dimension_numbers<[1], [0], [0], [1], [0, 0, 1, 1], [], []>} : vector<2x64xf32>, vector<64x64xf32>, vector<2x64xf32> -> vector<2x64xf32>
    %712 = vector.broadcast %270 : vector<1x64xf32> to vector<2x64xf32>
    %713 = arith.addf %711, %712 : vector<2x64xf32>
    %c0_407 = arith.constant 0 : index
    %c0_408 = arith.constant 0 : index
    %c0_409 = arith.constant 0 : index
    %714 = vector.load %arg12[%c0_407, %c0_408, %c0_409] : memref<3x64x64xf32, #tpu.memory_space<vmem>>, vector<1x64x64xf32>
    %715 = vector.shape_cast %714 : vector<1x64x64xf32> to vector<64x64xf32>
    %cst_410 = arith.constant dense<0.000000e+00> : vector<2x64xf32>
    %716 = tpu.matmul %654, %715, %cst_410 {dimension_numbers = #tpu.dot_dimension_numbers<[1], [0], [0], [1], [0, 0, 1, 1], [], []>} : vector<2x64xf32>, vector<64x64xf32>, vector<2x64xf32> -> vector<2x64xf32>
    %717 = vector.broadcast %272 : vector<1x64xf32> to vector<2x64xf32>
    %718 = arith.addf %716, %717 : vector<2x64xf32>
    %c1_411 = arith.constant 1 : index
    %c0_412 = arith.constant 0 : index
    %c0_413 = arith.constant 0 : index
    %719 = vector.load %arg12[%c1_411, %c0_412, %c0_413] : memref<3x64x64xf32, #tpu.memory_space<vmem>>, vector<1x64x64xf32>
    %720 = vector.shape_cast %719 : vector<1x64x64xf32> to vector<64x64xf32>
    %cst_414 = arith.constant dense<0.000000e+00> : vector<2x64xf32>
    %721 = tpu.matmul %654, %720, %cst_414 {dimension_numbers = #tpu.dot_dimension_numbers<[1], [0], [0], [1], [0, 0, 1, 1], [], []>} : vector<2x64xf32>, vector<64x64xf32>, vector<2x64xf32> -> vector<2x64xf32>
    %722 = vector.broadcast %274 : vector<1x64xf32> to vector<2x64xf32>
    %723 = arith.addf %721, %722 : vector<2x64xf32>
    %c2_415 = arith.constant 2 : index
    %c0_416 = arith.constant 0 : index
    %c0_417 = arith.constant 0 : index
    %724 = vector.load %arg12[%c2_415, %c0_416, %c0_417] : memref<3x64x64xf32, #tpu.memory_space<vmem>>, vector<1x64x64xf32>
    %725 = vector.shape_cast %724 : vector<1x64x64xf32> to vector<64x64xf32>
    %cst_418 = arith.constant dense<0.000000e+00> : vector<2x64xf32>
    %726 = tpu.matmul %654, %725, %cst_418 {dimension_numbers = #tpu.dot_dimension_numbers<[1], [0], [0], [1], [0, 0, 1, 1], [], []>} : vector<2x64xf32>, vector<64x64xf32>, vector<2x64xf32> -> vector<2x64xf32>
    %727 = vector.broadcast %276 : vector<1x64xf32> to vector<2x64xf32>
    %728 = arith.addf %726, %727 : vector<2x64xf32>
    %729 = arith.addf %703, %718 : vector<2x64xf32>
    %730 = arith.negf %729 : vector<2x64xf32>
    %731 = math.exp %730 : vector<2x64xf32>
    %cst_419 = arith.constant 1.000000e+00 : f32
    %732 = vector.broadcast %cst_419 : f32 to vector<2x64xf32>
    %733 = arith.addf %732, %731 : vector<2x64xf32>
    %734 = arith.divf %732, %733 : vector<2x64xf32>
    %735 = arith.addf %708, %723 : vector<2x64xf32>
    %736 = arith.negf %735 : vector<2x64xf32>
    %737 = math.exp %736 : vector<2x64xf32>
    %cst_420 = arith.constant 1.000000e+00 : f32
    %738 = vector.broadcast %cst_420 : f32 to vector<2x64xf32>
    %739 = arith.addf %738, %737 : vector<2x64xf32>
    %740 = arith.divf %738, %739 : vector<2x64xf32>
    %741 = arith.mulf %734, %728 : vector<2x64xf32>
    %742 = arith.addf %713, %741 : vector<2x64xf32>
    %743 = math.tanh %742 : vector<2x64xf32>
    %cst_421 = arith.constant 1.000000e+00 : f32
    %744 = vector.broadcast %cst_421 : f32 to vector<2x64xf32>
    %745 = arith.subf %744, %740 : vector<2x64xf32>
    %746 = arith.mulf %745, %743 : vector<2x64xf32>
    %747 = arith.mulf %740, %654 : vector<2x64xf32>
    %748 = arith.addf %746, %747 : vector<2x64xf32>
    %749 = vector.extract_strided_slice %150 {offsets = [5, 0], sizes = [1, 64], strides = [1, 1]} : vector<8x64xf32> to vector<1x64xf32>
    %750 = vector.extract_strided_slice %250 {offsets = [5, 0], sizes = [1, 64], strides = [1, 1]} : vector<8x64xf32> to vector<1x64xf32>
    %751 = tpu.concatenate %749, %750 in 0 : vector<1x64xf32>, vector<1x64xf32> -> vector<2x64xf32>
    %752 = vector.extract_strided_slice %154 {offsets = [5, 0], sizes = [1, 64], strides = [1, 1]} : vector<8x64xf32> to vector<1x64xf32>
    %753 = vector.extract_strided_slice %254 {offsets = [5, 0], sizes = [1, 64], strides = [1, 1]} : vector<8x64xf32> to vector<1x64xf32>
    %754 = tpu.concatenate %752, %753 in 0 : vector<1x64xf32>, vector<1x64xf32> -> vector<2x64xf32>
    %755 = vector.extract_strided_slice %158 {offsets = [5, 0], sizes = [1, 64], strides = [1, 1]} : vector<8x64xf32> to vector<1x64xf32>
    %756 = vector.extract_strided_slice %258 {offsets = [5, 0], sizes = [1, 64], strides = [1, 1]} : vector<8x64xf32> to vector<1x64xf32>
    %757 = tpu.concatenate %755, %756 in 0 : vector<1x64xf32>, vector<1x64xf32> -> vector<2x64xf32>
    %c0_422 = arith.constant 0 : index
    %c0_423 = arith.constant 0 : index
    %c0_424 = arith.constant 0 : index
    %758 = vector.load %arg8[%c0_422, %c0_423, %c0_424] : memref<3x64x64xf32, #tpu.memory_space<vmem>>, vector<1x64x64xf32>
    %759 = vector.shape_cast %758 : vector<1x64x64xf32> to vector<64x64xf32>
    %cst_425 = arith.constant dense<0.000000e+00> : vector<2x64xf32>
    %760 = tpu.matmul %698, %759, %cst_425 {dimension_numbers = #tpu.dot_dimension_numbers<[1], [0], [0], [1], [0, 0, 1, 1], [], []>} : vector<2x64xf32>, vector<64x64xf32>, vector<2x64xf32> -> vector<2x64xf32>
    %761 = vector.broadcast %260 : vector<1x64xf32> to vector<2x64xf32>
    %762 = arith.addf %760, %761 : vector<2x64xf32>
    %c1_426 = arith.constant 1 : index
    %c0_427 = arith.constant 0 : index
    %c0_428 = arith.constant 0 : index
    %763 = vector.load %arg8[%c1_426, %c0_427, %c0_428] : memref<3x64x64xf32, #tpu.memory_space<vmem>>, vector<1x64x64xf32>
    %764 = vector.shape_cast %763 : vector<1x64x64xf32> to vector<64x64xf32>
    %cst_429 = arith.constant dense<0.000000e+00> : vector<2x64xf32>
    %765 = tpu.matmul %698, %764, %cst_429 {dimension_numbers = #tpu.dot_dimension_numbers<[1], [0], [0], [1], [0, 0, 1, 1], [], []>} : vector<2x64xf32>, vector<64x64xf32>, vector<2x64xf32> -> vector<2x64xf32>
    %766 = vector.broadcast %262 : vector<1x64xf32> to vector<2x64xf32>
    %767 = arith.addf %765, %766 : vector<2x64xf32>
    %c2_430 = arith.constant 2 : index
    %c0_431 = arith.constant 0 : index
    %c0_432 = arith.constant 0 : index
    %768 = vector.load %arg8[%c2_430, %c0_431, %c0_432] : memref<3x64x64xf32, #tpu.memory_space<vmem>>, vector<1x64x64xf32>
    %769 = vector.shape_cast %768 : vector<1x64x64xf32> to vector<64x64xf32>
    %cst_433 = arith.constant dense<0.000000e+00> : vector<2x64xf32>
    %770 = tpu.matmul %698, %769, %cst_433 {dimension_numbers = #tpu.dot_dimension_numbers<[1], [0], [0], [1], [0, 0, 1, 1], [], []>} : vector<2x64xf32>, vector<64x64xf32>, vector<2x64xf32> -> vector<2x64xf32>
    %771 = vector.broadcast %264 : vector<1x64xf32> to vector<2x64xf32>
    %772 = arith.addf %770, %771 : vector<2x64xf32>
    %773 = arith.addf %751, %762 : vector<2x64xf32>
    %774 = arith.negf %773 : vector<2x64xf32>
    %775 = math.exp %774 : vector<2x64xf32>
    %cst_434 = arith.constant 1.000000e+00 : f32
    %776 = vector.broadcast %cst_434 : f32 to vector<2x64xf32>
    %777 = arith.addf %776, %775 : vector<2x64xf32>
    %778 = arith.divf %776, %777 : vector<2x64xf32>
    %779 = arith.addf %754, %767 : vector<2x64xf32>
    %780 = arith.negf %779 : vector<2x64xf32>
    %781 = math.exp %780 : vector<2x64xf32>
    %cst_435 = arith.constant 1.000000e+00 : f32
    %782 = vector.broadcast %cst_435 : f32 to vector<2x64xf32>
    %783 = arith.addf %782, %781 : vector<2x64xf32>
    %784 = arith.divf %782, %783 : vector<2x64xf32>
    %785 = arith.mulf %778, %772 : vector<2x64xf32>
    %786 = arith.addf %757, %785 : vector<2x64xf32>
    %787 = math.tanh %786 : vector<2x64xf32>
    %cst_436 = arith.constant 1.000000e+00 : f32
    %788 = vector.broadcast %cst_436 : f32 to vector<2x64xf32>
    %789 = arith.subf %788, %784 : vector<2x64xf32>
    %790 = arith.mulf %789, %787 : vector<2x64xf32>
    %791 = arith.mulf %784, %698 : vector<2x64xf32>
    %792 = arith.addf %790, %791 : vector<2x64xf32>
    %c0_437 = arith.constant 0 : index
    %c0_438 = arith.constant 0 : index
    %c0_439 = arith.constant 0 : index
    %793 = vector.load %arg11[%c0_437, %c0_438, %c0_439] : memref<3x64x64xf32, #tpu.memory_space<vmem>>, vector<1x64x64xf32>
    %794 = vector.shape_cast %793 : vector<1x64x64xf32> to vector<64x64xf32>
    %cst_440 = arith.constant dense<0.000000e+00> : vector<2x64xf32>
    %795 = tpu.matmul %792, %794, %cst_440 {dimension_numbers = #tpu.dot_dimension_numbers<[1], [0], [0], [1], [0, 0, 1, 1], [], []>} : vector<2x64xf32>, vector<64x64xf32>, vector<2x64xf32> -> vector<2x64xf32>
    %796 = vector.broadcast %266 : vector<1x64xf32> to vector<2x64xf32>
    %797 = arith.addf %795, %796 : vector<2x64xf32>
    %c1_441 = arith.constant 1 : index
    %c0_442 = arith.constant 0 : index
    %c0_443 = arith.constant 0 : index
    %798 = vector.load %arg11[%c1_441, %c0_442, %c0_443] : memref<3x64x64xf32, #tpu.memory_space<vmem>>, vector<1x64x64xf32>
    %799 = vector.shape_cast %798 : vector<1x64x64xf32> to vector<64x64xf32>
    %cst_444 = arith.constant dense<0.000000e+00> : vector<2x64xf32>
    %800 = tpu.matmul %792, %799, %cst_444 {dimension_numbers = #tpu.dot_dimension_numbers<[1], [0], [0], [1], [0, 0, 1, 1], [], []>} : vector<2x64xf32>, vector<64x64xf32>, vector<2x64xf32> -> vector<2x64xf32>
    %801 = vector.broadcast %268 : vector<1x64xf32> to vector<2x64xf32>
    %802 = arith.addf %800, %801 : vector<2x64xf32>
    %c2_445 = arith.constant 2 : index
    %c0_446 = arith.constant 0 : index
    %c0_447 = arith.constant 0 : index
    %803 = vector.load %arg11[%c2_445, %c0_446, %c0_447] : memref<3x64x64xf32, #tpu.memory_space<vmem>>, vector<1x64x64xf32>
    %804 = vector.shape_cast %803 : vector<1x64x64xf32> to vector<64x64xf32>
    %cst_448 = arith.constant dense<0.000000e+00> : vector<2x64xf32>
    %805 = tpu.matmul %792, %804, %cst_448 {dimension_numbers = #tpu.dot_dimension_numbers<[1], [0], [0], [1], [0, 0, 1, 1], [], []>} : vector<2x64xf32>, vector<64x64xf32>, vector<2x64xf32> -> vector<2x64xf32>
    %806 = vector.broadcast %270 : vector<1x64xf32> to vector<2x64xf32>
    %807 = arith.addf %805, %806 : vector<2x64xf32>
    %c0_449 = arith.constant 0 : index
    %c0_450 = arith.constant 0 : index
    %c0_451 = arith.constant 0 : index
    %808 = vector.load %arg12[%c0_449, %c0_450, %c0_451] : memref<3x64x64xf32, #tpu.memory_space<vmem>>, vector<1x64x64xf32>
    %809 = vector.shape_cast %808 : vector<1x64x64xf32> to vector<64x64xf32>
    %cst_452 = arith.constant dense<0.000000e+00> : vector<2x64xf32>
    %810 = tpu.matmul %748, %809, %cst_452 {dimension_numbers = #tpu.dot_dimension_numbers<[1], [0], [0], [1], [0, 0, 1, 1], [], []>} : vector<2x64xf32>, vector<64x64xf32>, vector<2x64xf32> -> vector<2x64xf32>
    %811 = vector.broadcast %272 : vector<1x64xf32> to vector<2x64xf32>
    %812 = arith.addf %810, %811 : vector<2x64xf32>
    %c1_453 = arith.constant 1 : index
    %c0_454 = arith.constant 0 : index
    %c0_455 = arith.constant 0 : index
    %813 = vector.load %arg12[%c1_453, %c0_454, %c0_455] : memref<3x64x64xf32, #tpu.memory_space<vmem>>, vector<1x64x64xf32>
    %814 = vector.shape_cast %813 : vector<1x64x64xf32> to vector<64x64xf32>
    %cst_456 = arith.constant dense<0.000000e+00> : vector<2x64xf32>
    %815 = tpu.matmul %748, %814, %cst_456 {dimension_numbers = #tpu.dot_dimension_numbers<[1], [0], [0], [1], [0, 0, 1, 1], [], []>} : vector<2x64xf32>, vector<64x64xf32>, vector<2x64xf32> -> vector<2x64xf32>
    %816 = vector.broadcast %274 : vector<1x64xf32> to vector<2x64xf32>
    %817 = arith.addf %815, %816 : vector<2x64xf32>
    %c2_457 = arith.constant 2 : index
    %c0_458 = arith.constant 0 : index
    %c0_459 = arith.constant 0 : index
    %818 = vector.load %arg12[%c2_457, %c0_458, %c0_459] : memref<3x64x64xf32, #tpu.memory_space<vmem>>, vector<1x64x64xf32>
    %819 = vector.shape_cast %818 : vector<1x64x64xf32> to vector<64x64xf32>
    %cst_460 = arith.constant dense<0.000000e+00> : vector<2x64xf32>
    %820 = tpu.matmul %748, %819, %cst_460 {dimension_numbers = #tpu.dot_dimension_numbers<[1], [0], [0], [1], [0, 0, 1, 1], [], []>} : vector<2x64xf32>, vector<64x64xf32>, vector<2x64xf32> -> vector<2x64xf32>
    %821 = vector.broadcast %276 : vector<1x64xf32> to vector<2x64xf32>
    %822 = arith.addf %820, %821 : vector<2x64xf32>
    %823 = arith.addf %797, %812 : vector<2x64xf32>
    %824 = arith.negf %823 : vector<2x64xf32>
    %825 = math.exp %824 : vector<2x64xf32>
    %cst_461 = arith.constant 1.000000e+00 : f32
    %826 = vector.broadcast %cst_461 : f32 to vector<2x64xf32>
    %827 = arith.addf %826, %825 : vector<2x64xf32>
    %828 = arith.divf %826, %827 : vector<2x64xf32>
    %829 = arith.addf %802, %817 : vector<2x64xf32>
    %830 = arith.negf %829 : vector<2x64xf32>
    %831 = math.exp %830 : vector<2x64xf32>
    %cst_462 = arith.constant 1.000000e+00 : f32
    %832 = vector.broadcast %cst_462 : f32 to vector<2x64xf32>
    %833 = arith.addf %832, %831 : vector<2x64xf32>
    %834 = arith.divf %832, %833 : vector<2x64xf32>
    %835 = arith.mulf %828, %822 : vector<2x64xf32>
    %836 = arith.addf %807, %835 : vector<2x64xf32>
    %837 = math.tanh %836 : vector<2x64xf32>
    %cst_463 = arith.constant 1.000000e+00 : f32
    %838 = vector.broadcast %cst_463 : f32 to vector<2x64xf32>
    %839 = arith.subf %838, %834 : vector<2x64xf32>
    %840 = arith.mulf %839, %837 : vector<2x64xf32>
    %841 = arith.mulf %834, %748 : vector<2x64xf32>
    %842 = arith.addf %840, %841 : vector<2x64xf32>
    %843 = vector.extract_strided_slice %150 {offsets = [6, 0], sizes = [1, 64], strides = [1, 1]} : vector<8x64xf32> to vector<1x64xf32>
    %844 = vector.extract_strided_slice %250 {offsets = [6, 0], sizes = [1, 64], strides = [1, 1]} : vector<8x64xf32> to vector<1x64xf32>
    %845 = tpu.concatenate %843, %844 in 0 : vector<1x64xf32>, vector<1x64xf32> -> vector<2x64xf32>
    %846 = vector.extract_strided_slice %154 {offsets = [6, 0], sizes = [1, 64], strides = [1, 1]} : vector<8x64xf32> to vector<1x64xf32>
    %847 = vector.extract_strided_slice %254 {offsets = [6, 0], sizes = [1, 64], strides = [1, 1]} : vector<8x64xf32> to vector<1x64xf32>
    %848 = tpu.concatenate %846, %847 in 0 : vector<1x64xf32>, vector<1x64xf32> -> vector<2x64xf32>
    %849 = vector.extract_strided_slice %158 {offsets = [6, 0], sizes = [1, 64], strides = [1, 1]} : vector<8x64xf32> to vector<1x64xf32>
    %850 = vector.extract_strided_slice %258 {offsets = [6, 0], sizes = [1, 64], strides = [1, 1]} : vector<8x64xf32> to vector<1x64xf32>
    %851 = tpu.concatenate %849, %850 in 0 : vector<1x64xf32>, vector<1x64xf32> -> vector<2x64xf32>
    %c0_464 = arith.constant 0 : index
    %c0_465 = arith.constant 0 : index
    %c0_466 = arith.constant 0 : index
    %852 = vector.load %arg8[%c0_464, %c0_465, %c0_466] : memref<3x64x64xf32, #tpu.memory_space<vmem>>, vector<1x64x64xf32>
    %853 = vector.shape_cast %852 : vector<1x64x64xf32> to vector<64x64xf32>
    %cst_467 = arith.constant dense<0.000000e+00> : vector<2x64xf32>
    %854 = tpu.matmul %792, %853, %cst_467 {dimension_numbers = #tpu.dot_dimension_numbers<[1], [0], [0], [1], [0, 0, 1, 1], [], []>} : vector<2x64xf32>, vector<64x64xf32>, vector<2x64xf32> -> vector<2x64xf32>
    %855 = vector.broadcast %260 : vector<1x64xf32> to vector<2x64xf32>
    %856 = arith.addf %854, %855 : vector<2x64xf32>
    %c1_468 = arith.constant 1 : index
    %c0_469 = arith.constant 0 : index
    %c0_470 = arith.constant 0 : index
    %857 = vector.load %arg8[%c1_468, %c0_469, %c0_470] : memref<3x64x64xf32, #tpu.memory_space<vmem>>, vector<1x64x64xf32>
    %858 = vector.shape_cast %857 : vector<1x64x64xf32> to vector<64x64xf32>
    %cst_471 = arith.constant dense<0.000000e+00> : vector<2x64xf32>
    %859 = tpu.matmul %792, %858, %cst_471 {dimension_numbers = #tpu.dot_dimension_numbers<[1], [0], [0], [1], [0, 0, 1, 1], [], []>} : vector<2x64xf32>, vector<64x64xf32>, vector<2x64xf32> -> vector<2x64xf32>
    %860 = vector.broadcast %262 : vector<1x64xf32> to vector<2x64xf32>
    %861 = arith.addf %859, %860 : vector<2x64xf32>
    %c2_472 = arith.constant 2 : index
    %c0_473 = arith.constant 0 : index
    %c0_474 = arith.constant 0 : index
    %862 = vector.load %arg8[%c2_472, %c0_473, %c0_474] : memref<3x64x64xf32, #tpu.memory_space<vmem>>, vector<1x64x64xf32>
    %863 = vector.shape_cast %862 : vector<1x64x64xf32> to vector<64x64xf32>
    %cst_475 = arith.constant dense<0.000000e+00> : vector<2x64xf32>
    %864 = tpu.matmul %792, %863, %cst_475 {dimension_numbers = #tpu.dot_dimension_numbers<[1], [0], [0], [1], [0, 0, 1, 1], [], []>} : vector<2x64xf32>, vector<64x64xf32>, vector<2x64xf32> -> vector<2x64xf32>
    %865 = vector.broadcast %264 : vector<1x64xf32> to vector<2x64xf32>
    %866 = arith.addf %864, %865 : vector<2x64xf32>
    %867 = arith.addf %845, %856 : vector<2x64xf32>
    %868 = arith.negf %867 : vector<2x64xf32>
    %869 = math.exp %868 : vector<2x64xf32>
    %cst_476 = arith.constant 1.000000e+00 : f32
    %870 = vector.broadcast %cst_476 : f32 to vector<2x64xf32>
    %871 = arith.addf %870, %869 : vector<2x64xf32>
    %872 = arith.divf %870, %871 : vector<2x64xf32>
    %873 = arith.addf %848, %861 : vector<2x64xf32>
    %874 = arith.negf %873 : vector<2x64xf32>
    %875 = math.exp %874 : vector<2x64xf32>
    %cst_477 = arith.constant 1.000000e+00 : f32
    %876 = vector.broadcast %cst_477 : f32 to vector<2x64xf32>
    %877 = arith.addf %876, %875 : vector<2x64xf32>
    %878 = arith.divf %876, %877 : vector<2x64xf32>
    %879 = arith.mulf %872, %866 : vector<2x64xf32>
    %880 = arith.addf %851, %879 : vector<2x64xf32>
    %881 = math.tanh %880 : vector<2x64xf32>
    %cst_478 = arith.constant 1.000000e+00 : f32
    %882 = vector.broadcast %cst_478 : f32 to vector<2x64xf32>
    %883 = arith.subf %882, %878 : vector<2x64xf32>
    %884 = arith.mulf %883, %881 : vector<2x64xf32>
    %885 = arith.mulf %878, %792 : vector<2x64xf32>
    %886 = arith.addf %884, %885 : vector<2x64xf32>
    %c0_479 = arith.constant 0 : index
    %c0_480 = arith.constant 0 : index
    %c0_481 = arith.constant 0 : index
    %887 = vector.load %arg11[%c0_479, %c0_480, %c0_481] : memref<3x64x64xf32, #tpu.memory_space<vmem>>, vector<1x64x64xf32>
    %888 = vector.shape_cast %887 : vector<1x64x64xf32> to vector<64x64xf32>
    %cst_482 = arith.constant dense<0.000000e+00> : vector<2x64xf32>
    %889 = tpu.matmul %886, %888, %cst_482 {dimension_numbers = #tpu.dot_dimension_numbers<[1], [0], [0], [1], [0, 0, 1, 1], [], []>} : vector<2x64xf32>, vector<64x64xf32>, vector<2x64xf32> -> vector<2x64xf32>
    %890 = vector.broadcast %266 : vector<1x64xf32> to vector<2x64xf32>
    %891 = arith.addf %889, %890 : vector<2x64xf32>
    %c1_483 = arith.constant 1 : index
    %c0_484 = arith.constant 0 : index
    %c0_485 = arith.constant 0 : index
    %892 = vector.load %arg11[%c1_483, %c0_484, %c0_485] : memref<3x64x64xf32, #tpu.memory_space<vmem>>, vector<1x64x64xf32>
    %893 = vector.shape_cast %892 : vector<1x64x64xf32> to vector<64x64xf32>
    %cst_486 = arith.constant dense<0.000000e+00> : vector<2x64xf32>
    %894 = tpu.matmul %886, %893, %cst_486 {dimension_numbers = #tpu.dot_dimension_numbers<[1], [0], [0], [1], [0, 0, 1, 1], [], []>} : vector<2x64xf32>, vector<64x64xf32>, vector<2x64xf32> -> vector<2x64xf32>
    %895 = vector.broadcast %268 : vector<1x64xf32> to vector<2x64xf32>
    %896 = arith.addf %894, %895 : vector<2x64xf32>
    %c2_487 = arith.constant 2 : index
    %c0_488 = arith.constant 0 : index
    %c0_489 = arith.constant 0 : index
    %897 = vector.load %arg11[%c2_487, %c0_488, %c0_489] : memref<3x64x64xf32, #tpu.memory_space<vmem>>, vector<1x64x64xf32>
    %898 = vector.shape_cast %897 : vector<1x64x64xf32> to vector<64x64xf32>
    %cst_490 = arith.constant dense<0.000000e+00> : vector<2x64xf32>
    %899 = tpu.matmul %886, %898, %cst_490 {dimension_numbers = #tpu.dot_dimension_numbers<[1], [0], [0], [1], [0, 0, 1, 1], [], []>} : vector<2x64xf32>, vector<64x64xf32>, vector<2x64xf32> -> vector<2x64xf32>
    %900 = vector.broadcast %270 : vector<1x64xf32> to vector<2x64xf32>
    %901 = arith.addf %899, %900 : vector<2x64xf32>
    %c0_491 = arith.constant 0 : index
    %c0_492 = arith.constant 0 : index
    %c0_493 = arith.constant 0 : index
    %902 = vector.load %arg12[%c0_491, %c0_492, %c0_493] : memref<3x64x64xf32, #tpu.memory_space<vmem>>, vector<1x64x64xf32>
    %903 = vector.shape_cast %902 : vector<1x64x64xf32> to vector<64x64xf32>
    %cst_494 = arith.constant dense<0.000000e+00> : vector<2x64xf32>
    %904 = tpu.matmul %842, %903, %cst_494 {dimension_numbers = #tpu.dot_dimension_numbers<[1], [0], [0], [1], [0, 0, 1, 1], [], []>} : vector<2x64xf32>, vector<64x64xf32>, vector<2x64xf32> -> vector<2x64xf32>
    %905 = vector.broadcast %272 : vector<1x64xf32> to vector<2x64xf32>
    %906 = arith.addf %904, %905 : vector<2x64xf32>
    %c1_495 = arith.constant 1 : index
    %c0_496 = arith.constant 0 : index
    %c0_497 = arith.constant 0 : index
    %907 = vector.load %arg12[%c1_495, %c0_496, %c0_497] : memref<3x64x64xf32, #tpu.memory_space<vmem>>, vector<1x64x64xf32>
    %908 = vector.shape_cast %907 : vector<1x64x64xf32> to vector<64x64xf32>
    %cst_498 = arith.constant dense<0.000000e+00> : vector<2x64xf32>
    %909 = tpu.matmul %842, %908, %cst_498 {dimension_numbers = #tpu.dot_dimension_numbers<[1], [0], [0], [1], [0, 0, 1, 1], [], []>} : vector<2x64xf32>, vector<64x64xf32>, vector<2x64xf32> -> vector<2x64xf32>
    %910 = vector.broadcast %274 : vector<1x64xf32> to vector<2x64xf32>
    %911 = arith.addf %909, %910 : vector<2x64xf32>
    %c2_499 = arith.constant 2 : index
    %c0_500 = arith.constant 0 : index
    %c0_501 = arith.constant 0 : index
    %912 = vector.load %arg12[%c2_499, %c0_500, %c0_501] : memref<3x64x64xf32, #tpu.memory_space<vmem>>, vector<1x64x64xf32>
    %913 = vector.shape_cast %912 : vector<1x64x64xf32> to vector<64x64xf32>
    %cst_502 = arith.constant dense<0.000000e+00> : vector<2x64xf32>
    %914 = tpu.matmul %842, %913, %cst_502 {dimension_numbers = #tpu.dot_dimension_numbers<[1], [0], [0], [1], [0, 0, 1, 1], [], []>} : vector<2x64xf32>, vector<64x64xf32>, vector<2x64xf32> -> vector<2x64xf32>
    %915 = vector.broadcast %276 : vector<1x64xf32> to vector<2x64xf32>
    %916 = arith.addf %914, %915 : vector<2x64xf32>
    %917 = arith.addf %891, %906 : vector<2x64xf32>
    %918 = arith.negf %917 : vector<2x64xf32>
    %919 = math.exp %918 : vector<2x64xf32>
    %cst_503 = arith.constant 1.000000e+00 : f32
    %920 = vector.broadcast %cst_503 : f32 to vector<2x64xf32>
    %921 = arith.addf %920, %919 : vector<2x64xf32>
    %922 = arith.divf %920, %921 : vector<2x64xf32>
    %923 = arith.addf %896, %911 : vector<2x64xf32>
    %924 = arith.negf %923 : vector<2x64xf32>
    %925 = math.exp %924 : vector<2x64xf32>
    %cst_504 = arith.constant 1.000000e+00 : f32
    %926 = vector.broadcast %cst_504 : f32 to vector<2x64xf32>
    %927 = arith.addf %926, %925 : vector<2x64xf32>
    %928 = arith.divf %926, %927 : vector<2x64xf32>
    %929 = arith.mulf %922, %916 : vector<2x64xf32>
    %930 = arith.addf %901, %929 : vector<2x64xf32>
    %931 = math.tanh %930 : vector<2x64xf32>
    %cst_505 = arith.constant 1.000000e+00 : f32
    %932 = vector.broadcast %cst_505 : f32 to vector<2x64xf32>
    %933 = arith.subf %932, %928 : vector<2x64xf32>
    %934 = arith.mulf %933, %931 : vector<2x64xf32>
    %935 = arith.mulf %928, %842 : vector<2x64xf32>
    %936 = arith.addf %934, %935 : vector<2x64xf32>
    %937 = vector.extract_strided_slice %150 {offsets = [7, 0], sizes = [1, 64], strides = [1, 1]} : vector<8x64xf32> to vector<1x64xf32>
    %938 = vector.extract_strided_slice %250 {offsets = [7, 0], sizes = [1, 64], strides = [1, 1]} : vector<8x64xf32> to vector<1x64xf32>
    %939 = tpu.concatenate %937, %938 in 0 : vector<1x64xf32>, vector<1x64xf32> -> vector<2x64xf32>
    %940 = vector.extract_strided_slice %154 {offsets = [7, 0], sizes = [1, 64], strides = [1, 1]} : vector<8x64xf32> to vector<1x64xf32>
    %941 = vector.extract_strided_slice %254 {offsets = [7, 0], sizes = [1, 64], strides = [1, 1]} : vector<8x64xf32> to vector<1x64xf32>
    %942 = tpu.concatenate %940, %941 in 0 : vector<1x64xf32>, vector<1x64xf32> -> vector<2x64xf32>
    %943 = vector.extract_strided_slice %158 {offsets = [7, 0], sizes = [1, 64], strides = [1, 1]} : vector<8x64xf32> to vector<1x64xf32>
    %944 = vector.extract_strided_slice %258 {offsets = [7, 0], sizes = [1, 64], strides = [1, 1]} : vector<8x64xf32> to vector<1x64xf32>
    %945 = tpu.concatenate %943, %944 in 0 : vector<1x64xf32>, vector<1x64xf32> -> vector<2x64xf32>
    %c0_506 = arith.constant 0 : index
    %c0_507 = arith.constant 0 : index
    %c0_508 = arith.constant 0 : index
    %946 = vector.load %arg8[%c0_506, %c0_507, %c0_508] : memref<3x64x64xf32, #tpu.memory_space<vmem>>, vector<1x64x64xf32>
    %947 = vector.shape_cast %946 : vector<1x64x64xf32> to vector<64x64xf32>
    %cst_509 = arith.constant dense<0.000000e+00> : vector<2x64xf32>
    %948 = tpu.matmul %886, %947, %cst_509 {dimension_numbers = #tpu.dot_dimension_numbers<[1], [0], [0], [1], [0, 0, 1, 1], [], []>} : vector<2x64xf32>, vector<64x64xf32>, vector<2x64xf32> -> vector<2x64xf32>
    %949 = vector.broadcast %260 : vector<1x64xf32> to vector<2x64xf32>
    %950 = arith.addf %948, %949 : vector<2x64xf32>
    %c1_510 = arith.constant 1 : index
    %c0_511 = arith.constant 0 : index
    %c0_512 = arith.constant 0 : index
    %951 = vector.load %arg8[%c1_510, %c0_511, %c0_512] : memref<3x64x64xf32, #tpu.memory_space<vmem>>, vector<1x64x64xf32>
    %952 = vector.shape_cast %951 : vector<1x64x64xf32> to vector<64x64xf32>
    %cst_513 = arith.constant dense<0.000000e+00> : vector<2x64xf32>
    %953 = tpu.matmul %886, %952, %cst_513 {dimension_numbers = #tpu.dot_dimension_numbers<[1], [0], [0], [1], [0, 0, 1, 1], [], []>} : vector<2x64xf32>, vector<64x64xf32>, vector<2x64xf32> -> vector<2x64xf32>
    %954 = vector.broadcast %262 : vector<1x64xf32> to vector<2x64xf32>
    %955 = arith.addf %953, %954 : vector<2x64xf32>
    %c2_514 = arith.constant 2 : index
    %c0_515 = arith.constant 0 : index
    %c0_516 = arith.constant 0 : index
    %956 = vector.load %arg8[%c2_514, %c0_515, %c0_516] : memref<3x64x64xf32, #tpu.memory_space<vmem>>, vector<1x64x64xf32>
    %957 = vector.shape_cast %956 : vector<1x64x64xf32> to vector<64x64xf32>
    %cst_517 = arith.constant dense<0.000000e+00> : vector<2x64xf32>
    %958 = tpu.matmul %886, %957, %cst_517 {dimension_numbers = #tpu.dot_dimension_numbers<[1], [0], [0], [1], [0, 0, 1, 1], [], []>} : vector<2x64xf32>, vector<64x64xf32>, vector<2x64xf32> -> vector<2x64xf32>
    %959 = vector.broadcast %264 : vector<1x64xf32> to vector<2x64xf32>
    %960 = arith.addf %958, %959 : vector<2x64xf32>
    %961 = arith.addf %939, %950 : vector<2x64xf32>
    %962 = arith.negf %961 : vector<2x64xf32>
    %963 = math.exp %962 : vector<2x64xf32>
    %cst_518 = arith.constant 1.000000e+00 : f32
    %964 = vector.broadcast %cst_518 : f32 to vector<2x64xf32>
    %965 = arith.addf %964, %963 : vector<2x64xf32>
    %966 = arith.divf %964, %965 : vector<2x64xf32>
    %967 = arith.addf %942, %955 : vector<2x64xf32>
    %968 = arith.negf %967 : vector<2x64xf32>
    %969 = math.exp %968 : vector<2x64xf32>
    %cst_519 = arith.constant 1.000000e+00 : f32
    %970 = vector.broadcast %cst_519 : f32 to vector<2x64xf32>
    %971 = arith.addf %970, %969 : vector<2x64xf32>
    %972 = arith.divf %970, %971 : vector<2x64xf32>
    %973 = arith.mulf %966, %960 : vector<2x64xf32>
    %974 = arith.addf %945, %973 : vector<2x64xf32>
    %975 = math.tanh %974 : vector<2x64xf32>
    %cst_520 = arith.constant 1.000000e+00 : f32
    %976 = vector.broadcast %cst_520 : f32 to vector<2x64xf32>
    %977 = arith.subf %976, %972 : vector<2x64xf32>
    %978 = arith.mulf %977, %975 : vector<2x64xf32>
    %979 = arith.mulf %972, %886 : vector<2x64xf32>
    %980 = arith.addf %978, %979 : vector<2x64xf32>
    %c0_521 = arith.constant 0 : index
    %c0_522 = arith.constant 0 : index
    %c0_523 = arith.constant 0 : index
    %981 = vector.load %arg11[%c0_521, %c0_522, %c0_523] : memref<3x64x64xf32, #tpu.memory_space<vmem>>, vector<1x64x64xf32>
    %982 = vector.shape_cast %981 : vector<1x64x64xf32> to vector<64x64xf32>
    %cst_524 = arith.constant dense<0.000000e+00> : vector<2x64xf32>
    %983 = tpu.matmul %980, %982, %cst_524 {dimension_numbers = #tpu.dot_dimension_numbers<[1], [0], [0], [1], [0, 0, 1, 1], [], []>} : vector<2x64xf32>, vector<64x64xf32>, vector<2x64xf32> -> vector<2x64xf32>
    %984 = vector.broadcast %266 : vector<1x64xf32> to vector<2x64xf32>
    %985 = arith.addf %983, %984 : vector<2x64xf32>
    %c1_525 = arith.constant 1 : index
    %c0_526 = arith.constant 0 : index
    %c0_527 = arith.constant 0 : index
    %986 = vector.load %arg11[%c1_525, %c0_526, %c0_527] : memref<3x64x64xf32, #tpu.memory_space<vmem>>, vector<1x64x64xf32>
    %987 = vector.shape_cast %986 : vector<1x64x64xf32> to vector<64x64xf32>
    %cst_528 = arith.constant dense<0.000000e+00> : vector<2x64xf32>
    %988 = tpu.matmul %980, %987, %cst_528 {dimension_numbers = #tpu.dot_dimension_numbers<[1], [0], [0], [1], [0, 0, 1, 1], [], []>} : vector<2x64xf32>, vector<64x64xf32>, vector<2x64xf32> -> vector<2x64xf32>
    %989 = vector.broadcast %268 : vector<1x64xf32> to vector<2x64xf32>
    %990 = arith.addf %988, %989 : vector<2x64xf32>
    %c2_529 = arith.constant 2 : index
    %c0_530 = arith.constant 0 : index
    %c0_531 = arith.constant 0 : index
    %991 = vector.load %arg11[%c2_529, %c0_530, %c0_531] : memref<3x64x64xf32, #tpu.memory_space<vmem>>, vector<1x64x64xf32>
    %992 = vector.shape_cast %991 : vector<1x64x64xf32> to vector<64x64xf32>
    %cst_532 = arith.constant dense<0.000000e+00> : vector<2x64xf32>
    %993 = tpu.matmul %980, %992, %cst_532 {dimension_numbers = #tpu.dot_dimension_numbers<[1], [0], [0], [1], [0, 0, 1, 1], [], []>} : vector<2x64xf32>, vector<64x64xf32>, vector<2x64xf32> -> vector<2x64xf32>
    %994 = vector.broadcast %270 : vector<1x64xf32> to vector<2x64xf32>
    %995 = arith.addf %993, %994 : vector<2x64xf32>
    %c0_533 = arith.constant 0 : index
    %c0_534 = arith.constant 0 : index
    %c0_535 = arith.constant 0 : index
    %996 = vector.load %arg12[%c0_533, %c0_534, %c0_535] : memref<3x64x64xf32, #tpu.memory_space<vmem>>, vector<1x64x64xf32>
    %997 = vector.shape_cast %996 : vector<1x64x64xf32> to vector<64x64xf32>
    %cst_536 = arith.constant dense<0.000000e+00> : vector<2x64xf32>
    %998 = tpu.matmul %936, %997, %cst_536 {dimension_numbers = #tpu.dot_dimension_numbers<[1], [0], [0], [1], [0, 0, 1, 1], [], []>} : vector<2x64xf32>, vector<64x64xf32>, vector<2x64xf32> -> vector<2x64xf32>
    %999 = vector.broadcast %272 : vector<1x64xf32> to vector<2x64xf32>
    %1000 = arith.addf %998, %999 : vector<2x64xf32>
    %c1_537 = arith.constant 1 : index
    %c0_538 = arith.constant 0 : index
    %c0_539 = arith.constant 0 : index
    %1001 = vector.load %arg12[%c1_537, %c0_538, %c0_539] : memref<3x64x64xf32, #tpu.memory_space<vmem>>, vector<1x64x64xf32>
    %1002 = vector.shape_cast %1001 : vector<1x64x64xf32> to vector<64x64xf32>
    %cst_540 = arith.constant dense<0.000000e+00> : vector<2x64xf32>
    %1003 = tpu.matmul %936, %1002, %cst_540 {dimension_numbers = #tpu.dot_dimension_numbers<[1], [0], [0], [1], [0, 0, 1, 1], [], []>} : vector<2x64xf32>, vector<64x64xf32>, vector<2x64xf32> -> vector<2x64xf32>
    %1004 = vector.broadcast %274 : vector<1x64xf32> to vector<2x64xf32>
    %1005 = arith.addf %1003, %1004 : vector<2x64xf32>
    %c2_541 = arith.constant 2 : index
    %c0_542 = arith.constant 0 : index
    %c0_543 = arith.constant 0 : index
    %1006 = vector.load %arg12[%c2_541, %c0_542, %c0_543] : memref<3x64x64xf32, #tpu.memory_space<vmem>>, vector<1x64x64xf32>
    %1007 = vector.shape_cast %1006 : vector<1x64x64xf32> to vector<64x64xf32>
    %cst_544 = arith.constant dense<0.000000e+00> : vector<2x64xf32>
    %1008 = tpu.matmul %936, %1007, %cst_544 {dimension_numbers = #tpu.dot_dimension_numbers<[1], [0], [0], [1], [0, 0, 1, 1], [], []>} : vector<2x64xf32>, vector<64x64xf32>, vector<2x64xf32> -> vector<2x64xf32>
    %1009 = vector.broadcast %276 : vector<1x64xf32> to vector<2x64xf32>
    %1010 = arith.addf %1008, %1009 : vector<2x64xf32>
    %1011 = arith.addf %985, %1000 : vector<2x64xf32>
    %1012 = arith.negf %1011 : vector<2x64xf32>
    %1013 = math.exp %1012 : vector<2x64xf32>
    %cst_545 = arith.constant 1.000000e+00 : f32
    %1014 = vector.broadcast %cst_545 : f32 to vector<2x64xf32>
    %1015 = arith.addf %1014, %1013 : vector<2x64xf32>
    %1016 = arith.divf %1014, %1015 : vector<2x64xf32>
    %1017 = arith.addf %990, %1005 : vector<2x64xf32>
    %1018 = arith.negf %1017 : vector<2x64xf32>
    %1019 = math.exp %1018 : vector<2x64xf32>
    %cst_546 = arith.constant 1.000000e+00 : f32
    %1020 = vector.broadcast %cst_546 : f32 to vector<2x64xf32>
    %1021 = arith.addf %1020, %1019 : vector<2x64xf32>
    %1022 = arith.divf %1020, %1021 : vector<2x64xf32>
    %1023 = arith.mulf %1016, %1010 : vector<2x64xf32>
    %1024 = arith.addf %995, %1023 : vector<2x64xf32>
    %1025 = math.tanh %1024 : vector<2x64xf32>
    %cst_547 = arith.constant 1.000000e+00 : f32
    %1026 = vector.broadcast %cst_547 : f32 to vector<2x64xf32>
    %1027 = arith.subf %1026, %1022 : vector<2x64xf32>
    %1028 = arith.mulf %1027, %1025 : vector<2x64xf32>
    %1029 = arith.mulf %1022, %936 : vector<2x64xf32>
    %1030 = arith.addf %1028, %1029 : vector<2x64xf32>
    %1031 = vector.extract_strided_slice %372 {offsets = [0, 0], sizes = [1, 64], strides = [1, 1]} : vector<2x64xf32> to vector<1x64xf32>
    %1032 = vector.extract_strided_slice %466 {offsets = [0, 0], sizes = [1, 64], strides = [1, 1]} : vector<2x64xf32> to vector<1x64xf32>
    %1033 = vector.extract_strided_slice %560 {offsets = [0, 0], sizes = [1, 64], strides = [1, 1]} : vector<2x64xf32> to vector<1x64xf32>
    %1034 = vector.extract_strided_slice %654 {offsets = [0, 0], sizes = [1, 64], strides = [1, 1]} : vector<2x64xf32> to vector<1x64xf32>
    %1035 = vector.extract_strided_slice %748 {offsets = [0, 0], sizes = [1, 64], strides = [1, 1]} : vector<2x64xf32> to vector<1x64xf32>
    %1036 = vector.extract_strided_slice %842 {offsets = [0, 0], sizes = [1, 64], strides = [1, 1]} : vector<2x64xf32> to vector<1x64xf32>
    %1037 = vector.extract_strided_slice %936 {offsets = [0, 0], sizes = [1, 64], strides = [1, 1]} : vector<2x64xf32> to vector<1x64xf32>
    %1038 = vector.extract_strided_slice %1030 {offsets = [0, 0], sizes = [1, 64], strides = [1, 1]} : vector<2x64xf32> to vector<1x64xf32>
    %1039 = tpu.concatenate %1031, %1032, %1033, %1034, %1035, %1036, %1037, %1038 in 0 : vector<1x64xf32>, vector<1x64xf32>, vector<1x64xf32>, vector<1x64xf32>, vector<1x64xf32>, vector<1x64xf32>, vector<1x64xf32>, vector<1x64xf32> -> vector<8x64xf32>
    %c0_548 = arith.constant 0 : index
    %c0_549 = arith.constant 0 : index
    %1040 = vector.load %arg15[%c0_548, %c0_549] : memref<64x64xf32, #tpu.memory_space<vmem>>, vector<64x64xf32>
    %cst_550 = arith.constant dense<0.000000e+00> : vector<8x64xf32>
    %1041 = tpu.matmul %1039, %1040, %cst_550 {dimension_numbers = #tpu.dot_dimension_numbers<[1], [0], [0], [1], [0, 0, 1, 1], [], []>} : vector<8x64xf32>, vector<64x64xf32>, vector<8x64xf32> -> vector<8x64xf32>
    %c0_551 = arith.constant 0 : index
    %c0_552 = arith.constant 0 : index
    %1042 = vector.load %arg16[%c0_551, %c0_552] : memref<1x64xf32, #tpu.memory_space<vmem>>, vector<1x64xf32>
    %1043 = vector.broadcast %1042 : vector<1x64xf32> to vector<8x64xf32>
    %1044 = arith.addf %1041, %1043 : vector<8x64xf32>
    %cst_553 = arith.constant 0.000000e+00 : f32
    %1045 = vector.broadcast %cst_553 : f32 to vector<8x64xf32>
    %1046 = arith.maximumf %1044, %1045 : vector<8x64xf32>
    %c0_554 = arith.constant 0 : index
    %c0_555 = arith.constant 0 : index
    %1047 = vector.load %arg17[%c0_554, %c0_555] : memref<64x4xf32, #tpu.memory_space<vmem>>, vector<64x4xf32>
    %cst_556 = arith.constant dense<0.000000e+00> : vector<8x4xf32>
    %1048 = tpu.matmul %1046, %1047, %cst_556 {dimension_numbers = #tpu.dot_dimension_numbers<[1], [0], [0], [1], [0, 0, 1, 1], [], []>} : vector<8x64xf32>, vector<64x4xf32>, vector<8x4xf32> -> vector<8x4xf32>
    %c0_557 = arith.constant 0 : index
    %c0_558 = arith.constant 0 : index
    %1049 = vector.load %arg18[%c0_557, %c0_558] : memref<1x4xf32, #tpu.memory_space<vmem>>, vector<1x4xf32>
    %1050 = vector.broadcast %1049 : vector<1x4xf32> to vector<8x4xf32>
    %1051 = arith.addf %1048, %1050 : vector<8x4xf32>
    %1052 = vector.extract_strided_slice %1051 {offsets = [0, 0], sizes = [8, 2], strides = [1, 1]} : vector<8x4xf32> to vector<8x2xf32>
    %c0_559 = arith.constant 0 : index
    %c0_560 = arith.constant 0 : index
    %c0_561 = arith.constant 0 : index
    %1053 = vector.load %arg26[%c0_559, %c0_560, %c0_561] : memref<2x8x2xf32, #tpu.memory_space<vmem>>, vector<1x8x2xf32>
    %1054 = vector.shape_cast %1053 : vector<1x8x2xf32> to vector<8x2xf32>
    %1055 = vector.shape_cast %1052 : vector<8x2xf32> to vector<1x8x2xf32>
    tpu.vector_store %arg26[%c0_559, %c0_560, %c0_561], %1055 {strides = array<i32>} : memref<2x8x2xf32, #tpu.memory_space<vmem>>, vector<1x8x2xf32>,
    %1056 = vector.extract_strided_slice %1051 {offsets = [0, 2], sizes = [8, 2], strides = [1, 1]} : vector<8x4xf32> to vector<8x2xf32>
    %c0_562 = arith.constant 0 : index
    %c0_563 = arith.constant 0 : index
    %c0_564 = arith.constant 0 : index
    %1057 = vector.load %arg27[%c0_562, %c0_563, %c0_564] : memref<2x8x2xf32, #tpu.memory_space<vmem>>, vector<1x8x2xf32>
    %1058 = vector.shape_cast %1057 : vector<1x8x2xf32> to vector<8x2xf32>
    %1059 = vector.shape_cast %1056 : vector<8x2xf32> to vector<1x8x2xf32>
    tpu.vector_store %arg27[%c0_562, %c0_563, %c0_564], %1059 {strides = array<i32>} : memref<2x8x2xf32, #tpu.memory_space<vmem>>, vector<1x8x2xf32>,
    %1060 = vector.extract_strided_slice %372 {offsets = [1, 0], sizes = [1, 64], strides = [1, 1]} : vector<2x64xf32> to vector<1x64xf32>
    %1061 = vector.extract_strided_slice %466 {offsets = [1, 0], sizes = [1, 64], strides = [1, 1]} : vector<2x64xf32> to vector<1x64xf32>
    %1062 = vector.extract_strided_slice %560 {offsets = [1, 0], sizes = [1, 64], strides = [1, 1]} : vector<2x64xf32> to vector<1x64xf32>
    %1063 = vector.extract_strided_slice %654 {offsets = [1, 0], sizes = [1, 64], strides = [1, 1]} : vector<2x64xf32> to vector<1x64xf32>
    %1064 = vector.extract_strided_slice %748 {offsets = [1, 0], sizes = [1, 64], strides = [1, 1]} : vector<2x64xf32> to vector<1x64xf32>
    %1065 = vector.extract_strided_slice %842 {offsets = [1, 0], sizes = [1, 64], strides = [1, 1]} : vector<2x64xf32> to vector<1x64xf32>
    %1066 = vector.extract_strided_slice %936 {offsets = [1, 0], sizes = [1, 64], strides = [1, 1]} : vector<2x64xf32> to vector<1x64xf32>
    %1067 = vector.extract_strided_slice %1030 {offsets = [1, 0], sizes = [1, 64], strides = [1, 1]} : vector<2x64xf32> to vector<1x64xf32>
    %1068 = tpu.concatenate %1060, %1061, %1062, %1063, %1064, %1065, %1066, %1067 in 0 : vector<1x64xf32>, vector<1x64xf32>, vector<1x64xf32>, vector<1x64xf32>, vector<1x64xf32>, vector<1x64xf32>, vector<1x64xf32>, vector<1x64xf32> -> vector<8x64xf32>
    %c0_565 = arith.constant 0 : index
    %c0_566 = arith.constant 0 : index
    %1069 = vector.load %arg15[%c0_565, %c0_566] : memref<64x64xf32, #tpu.memory_space<vmem>>, vector<64x64xf32>
    %cst_567 = arith.constant dense<0.000000e+00> : vector<8x64xf32>
    %1070 = tpu.matmul %1068, %1069, %cst_567 {dimension_numbers = #tpu.dot_dimension_numbers<[1], [0], [0], [1], [0, 0, 1, 1], [], []>} : vector<8x64xf32>, vector<64x64xf32>, vector<8x64xf32> -> vector<8x64xf32>
    %c0_568 = arith.constant 0 : index
    %c0_569 = arith.constant 0 : index
    %1071 = vector.load %arg16[%c0_568, %c0_569] : memref<1x64xf32, #tpu.memory_space<vmem>>, vector<1x64xf32>
    %1072 = vector.broadcast %1071 : vector<1x64xf32> to vector<8x64xf32>
    %1073 = arith.addf %1070, %1072 : vector<8x64xf32>
    %cst_570 = arith.constant 0.000000e+00 : f32
    %1074 = vector.broadcast %cst_570 : f32 to vector<8x64xf32>
    %1075 = arith.maximumf %1073, %1074 : vector<8x64xf32>
    %c0_571 = arith.constant 0 : index
    %c0_572 = arith.constant 0 : index
    %1076 = vector.load %arg17[%c0_571, %c0_572] : memref<64x4xf32, #tpu.memory_space<vmem>>, vector<64x4xf32>
    %cst_573 = arith.constant dense<0.000000e+00> : vector<8x4xf32>
    %1077 = tpu.matmul %1075, %1076, %cst_573 {dimension_numbers = #tpu.dot_dimension_numbers<[1], [0], [0], [1], [0, 0, 1, 1], [], []>} : vector<8x64xf32>, vector<64x4xf32>, vector<8x4xf32> -> vector<8x4xf32>
    %c0_574 = arith.constant 0 : index
    %c0_575 = arith.constant 0 : index
    %1078 = vector.load %arg18[%c0_574, %c0_575] : memref<1x4xf32, #tpu.memory_space<vmem>>, vector<1x4xf32>
    %1079 = vector.broadcast %1078 : vector<1x4xf32> to vector<8x4xf32>
    %1080 = arith.addf %1077, %1079 : vector<8x4xf32>
    %1081 = vector.extract_strided_slice %1080 {offsets = [0, 0], sizes = [8, 2], strides = [1, 1]} : vector<8x4xf32> to vector<8x2xf32>
    %c1_576 = arith.constant 1 : index
    %c0_577 = arith.constant 0 : index
    %c0_578 = arith.constant 0 : index
    %1082 = vector.load %arg26[%c1_576, %c0_577, %c0_578] : memref<2x8x2xf32, #tpu.memory_space<vmem>>, vector<1x8x2xf32>
    %1083 = vector.shape_cast %1082 : vector<1x8x2xf32> to vector<8x2xf32>
    %1084 = vector.shape_cast %1081 : vector<8x2xf32> to vector<1x8x2xf32>
    tpu.vector_store %arg26[%c1_576, %c0_577, %c0_578], %1084 {strides = array<i32>} : memref<2x8x2xf32, #tpu.memory_space<vmem>>, vector<1x8x2xf32>,
    %1085 = vector.extract_strided_slice %1080 {offsets = [0, 2], sizes = [8, 2], strides = [1, 1]} : vector<8x4xf32> to vector<8x2xf32>
    %c1_579 = arith.constant 1 : index
    %c0_580 = arith.constant 0 : index
    %c0_581 = arith.constant 0 : index
    %1086 = vector.load %arg27[%c1_579, %c0_580, %c0_581] : memref<2x8x2xf32, #tpu.memory_space<vmem>>, vector<1x8x2xf32>
    %1087 = vector.shape_cast %1086 : vector<1x8x2xf32> to vector<8x2xf32>
    %1088 = vector.shape_cast %1085 : vector<8x2xf32> to vector<1x8x2xf32>
    tpu.vector_store %arg27[%c1_579, %c0_580, %c0_581], %1088 {strides = array<i32>} : memref<2x8x2xf32, #tpu.memory_space<vmem>>, vector<1x8x2xf32>,
    return
  }
}

</mosaic_0001>

<llo_original>
// kernel: gru_predictor_forward.1
$region0: #{gru_predictor_forward.1}
  #allocation0 [shape = 'u32[]', space=smem, size = 0x4, offset = 0x4, fixed_abs, tag = 'smem constant byte address 0x4 - core index']
  #allocation1 [shape = 'u32[144,128]{1,0:T(1,128)}', space=vmem, size = 0x12000, scoped, tag = 'internal scratch']
  %s0 = inlined_call_operand.smem [shape: u32[30], index: -1, kind: input, shape index: {}]
  %s1 = sld [smem:[%s0]]
  %s2 = scalar_lea.smem %s0, 1
  %s3 = sld [smem:[%s2]]
  %s4 = scalar_lea.smem %s0, 2
  %s5 = sld [smem:[%s4]]
  %s6 = scalar_lea.smem %s0, 3
  %s7 = sld [smem:[%s6]]
  %s8 = scalar_lea.smem %s0, 4
  %s9 = sld [smem:[%s8]]
  %s10 = scalar_lea.smem %s0, 5
  %s11 = sld [smem:[%s10]]
  %s12 = scalar_lea.smem %s0, 6
  %s13 = sld [smem:[%s12]]
  %s14 = scalar_lea.smem %s0, 7
  %s15 = sld [smem:[%s14]]
  %s16 = scalar_lea.smem %s0, 8
  %s17 = sld [smem:[%s16]]
  %s18 = scalar_lea.smem %s0, 9
  %s19 = sld [smem:[%s18]]
  %s20 = scalar_lea.smem %s0, 10
  %s21 = sld [smem:[%s20]]
  %s22 = scalar_lea.smem %s0, 11
  %s23 = sld [smem:[%s22]]
  %s24 = scalar_lea.smem %s0, 12
  %s25 = sld [smem:[%s24]]
  %s26 = scalar_lea.smem %s0, 13
  %s27 = sld [smem:[%s26]]
  %s28 = scalar_lea.smem %s0, 14
  %s29 = sld [smem:[%s28]]
  %s30 = scalar_lea.smem %s0, 15
  %s31 = sld [smem:[%s30]]
  %s32 = scalar_lea.smem %s0, 16
  %s33 = sld [smem:[%s32]]
  %s34 = scalar_lea.smem %s0, 17
  %s35 = sld [smem:[%s34]]
  %s36 = scalar_lea.smem %s0, 18
  %s37 = sld [smem:[%s36]]
  %s38 = scalar_lea.smem %s0, 19
  %s39 = sld [smem:[%s38]]
  %s40 = scalar_lea.smem %s0, 20
  %s41 = sld [smem:[%s40]]
  %s42 = scalar_lea.smem %s0, 21
  %s43 = sld [smem:[%s42]]
  %s44 = scalar_lea.smem %s0, 22
  %s45 = sld [smem:[%s44]]
  %s46 = scalar_lea.smem %s0, 23
  %s47 = sld [smem:[%s46]]
  %s48 = scalar_lea.smem %s0, 24
  %s49 = sld [smem:[%s48]]
  %s50 = scalar_lea.smem %s0, 25
  %s51 = sld [smem:[%s50]]
  %s52 = scalar_lea.smem %s0, 26
  %s53 = sld [smem:[%s52]]
  %s54 = scalar_lea.smem %s0, 27
  %s55 = sld [smem:[%s54]]
  %s56 = scalar_lea.smem %s0, 28
  %s57 = sld [smem:[%s56]]
  %s58 = scalar_lea.smem %s0, 29
  %s59 = sld [smem:[%s58]]
  %60 = xla_tuple %s53, %s55, %s57, %s59
  %s61 = sld [smem:[#allocation0]]
  $region214: #{gru_predictor_forward.1} parent=0
    _
  %s63 = ssub.s32 1, %s61
  %s64 = scalar_select 0, %s63, %s61
  $region1: #{gru_predictor_forward.1} parent=0
    #allocation2 [shape = 'u8[8192]{0}', space=vmem, size = 0x2000, scoped, tag = 'input window, operand 2, single buffered']
    #allocation3 [shape = 's32[1]{0}', space=sflag, size = 0x4, scoped, tag = 'scoped memory for gru_predictor_forward.1']
    #allocation4 [shape = 'u8[512]{0}', space=vmem, size = 0x400, scoped, tag = 'input window, operand 3, single buffered']
    #allocation5 [shape = 's32[1]{0}', space=sflag, size = 0x4, scoped, tag = 'scoped memory for gru_predictor_forward.1']
    #allocation6 [shape = 'u8[4096]{0}', space=vmem, size = 0x1000, scoped, tag = 'input window, operand 4, single buffered']
    #allocation7 [shape = 'u8[512]{0}', space=vmem, size = 0x400, scoped, tag = 'input window, operand 5, single buffered']
    #allocation8 [shape = 's32[1]{0}', space=sflag, size = 0x4, scoped, tag = 'scoped memory for gru_predictor_forward.1']
    #allocation9 [shape = 'u8[49152]{0}', space=vmem, size = 0xc000, scoped, tag = 'input window, operand 6, single buffered']
    #allocation10 [shape = 'u8[49152]{0}', space=vmem, size = 0xc000, scoped, tag = 'input window, operand 7, single buffered']
    #allocation11 [shape = 's32[1]{0}', space=sflag, size = 0x4, scoped, tag = 'scoped memory for gru_predictor_forward.1']
    #allocation12 [shape = 'u8[1536]{0}', space=vmem, size = 0x800, scoped, tag = 'input window, operand 10, single buffered']
    #allocation13 [shape = 'u8[98304]{0}', space=vmem, size = 0x18000, scoped, tag = 'input window, operand 11, single buffered']
    #allocation14 [shape = 's32[1]{0}', space=sflag, size = 0x4, scoped, tag = 'scoped memory for gru_predictor_forward.1']
    #allocation15 [shape = 'u8[98304]{0}', space=vmem, size = 0x18000, scoped, tag = 'input window, operand 12, single buffered']
    #allocation16 [shape = 'u8[1536]{0}', space=vmem, size = 0x800, scoped, tag = 'input window, operand 13, single buffered']
    #allocation17 [shape = 's32[1]{0}', space=sflag, size = 0x4, scoped, tag = 'scoped memory for gru_predictor_forward.1']
    #allocation18 [shape = 'u8[1536]{0}', space=vmem, size = 0x800, scoped, tag = 'input window, operand 14, single buffered']
    #allocation19 [shape = 'u8[32768]{0}', space=vmem, size = 0x8000, scoped, tag = 'input window, operand 15, single buffered']
    #allocation20 [shape = 's32[1]{0}', space=sflag, size = 0x4, scoped, tag = 'scoped memory for gru_predictor_forward.1']
    #allocation21 [shape = 'u8[512]{0}', space=vmem, size = 0x400, scoped, tag = 'input window, operand 16, single buffered']
    #allocation22 [shape = 'u8[512]{0}', space=vmem, size = 0x400, scoped, tag = 'input window, operand 18, single buffered']
    #allocation23 [shape = 's32[1]{0}', space=sflag, size = 0x4, scoped, tag = 'scoped memory for gru_predictor_forward.1']
    #allocation24 [shape = 'u8[8192]{0}', space=vmem, size = 0x2000, scoped, tag = 'input window, operand 19, single buffered']
    #allocation25 [shape = 'u8[512]{0}', space=vmem, size = 0x400, scoped, tag = 'input window, operand 21, single buffered']
    #allocation26 [shape = 's32[1]{0}', space=sflag, size = 0x4, scoped, tag = 'scoped memory for gru_predictor_forward.1']
    #allocation27 [shape = 'u8[65536]{0}', space=vmem, size = 0x10000, scoped, tag = 'input window, operand 22, single buffered']
    #allocation28 [shape = 'u8[2048]{0}', space=vmem, size = 0x800, scoped, tag = 'input window, operand 23, single buffered']
    #allocation29 [shape = 's32[1]{0}', space=sflag, size = 0x4, scoped, tag = 'scoped memory for gru_predictor_forward.1']
    #allocation30 [shape = 'u8[512]{0}', space=vmem, size = 0x400, scoped, tag = 'input window, operand 25, single buffered']
    %65 = vsyncpa [#allocation3], 0
    %66 = vsyncpa [#allocation5], 0
    %67 = vsyncpa [#allocation8], 0
    %68 = vsyncpa [#allocation11], 0
    %69 = vsyncpa [#allocation14], 0
    %70 = vsyncpa [#allocation17], 0
    %71 = vsyncpa [#allocation20], 0
    %72 = vsyncpa [#allocation23], 0
    %73 = vsyncpa [#allocation26], 0
    %74 = vsyncpa [#allocation29], 0
    // Predicated region
    $region2: #{gru_predictor_forward.1} parent=1 // pred_check
      _
    $region3: #{gru_predictor_forward.1} parent=1 // pred_check_branch
      %76 = sbr.rel (0) target = $region5
    $region4: #{gru_predictor_forward.1} parent=1 // pred_region
      _
    $region5: #{gru_predictor_forward.1} parent=1 // pred_fallthru
      _
    // Predicated region
    $region6: #{gru_predictor_forward.1} parent=1 // pred_check
      _
    $region7: #{gru_predictor_forward.1} parent=1 // pred_check_branch
      %78 = sbr.rel (0) target = $region9
    $region8: #{gru_predictor_forward.1} parent=1 // pred_region
      _
    $region9: #{gru_predictor_forward.1} parent=1 // pred_fallthru
      _
    // Predicated region
    $region10: #{gru_predictor_forward.1} parent=1 // pred_check
      _
    $region11: #{gru_predictor_forward.1} parent=1 // pred_check_branch
      %80 = sbr.rel (0) target = $region13
    $region12: #{gru_predictor_forward.1} parent=1 // pred_region
      %s82 = ssub.s32 256, 256
      %83 = vsyncadd [#allocation3], %s82
      %s84 = sshll.u32 [#allocation2], 4
      %s85 = int_to_ptr.vmem [resolvable:$true] %s84
      %90 = dma.hbm_to_vmem [thread:$0]  %s5, 256, %s85, [#allocation3], 128, 128, 8
    $region13: #{gru_predictor_forward.1} parent=1 // pred_fallthru
      _
    // Predicated region
    $region14: #{gru_predictor_forward.1} parent=1 // pred_check
      _
    $region15: #{gru_predictor_forward.1} parent=1 // pred_check_branch
      %92 = sbr.rel (0) target = $region17
    $region16: #{gru_predictor_forward.1} parent=1 // pred_region
      %s94 = ssub.s32 16, 16
      %95 = vsyncadd [#allocation5], %s94
      %s97 = sshll.u32 [#allocation4], 4
      %s98 = int_to_ptr.vmem [resolvable:$true] %s97
      %100 = dma.hbm_to_vmem [thread:$0]  %s7, 16, %s98, [#allocation5]
    $region17: #{gru_predictor_forward.1} parent=1 // pred_fallthru
      _
    // Predicated region
    $region18: #{gru_predictor_forward.1} parent=1 // pred_check
      _
    $region19: #{gru_predictor_forward.1} parent=1 // pred_check_branch
      %102 = sbr.rel (0) target = $region21
    $region20: #{gru_predictor_forward.1} parent=1 // pred_region
      %s104 = ssub.s32 128, 128
      %105 = vsyncadd [#allocation5], %s104
      %s107 = sshll.u32 [#allocation6], 4
      %s108 = int_to_ptr.vmem [resolvable:$true] %s107
      %110 = dma.hbm_to_vmem [thread:$0]  %s9, 128, %s108, [#allocation5]
    $region21: #{gru_predictor_forward.1} parent=1 // pred_fallthru
      _
    // Predicated region
    $region22: #{gru_predictor_forward.1} parent=1 // pred_check
      _
    $region23: #{gru_predictor_forward.1} parent=1 // pred_check_branch
      %112 = sbr.rel (0) target = $region25
    $region24: #{gru_predictor_forward.1} parent=1 // pred_region
      %s114 = ssub.s32 16, 16
      %115 = vsyncadd [#allocation8], %s114
      %s117 = sshll.u32 [#allocation7], 4
      %s118 = int_to_ptr.vmem [resolvable:$true] %s117
      %120 = dma.hbm_to_vmem [thread:$0]  %s11, 16, %s118, [#allocation8]
    $region25: #{gru_predictor_forward.1} parent=1 // pred_fallthru
      _
    // Predicated region
    $region26: #{gru_predictor_forward.1} parent=1 // pred_check
      _
    $region27: #{gru_predictor_forward.1} parent=1 // pred_check_branch
      %122 = sbr.rel (0) target = $region29
    $region28: #{gru_predictor_forward.1} parent=1 // pred_region
      %s124 = ssub.s32 1536, 1536
      %125 = vsyncadd [#allocation8], %s124
      %s126 = sshll.u32 [#allocation9], 4
      %s127 = int_to_ptr.vmem [resolvable:$true] %s126
      %132 = dma.hbm_to_vmem [thread:$0]  %s13, 1536, %s127, [#allocation8], 128, 128, 8
    $region29: #{gru_predictor_forward.1} parent=1 // pred_fallthru
      _
    // Predicated region
    $region30: #{gru_predictor_forward.1} parent=1 // pred_check
      _
    $region31: #{gru_predictor_forward.1} parent=1 // pred_check_branch
      %134 = sbr.rel (0) target = $region33
    $region32: #{gru_predictor_forward.1} parent=1 // pred_region
      %s136 = ssub.s32 1536, 1536
      %137 = vsyncadd [#allocation11], %s136
      %s138 = sshll.u32 [#allocation10], 4
      %s139 = int_to_ptr.vmem [resolvable:$true] %s138
      %144 = dma.hbm_to_vmem [thread:$0]  %s15, 1536, %s139, [#allocation11], 128, 128, 8
    $region33: #{gru_predictor_forward.1} parent=1 // pred_fallthru
      _
    // Predicated region
    $region34: #{gru_predictor_forward.1} parent=1 // pred_check
      _
    $region35: #{gru_predictor_forward.1} parent=1 // pred_check_branch
      %146 = sbr.rel (0) target = $region37
    $region36: #{gru_predictor_forward.1} parent=1 // pred_region
      _
    $region37: #{gru_predictor_forward.1} parent=1 // pred_fallthru
      _
    // Predicated region
    $region38: #{gru_predictor_forward.1} parent=1 // pred_check
      _
    $region39: #{gru_predictor_forward.1} parent=1 // pred_check_branch
      %148 = sbr.rel (0) target = $region41
    $region40: #{gru_predictor_forward.1} parent=1 // pred_region
      _
    $region41: #{gru_predictor_forward.1} parent=1 // pred_fallthru
      _
    // Predicated region
    $region42: #{gru_predictor_forward.1} parent=1 // pred_check
      _
    $region43: #{gru_predictor_forward.1} parent=1 // pred_check_branch
      %150 = sbr.rel (0) target = $region45
    $region44: #{gru_predictor_forward.1} parent=1 // pred_region
      %s152 = ssub.s32 48, 48
      %153 = vsyncadd [#allocation11], %s152
      %s154 = sshll.u32 [#allocation12], 4
      %s155 = int_to_ptr.vmem [resolvable:$true] %s154
      %160 = dma.hbm_to_vmem [thread:$0]  %s21, 48, %s155, [#allocation11], 16, 16, 1
    $region45: #{gru_predictor_forward.1} parent=1 // pred_fallthru
      _
    // Predicated region
    $region46: #{gru_predictor_forward.1} parent=1 // pred_check
      _
    $region47: #{gru_predictor_forward.1} parent=1 // pred_check_branch
      %162 = sbr.rel (0) target = $region49
    $region48: #{gru_predictor_forward.1} parent=1 // pred_region
      %s164 = ssub.s32 3072, 3072
      %165 = vsyncadd [#allocation14], %s164
      %s166 = sshll.u32 [#allocation13], 4
      %s167 = int_to_ptr.vmem [resolvable:$true] %s166
      %172 = dma.hbm_to_vmem [thread:$0]  %s23, 3072, %s167, [#allocation14], 128, 128, 8
    $region49: #{gru_predictor_forward.1} parent=1 // pred_fallthru
      _
    // Predicated region
    $region50: #{gru_predictor_forward.1} parent=1 // pred_check
      _
    $region51: #{gru_predictor_forward.1} parent=1 // pred_check_branch
      %174 = sbr.rel (0) target = $region53
    $region52: #{gru_predictor_forward.1} parent=1 // pred_region
      %s176 = ssub.s32 3072, 3072
      %177 = vsyncadd [#allocation14], %s176
      %s178 = sshll.u32 [#allocation15], 4
      %s179 = int_to_ptr.vmem [resolvable:$true] %s178
      %184 = dma.hbm_to_vmem [thread:$0]  %s25, 3072, %s179, [#allocation14], 128, 128, 8
    $region53: #{gru_predictor_forward.1} parent=1 // pred_fallthru
      _
    // Predicated region
    $region54: #{gru_predictor_forward.1} parent=1 // pred_check
      _
    $region55: #{gru_predictor_forward.1} parent=1 // pred_check_branch
      %186 = sbr.rel (0) target = $region57
    $region56: #{gru_predictor_forward.1} parent=1 // pred_region
      %s188 = ssub.s32 48, 48
      %189 = vsyncadd [#allocation17], %s188
      %s190 = sshll.u32 [#allocation16], 4
      %s191 = int_to_ptr.vmem [resolvable:$true] %s190
      %196 = dma.hbm_to_vmem [thread:$0]  %s27, 48, %s191, [#allocation17], 16, 16, 1
    $region57: #{gru_predictor_forward.1} parent=1 // pred_fallthru
      _
    // Predicated region
    $region58: #{gru_predictor_forward.1} parent=1 // pred_check
      _
    $region59: #{gru_predictor_forward.1} parent=1 // pred_check_branch
      %198 = sbr.rel (0) target = $region61
    $region60: #{gru_predictor_forward.1} parent=1 // pred_region
      %s200 = ssub.s32 48, 48
      %201 = vsyncadd [#allocation17], %s200
      %s202 = sshll.u32 [#allocation18], 4
      %s203 = int_to_ptr.vmem [resolvable:$true] %s202
      %208 = dma.hbm_to_vmem [thread:$0]  %s29, 48, %s203, [#allocation17], 16, 16, 1
    $region61: #{gru_predictor_forward.1} parent=1 // pred_fallthru
      _
    // Predicated region
    $region62: #{gru_predictor_forward.1} parent=1 // pred_check
      _
    $region63: #{gru_predictor_forward.1} parent=1 // pred_check_branch
      %210 = sbr.rel (0) target = $region65
    $region64: #{gru_predictor_forward.1} parent=1 // pred_region
      %s212 = ssub.s32 1024, 1024
      %213 = vsyncadd [#allocation20], %s212
      %s214 = sshll.u32 [#allocation19], 4
      %s215 = int_to_ptr.vmem [resolvable:$true] %s214
      %220 = dma.hbm_to_vmem [thread:$0]  %s31, 1024, %s215, [#allocation20], 128, 128, 8
    $region65: #{gru_predictor_forward.1} parent=1 // pred_fallthru
      _
    // Predicated region
    $region66: #{gru_predictor_forward.1} parent=1 // pred_check
      _
    $region67: #{gru_predictor_forward.1} parent=1 // pred_check_branch
      %222 = sbr.rel (0) target = $region69
    $region68: #{gru_predictor_forward.1} parent=1 // pred_region
      %s224 = ssub.s32 16, 16
      %225 = vsyncadd [#allocation20], %s224
      %s227 = sshll.u32 [#allocation21], 4
      %s228 = int_to_ptr.vmem [resolvable:$true] %s227
      %230 = dma.hbm_to_vmem [thread:$0]  %s33, 16, %s228, [#allocation20]
    $region69: #{gru_predictor_forward.1} parent=1 // pred_fallthru
      _
    // Predicated region
    $region70: #{gru_predictor_forward.1} parent=1 // pred_check
      _
    $region71: #{gru_predictor_forward.1} parent=1 // pred_check_branch
      %232 = sbr.rel (0) target = $region73
    $region72: #{gru_predictor_forward.1} parent=1 // pred_region
      _
    $region73: #{gru_predictor_forward.1} parent=1 // pred_fallthru
      _
    // Predicated region
    $region74: #{gru_predictor_forward.1} parent=1 // pred_check
      _
    $region75: #{gru_predictor_forward.1} parent=1 // pred_check_branch
      %234 = sbr.rel (0) target = $region77
    $region76: #{gru_predictor_forward.1} parent=1 // pred_region
      %s236 = ssub.s32 16, 16
      %237 = vsyncadd [#allocation23], %s236
      %s239 = sshll.u32 [#allocation22], 4
      %s240 = int_to_ptr.vmem [resolvable:$true] %s239
      %242 = dma.hbm_to_vmem [thread:$0]  %s37, 16, %s240, [#allocation23]
    $region77: #{gru_predictor_forward.1} parent=1 // pred_fallthru
      _
    // Predicated region
    $region78: #{gru_predictor_forward.1} parent=1 // pred_check
      _
    $region79: #{gru_predictor_forward.1} parent=1 // pred_check_branch
      %244 = sbr.rel (0) target = $region81
    $region80: #{gru_predictor_forward.1} parent=1 // pred_region
      %s246 = ssub.s32 256, 256
      %247 = vsyncadd [#allocation23], %s246
      %s248 = sshll.u32 [#allocation24], 4
      %s249 = int_to_ptr.vmem [resolvable:$true] %s248
      %254 = dma.hbm_to_vmem [thread:$0]  %s39, 256, %s249, [#allocation23], 128, 128, 8
    $region81: #{gru_predictor_forward.1} parent=1 // pred_fallthru
      _
    // Predicated region
    $region82: #{gru_predictor_forward.1} parent=1 // pred_check
      _
    $region83: #{gru_predictor_forward.1} parent=1 // pred_check_branch
      %256 = sbr.rel (0) target = $region85
    $region84: #{gru_predictor_forward.1} parent=1 // pred_region
      _
    $region85: #{gru_predictor_forward.1} parent=1 // pred_fallthru
      _
    // Predicated region
    $region86: #{gru_predictor_forward.1} parent=1 // pred_check
      _
    $region87: #{gru_predictor_forward.1} parent=1 // pred_check_branch
      %258 = sbr.rel (0) target = $region89
    $region88: #{gru_predictor_forward.1} parent=1 // pred_region
      %s260 = ssub.s32 16, 16
      %261 = vsyncadd [#allocation26], %s260
      %s263 = sshll.u32 [#allocation25], 4
      %s264 = int_to_ptr.vmem [resolvable:$true] %s263
      %266 = dma.hbm_to_vmem [thread:$0]  %s43, 16, %s264, [#allocation26]
    $region89: #{gru_predictor_forward.1} parent=1 // pred_fallthru
      _
    // Predicated region
    $region90: #{gru_predictor_forward.1} parent=1 // pred_check
      _
    $region91: #{gru_predictor_forward.1} parent=1 // pred_check_branch
      %268 = sbr.rel (0) target = $region93
    $region92: #{gru_predictor_forward.1} parent=1 // pred_region
      %s270 = ssub.s32 2048, 2048
      %271 = vsyncadd [#allocation26], %s270
      %s272 = sshll.u32 [#allocation27], 4
      %s273 = int_to_ptr.vmem [resolvable:$true] %s272
      %278 = dma.hbm_to_vmem [thread:$0]  %s45, 2048, %s273, [#allocation26], 128, 128, 8
    $region93: #{gru_predictor_forward.1} parent=1 // pred_fallthru
      _
    // Predicated region
    $region94: #{gru_predictor_forward.1} parent=1 // pred_check
      _
    $region95: #{gru_predictor_forward.1} parent=1 // pred_check_branch
      %280 = sbr.rel (0) target = $region97
    $region96: #{gru_predictor_forward.1} parent=1 // pred_region
      %s282 = ssub.s32 64, 64
      %283 = vsyncadd [#allocation29], %s282
      %s284 = sshll.u32 [#allocation28], 4
      %s285 = int_to_ptr.vmem [resolvable:$true] %s284
      %290 = dma.hbm_to_vmem [thread:$0]  %s47, 64, %s285, [#allocation29], 16, 16, 1
    $region97: #{gru_predictor_forward.1} parent=1 // pred_fallthru
      _
    // Predicated region
    $region98: #{gru_predictor_forward.1} parent=1 // pred_check
      _
    $region99: #{gru_predictor_forward.1} parent=1 // pred_check_branch
      %292 = sbr.rel (0) target = $region101
    $region100: #{gru_predictor_forward.1} parent=1 // pred_region
      _
    $region101: #{gru_predictor_forward.1} parent=1 // pred_fallthru
      _
    // Predicated region
    $region102: #{gru_predictor_forward.1} parent=1 // pred_check
      _
    $region103: #{gru_predictor_forward.1} parent=1 // pred_check_branch
      %294 = sbr.rel (0) target = $region105
    $region104: #{gru_predictor_forward.1} parent=1 // pred_region
      %s296 = ssub.s32 16, 16
      %297 = vsyncadd [#allocation29], %s296
      %s299 = sshll.u32 [#allocation30], 4
      %s300 = int_to_ptr.vmem [resolvable:$true] %s299
      %302 = dma.hbm_to_vmem [thread:$0]  %s51, 16, %s300, [#allocation29]
    $region105: #{gru_predictor_forward.1} parent=1 // pred_fallthru
      _
    // Predicated region
    $region106: #{gru_predictor_forward.1} parent=1 // pred_check
      _
    $region107: #{gru_predictor_forward.1} parent=1 // pred_check_branch
      %304 = sbr.rel (0) target = $region109
    $region108: #{gru_predictor_forward.1} parent=1 // pred_region
      %305 = dma.done [#allocation3], 256
    $region109: #{gru_predictor_forward.1} parent=1 // pred_fallthru
      _
    // Predicated region
    $region110: #{gru_predictor_forward.1} parent=1 // pred_check
      _
    $region111: #{gru_predictor_forward.1} parent=1 // pred_check_branch
      %307 = sbr.rel (0) target = $region113
    $region112: #{gru_predictor_forward.1} parent=1 // pred_region
      %308 = dma.done [#allocation5], 16
    $region113: #{gru_predictor_forward.1} parent=1 // pred_fallthru
      _
    // Predicated region
    $region114: #{gru_predictor_forward.1} parent=1 // pred_check
      _
    $region115: #{gru_predictor_forward.1} parent=1 // pred_check_branch
      %310 = sbr.rel (0) target = $region117
    $region116: #{gru_predictor_forward.1} parent=1 // pred_region
      %311 = dma.done [#allocation5], 128
    $region117: #{gru_predictor_forward.1} parent=1 // pred_fallthru
      _
    // Predicated region
    $region118: #{gru_predictor_forward.1} parent=1 // pred_check
      _
    $region119: #{gru_predictor_forward.1} parent=1 // pred_check_branch
      %313 = sbr.rel (0) target = $region121
    $region120: #{gru_predictor_forward.1} parent=1 // pred_region
      %314 = dma.done [#allocation8], 16
    $region121: #{gru_predictor_forward.1} parent=1 // pred_fallthru
      _
    // Predicated region
    $region122: #{gru_predictor_forward.1} parent=1 // pred_check
      _
    $region123: #{gru_predictor_forward.1} parent=1 // pred_check_branch
      %316 = sbr.rel (0) target = $region125
    $region124: #{gru_predictor_forward.1} parent=1 // pred_region
      %317 = dma.done [#allocation8], 1536
    $region125: #{gru_predictor_forward.1} parent=1 // pred_fallthru
      _
    // Predicated region
    $region126: #{gru_predictor_forward.1} parent=1 // pred_check
      _
    $region127: #{gru_predictor_forward.1} parent=1 // pred_check_branch
      %319 = sbr.rel (0) target = $region129
    $region128: #{gru_predictor_forward.1} parent=1 // pred_region
      %320 = dma.done [#allocation11], 1536
    $region129: #{gru_predictor_forward.1} parent=1 // pred_fallthru
      _
    // Predicated region
    $region130: #{gru_predictor_forward.1} parent=1 // pred_check
      _
    $region131: #{gru_predictor_forward.1} parent=1 // pred_check_branch
      %322 = sbr.rel (0) target = $region133
    $region132: #{gru_predictor_forward.1} parent=1 // pred_region
      %323 = dma.done [#allocation11], 48
    $region133: #{gru_predictor_forward.1} parent=1 // pred_fallthru
      _
    // Predicated region
    $region134: #{gru_predictor_forward.1} parent=1 // pred_check
      _
    $region135: #{gru_predictor_forward.1} parent=1 // pred_check_branch
      %325 = sbr.rel (0) target = $region137
    $region136: #{gru_predictor_forward.1} parent=1 // pred_region
      %326 = dma.done [#allocation14], 3072
    $region137: #{gru_predictor_forward.1} parent=1 // pred_fallthru
      _
    // Predicated region
    $region138: #{gru_predictor_forward.1} parent=1 // pred_check
      _
    $region139: #{gru_predictor_forward.1} parent=1 // pred_check_branch
      %328 = sbr.rel (0) target = $region141
    $region140: #{gru_predictor_forward.1} parent=1 // pred_region
      %329 = dma.done [#allocation14], 3072
    $region141: #{gru_predictor_forward.1} parent=1 // pred_fallthru
      _
    // Predicated region
    $region142: #{gru_predictor_forward.1} parent=1 // pred_check
      _
    $region143: #{gru_predictor_forward.1} parent=1 // pred_check_branch
      %331 = sbr.rel (0) target = $region145
    $region144: #{gru_predictor_forward.1} parent=1 // pred_region
      %332 = dma.done [#allocation17], 48
    $region145: #{gru_predictor_forward.1} parent=1 // pred_fallthru
      _
    // Predicated region
    $region146: #{gru_predictor_forward.1} parent=1 // pred_check
      _
    $region147: #{gru_predictor_forward.1} parent=1 // pred_check_branch
      %334 = sbr.rel (0) target = $region149
    $region148: #{gru_predictor_forward.1} parent=1 // pred_region
      %335 = dma.done [#allocation17], 48
    $region149: #{gru_predictor_forward.1} parent=1 // pred_fallthru
      _
    // Predicated region
    $region150: #{gru_predictor_forward.1} parent=1 // pred_check
      _
    $region151: #{gru_predictor_forward.1} parent=1 // pred_check_branch
      %337 = sbr.rel (0) target = $region153
    $region152: #{gru_predictor_forward.1} parent=1 // pred_region
      %338 = dma.done [#allocation20], 1024
    $region153: #{gru_predictor_forward.1} parent=1 // pred_fallthru
      _
    // Predicated region
    $region154: #{gru_predictor_forward.1} parent=1 // pred_check
      _
    $region155: #{gru_predictor_forward.1} parent=1 // pred_check_branch
      %340 = sbr.rel (0) target = $region157
    $region156: #{gru_predictor_forward.1} parent=1 // pred_region
      %341 = dma.done [#allocation20], 16
    $region157: #{gru_predictor_forward.1} parent=1 // pred_fallthru
      _
    // Predicated region
    $region158: #{gru_predictor_forward.1} parent=1 // pred_check
      _
    $region159: #{gru_predictor_forward.1} parent=1 // pred_check_branch
      %343 = sbr.rel (0) target = $region161
    $region160: #{gru_predictor_forward.1} parent=1 // pred_region
      %344 = dma.done [#allocation23], 16
    $region161: #{gru_predictor_forward.1} parent=1 // pred_fallthru
      _
    // Predicated region
    $region162: #{gru_predictor_forward.1} parent=1 // pred_check
      _
    $region163: #{gru_predictor_forward.1} parent=1 // pred_check_branch
      %346 = sbr.rel (0) target = $region165
    $region164: #{gru_predictor_forward.1} parent=1 // pred_region
      %347 = dma.done [#allocation23], 256
    $region165: #{gru_predictor_forward.1} parent=1 // pred_fallthru
      _
    // Predicated region
    $region166: #{gru_predictor_forward.1} parent=1 // pred_check
      _
    $region167: #{gru_predictor_forward.1} parent=1 // pred_check_branch
      %349 = sbr.rel (0) target = $region169
    $region168: #{gru_predictor_forward.1} parent=1 // pred_region
      %350 = dma.done [#allocation26], 16
    $region169: #{gru_predictor_forward.1} parent=1 // pred_fallthru
      _
    // Predicated region
    $region170: #{gru_predictor_forward.1} parent=1 // pred_check
      _
    $region171: #{gru_predictor_forward.1} parent=1 // pred_check_branch
      %352 = sbr.rel (0) target = $region173
    $region172: #{gru_predictor_forward.1} parent=1 // pred_region
      %353 = dma.done [#allocation26], 2048
    $region173: #{gru_predictor_forward.1} parent=1 // pred_fallthru
      _
    // Predicated region
    $region174: #{gru_predictor_forward.1} parent=1 // pred_check
      _
    $region175: #{gru_predictor_forward.1} parent=1 // pred_check_branch
      %355 = sbr.rel (0) target = $region177
    $region176: #{gru_predictor_forward.1} parent=1 // pred_region
      %356 = dma.done [#allocation29], 64
    $region177: #{gru_predictor_forward.1} parent=1 // pred_fallthru
      _
    // Predicated region
    $region178: #{gru_predictor_forward.1} parent=1 // pred_check
      _
    $region179: #{gru_predictor_forward.1} parent=1 // pred_check_branch
      %358 = sbr.rel (0) target = $region181
    $region180: #{gru_predictor_forward.1} parent=1 // pred_region
      %359 = dma.done [#allocation29], 16
    $region181: #{gru_predictor_forward.1} parent=1 // pred_fallthru
      _
    %v360 = vld [vmem:[%s1] sm:$0x3]
    %v361 = vld [vmem:[#allocation2] sm:$0xff]
    %v362 = vld [vmem:[#allocation2 + $0x8] sm:$0xff]
    %v363 = vld [vmem:[#allocation4] sm:$0x1]
    %v365 = vlaneseq
    %v366 = vshrl.u32 %v365, 7
    %v367 = vsub.s32 0, %v366
    %v368 = vrot.slane %v363, %v367
    %vm370 = vcmask 130048
    %v372 = vsel %vm370, %v360, 0
    %374 = vmatprep.subr.mxu0 0.0
    %375 = vmatpush1.msra.mxu0 %v361
    %376 = vmatprep.subr.mxu0 0.0
    %377 = vmatpush1.msra.mxu0 %v362
    %378 = vmatprep.subr.mxu0 0.0
    %379 = vmatpush1.msra.mxu0 0.0
    %380 = vmatprep.subr.mxu0 0.0
    %381 = vmatpush1.msra.mxu0 0.0
    %382 = vmatprep.subr.mxu0 0.0
    %383 = vmatpush1.msra.mxu0 0.0
    %384 = vmatprep.subr.mxu0 0.0
    %385 = vmatpush1.msra.mxu0 0.0
    %386 = vmatprep.subr.mxu0 0.0
    %387 = vmatpush1.msra.mxu0 0.0
    %388 = vmatprep.subr.mxu0 0.0
    %389 = vmatpush1.msra.mxu0 0.0
    %390 = vmatprep.subr.mxu0 0.0
    %391 = vmatpush1.msra.mxu0 0.0
    %392 = vmatprep.subr.mxu0 0.0
    %393 = vmatpush1.msra.mxu0 0.0
    %394 = vmatprep.subr.mxu0 0.0
    %395 = vmatpush1.msra.mxu0 0.0
    %396 = vmatprep.subr.mxu0 0.0
    %397 = vmatpush1.msra.mxu0 0.0
    %398 = vmatprep.subr.mxu0 0.0
    %399 = vmatpush1.msra.mxu0 0.0
    %400 = vmatprep.subr.mxu0 0.0
    %401 = vmatpush1.msra.mxu0 0.0
    %402 = vmatprep.subr.mxu0 0.0
    %403 = vmatpush1.msra.mxu0 0.0
    %404 = vmatprep.subr.mxu0 0.0
    %405 = vmatpush1.msra.mxu0 0.0
    %406 = vmatprep.subr.mxu0 0.0
    %407 = vmatpush1.msra.mxu0 0.0
    %408 = vmatprep.subr.mxu0 0.0
    %409 = vmatpush1.msra.mxu0 0.0
    %410 = vmatprep.subr.mxu0 0.0
    %411 = vmatpush1.msra.mxu0 0.0
    %412 = vmatprep.subr.mxu0 0.0
    %413 = vmatpush1.msra.mxu0 0.0
    %414 = vmatprep.subr.mxu0 0.0
    %415 = vmatpush1.msra.mxu0 0.0
    %416 = vmatprep.subr.mxu0 0.0
    %417 = vmatpush1.msra.mxu0 0.0
    %418 = vmatprep.subr.mxu0 0.0
    %419 = vmatpush1.msra.mxu0 0.0
    %420 = vmatprep.subr.mxu0 0.0
    %421 = vmatpush1.msra.mxu0 0.0
    %422 = vmatprep.subr.mxu0 0.0
    %423 = vmatpush1.msra.mxu0 0.0
    %424 = vmatprep.subr.mxu0 0.0
    %425 = vmatpush1.msra.mxu0 0.0
    %426 = vmatprep.subr.mxu0 0.0
    %427 = vmatpush1.msra.mxu0 0.0
    %428 = vmatprep.subr.mxu0 0.0
    %429 = vmatpush1.msra.mxu0 0.0
    %430 = vmatprep.subr.mxu0 0.0
    %431 = vmatpush1.msra.mxu0 0.0
    %432 = vmatprep.subr.mxu0 0.0
    %433 = vmatpush1.msra.mxu0 0.0
    %434 = vmatprep.subr.mxu0 0.0
    %435 = vmatpush1.msra.mxu0 0.0
    %436 = vmatprep.subr.mxu0 0.0
    %437 = vmatpush1.msra.mxu0 0.0
    %438 = vmatprep.mubr.f32.mxu0 0.0
    %439 = vmatmul.mubr.f32.gmra.mrb[0].mxu0 %v372
    %v440 = vpop.f32.mrb[0].mxu0
    %v441 = vadd.f32 %v368, %v440
    %v442 = vpop.f32.mrb[0].mxu0
    %443 = vdwg.mxu0
    %v444 = vmax.f32 %v441, 0.0
    %v445 = vld [vmem:[#allocation10] sm:$0xff]
    %v446 = vld [vmem:[#allocation10 + $0x8] sm:$0xff]
    %v447 = vld [vmem:[#allocation10 + $0x10] sm:$0xff]
    %v448 = vld [vmem:[#allocation10 + $0x18] sm:$0xff]
    %v449 = vld [vmem:[#allocation6] sm:$0x3f]
    %vm450 = vcmask 261120
    %v452 = vsel %vm450, %v449, 0
    %454 = vmatprep.subr.mxu0 0.0
    %455 = vmatpush1.msra.mxu0 %v445
    %456 = vmatprep.subr.mxu0 0.0
    %457 = vmatpush1.msra.mxu0 %v446
    %458 = vmatprep.subr.mxu0 0.0
    %459 = vmatpush1.msra.mxu0 %v447
    %460 = vmatprep.subr.mxu0 0.0
    %461 = vmatpush1.msra.mxu0 %v448
    %462 = vmatprep.subr.mxu0 0.0
    %463 = vmatpush1.msra.mxu0 0.0
    %464 = vmatprep.subr.mxu0 0.0
    %465 = vmatpush1.msra.mxu0 0.0
    %466 = vmatprep.subr.mxu0 0.0
    %467 = vmatpush1.msra.mxu0 0.0
    %468 = vmatprep.subr.mxu0 0.0
    %469 = vmatpush1.msra.mxu0 0.0
    %470 = vmatprep.subr.mxu0 0.0
    %471 = vmatpush1.msra.mxu0 0.0
    %472 = vmatprep.subr.mxu0 0.0
    %473 = vmatpush1.msra.mxu0 0.0
    %474 = vmatprep.subr.mxu0 0.0
    %475 = vmatpush1.msra.mxu0 0.0
    %476 = vmatprep.subr.mxu0 0.0
    %477 = vmatpush1.msra.mxu0 0.0
    %478 = vmatprep.subr.mxu0 0.0
    %479 = vmatpush1.msra.mxu0 0.0
    %480 = vmatprep.subr.mxu0 0.0
    %481 = vmatpush1.msra.mxu0 0.0
    %482 = vmatprep.subr.mxu0 0.0
    %483 = vmatpush1.msra.mxu0 0.0
    %484 = vmatprep.subr.mxu0 0.0
    %485 = vmatpush1.msra.mxu0 0.0
    %486 = vmatprep.subr.mxu0 0.0
    %487 = vmatpush1.msra.mxu0 0.0
    %488 = vmatprep.subr.mxu0 0.0
    %489 = vmatpush1.msra.mxu0 0.0
    %490 = vmatprep.subr.mxu0 0.0
    %491 = vmatpush1.msra.mxu0 0.0
    %492 = vmatprep.subr.mxu0 0.0
    %493 = vmatpush1.msra.mxu0 0.0
    %494 = vmatprep.subr.mxu0 0.0
    %495 = vmatpush1.msra.mxu0 0.0
    %496 = vmatprep.subr.mxu0 0.0
    %497 = vmatpush1.msra.mxu0 0.0
    %498 = vmatprep.subr.mxu0 0.0
    %499 = vmatpush1.msra.mxu0 0.0
    %500 = vmatprep.subr.mxu0 0.0
    %501 = vmatpush1.msra.mxu0 0.0
    %502 = vmatprep.subr.mxu0 0.0
    %503 = vmatpush1.msra.mxu0 0.0
    %504 = vmatprep.subr.mxu0 0.0
    %505 = vmatpush1.msra.mxu0 0.0
    %506 = vmatprep.subr.mxu0 0.0
    %507 = vmatpush1.msra.mxu0 0.0
    %508 = vmatprep.subr.mxu0 0.0
    %509 = vmatpush1.msra.mxu0 0.0
    %510 = vmatprep.subr.mxu0 0.0
    %511 = vmatpush1.msra.mxu0 0.0
    %512 = vmatprep.subr.mxu0 0.0
    %513 = vmatpush1.msra.mxu0 0.0
    %514 = vmatprep.subr.mxu0 0.0
    %515 = vmatpush1.msra.mxu0 0.0
    %516 = vmatprep.subr.mxu0 0.0
    %517 = vmatpush1.msra.mxu0 0.0
    %518 = vmatprep.mubr.f32.mxu0 0.0
    %519 = vmatmul.mubr.f32.gmra.mrb[0].mxu0 %v452
    %v520 = vpop.f32.mrb[0].mxu0
    %v521 = vadd.f32 0.0, %v520
    %v522 = vpop.f32.mrb[0].mxu0
    %523 = vdwg.mxu0
    %v524 = vld [vmem:[#allocation9] sm:$0xff]
    %v525 = vld [vmem:[#allocation9 + $0x8] sm:$0xff]
    %v526 = vld [vmem:[#allocation9 + $0x10] sm:$0xff]
    %v527 = vld [vmem:[#allocation9 + $0x18] sm:$0xff]
    %v528 = vld [vmem:[#allocation7] sm:$0x1]
    %v530 = vsel %vm450, %v528, 0
    %532 = vmatprep.subr.mxu0 0.0
    %533 = vmatpush1.msra.mxu0 %v445
    %534 = vmatprep.subr.mxu0 0.0
    %535 = vmatpush1.msra.mxu0 %v446
    %536 = vmatprep.subr.mxu0 0.0
    %537 = vmatpush1.msra.mxu0 %v447
    %538 = vmatprep.subr.mxu0 0.0
    %539 = vmatpush1.msra.mxu0 %v448
    %540 = vmatprep.subr.mxu0 0.0
    %541 = vmatpush1.msra.mxu0 0.0
    %542 = vmatprep.subr.mxu0 0.0
    %543 = vmatpush1.msra.mxu0 0.0
    %544 = vmatprep.subr.mxu0 0.0
    %545 = vmatpush1.msra.mxu0 0.0
    %546 = vmatprep.subr.mxu0 0.0
    %547 = vmatpush1.msra.mxu0 0.0
    %548 = vmatprep.subr.mxu0 0.0
    %549 = vmatpush1.msra.mxu0 0.0
    %550 = vmatprep.subr.mxu0 0.0
    %551 = vmatpush1.msra.mxu0 0.0
    %552 = vmatprep.subr.mxu0 0.0
    %553 = vmatpush1.msra.mxu0 0.0
    %554 = vmatprep.subr.mxu0 0.0
    %555 = vmatpush1.msra.mxu0 0.0
    %556 = vmatprep.subr.mxu0 0.0
    %557 = vmatpush1.msra.mxu0 0.0
    %558 = vmatprep.subr.mxu0 0.0
    %559 = vmatpush1.msra.mxu0 0.0
    %560 = vmatprep.subr.mxu0 0.0
    %561 = vmatpush1.msra.mxu0 0.0
    %562 = vmatprep.subr.mxu0 0.0
    %563 = vmatpush1.msra.mxu0 0.0
    %564 = vmatprep.subr.mxu0 0.0
    %565 = vmatpush1.msra.mxu0 0.0
    %566 = vmatprep.subr.mxu0 0.0
    %567 = vmatpush1.msra.mxu0 0.0
    %568 = vmatprep.subr.mxu0 0.0
    %569 = vmatpush1.msra.mxu0 0.0
    %570 = vmatprep.subr.mxu0 0.0
    %571 = vmatpush1.msra.mxu0 0.0
    %572 = vmatprep.subr.mxu0 0.0
    %573 = vmatpush1.msra.mxu0 0.0
    %574 = vmatprep.subr.mxu0 0.0
    %575 = vmatpush1.msra.mxu0 0.0
    %576 = vmatprep.subr.mxu0 0.0
    %577 = vmatpush1.msra.mxu0 0.0
    %578 = vmatprep.subr.mxu0 0.0
    %579 = vmatpush1.msra.mxu0 0.0
    %580 = vmatprep.subr.mxu0 0.0
    %581 = vmatpush1.msra.mxu0 0.0
    %582 = vmatprep.subr.mxu0 0.0
    %583 = vmatpush1.msra.mxu0 0.0
    %584 = vmatprep.subr.mxu0 0.0
    %585 = vmatpush1.msra.mxu0 0.0
    %586 = vmatprep.subr.mxu0 0.0
    %587 = vmatpush1.msra.mxu0 0.0
    %588 = vmatprep.subr.mxu0 0.0
    %589 = vmatpush1.msra.mxu0 0.0
    %590 = vmatprep.subr.mxu0 0.0
    %591 = vmatpush1.msra.mxu0 0.0
    %592 = vmatprep.subr.mxu0 0.0
    %593 = vmatpush1.msra.mxu0 0.0
    %594 = vmatprep.subr.mxu0 0.0
    %595 = vmatpush1.msra.mxu0 0.0
    %596 = vmatprep.mubr.f32.mxu0 0.0
    %597 = vmatmul.mubr.f32.gmra.mrb[0].mxu0 %v530
    %v598 = vpop.f32.mrb[0].mxu0
    %v599 = vadd.f32 0.0, %v598
    %v600 = vpop.f32.mrb[0].mxu0
    %601 = vdwg.mxu0
    %v602 = vlaneseq
    %v603 = vshrl.u32 %v602, 7
    %v604 = vsub.s32 0, %v603
    %v605 = vrot.slane %v599, %v604
    %v607 = vsel %vm450, %v444, 0
    %609 = vmatprep.subr.mxu0 0.0
    %610 = vmatpush1.msra.mxu0 %v524
    %611 = vmatprep.subr.mxu0 0.0
    %612 = vmatpush1.msra.mxu0 %v525
    %613 = vmatprep.subr.mxu0 0.0
    %614 = vmatpush1.msra.mxu0 %v526
    %615 = vmatprep.subr.mxu0 0.0
    %616 = vmatpush1.msra.mxu0 %v527
    %617 = vmatprep.subr.mxu0 0.0
    %618 = vmatpush1.msra.mxu0 0.0
    %619 = vmatprep.subr.mxu0 0.0
    %620 = vmatpush1.msra.mxu0 0.0
    %621 = vmatprep.subr.mxu0 0.0
    %622 = vmatpush1.msra.mxu0 0.0
    %623 = vmatprep.subr.mxu0 0.0
    %624 = vmatpush1.msra.mxu0 0.0
    %625 = vmatprep.subr.mxu0 0.0
    %626 = vmatpush1.msra.mxu0 0.0
    %627 = vmatprep.subr.mxu0 0.0
    %628 = vmatpush1.msra.mxu0 0.0
    %629 = vmatprep.subr.mxu0 0.0
    %630 = vmatpush1.msra.mxu0 0.0
    %631 = vmatprep.subr.mxu0 0.0
    %632 = vmatpush1.msra.mxu0 0.0
    %633 = vmatprep.subr.mxu0 0.0
    %634 = vmatpush1.msra.mxu0 0.0
    %635 = vmatprep.subr.mxu0 0.0
    %636 = vmatpush1.msra.mxu0 0.0
    %637 = vmatprep.subr.mxu0 0.0
    %638 = vmatpush1.msra.mxu0 0.0
    %639 = vmatprep.subr.mxu0 0.0
    %640 = vmatpush1.msra.mxu0 0.0
    %641 = vmatprep.subr.mxu0 0.0
    %642 = vmatpush1.msra.mxu0 0.0
    %643 = vmatprep.subr.mxu0 0.0
    %644 = vmatpush1.msra.mxu0 0.0
    %645 = vmatprep.subr.mxu0 0.0
    %646 = vmatpush1.msra.mxu0 0.0
    %647 = vmatprep.subr.mxu0 0.0
    %648 = vmatpush1.msra.mxu0 0.0
    %649 = vmatprep.subr.mxu0 0.0
    %650 = vmatpush1.msra.mxu0 0.0
    %651 = vmatprep.subr.mxu0 0.0
    %652 = vmatpush1.msra.mxu0 0.0
    %653 = vmatprep.subr.mxu0 0.0
    %654 = vmatpush1.msra.mxu0 0.0
    %655 = vmatprep.subr.mxu0 0.0
    %656 = vmatpush1.msra.mxu0 0.0
    %657 = vmatprep.subr.mxu0 0.0
    %658 = vmatpush1.msra.mxu0 0.0
    %659 = vmatprep.subr.mxu0 0.0
    %660 = vmatpush1.msra.mxu0 0.0
    %661 = vmatprep.subr.mxu0 0.0
    %662 = vmatpush1.msra.mxu0 0.0
    %663 = vmatprep.subr.mxu0 0.0
    %664 = vmatpush1.msra.mxu0 0.0
    %665 = vmatprep.subr.mxu0 0.0
    %666 = vmatpush1.msra.mxu0 0.0
    %667 = vmatprep.subr.mxu0 0.0
    %668 = vmatpush1.msra.mxu0 0.0
    %669 = vmatprep.subr.mxu0 0.0
    %670 = vmatpush1.msra.mxu0 0.0
    %671 = vmatprep.subr.mxu0 0.0
    %672 = vmatpush1.msra.mxu0 0.0
    %673 = vmatprep.mubr.f32.mxu0 0.0
    %674 = vmatmul.mubr.f32.gmra.mrb[0].mxu0 %v607
    %v675 = vpop.f32.mrb[0].mxu0
    %v676 = vadd.f32 %v605, %v675
    %v677 = vpop.f32.mrb[0].mxu0
    %678 = vdwg.mxu0
    %v679 = vld [vmem:[%s19] sm:$0x1]
    %v681 = vlaneseq
    %v682 = vshrl.u32 %v681, 7
    %v683 = vsub.s32 0, %v682
    %v684 = vrot.slane %v679, %v683
    %v686 = vadd.f32 %v676, %v684
    %s687 = scalar_lea.vmem [#allocation10], 32
    %v688 = vld [vmem:[%s687] sm:$0xff]
    %v689 = vld [vmem:[%s687 + $0x8] sm:$0xff]
    %v690 = vld [vmem:[%s687 + $0x10] sm:$0xff]
    %v691 = vld [vmem:[%s687 + $0x18] sm:$0xff]
    %692 = vmatprep.subr.mxu0 0.0
    %693 = vmatpush1.msra.mxu0 %v688
    %694 = vmatprep.subr.mxu0 0.0
    %695 = vmatpush1.msra.mxu0 %v689
    %696 = vmatprep.subr.mxu0 0.0
    %697 = vmatpush1.msra.mxu0 %v690
    %698 = vmatprep.subr.mxu0 0.0
    %699 = vmatpush1.msra.mxu0 %v691
    %700 = vmatprep.subr.mxu0 0.0
    %701 = vmatpush1.msra.mxu0 0.0
    %702 = vmatprep.subr.mxu0 0.0
    %703 = vmatpush1.msra.mxu0 0.0
    %704 = vmatprep.subr.mxu0 0.0
    %705 = vmatpush1.msra.mxu0 0.0
    %706 = vmatprep.subr.mxu0 0.0
    %707 = vmatpush1.msra.mxu0 0.0
    %708 = vmatprep.subr.mxu0 0.0
    %709 = vmatpush1.msra.mxu0 0.0
    %710 = vmatprep.subr.mxu0 0.0
    %711 = vmatpush1.msra.mxu0 0.0
    %712 = vmatprep.subr.mxu0 0.0
    %713 = vmatpush1.msra.mxu0 0.0
    %714 = vmatprep.subr.mxu0 0.0
    %715 = vmatpush1.msra.mxu0 0.0
    %716 = vmatprep.subr.mxu0 0.0
    %717 = vmatpush1.msra.mxu0 0.0
    %718 = vmatprep.subr.mxu0 0.0
    %719 = vmatpush1.msra.mxu0 0.0
    %720 = vmatprep.subr.mxu0 0.0
    %721 = vmatpush1.msra.mxu0 0.0
    %722 = vmatprep.subr.mxu0 0.0
    %723 = vmatpush1.msra.mxu0 0.0
    %724 = vmatprep.subr.mxu0 0.0
    %725 = vmatpush1.msra.mxu0 0.0
    %726 = vmatprep.subr.mxu0 0.0
    %727 = vmatpush1.msra.mxu0 0.0
    %728 = vmatprep.subr.mxu0 0.0
    %729 = vmatpush1.msra.mxu0 0.0
    %730 = vmatprep.subr.mxu0 0.0
    %731 = vmatpush1.msra.mxu0 0.0
    %732 = vmatprep.subr.mxu0 0.0
    %733 = vmatpush1.msra.mxu0 0.0
    %734 = vmatprep.subr.mxu0 0.0
    %735 = vmatpush1.msra.mxu0 0.0
    %736 = vmatprep.subr.mxu0 0.0
    %737 = vmatpush1.msra.mxu0 0.0
    %738 = vmatprep.subr.mxu0 0.0
    %739 = vmatpush1.msra.mxu0 0.0
    %740 = vmatprep.subr.mxu0 0.0
    %741 = vmatpush1.msra.mxu0 0.0
    %742 = vmatprep.subr.mxu0 0.0
    %743 = vmatpush1.msra.mxu0 0.0
    %744 = vmatprep.subr.mxu0 0.0
    %745 = vmatpush1.msra.mxu0 0.0
    %746 = vmatprep.subr.mxu0 0.0
    %747 = vmatpush1.msra.mxu0 0.0
    %748 = vmatprep.subr.mxu0 0.0
    %749 = vmatpush1.msra.mxu0 0.0
    %750 = vmatprep.subr.mxu0 0.0
    %751 = vmatpush1.msra.mxu0 0.0
    %752 = vmatprep.subr.mxu0 0.0
    %753 = vmatpush1.msra.mxu0 0.0
    %754 = vmatprep.subr.mxu0 0.0
    %755 = vmatpush1.msra.mxu0 0.0
    %756 = vmatprep.mubr.f32.mxu0 0.0
    %757 = vmatmul.mubr.f32.gmra.mrb[0].mxu0 %v452
    %v758 = vpop.f32.mrb[0].mxu0
    %v759 = vadd.f32 0.0, %v758
    %v760 = vpop.f32.mrb[0].mxu0
    %761 = vdwg.mxu0
    %s762 = scalar_lea.vmem [#allocation9], 32
    %v763 = vld [vmem:[%s762] sm:$0xff]
    %v764 = vld [vmem:[%s762 + $0x8] sm:$0xff]
    %v765 = vld [vmem:[%s762 + $0x10] sm:$0xff]
    %v766 = vld [vmem:[%s762 + $0x18] sm:$0xff]
    %767 = vmatprep.subr.mxu0 0.0
    %768 = vmatpush1.msra.mxu0 %v688
    %769 = vmatprep.subr.mxu0 0.0
    %770 = vmatpush1.msra.mxu0 %v689
    %771 = vmatprep.subr.mxu0 0.0
    %772 = vmatpush1.msra.mxu0 %v690
    %773 = vmatprep.subr.mxu0 0.0
    %774 = vmatpush1.msra.mxu0 %v691
    %775 = vmatprep.subr.mxu0 0.0
    %776 = vmatpush1.msra.mxu0 0.0
    %777 = vmatprep.subr.mxu0 0.0
    %778 = vmatpush1.msra.mxu0 0.0
    %779 = vmatprep.subr.mxu0 0.0
    %780 = vmatpush1.msra.mxu0 0.0
    %781 = vmatprep.subr.mxu0 0.0
    %782 = vmatpush1.msra.mxu0 0.0
    %783 = vmatprep.subr.mxu0 0.0
    %784 = vmatpush1.msra.mxu0 0.0
    %785 = vmatprep.subr.mxu0 0.0
    %786 = vmatpush1.msra.mxu0 0.0
    %787 = vmatprep.subr.mxu0 0.0
    %788 = vmatpush1.msra.mxu0 0.0
    %789 = vmatprep.subr.mxu0 0.0
    %790 = vmatpush1.msra.mxu0 0.0
    %791 = vmatprep.subr.mxu0 0.0
    %792 = vmatpush1.msra.mxu0 0.0
    %793 = vmatprep.subr.mxu0 0.0
    %794 = vmatpush1.msra.mxu0 0.0
    %795 = vmatprep.subr.mxu0 0.0
    %796 = vmatpush1.msra.mxu0 0.0
    %797 = vmatprep.subr.mxu0 0.0
    %798 = vmatpush1.msra.mxu0 0.0
    %799 = vmatprep.subr.mxu0 0.0
    %800 = vmatpush1.msra.mxu0 0.0
    %801 = vmatprep.subr.mxu0 0.0
    %802 = vmatpush1.msra.mxu0 0.0
    %803 = vmatprep.subr.mxu0 0.0
    %804 = vmatpush1.msra.mxu0 0.0
    %805 = vmatprep.subr.mxu0 0.0
    %806 = vmatpush1.msra.mxu0 0.0
    %807 = vmatprep.subr.mxu0 0.0
    %808 = vmatpush1.msra.mxu0 0.0
    %809 = vmatprep.subr.mxu0 0.0
    %810 = vmatpush1.msra.mxu0 0.0
    %811 = vmatprep.subr.mxu0 0.0
    %812 = vmatpush1.msra.mxu0 0.0
    %813 = vmatprep.subr.mxu0 0.0
    %814 = vmatpush1.msra.mxu0 0.0
    %815 = vmatprep.subr.mxu0 0.0
    %816 = vmatpush1.msra.mxu0 0.0
    %817 = vmatprep.subr.mxu0 0.0
    %818 = vmatpush1.msra.mxu0 0.0
    %819 = vmatprep.subr.mxu0 0.0
    %820 = vmatpush1.msra.mxu0 0.0
    %821 = vmatprep.subr.mxu0 0.0
    %822 = vmatpush1.msra.mxu0 0.0
    %823 = vmatprep.subr.mxu0 0.0
    %824 = vmatpush1.msra.mxu0 0.0
    %825 = vmatprep.subr.mxu0 0.0
    %826 = vmatpush1.msra.mxu0 0.0
    %827 = vmatprep.subr.mxu0 0.0
    %828 = vmatpush1.msra.mxu0 0.0
    %829 = vmatprep.subr.mxu0 0.0
    %830 = vmatpush1.msra.mxu0 0.0
    %831 = vmatprep.mubr.f32.mxu0 0.0
    %832 = vmatmul.mubr.f32.gmra.mrb[0].mxu0 %v530
    %v833 = vpop.f32.mrb[0].mxu0
    %v834 = vadd.f32 0.0, %v833
    %v835 = vpop.f32.mrb[0].mxu0
    %836 = vdwg.mxu0
    %v837 = vlaneseq
    %v838 = vshrl.u32 %v837, 7
    %v839 = vsub.s32 0, %v838
    %v840 = vrot.slane %v834, %v839
    %841 = vmatprep.subr.mxu0 0.0
    %842 = vmatpush1.msra.mxu0 %v763
    %843 = vmatprep.subr.mxu0 0.0
    %844 = vmatpush1.msra.mxu0 %v764
    %845 = vmatprep.subr.mxu0 0.0
    %846 = vmatpush1.msra.mxu0 %v765
    %847 = vmatprep.subr.mxu0 0.0
    %848 = vmatpush1.msra.mxu0 %v766
    %849 = vmatprep.subr.mxu0 0.0
    %850 = vmatpush1.msra.mxu0 0.0
    %851 = vmatprep.subr.mxu0 0.0
    %852 = vmatpush1.msra.mxu0 0.0
    %853 = vmatprep.subr.mxu0 0.0
    %854 = vmatpush1.msra.mxu0 0.0
    %855 = vmatprep.subr.mxu0 0.0
    %856 = vmatpush1.msra.mxu0 0.0
    %857 = vmatprep.subr.mxu0 0.0
    %858 = vmatpush1.msra.mxu0 0.0
    %859 = vmatprep.subr.mxu0 0.0
    %860 = vmatpush1.msra.mxu0 0.0
    %861 = vmatprep.subr.mxu0 0.0
    %862 = vmatpush1.msra.mxu0 0.0
    %863 = vmatprep.subr.mxu0 0.0
    %864 = vmatpush1.msra.mxu0 0.0
    %865 = vmatprep.subr.mxu0 0.0
    %866 = vmatpush1.msra.mxu0 0.0
    %867 = vmatprep.subr.mxu0 0.0
    %868 = vmatpush1.msra.mxu0 0.0
    %869 = vmatprep.subr.mxu0 0.0
    %870 = vmatpush1.msra.mxu0 0.0
    %871 = vmatprep.subr.mxu0 0.0
    %872 = vmatpush1.msra.mxu0 0.0
    %873 = vmatprep.subr.mxu0 0.0
    %874 = vmatpush1.msra.mxu0 0.0
    %875 = vmatprep.subr.mxu0 0.0
    %876 = vmatpush1.msra.mxu0 0.0
    %877 = vmatprep.subr.mxu0 0.0
    %878 = vmatpush1.msra.mxu0 0.0
    %879 = vmatprep.subr.mxu0 0.0
    %880 = vmatpush1.msra.mxu0 0.0
    %881 = vmatprep.subr.mxu0 0.0
    %882 = vmatpush1.msra.mxu0 0.0
    %883 = vmatprep.subr.mxu0 0.0
    %884 = vmatpush1.msra.mxu0 0.0
    %885 = vmatprep.subr.mxu0 0.0
    %886 = vmatpush1.msra.mxu0 0.0
    %887 = vmatprep.subr.mxu0 0.0
    %888 = vmatpush1.msra.mxu0 0.0
    %889 = vmatprep.subr.mxu0 0.0
    %890 = vmatpush1.msra.mxu0 0.0
    %891 = vmatprep.subr.mxu0 0.0
    %892 = vmatpush1.msra.mxu0 0.0
    %893 = vmatprep.subr.mxu0 0.0
    %894 = vmatpush1.msra.mxu0 0.0
    %895 = vmatprep.subr.mxu0 0.0
    %896 = vmatpush1.msra.mxu0 0.0
    %897 = vmatprep.subr.mxu0 0.0
    %898 = vmatpush1.msra.mxu0 0.0
    %899 = vmatprep.subr.mxu0 0.0
    %900 = vmatpush1.msra.mxu0 0.0
    %901 = vmatprep.subr.mxu0 0.0
    %902 = vmatpush1.msra.mxu0 0.0
    %903 = vmatprep.subr.mxu0 0.0
    %904 = vmatpush1.msra.mxu0 0.0
    %905 = vmatprep.mubr.f32.mxu0 0.0
    %906 = vmatmul.mubr.f32.gmra.mrb[0].mxu0 %v607
    %v907 = vpop.f32.mrb[0].mxu0
    %v908 = vadd.f32 %v840, %v907
    %v909 = vpop.f32.mrb[0].mxu0
    %910 = vdwg.mxu0
    %s911 = scalar_lea.vmem %s19, 1
    %v912 = vld [vmem:[%s911] sm:$0x1]
    %v914 = vlaneseq
    %v915 = vshrl.u32 %v914, 7
    %v916 = vsub.s32 0, %v915
    %v917 = vrot.slane %v912, %v916
    %v919 = vadd.f32 %v908, %v917
    %s920 = scalar_lea.vmem [#allocation10], 64
    %v921 = vld [vmem:[%s920] sm:$0xff]
    %v922 = vld [vmem:[%s920 + $0x8] sm:$0xff]
    %v923 = vld [vmem:[%s920 + $0x10] sm:$0xff]
    %v924 = vld [vmem:[%s920 + $0x18] sm:$0xff]
    %925 = vmatprep.subr.mxu0 0.0
    %926 = vmatpush1.msra.mxu0 %v921
    %927 = vmatprep.subr.mxu0 0.0
    %928 = vmatpush1.msra.mxu0 %v922
    %929 = vmatprep.subr.mxu0 0.0
    %930 = vmatpush1.msra.mxu0 %v923
    %931 = vmatprep.subr.mxu0 0.0
    %932 = vmatpush1.msra.mxu0 %v924
    %933 = vmatprep.subr.mxu0 0.0
    %934 = vmatpush1.msra.mxu0 0.0
    %935 = vmatprep.subr.mxu0 0.0
    %936 = vmatpush1.msra.mxu0 0.0
    %937 = vmatprep.subr.mxu0 0.0
    %938 = vmatpush1.msra.mxu0 0.0
    %939 = vmatprep.subr.mxu0 0.0
    %940 = vmatpush1.msra.mxu0 0.0
    %941 = vmatprep.subr.mxu0 0.0
    %942 = vmatpush1.msra.mxu0 0.0
    %943 = vmatprep.subr.mxu0 0.0
    %944 = vmatpush1.msra.mxu0 0.0
    %945 = vmatprep.subr.mxu0 0.0
    %946 = vmatpush1.msra.mxu0 0.0
    %947 = vmatprep.subr.mxu0 0.0
    %948 = vmatpush1.msra.mxu0 0.0
    %949 = vmatprep.subr.mxu0 0.0
    %950 = vmatpush1.msra.mxu0 0.0
    %951 = vmatprep.subr.mxu0 0.0
    %952 = vmatpush1.msra.mxu0 0.0
    %953 = vmatprep.subr.mxu0 0.0
    %954 = vmatpush1.msra.mxu0 0.0
    %955 = vmatprep.subr.mxu0 0.0
    %956 = vmatpush1.msra.mxu0 0.0
    %957 = vmatprep.subr.mxu0 0.0
    %958 = vmatpush1.msra.mxu0 0.0
    %959 = vmatprep.subr.mxu0 0.0
    %960 = vmatpush1.msra.mxu0 0.0
    %961 = vmatprep.subr.mxu0 0.0
    %962 = vmatpush1.msra.mxu0 0.0
    %963 = vmatprep.subr.mxu0 0.0
    %964 = vmatpush1.msra.mxu0 0.0
    %965 = vmatprep.subr.mxu0 0.0
    %966 = vmatpush1.msra.mxu0 0.0
    %967 = vmatprep.subr.mxu0 0.0
    %968 = vmatpush1.msra.mxu0 0.0
    %969 = vmatprep.subr.mxu0 0.0
    %970 = vmatpush1.msra.mxu0 0.0
    %971 = vmatprep.subr.mxu0 0.0
    %972 = vmatpush1.msra.mxu0 0.0
    %973 = vmatprep.subr.mxu0 0.0
    %974 = vmatpush1.msra.mxu0 0.0
    %975 = vmatprep.subr.mxu0 0.0
    %976 = vmatpush1.msra.mxu0 0.0
    %977 = vmatprep.subr.mxu0 0.0
    %978 = vmatpush1.msra.mxu0 0.0
    %979 = vmatprep.subr.mxu0 0.0
    %980 = vmatpush1.msra.mxu0 0.0
    %981 = vmatprep.subr.mxu0 0.0
    %982 = vmatpush1.msra.mxu0 0.0
    %983 = vmatprep.subr.mxu0 0.0
    %984 = vmatpush1.msra.mxu0 0.0
    %985 = vmatprep.subr.mxu0 0.0
    %986 = vmatpush1.msra.mxu0 0.0
    %987 = vmatprep.subr.mxu0 0.0
    %988 = vmatpush1.msra.mxu0 0.0
    %989 = vmatprep.mubr.f32.mxu0 0.0
    %990 = vmatmul.mubr.f32.gmra.mrb[0].mxu0 %v452
    %v991 = vpop.f32.mrb[0].mxu0
    %v992 = vadd.f32 0.0, %v991
    %v993 = vpop.f32.mrb[0].mxu0
    %994 = vdwg.mxu0
    %s995 = scalar_lea.vmem [#allocation9], 64
    %v996 = vld [vmem:[%s995] sm:$0xff]
    %v997 = vld [vmem:[%s995 + $0x8] sm:$0xff]
    %v998 = vld [vmem:[%s995 + $0x10] sm:$0xff]
    %v999 = vld [vmem:[%s995 + $0x18] sm:$0xff]
    %1000 = vmatprep.subr.mxu0 0.0
    %1001 = vmatpush1.msra.mxu0 %v921
    %1002 = vmatprep.subr.mxu0 0.0
    %1003 = vmatpush1.msra.mxu0 %v922
    %1004 = vmatprep.subr.mxu0 0.0
    %1005 = vmatpush1.msra.mxu0 %v923
    %1006 = vmatprep.subr.mxu0 0.0
    %1007 = vmatpush1.msra.mxu0 %v924
    %1008 = vmatprep.subr.mxu0 0.0
    %1009 = vmatpush1.msra.mxu0 0.0
    %1010 = vmatprep.subr.mxu0 0.0
    %1011 = vmatpush1.msra.mxu0 0.0
    %1012 = vmatprep.subr.mxu0 0.0
    %1013 = vmatpush1.msra.mxu0 0.0
    %1014 = vmatprep.subr.mxu0 0.0
    %1015 = vmatpush1.msra.mxu0 0.0
    %1016 = vmatprep.subr.mxu0 0.0
    %1017 = vmatpush1.msra.mxu0 0.0
    %1018 = vmatprep.subr.mxu0 0.0
    %1019 = vmatpush1.msra.mxu0 0.0
    %1020 = vmatprep.subr.mxu0 0.0
    %1021 = vmatpush1.msra.mxu0 0.0
    %1022 = vmatprep.subr.mxu0 0.0
    %1023 = vmatpush1.msra.mxu0 0.0
    %1024 = vmatprep.subr.mxu0 0.0
    %1025 = vmatpush1.msra.mxu0 0.0
    %1026 = vmatprep.subr.mxu0 0.0
    %1027 = vmatpush1.msra.mxu0 0.0
    %1028 = vmatprep.subr.mxu0 0.0
    %1029 = vmatpush1.msra.mxu0 0.0
    %1030 = vmatprep.subr.mxu0 0.0
    %1031 = vmatpush1.msra.mxu0 0.0
    %1032 = vmatprep.subr.mxu0 0.0
    %1033 = vmatpush1.msra.mxu0 0.0
    %1034 = vmatprep.subr.mxu0 0.0
    %1035 = vmatpush1.msra.mxu0 0.0
    %1036 = vmatprep.subr.mxu0 0.0
    %1037 = vmatpush1.msra.mxu0 0.0
    %1038 = vmatprep.subr.mxu0 0.0
    %1039 = vmatpush1.msra.mxu0 0.0
    %1040 = vmatprep.subr.mxu0 0.0
    %1041 = vmatpush1.msra.mxu0 0.0
    %1042 = vmatprep.subr.mxu0 0.0
    %1043 = vmatpush1.msra.mxu0 0.0
    %1044 = vmatprep.subr.mxu0 0.0
    %1045 = vmatpush1.msra.mxu0 0.0
    %1046 = vmatprep.subr.mxu0 0.0
    %1047 = vmatpush1.msra.mxu0 0.0
    %1048 = vmatprep.subr.mxu0 0.0
    %1049 = vmatpush1.msra.mxu0 0.0
    %1050 = vmatprep.subr.mxu0 0.0
    %1051 = vmatpush1.msra.mxu0 0.0
    %1052 = vmatprep.subr.mxu0 0.0
    %1053 = vmatpush1.msra.mxu0 0.0
    %1054 = vmatprep.subr.mxu0 0.0
    %1055 = vmatpush1.msra.mxu0 0.0
    %1056 = vmatprep.subr.mxu0 0.0
    %1057 = vmatpush1.msra.mxu0 0.0
    %1058 = vmatprep.subr.mxu0 0.0
    %1059 = vmatpush1.msra.mxu0 0.0
    %1060 = vmatprep.subr.mxu0 0.0
    %1061 = vmatpush1.msra.mxu0 0.0
    %1062 = vmatprep.subr.mxu0 0.0
    %1063 = vmatpush1.msra.mxu0 0.0
    %1064 = vmatprep.mubr.f32.mxu0 0.0
    %1065 = vmatmul.mubr.f32.gmra.mrb[0].mxu0 %v530
    %v1066 = vpop.f32.mrb[0].mxu0
    %v1067 = vadd.f32 0.0, %v1066
    %v1068 = vpop.f32.mrb[0].mxu0
    %1069 = vdwg.mxu0
    %v1070 = vlaneseq
    %v1071 = vshrl.u32 %v1070, 7
    %v1072 = vsub.s32 0, %v1071
    %v1073 = vrot.slane %v1067, %v1072
    %1074 = vmatprep.subr.mxu0 0.0
    %1075 = vmatpush1.msra.mxu0 %v996
    %1076 = vmatprep.subr.mxu0 0.0
    %1077 = vmatpush1.msra.mxu0 %v997
    %1078 = vmatprep.subr.mxu0 0.0
    %1079 = vmatpush1.msra.mxu0 %v998
    %1080 = vmatprep.subr.mxu0 0.0
    %1081 = vmatpush1.msra.mxu0 %v999
    %1082 = vmatprep.subr.mxu0 0.0
    %1083 = vmatpush1.msra.mxu0 0.0
    %1084 = vmatprep.subr.mxu0 0.0
    %1085 = vmatpush1.msra.mxu0 0.0
    %1086 = vmatprep.subr.mxu0 0.0
    %1087 = vmatpush1.msra.mxu0 0.0
    %1088 = vmatprep.subr.mxu0 0.0
    %1089 = vmatpush1.msra.mxu0 0.0
    %1090 = vmatprep.subr.mxu0 0.0
    %1091 = vmatpush1.msra.mxu0 0.0
    %1092 = vmatprep.subr.mxu0 0.0
    %1093 = vmatpush1.msra.mxu0 0.0
    %1094 = vmatprep.subr.mxu0 0.0
    %1095 = vmatpush1.msra.mxu0 0.0
    %1096 = vmatprep.subr.mxu0 0.0
    %1097 = vmatpush1.msra.mxu0 0.0
    %1098 = vmatprep.subr.mxu0 0.0
    %1099 = vmatpush1.msra.mxu0 0.0
    %1100 = vmatprep.subr.mxu0 0.0
    %1101 = vmatpush1.msra.mxu0 0.0
    %1102 = vmatprep.subr.mxu0 0.0
    %1103 = vmatpush1.msra.mxu0 0.0
    %1104 = vmatprep.subr.mxu0 0.0
    %1105 = vmatpush1.msra.mxu0 0.0
    %1106 = vmatprep.subr.mxu0 0.0
    %1107 = vmatpush1.msra.mxu0 0.0
    %1108 = vmatprep.subr.mxu0 0.0
    %1109 = vmatpush1.msra.mxu0 0.0
    %1110 = vmatprep.subr.mxu0 0.0
    %1111 = vmatpush1.msra.mxu0 0.0
    %1112 = vmatprep.subr.mxu0 0.0
    %1113 = vmatpush1.msra.mxu0 0.0
    %1114 = vmatprep.subr.mxu0 0.0
    %1115 = vmatpush1.msra.mxu0 0.0
    %1116 = vmatprep.subr.mxu0 0.0
    %1117 = vmatpush1.msra.mxu0 0.0
    %1118 = vmatprep.subr.mxu0 0.0
    %1119 = vmatpush1.msra.mxu0 0.0
    %1120 = vmatprep.subr.mxu0 0.0
    %1121 = vmatpush1.msra.mxu0 0.0
    %1122 = vmatprep.subr.mxu0 0.0
    %1123 = vmatpush1.msra.mxu0 0.0
    %1124 = vmatprep.subr.mxu0 0.0
    %1125 = vmatpush1.msra.mxu0 0.0
    %1126 = vmatprep.subr.mxu0 0.0
    %1127 = vmatpush1.msra.mxu0 0.0
    %1128 = vmatprep.subr.mxu0 0.0
    %1129 = vmatpush1.msra.mxu0 0.0
    %1130 = vmatprep.subr.mxu0 0.0
    %1131 = vmatpush1.msra.mxu0 0.0
    %1132 = vmatprep.subr.mxu0 0.0
    %1133 = vmatpush1.msra.mxu0 0.0
    %1134 = vmatprep.subr.mxu0 0.0
    %1135 = vmatpush1.msra.mxu0 0.0
    %1136 = vmatprep.subr.mxu0 0.0
    %1137 = vmatpush1.msra.mxu0 0.0
    %1138 = vmatprep.mubr.f32.mxu0 0.0
    %1139 = vmatmul.mubr.f32.gmra.mrb[0].mxu0 %v607
    %v1140 = vpop.f32.mrb[0].mxu0
    %v1141 = vadd.f32 %v1073, %v1140
    %v1142 = vpop.f32.mrb[0].mxu0
    %1143 = vdwg.mxu0
    %s1144 = scalar_lea.vmem %s19, 2
    %v1145 = vld [vmem:[%s1144] sm:$0x1]
    %v1147 = vlaneseq
    %v1148 = vshrl.u32 %v1147, 7
    %v1149 = vsub.s32 0, %v1148
    %v1150 = vrot.slane %v1145, %v1149
    %v1152 = vadd.f32 %v1141, %v1150
    %v1153 = vld [vmem:[#allocation24] sm:$0xff]
    %v1154 = vld [vmem:[#allocation24 + $0x8] sm:$0xff]
    %v1155 = vld [vmem:[#allocation25] sm:$0x1]
    %v1157 = vlaneseq
    %v1158 = vshrl.u32 %v1157, 7
    %v1159 = vsub.s32 0, %v1158
    %v1160 = vrot.slane %v1155, %v1159
    %1162 = vmatprep.subr.mxu0 0.0
    %1163 = vmatpush1.msra.mxu0 %v1153
    %1164 = vmatprep.subr.mxu0 0.0
    %1165 = vmatpush1.msra.mxu0 %v1154
    %1166 = vmatprep.subr.mxu0 0.0
    %1167 = vmatpush1.msra.mxu0 0.0
    %1168 = vmatprep.subr.mxu0 0.0
    %1169 = vmatpush1.msra.mxu0 0.0
    %1170 = vmatprep.subr.mxu0 0.0
    %1171 = vmatpush1.msra.mxu0 0.0
    %1172 = vmatprep.subr.mxu0 0.0
    %1173 = vmatpush1.msra.mxu0 0.0
    %1174 = vmatprep.subr.mxu0 0.0
    %1175 = vmatpush1.msra.mxu0 0.0
    %1176 = vmatprep.subr.mxu0 0.0
    %1177 = vmatpush1.msra.mxu0 0.0
    %1178 = vmatprep.subr.mxu0 0.0
    %1179 = vmatpush1.msra.mxu0 0.0
    %1180 = vmatprep.subr.mxu0 0.0
    %1181 = vmatpush1.msra.mxu0 0.0
    %1182 = vmatprep.subr.mxu0 0.0
    %1183 = vmatpush1.msra.mxu0 0.0
    %1184 = vmatprep.subr.mxu0 0.0
    %1185 = vmatpush1.msra.mxu0 0.0
    %1186 = vmatprep.subr.mxu0 0.0
    %1187 = vmatpush1.msra.mxu0 0.0
    %1188 = vmatprep.subr.mxu0 0.0
    %1189 = vmatpush1.msra.mxu0 0.0
    %1190 = vmatprep.subr.mxu0 0.0
    %1191 = vmatpush1.msra.mxu0 0.0
    %1192 = vmatprep.subr.mxu0 0.0
    %1193 = vmatpush1.msra.mxu0 0.0
    %1194 = vmatprep.subr.mxu0 0.0
    %1195 = vmatpush1.msra.mxu0 0.0
    %1196 = vmatprep.subr.mxu0 0.0
    %1197 = vmatpush1.msra.mxu0 0.0
    %1198 = vmatprep.subr.mxu0 0.0
    %1199 = vmatpush1.msra.mxu0 0.0
    %1200 = vmatprep.subr.mxu0 0.0
    %1201 = vmatpush1.msra.mxu0 0.0
    %1202 = vmatprep.subr.mxu0 0.0
    %1203 = vmatpush1.msra.mxu0 0.0
    %1204 = vmatprep.subr.mxu0 0.0
    %1205 = vmatpush1.msra.mxu0 0.0
    %1206 = vmatprep.subr.mxu0 0.0
    %1207 = vmatpush1.msra.mxu0 0.0
    %1208 = vmatprep.subr.mxu0 0.0
    %1209 = vmatpush1.msra.mxu0 0.0
    %1210 = vmatprep.subr.mxu0 0.0
    %1211 = vmatpush1.msra.mxu0 0.0
    %1212 = vmatprep.subr.mxu0 0.0
    %1213 = vmatpush1.msra.mxu0 0.0
    %1214 = vmatprep.subr.mxu0 0.0
    %1215 = vmatpush1.msra.mxu0 0.0
    %1216 = vmatprep.subr.mxu0 0.0
    %1217 = vmatpush1.msra.mxu0 0.0
    %1218 = vmatprep.subr.mxu0 0.0
    %1219 = vmatpush1.msra.mxu0 0.0
    %1220 = vmatprep.subr.mxu0 0.0
    %1221 = vmatpush1.msra.mxu0 0.0
    %1222 = vmatprep.subr.mxu0 0.0
    %1223 = vmatpush1.msra.mxu0 0.0
    %1224 = vmatprep.subr.mxu0 0.0
    %1225 = vmatpush1.msra.mxu0 0.0
    %1226 = vmatprep.mubr.f32.mxu0 0.0
    %1227 = vmatmul.mubr.f32.gmra.mrb[0].mxu0 %v372
    %v1228 = vpop.f32.mrb[0].mxu0
    %v1229 = vadd.f32 %v1160, %v1228
    %v1230 = vpop.f32.mrb[0].mxu0
    %1231 = vdwg.mxu0
    %v1232 = vld [vmem:[%s3] sm:$0xff]
    %v1233 = vadd.f32 %v1232, 1.0
    %1235 = vrot.lane.b32.xlu0 %v1233, 123
    %v1236 = vpop.permute.xlu0 %1235
    %vm1238 = vcmask 7168
    %1239 = vst.msk [vmem:[%s57] sm:$0xff] %vm1238, %v1236
    %v1240 = vld [vmem:[%s41] sm:$0xf]
    %v1241 = vlaneseq
    %v1242 = vshrl.u32 %v1241, 7
    %v1243 = vsub.s32 0, %v1242
    %v1244 = vrot.slane %v1229, %v1243
    %vm1245 = vcmask 31744
    %v1247 = vsel %vm1245, %v1232, 0
    %vm1249 = vcmask 1043456
    %v1251 = vsel %vm1249, %v1240, 0
    %1253 = vmatprep.subr.mxu0 0.0
    %1254 = vmatpush1.msra.mxu0 %v1251
    %1255 = vmatprep.subr.mxu0 0.0
    %1256 = vmatpush1.msra.mxu0 0.0
    %1257 = vmatprep.subr.mxu0 0.0
    %1258 = vmatpush1.msra.mxu0 0.0
    %1259 = vmatprep.subr.mxu0 0.0
    %1260 = vmatpush1.msra.mxu0 0.0
    %1261 = vmatprep.subr.mxu0 0.0
    %1262 = vmatpush1.msra.mxu0 0.0
    %1263 = vmatprep.subr.mxu0 0.0
    %1264 = vmatpush1.msra.mxu0 0.0
    %1265 = vmatprep.subr.mxu0 0.0
    %1266 = vmatpush1.msra.mxu0 0.0
    %1267 = vmatprep.subr.mxu0 0.0
    %1268 = vmatpush1.msra.mxu0 0.0
    %1269 = vmatprep.subr.mxu0 0.0
    %1270 = vmatpush1.msra.mxu0 0.0
    %1271 = vmatprep.subr.mxu0 0.0
    %1272 = vmatpush1.msra.mxu0 0.0
    %1273 = vmatprep.subr.mxu0 0.0
    %1274 = vmatpush1.msra.mxu0 0.0
    %1275 = vmatprep.subr.mxu0 0.0
    %1276 = vmatpush1.msra.mxu0 0.0
    %1277 = vmatprep.subr.mxu0 0.0
    %1278 = vmatpush1.msra.mxu0 0.0
    %1279 = vmatprep.subr.mxu0 0.0
    %1280 = vmatpush1.msra.mxu0 0.0
    %1281 = vmatprep.subr.mxu0 0.0
    %1282 = vmatpush1.msra.mxu0 0.0
    %1283 = vmatprep.subr.mxu0 0.0
    %1284 = vmatpush1.msra.mxu0 0.0
    %1285 = vmatprep.subr.mxu0 0.0
    %1286 = vmatpush1.msra.mxu0 0.0
    %1287 = vmatprep.subr.mxu0 0.0
    %1288 = vmatpush1.msra.mxu0 0.0
    %1289 = vmatprep.subr.mxu0 0.0
    %1290 = vmatpush1.msra.mxu0 0.0
    %1291 = vmatprep.subr.mxu0 0.0
    %1292 = vmatpush1.msra.mxu0 0.0
    %1293 = vmatprep.subr.mxu0 0.0
    %1294 = vmatpush1.msra.mxu0 0.0
    %1295 = vmatprep.subr.mxu0 0.0
    %1296 = vmatpush1.msra.mxu0 0.0
    %1297 = vmatprep.subr.mxu0 0.0
    %1298 = vmatpush1.msra.mxu0 0.0
    %1299 = vmatprep.subr.mxu0 0.0
    %1300 = vmatpush1.msra.mxu0 0.0
    %1301 = vmatprep.subr.mxu0 0.0
    %1302 = vmatpush1.msra.mxu0 0.0
    %1303 = vmatprep.subr.mxu0 0.0
    %1304 = vmatpush1.msra.mxu0 0.0
    %1305 = vmatprep.subr.mxu0 0.0
    %1306 = vmatpush1.msra.mxu0 0.0
    %1307 = vmatprep.subr.mxu0 0.0
    %1308 = vmatpush1.msra.mxu0 0.0
    %1309 = vmatprep.subr.mxu0 0.0
    %1310 = vmatpush1.msra.mxu0 0.0
    %1311 = vmatprep.subr.mxu0 0.0
    %1312 = vmatpush1.msra.mxu0 0.0
    %1313 = vmatprep.subr.mxu0 0.0
    %1314 = vmatpush1.msra.mxu0 0.0
    %1315 = vmatprep.subr.mxu0 0.0
    %1316 = vmatpush1.msra.mxu0 0.0
    %1317 = vmatprep.mubr.f32.mxu0 0.0
    %1318 = vmatmul.mubr.f32.gmra.mrb[0].mxu0 %v1247
    %v1319 = vpop.f32.mrb[0].mxu0
    %v1320 = vadd.f32 %v1244, %v1319
    %v1321 = vpop.f32.mrb[0].mxu0
    %1322 = vdwg.mxu0
    %vm1323 = vcmp.gt.f32.partialorder %v1320, 0.0
    %v1324 = vmin.f32 %v1320, 0.0
    %v1325 = vmul.f32 %v1324, 1.442695
    %v1326 = vpow.pop %v1325
    %v1327 = vsub.f32 %v1326, 1.0
    %v1328 = vsel %vm1323, %v1320, %v1327
    %v1329 = vld [vmem:[#allocation27] sm:$0xff]
    %v1330 = vld [vmem:[#allocation27 + $0x8] sm:$0xff]
    %v1331 = vld [vmem:[#allocation27 + $0x10] sm:$0xff]
    %v1332 = vld [vmem:[#allocation27 + $0x18] sm:$0xff]
    %v1333 = vld [vmem:[#allocation28] sm:$0x1]
    %v1335 = vlaneseq
    %v1336 = vshrl.u32 %v1335, 7
    %v1337 = vsub.s32 0, %v1336
    %v1338 = vrot.slane %v1333, %v1337
    %v1341 = vsel %vm450, %v1328, 0
    %1343 = vmatprep.subr.mxu0 0.0
    %1344 = vmatpush1.msra.mxu0 %v1329
    %1345 = vmatprep.subr.mxu0 0.0
    %1346 = vmatpush1.msra.mxu0 %v1330
    %1347 = vmatprep.subr.mxu0 0.0
    %1348 = vmatpush1.msra.mxu0 %v1331
    %1349 = vmatprep.subr.mxu0 0.0
    %1350 = vmatpush1.msra.mxu0 %v1332
    %1351 = vmatprep.subr.mxu0 0.0
    %1352 = vmatpush1.msra.mxu0 0.0
    %1353 = vmatprep.subr.mxu0 0.0
    %1354 = vmatpush1.msra.mxu0 0.0
    %1355 = vmatprep.subr.mxu0 0.0
    %1356 = vmatpush1.msra.mxu0 0.0
    %1357 = vmatprep.subr.mxu0 0.0
    %1358 = vmatpush1.msra.mxu0 0.0
    %1359 = vmatprep.subr.mxu0 0.0
    %1360 = vmatpush1.msra.mxu0 0.0
    %1361 = vmatprep.subr.mxu0 0.0
    %1362 = vmatpush1.msra.mxu0 0.0
    %1363 = vmatprep.subr.mxu0 0.0
    %1364 = vmatpush1.msra.mxu0 0.0
    %1365 = vmatprep.subr.mxu0 0.0
    %1366 = vmatpush1.msra.mxu0 0.0
    %1367 = vmatprep.subr.mxu0 0.0
    %1368 = vmatpush1.msra.mxu0 0.0
    %1369 = vmatprep.subr.mxu0 0.0
    %1370 = vmatpush1.msra.mxu0 0.0
    %1371 = vmatprep.subr.mxu0 0.0
    %1372 = vmatpush1.msra.mxu0 0.0
    %1373 = vmatprep.subr.mxu0 0.0
    %1374 = vmatpush1.msra.mxu0 0.0
    %1375 = vmatprep.subr.mxu0 0.0
    %1376 = vmatpush1.msra.mxu0 0.0
    %1377 = vmatprep.subr.mxu0 0.0
    %1378 = vmatpush1.msra.mxu0 0.0
    %1379 = vmatprep.subr.mxu0 0.0
    %1380 = vmatpush1.msra.mxu0 0.0
    %1381 = vmatprep.subr.mxu0 0.0
    %1382 = vmatpush1.msra.mxu0 0.0
    %1383 = vmatprep.subr.mxu0 0.0
    %1384 = vmatpush1.msra.mxu0 0.0
    %1385 = vmatprep.subr.mxu0 0.0
    %1386 = vmatpush1.msra.mxu0 0.0
    %1387 = vmatprep.subr.mxu0 0.0
    %1388 = vmatpush1.msra.mxu0 0.0
    %1389 = vmatprep.subr.mxu0 0.0
    %1390 = vmatpush1.msra.mxu0 0.0
    %1391 = vmatprep.subr.mxu0 0.0
    %1392 = vmatpush1.msra.mxu0 0.0
    %1393 = vmatprep.subr.mxu0 0.0
    %1394 = vmatpush1.msra.mxu0 0.0
    %1395 = vmatprep.subr.mxu0 0.0
    %1396 = vmatpush1.msra.mxu0 0.0
    %1397 = vmatprep.subr.mxu0 0.0
    %1398 = vmatpush1.msra.mxu0 0.0
    %1399 = vmatprep.subr.mxu0 0.0
    %1400 = vmatpush1.msra.mxu0 0.0
    %1401 = vmatprep.subr.mxu0 0.0
    %1402 = vmatpush1.msra.mxu0 0.0
    %1403 = vmatprep.subr.mxu0 0.0
    %1404 = vmatpush1.msra.mxu0 0.0
    %1405 = vmatprep.subr.mxu0 0.0
    %1406 = vmatpush1.msra.mxu0 0.0
    %1407 = vmatprep.mubr.f32.mxu0 0.0
    %1408 = vmatmul.mubr.f32.gmra.mrb[0].mxu0 %v1341
    %v1409 = vpop.f32.mrb[0].mxu0
    %v1410 = vadd.f32 %v1338, %v1409
    %v1411 = vpop.f32.mrb[0].mxu0
    %1412 = vdwg.mxu0
    %vm1413 = vcmp.gt.f32.partialorder %v1410, 0.0
    %v1414 = vmin.f32 %v1410, 0.0
    %v1415 = vmul.f32 %v1414, 1.442695
    %v1416 = vpow.pop %v1415
    %v1417 = vsub.f32 %v1416, 1.0
    %v1418 = vsel %vm1413, %v1410, %v1417
    %s1419 = scalar_lea.vmem [#allocation27], 32
    %v1420 = vld [vmem:[%s1419] sm:$0xff]
    %v1421 = vld [vmem:[%s1419 + $0x8] sm:$0xff]
    %v1422 = vld [vmem:[%s1419 + $0x10] sm:$0xff]
    %v1423 = vld [vmem:[%s1419 + $0x18] sm:$0xff]
    %s1424 = scalar_lea.vmem [#allocation28], 1
    %v1425 = vld [vmem:[%s1424] sm:$0x1]
    %v1427 = vlaneseq
    %v1428 = vshrl.u32 %v1427, 7
    %v1429 = vsub.s32 0, %v1428
    %v1430 = vrot.slane %v1425, %v1429
    %v1433 = vsel %vm450, %v1418, 0
    %1435 = vmatprep.subr.mxu0 0.0
    %1436 = vmatpush1.msra.mxu0 %v1420
    %1437 = vmatprep.subr.mxu0 0.0
    %1438 = vmatpush1.msra.mxu0 %v1421
    %1439 = vmatprep.subr.mxu0 0.0
    %1440 = vmatpush1.msra.mxu0 %v1422
    %1441 = vmatprep.subr.mxu0 0.0
    %1442 = vmatpush1.msra.mxu0 %v1423
    %1443 = vmatprep.subr.mxu0 0.0
    %1444 = vmatpush1.msra.mxu0 0.0
    %1445 = vmatprep.subr.mxu0 0.0
    %1446 = vmatpush1.msra.mxu0 0.0
    %1447 = vmatprep.subr.mxu0 0.0
    %1448 = vmatpush1.msra.mxu0 0.0
    %1449 = vmatprep.subr.mxu0 0.0
    %1450 = vmatpush1.msra.mxu0 0.0
    %1451 = vmatprep.subr.mxu0 0.0
    %1452 = vmatpush1.msra.mxu0 0.0
    %1453 = vmatprep.subr.mxu0 0.0
    %1454 = vmatpush1.msra.mxu0 0.0
    %1455 = vmatprep.subr.mxu0 0.0
    %1456 = vmatpush1.msra.mxu0 0.0
    %1457 = vmatprep.subr.mxu0 0.0
    %1458 = vmatpush1.msra.mxu0 0.0
    %1459 = vmatprep.subr.mxu0 0.0
    %1460 = vmatpush1.msra.mxu0 0.0
    %1461 = vmatprep.subr.mxu0 0.0
    %1462 = vmatpush1.msra.mxu0 0.0
    %1463 = vmatprep.subr.mxu0 0.0
    %1464 = vmatpush1.msra.mxu0 0.0
    %1465 = vmatprep.subr.mxu0 0.0
    %1466 = vmatpush1.msra.mxu0 0.0
    %1467 = vmatprep.subr.mxu0 0.0
    %1468 = vmatpush1.msra.mxu0 0.0
    %1469 = vmatprep.subr.mxu0 0.0
    %1470 = vmatpush1.msra.mxu0 0.0
    %1471 = vmatprep.subr.mxu0 0.0
    %1472 = vmatpush1.msra.mxu0 0.0
    %1473 = vmatprep.subr.mxu0 0.0
    %1474 = vmatpush1.msra.mxu0 0.0
    %1475 = vmatprep.subr.mxu0 0.0
    %1476 = vmatpush1.msra.mxu0 0.0
    %1477 = vmatprep.subr.mxu0 0.0
    %1478 = vmatpush1.msra.mxu0 0.0
    %1479 = vmatprep.subr.mxu0 0.0
    %1480 = vmatpush1.msra.mxu0 0.0
    %1481 = vmatprep.subr.mxu0 0.0
    %1482 = vmatpush1.msra.mxu0 0.0
    %1483 = vmatprep.subr.mxu0 0.0
    %1484 = vmatpush1.msra.mxu0 0.0
    %1485 = vmatprep.subr.mxu0 0.0
    %1486 = vmatpush1.msra.mxu0 0.0
    %1487 = vmatprep.subr.mxu0 0.0
    %1488 = vmatpush1.msra.mxu0 0.0
    %1489 = vmatprep.subr.mxu0 0.0
    %1490 = vmatpush1.msra.mxu0 0.0
    %1491 = vmatprep.subr.mxu0 0.0
    %1492 = vmatpush1.msra.mxu0 0.0
    %1493 = vmatprep.subr.mxu0 0.0
    %1494 = vmatpush1.msra.mxu0 0.0
    %1495 = vmatprep.subr.mxu0 0.0
    %1496 = vmatpush1.msra.mxu0 0.0
    %1497 = vmatprep.subr.mxu0 0.0
    %1498 = vmatpush1.msra.mxu0 0.0
    %1499 = vmatprep.mubr.f32.mxu0 0.0
    %1500 = vmatmul.mubr.f32.gmra.mrb[0].mxu0 %v1433
    %v1501 = vpop.f32.mrb[0].mxu0
    %v1502 = vadd.f32 %v1430, %v1501
    %v1503 = vpop.f32.mrb[0].mxu0
    %1504 = vdwg.mxu0
    %vm1505 = vcmp.gt.f32.partialorder %v1502, 0.0
    %v1506 = vmin.f32 %v1502, 0.0
    %v1507 = vmul.f32 %v1506, 1.442695
    %v1508 = vpow.pop %v1507
    %v1509 = vsub.f32 %v1508, 1.0
    %v1510 = vsel %vm1505, %v1502, %v1509
    %s1511 = scalar_lea.vmem [#allocation27], 64
    %v1512 = vld [vmem:[%s1511] sm:$0xff]
    %v1513 = vld [vmem:[%s1511 + $0x8] sm:$0xff]
    %v1514 = vld [vmem:[%s1511 + $0x10] sm:$0xff]
    %v1515 = vld [vmem:[%s1511 + $0x18] sm:$0xff]
    %s1516 = scalar_lea.vmem [#allocation28], 2
    %v1517 = vld [vmem:[%s1516] sm:$0x1]
    %v1519 = vlaneseq
    %v1520 = vshrl.u32 %v1519, 7
    %v1521 = vsub.s32 0, %v1520
    %v1522 = vrot.slane %v1517, %v1521
    %v1525 = vsel %vm450, %v1510, 0
    %1527 = vmatprep.subr.mxu0 0.0
    %1528 = vmatpush1.msra.mxu0 %v1512
    %1529 = vmatprep.subr.mxu0 0.0
    %1530 = vmatpush1.msra.mxu0 %v1513
    %1531 = vmatprep.subr.mxu0 0.0
    %1532 = vmatpush1.msra.mxu0 %v1514
    %1533 = vmatprep.subr.mxu0 0.0
    %1534 = vmatpush1.msra.mxu0 %v1515
    %1535 = vmatprep.subr.mxu0 0.0
    %1536 = vmatpush1.msra.mxu0 0.0
    %1537 = vmatprep.subr.mxu0 0.0
    %1538 = vmatpush1.msra.mxu0 0.0
    %1539 = vmatprep.subr.mxu0 0.0
    %1540 = vmatpush1.msra.mxu0 0.0
    %1541 = vmatprep.subr.mxu0 0.0
    %1542 = vmatpush1.msra.mxu0 0.0
    %1543 = vmatprep.subr.mxu0 0.0
    %1544 = vmatpush1.msra.mxu0 0.0
    %1545 = vmatprep.subr.mxu0 0.0
    %1546 = vmatpush1.msra.mxu0 0.0
    %1547 = vmatprep.subr.mxu0 0.0
    %1548 = vmatpush1.msra.mxu0 0.0
    %1549 = vmatprep.subr.mxu0 0.0
    %1550 = vmatpush1.msra.mxu0 0.0
    %1551 = vmatprep.subr.mxu0 0.0
    %1552 = vmatpush1.msra.mxu0 0.0
    %1553 = vmatprep.subr.mxu0 0.0
    %1554 = vmatpush1.msra.mxu0 0.0
    %1555 = vmatprep.subr.mxu0 0.0
    %1556 = vmatpush1.msra.mxu0 0.0
    %1557 = vmatprep.subr.mxu0 0.0
    %1558 = vmatpush1.msra.mxu0 0.0
    %1559 = vmatprep.subr.mxu0 0.0
    %1560 = vmatpush1.msra.mxu0 0.0
    %1561 = vmatprep.subr.mxu0 0.0
    %1562 = vmatpush1.msra.mxu0 0.0
    %1563 = vmatprep.subr.mxu0 0.0
    %1564 = vmatpush1.msra.mxu0 0.0
    %1565 = vmatprep.subr.mxu0 0.0
    %1566 = vmatpush1.msra.mxu0 0.0
    %1567 = vmatprep.subr.mxu0 0.0
    %1568 = vmatpush1.msra.mxu0 0.0
    %1569 = vmatprep.subr.mxu0 0.0
    %1570 = vmatpush1.msra.mxu0 0.0
    %1571 = vmatprep.subr.mxu0 0.0
    %1572 = vmatpush1.msra.mxu0 0.0
    %1573 = vmatprep.subr.mxu0 0.0
    %1574 = vmatpush1.msra.mxu0 0.0
    %1575 = vmatprep.subr.mxu0 0.0
    %1576 = vmatpush1.msra.mxu0 0.0
    %1577 = vmatprep.subr.mxu0 0.0
    %1578 = vmatpush1.msra.mxu0 0.0
    %1579 = vmatprep.subr.mxu0 0.0
    %1580 = vmatpush1.msra.mxu0 0.0
    %1581 = vmatprep.subr.mxu0 0.0
    %1582 = vmatpush1.msra.mxu0 0.0
    %1583 = vmatprep.subr.mxu0 0.0
    %1584 = vmatpush1.msra.mxu0 0.0
    %1585 = vmatprep.subr.mxu0 0.0
    %1586 = vmatpush1.msra.mxu0 0.0
    %1587 = vmatprep.subr.mxu0 0.0
    %1588 = vmatpush1.msra.mxu0 0.0
    %1589 = vmatprep.subr.mxu0 0.0
    %1590 = vmatpush1.msra.mxu0 0.0
    %1591 = vmatprep.mubr.f32.mxu0 0.0
    %1592 = vmatmul.mubr.f32.gmra.mrb[0].mxu0 %v1525
    %v1593 = vpop.f32.mrb[0].mxu0
    %v1594 = vadd.f32 %v1522, %v1593
    %v1595 = vpop.f32.mrb[0].mxu0
    %1596 = vdwg.mxu0
    %vm1597 = vcmp.gt.f32.partialorder %v1594, 0.0
    %v1598 = vmin.f32 %v1594, 0.0
    %v1599 = vmul.f32 %v1598, 1.442695
    %v1600 = vpow.pop %v1599
    %v1601 = vsub.f32 %v1600, 1.0
    %v1602 = vsel %vm1597, %v1594, %v1601
    %s1603 = scalar_lea.vmem [#allocation27], 96
    %v1604 = vld [vmem:[%s1603] sm:$0xff]
    %v1605 = vld [vmem:[%s1603 + $0x8] sm:$0xff]
    %v1606 = vld [vmem:[%s1603 + $0x10] sm:$0xff]
    %v1607 = vld [vmem:[%s1603 + $0x18] sm:$0xff]
    %s1608 = scalar_lea.vmem [#allocation28], 3
    %v1609 = vld [vmem:[%s1608] sm:$0x1]
    %v1611 = vlaneseq
    %v1612 = vshrl.u32 %v1611, 7
    %v1613 = vsub.s32 0, %v1612
    %v1614 = vrot.slane %v1609, %v1613
    %v1617 = vsel %vm450, %v1602, 0
    %1619 = vmatprep.subr.mxu0 0.0
    %1620 = vmatpush1.msra.mxu0 %v1604
    %1621 = vmatprep.subr.mxu0 0.0
    %1622 = vmatpush1.msra.mxu0 %v1605
    %1623 = vmatprep.subr.mxu0 0.0
    %1624 = vmatpush1.msra.mxu0 %v1606
    %1625 = vmatprep.subr.mxu0 0.0
    %1626 = vmatpush1.msra.mxu0 %v1607
    %1627 = vmatprep.subr.mxu0 0.0
    %1628 = vmatpush1.msra.mxu0 0.0
    %1629 = vmatprep.subr.mxu0 0.0
    %1630 = vmatpush1.msra.mxu0 0.0
    %1631 = vmatprep.subr.mxu0 0.0
    %1632 = vmatpush1.msra.mxu0 0.0
    %1633 = vmatprep.subr.mxu0 0.0
    %1634 = vmatpush1.msra.mxu0 0.0
    %1635 = vmatprep.subr.mxu0 0.0
    %1636 = vmatpush1.msra.mxu0 0.0
    %1637 = vmatprep.subr.mxu0 0.0
    %1638 = vmatpush1.msra.mxu0 0.0
    %1639 = vmatprep.subr.mxu0 0.0
    %1640 = vmatpush1.msra.mxu0 0.0
    %1641 = vmatprep.subr.mxu0 0.0
    %1642 = vmatpush1.msra.mxu0 0.0
    %1643 = vmatprep.subr.mxu0 0.0
    %1644 = vmatpush1.msra.mxu0 0.0
    %1645 = vmatprep.subr.mxu0 0.0
    %1646 = vmatpush1.msra.mxu0 0.0
    %1647 = vmatprep.subr.mxu0 0.0
    %1648 = vmatpush1.msra.mxu0 0.0
    %1649 = vmatprep.subr.mxu0 0.0
    %1650 = vmatpush1.msra.mxu0 0.0
    %1651 = vmatprep.subr.mxu0 0.0
    %1652 = vmatpush1.msra.mxu0 0.0
    %1653 = vmatprep.subr.mxu0 0.0
    %1654 = vmatpush1.msra.mxu0 0.0
    %1655 = vmatprep.subr.mxu0 0.0
    %1656 = vmatpush1.msra.mxu0 0.0
    %1657 = vmatprep.subr.mxu0 0.0
    %1658 = vmatpush1.msra.mxu0 0.0
    %1659 = vmatprep.subr.mxu0 0.0
    %1660 = vmatpush1.msra.mxu0 0.0
    %1661 = vmatprep.subr.mxu0 0.0
    %1662 = vmatpush1.msra.mxu0 0.0
    %1663 = vmatprep.subr.mxu0 0.0
    %1664 = vmatpush1.msra.mxu0 0.0
    %1665 = vmatprep.subr.mxu0 0.0
    %1666 = vmatpush1.msra.mxu0 0.0
    %1667 = vmatprep.subr.mxu0 0.0
    %1668 = vmatpush1.msra.mxu0 0.0
    %1669 = vmatprep.subr.mxu0 0.0
    %1670 = vmatpush1.msra.mxu0 0.0
    %1671 = vmatprep.subr.mxu0 0.0
    %1672 = vmatpush1.msra.mxu0 0.0
    %1673 = vmatprep.subr.mxu0 0.0
    %1674 = vmatpush1.msra.mxu0 0.0
    %1675 = vmatprep.subr.mxu0 0.0
    %1676 = vmatpush1.msra.mxu0 0.0
    %1677 = vmatprep.subr.mxu0 0.0
    %1678 = vmatpush1.msra.mxu0 0.0
    %1679 = vmatprep.subr.mxu0 0.0
    %1680 = vmatpush1.msra.mxu0 0.0
    %1681 = vmatprep.subr.mxu0 0.0
    %1682 = vmatpush1.msra.mxu0 0.0
    %1683 = vmatprep.mubr.f32.mxu0 0.0
    %1684 = vmatmul.mubr.f32.gmra.mrb[0].mxu0 %v1617
    %v1685 = vpop.f32.mrb[0].mxu0
    %v1686 = vadd.f32 %v1614, %v1685
    %v1687 = vpop.f32.mrb[0].mxu0
    %1688 = vdwg.mxu0
    %vm1689 = vcmp.gt.f32.partialorder %v1686, 0.0
    %v1690 = vmin.f32 %v1686, 0.0
    %v1691 = vmul.f32 %v1690, 1.442695
    %v1692 = vpow.pop %v1691
    %v1693 = vsub.f32 %v1692, 1.0
    %v1694 = vsel %vm1689, %v1686, %v1693
    %v1695 = vld [vmem:[%s49] sm:$0xff]
    %v1696 = vld [vmem:[%s49 + $0x8] sm:$0xff]
    %v1697 = vld [vmem:[%s49 + $0x10] sm:$0xff]
    %v1698 = vld [vmem:[%s49 + $0x18] sm:$0xff]
    %v1699 = vld [vmem:[#allocation30] sm:$0x1]
    %v1701 = vlaneseq
    %v1702 = vshrl.u32 %v1701, 7
    %v1703 = vsub.s32 0, %v1702
    %v1704 = vrot.slane %v1699, %v1703
    %v1707 = vsel %vm450, %v1694, 0
    %1709 = vmatprep.subr.mxu0 0.0
    %1710 = vmatpush1.msra.mxu0 %v1695
    %1711 = vmatprep.subr.mxu0 0.0
    %1712 = vmatpush1.msra.mxu0 %v1696
    %1713 = vmatprep.subr.mxu0 0.0
    %1714 = vmatpush1.msra.mxu0 %v1697
    %1715 = vmatprep.subr.mxu0 0.0
    %1716 = vmatpush1.msra.mxu0 %v1698
    %1717 = vmatprep.subr.mxu0 0.0
    %1718 = vmatpush1.msra.mxu0 0.0
    %1719 = vmatprep.subr.mxu0 0.0
    %1720 = vmatpush1.msra.mxu0 0.0
    %1721 = vmatprep.subr.mxu0 0.0
    %1722 = vmatpush1.msra.mxu0 0.0
    %1723 = vmatprep.subr.mxu0 0.0
    %1724 = vmatpush1.msra.mxu0 0.0
    %1725 = vmatprep.subr.mxu0 0.0
    %1726 = vmatpush1.msra.mxu0 0.0
    %1727 = vmatprep.subr.mxu0 0.0
    %1728 = vmatpush1.msra.mxu0 0.0
    %1729 = vmatprep.subr.mxu0 0.0
    %1730 = vmatpush1.msra.mxu0 0.0
    %1731 = vmatprep.subr.mxu0 0.0
    %1732 = vmatpush1.msra.mxu0 0.0
    %1733 = vmatprep.subr.mxu0 0.0
    %1734 = vmatpush1.msra.mxu0 0.0
    %1735 = vmatprep.subr.mxu0 0.0
    %1736 = vmatpush1.msra.mxu0 0.0
    %1737 = vmatprep.subr.mxu0 0.0
    %1738 = vmatpush1.msra.mxu0 0.0
    %1739 = vmatprep.subr.mxu0 0.0
    %1740 = vmatpush1.msra.mxu0 0.0
    %1741 = vmatprep.subr.mxu0 0.0
    %1742 = vmatpush1.msra.mxu0 0.0
    %1743 = vmatprep.subr.mxu0 0.0
    %1744 = vmatpush1.msra.mxu0 0.0
    %1745 = vmatprep.subr.mxu0 0.0
    %1746 = vmatpush1.msra.mxu0 0.0
    %1747 = vmatprep.subr.mxu0 0.0
    %1748 = vmatpush1.msra.mxu0 0.0
    %1749 = vmatprep.subr.mxu0 0.0
    %1750 = vmatpush1.msra.mxu0 0.0
    %1751 = vmatprep.subr.mxu0 0.0
    %1752 = vmatpush1.msra.mxu0 0.0
    %1753 = vmatprep.subr.mxu0 0.0
    %1754 = vmatpush1.msra.mxu0 0.0
    %1755 = vmatprep.subr.mxu0 0.0
    %1756 = vmatpush1.msra.mxu0 0.0
    %1757 = vmatprep.subr.mxu0 0.0
    %1758 = vmatpush1.msra.mxu0 0.0
    %1759 = vmatprep.subr.mxu0 0.0
    %1760 = vmatpush1.msra.mxu0 0.0
    %1761 = vmatprep.subr.mxu0 0.0
    %1762 = vmatpush1.msra.mxu0 0.0
    %1763 = vmatprep.subr.mxu0 0.0
    %1764 = vmatpush1.msra.mxu0 0.0
    %1765 = vmatprep.subr.mxu0 0.0
    %1766 = vmatpush1.msra.mxu0 0.0
    %1767 = vmatprep.subr.mxu0 0.0
    %1768 = vmatpush1.msra.mxu0 0.0
    %1769 = vmatprep.subr.mxu0 0.0
    %1770 = vmatpush1.msra.mxu0 0.0
    %1771 = vmatprep.subr.mxu0 0.0
    %1772 = vmatpush1.msra.mxu0 0.0
    %1773 = vmatprep.mubr.f32.mxu0 0.0
    %1774 = vmatmul.mubr.f32.gmra.mrb[0].mxu0 %v1707
    %v1775 = vpop.f32.mrb[0].mxu0
    %v1776 = vadd.f32 %v1704, %v1775
    %v1777 = vpop.f32.mrb[0].mxu0
    %1778 = vdwg.mxu0
    %vm1779 = vcmask 56320
    %1780 = vst.msk [vmem:[%s59] sm:$0xff] %vm1779, %v1776
    %v1781 = vlaneseq
    %v1782 = vshrl.u32 %v1781, 7
    %v1783 = vsub.s32 0, %v1782
    %v1784 = vrot.slane %v686, %v1783
    %vm1785 = vcmask 48128
    %v1786 = vsel %vm1785, %v1232, 0
    %vm1788 = vcmask 1045504
    %v1790 = vsel %vm1788, %v521, 0
    %1792 = vmatprep.subr.mxu0 0.0
    %1793 = vmatpush1.msra.mxu0 %v1790
    %1794 = vmatprep.subr.mxu0 0.0
    %1795 = vmatpush1.msra.mxu0 0.0
    %1796 = vmatprep.subr.mxu0 0.0
    %1797 = vmatpush1.msra.mxu0 0.0
    %1798 = vmatprep.subr.mxu0 0.0
    %1799 = vmatpush1.msra.mxu0 0.0
    %1800 = vmatprep.subr.mxu0 0.0
    %1801 = vmatpush1.msra.mxu0 0.0
    %1802 = vmatprep.subr.mxu0 0.0
    %1803 = vmatpush1.msra.mxu0 0.0
    %1804 = vmatprep.subr.mxu0 0.0
    %1805 = vmatpush1.msra.mxu0 0.0
    %1806 = vmatprep.subr.mxu0 0.0
    %1807 = vmatpush1.msra.mxu0 0.0
    %1808 = vmatprep.subr.mxu0 0.0
    %1809 = vmatpush1.msra.mxu0 0.0
    %1810 = vmatprep.subr.mxu0 0.0
    %1811 = vmatpush1.msra.mxu0 0.0
    %1812 = vmatprep.subr.mxu0 0.0
    %1813 = vmatpush1.msra.mxu0 0.0
    %1814 = vmatprep.subr.mxu0 0.0
    %1815 = vmatpush1.msra.mxu0 0.0
    %1816 = vmatprep.subr.mxu0 0.0
    %1817 = vmatpush1.msra.mxu0 0.0
    %1818 = vmatprep.subr.mxu0 0.0
    %1819 = vmatpush1.msra.mxu0 0.0
    %1820 = vmatprep.subr.mxu0 0.0
    %1821 = vmatpush1.msra.mxu0 0.0
    %1822 = vmatprep.subr.mxu0 0.0
    %1823 = vmatpush1.msra.mxu0 0.0
    %1824 = vmatprep.subr.mxu0 0.0
    %1825 = vmatpush1.msra.mxu0 0.0
    %1826 = vmatprep.subr.mxu0 0.0
    %1827 = vmatpush1.msra.mxu0 0.0
    %1828 = vmatprep.subr.mxu0 0.0
    %1829 = vmatpush1.msra.mxu0 0.0
    %1830 = vmatprep.subr.mxu0 0.0
    %1831 = vmatpush1.msra.mxu0 0.0
    %1832 = vmatprep.subr.mxu0 0.0
    %1833 = vmatpush1.msra.mxu0 0.0
    %1834 = vmatprep.subr.mxu0 0.0
    %1835 = vmatpush1.msra.mxu0 0.0
    %1836 = vmatprep.subr.mxu0 0.0
    %1837 = vmatpush1.msra.mxu0 0.0
    %1838 = vmatprep.subr.mxu0 0.0
    %1839 = vmatpush1.msra.mxu0 0.0
    %1840 = vmatprep.subr.mxu0 0.0
    %1841 = vmatpush1.msra.mxu0 0.0
    %1842 = vmatprep.subr.mxu0 0.0
    %1843 = vmatpush1.msra.mxu0 0.0
    %1844 = vmatprep.subr.mxu0 0.0
    %1845 = vmatpush1.msra.mxu0 0.0
    %1846 = vmatprep.subr.mxu0 0.0
    %1847 = vmatpush1.msra.mxu0 0.0
    %1848 = vmatprep.subr.mxu0 0.0
    %1849 = vmatpush1.msra.mxu0 0.0
    %1850 = vmatprep.subr.mxu0 0.0
    %1851 = vmatpush1.msra.mxu0 0.0
    %1852 = vmatprep.subr.mxu0 0.0
    %1853 = vmatpush1.msra.mxu0 0.0
    %1854 = vmatprep.subr.mxu0 0.0
    %1855 = vmatpush1.msra.mxu0 0.0
    %1856 = vmatprep.mubr.f32.mxu0 0.0
    %1857 = vmatmul.mubr.f32.gmra.mrb[0].mxu0 %v1786
    %v1858 = vpop.f32.mrb[0].mxu0
    %v1859 = vadd.f32 %v1784, %v1858
    %v1860 = vpop.f32.mrb[0].mxu0
    %1861 = vdwg.mxu0
    %v1862 = vlaneseq
    %v1863 = vshrl.u32 %v1862, 7
    %v1864 = vsub.s32 0, %v1863
    %v1865 = vrot.slane %v919, %v1864
    %v1867 = vsel %vm1788, %v759, 0
    %1869 = vmatprep.subr.mxu0 0.0
    %1870 = vmatpush1.msra.mxu0 %v1867
    %1871 = vmatprep.subr.mxu0 0.0
    %1872 = vmatpush1.msra.mxu0 0.0
    %1873 = vmatprep.subr.mxu0 0.0
    %1874 = vmatpush1.msra.mxu0 0.0
    %1875 = vmatprep.subr.mxu0 0.0
    %1876 = vmatpush1.msra.mxu0 0.0
    %1877 = vmatprep.subr.mxu0 0.0
    %1878 = vmatpush1.msra.mxu0 0.0
    %1879 = vmatprep.subr.mxu0 0.0
    %1880 = vmatpush1.msra.mxu0 0.0
    %1881 = vmatprep.subr.mxu0 0.0
    %1882 = vmatpush1.msra.mxu0 0.0
    %1883 = vmatprep.subr.mxu0 0.0
    %1884 = vmatpush1.msra.mxu0 0.0
    %1885 = vmatprep.subr.mxu0 0.0
    %1886 = vmatpush1.msra.mxu0 0.0
    %1887 = vmatprep.subr.mxu0 0.0
    %1888 = vmatpush1.msra.mxu0 0.0
    %1889 = vmatprep.subr.mxu0 0.0
    %1890 = vmatpush1.msra.mxu0 0.0
    %1891 = vmatprep.subr.mxu0 0.0
    %1892 = vmatpush1.msra.mxu0 0.0
    %1893 = vmatprep.subr.mxu0 0.0
    %1894 = vmatpush1.msra.mxu0 0.0
    %1895 = vmatprep.subr.mxu0 0.0
    %1896 = vmatpush1.msra.mxu0 0.0
    %1897 = vmatprep.subr.mxu0 0.0
    %1898 = vmatpush1.msra.mxu0 0.0
    %1899 = vmatprep.subr.mxu0 0.0
    %1900 = vmatpush1.msra.mxu0 0.0
    %1901 = vmatprep.subr.mxu0 0.0
    %1902 = vmatpush1.msra.mxu0 0.0
    %1903 = vmatprep.subr.mxu0 0.0
    %1904 = vmatpush1.msra.mxu0 0.0
    %1905 = vmatprep.subr.mxu0 0.0
    %1906 = vmatpush1.msra.mxu0 0.0
    %1907 = vmatprep.subr.mxu0 0.0
    %1908 = vmatpush1.msra.mxu0 0.0
    %1909 = vmatprep.subr.mxu0 0.0
    %1910 = vmatpush1.msra.mxu0 0.0
    %1911 = vmatprep.subr.mxu0 0.0
    %1912 = vmatpush1.msra.mxu0 0.0
    %1913 = vmatprep.subr.mxu0 0.0
    %1914 = vmatpush1.msra.mxu0 0.0
    %1915 = vmatprep.subr.mxu0 0.0
    %1916 = vmatpush1.msra.mxu0 0.0
    %1917 = vmatprep.subr.mxu0 0.0
    %1918 = vmatpush1.msra.mxu0 0.0
    %1919 = vmatprep.subr.mxu0 0.0
    %1920 = vmatpush1.msra.mxu0 0.0
    %1921 = vmatprep.subr.mxu0 0.0
    %1922 = vmatpush1.msra.mxu0 0.0
    %1923 = vmatprep.subr.mxu0 0.0
    %1924 = vmatpush1.msra.mxu0 0.0
    %1925 = vmatprep.subr.mxu0 0.0
    %1926 = vmatpush1.msra.mxu0 0.0
    %1927 = vmatprep.subr.mxu0 0.0
    %1928 = vmatpush1.msra.mxu0 0.0
    %1929 = vmatprep.subr.mxu0 0.0
    %1930 = vmatpush1.msra.mxu0 0.0
    %1931 = vmatprep.subr.mxu0 0.0
    %1932 = vmatpush1.msra.mxu0 0.0
    %1933 = vmatprep.mubr.f32.mxu0 0.0
    %1934 = vmatmul.mubr.f32.gmra.mrb[0].mxu0 %v1786
    %v1935 = vpop.f32.mrb[0].mxu0
    %v1936 = vadd.f32 %v1865, %v1935
    %v1937 = vpop.f32.mrb[0].mxu0
    %1938 = vdwg.mxu0
    %v1939 = vlaneseq
    %v1940 = vshrl.u32 %v1939, 7
    %v1941 = vsub.s32 0, %v1940
    %v1942 = vrot.slane %v1152, %v1941
    %v1944 = vsel %vm1788, %v992, 0
    %1946 = vmatprep.subr.mxu0 0.0
    %1947 = vmatpush1.msra.mxu0 %v1944
    %1948 = vmatprep.subr.mxu0 0.0
    %1949 = vmatpush1.msra.mxu0 0.0
    %1950 = vmatprep.subr.mxu0 0.0
    %1951 = vmatpush1.msra.mxu0 0.0
    %1952 = vmatprep.subr.mxu0 0.0
    %1953 = vmatpush1.msra.mxu0 0.0
    %1954 = vmatprep.subr.mxu0 0.0
    %1955 = vmatpush1.msra.mxu0 0.0
    %1956 = vmatprep.subr.mxu0 0.0
    %1957 = vmatpush1.msra.mxu0 0.0
    %1958 = vmatprep.subr.mxu0 0.0
    %1959 = vmatpush1.msra.mxu0 0.0
    %1960 = vmatprep.subr.mxu0 0.0
    %1961 = vmatpush1.msra.mxu0 0.0
    %1962 = vmatprep.subr.mxu0 0.0
    %1963 = vmatpush1.msra.mxu0 0.0
    %1964 = vmatprep.subr.mxu0 0.0
    %1965 = vmatpush1.msra.mxu0 0.0
    %1966 = vmatprep.subr.mxu0 0.0
    %1967 = vmatpush1.msra.mxu0 0.0
    %1968 = vmatprep.subr.mxu0 0.0
    %1969 = vmatpush1.msra.mxu0 0.0
    %1970 = vmatprep.subr.mxu0 0.0
    %1971 = vmatpush1.msra.mxu0 0.0
    %1972 = vmatprep.subr.mxu0 0.0
    %1973 = vmatpush1.msra.mxu0 0.0
    %1974 = vmatprep.subr.mxu0 0.0
    %1975 = vmatpush1.msra.mxu0 0.0
    %1976 = vmatprep.subr.mxu0 0.0
    %1977 = vmatpush1.msra.mxu0 0.0
    %1978 = vmatprep.subr.mxu0 0.0
    %1979 = vmatpush1.msra.mxu0 0.0
    %1980 = vmatprep.subr.mxu0 0.0
    %1981 = vmatpush1.msra.mxu0 0.0
    %1982 = vmatprep.subr.mxu0 0.0
    %1983 = vmatpush1.msra.mxu0 0.0
    %1984 = vmatprep.subr.mxu0 0.0
    %1985 = vmatpush1.msra.mxu0 0.0
    %1986 = vmatprep.subr.mxu0 0.0
    %1987 = vmatpush1.msra.mxu0 0.0
    %1988 = vmatprep.subr.mxu0 0.0
    %1989 = vmatpush1.msra.mxu0 0.0
    %1990 = vmatprep.subr.mxu0 0.0
    %1991 = vmatpush1.msra.mxu0 0.0
    %1992 = vmatprep.subr.mxu0 0.0
    %1993 = vmatpush1.msra.mxu0 0.0
    %1994 = vmatprep.subr.mxu0 0.0
    %1995 = vmatpush1.msra.mxu0 0.0
    %1996 = vmatprep.subr.mxu0 0.0
    %1997 = vmatpush1.msra.mxu0 0.0
    %1998 = vmatprep.subr.mxu0 0.0
    %1999 = vmatpush1.msra.mxu0 0.0
    %2000 = vmatprep.subr.mxu0 0.0
    %2001 = vmatpush1.msra.mxu0 0.0
    %2002 = vmatprep.subr.mxu0 0.0
    %2003 = vmatpush1.msra.mxu0 0.0
    %2004 = vmatprep.subr.mxu0 0.0
    %2005 = vmatpush1.msra.mxu0 0.0
    %2006 = vmatprep.subr.mxu0 0.0
    %2007 = vmatpush1.msra.mxu0 0.0
    %2008 = vmatprep.subr.mxu0 0.0
    %2009 = vmatpush1.msra.mxu0 0.0
    %2010 = vmatprep.mubr.f32.mxu0 0.0
    %2011 = vmatmul.mubr.f32.gmra.mrb[0].mxu0 %v1786
    %v2012 = vpop.f32.mrb[0].mxu0
    %v2013 = vadd.f32 %v1942, %v2012
    %v2014 = vpop.f32.mrb[0].mxu0
    %2015 = vdwg.mxu0
    %s2016 = scalar_lea.vmem %s3, 8
    %v2017 = vld [vmem:[%s2016] sm:$0xff]
    %v2018 = vadd.f32 %v2017, 1.0
    %2020 = vrot.lane.b32.xlu0 %v2018, 123
    %v2021 = vpop.permute.xlu0 %2020
    %s2023 = scalar_lea.vmem %s57, 8
    %2024 = vst.msk [vmem:[%s2023] sm:$0xff] %vm1238, %v2021
    %v2025 = vld [vmem:[%s41] sm:$0xf]
    %v2026 = vlaneseq
    %v2027 = vshrl.u32 %v2026, 7
    %v2028 = vsub.s32 1, %v2027
    %v2029 = vrot.slane %v1229, %v2028
    %v2031 = vsel %vm1245, %v2017, 0
    %v2034 = vsel %vm1249, %v2025, 0
    %2036 = vmatprep.subr.mxu0 0.0
    %2037 = vmatpush1.msra.mxu0 %v2034
    %2038 = vmatprep.subr.mxu0 0.0
    %2039 = vmatpush1.msra.mxu0 0.0
    %2040 = vmatprep.subr.mxu0 0.0
    %2041 = vmatpush1.msra.mxu0 0.0
    %2042 = vmatprep.subr.mxu0 0.0
    %2043 = vmatpush1.msra.mxu0 0.0
    %2044 = vmatprep.subr.mxu0 0.0
    %2045 = vmatpush1.msra.mxu0 0.0
    %2046 = vmatprep.subr.mxu0 0.0
    %2047 = vmatpush1.msra.mxu0 0.0
    %2048 = vmatprep.subr.mxu0 0.0
    %2049 = vmatpush1.msra.mxu0 0.0
    %2050 = vmatprep.subr.mxu0 0.0
    %2051 = vmatpush1.msra.mxu0 0.0
    %2052 = vmatprep.subr.mxu0 0.0
    %2053 = vmatpush1.msra.mxu0 0.0
    %2054 = vmatprep.subr.mxu0 0.0
    %2055 = vmatpush1.msra.mxu0 0.0
    %2056 = vmatprep.subr.mxu0 0.0
    %2057 = vmatpush1.msra.mxu0 0.0
    %2058 = vmatprep.subr.mxu0 0.0
    %2059 = vmatpush1.msra.mxu0 0.0
    %2060 = vmatprep.subr.mxu0 0.0
    %2061 = vmatpush1.msra.mxu0 0.0
    %2062 = vmatprep.subr.mxu0 0.0
    %2063 = vmatpush1.msra.mxu0 0.0
    %2064 = vmatprep.subr.mxu0 0.0
    %2065 = vmatpush1.msra.mxu0 0.0
    %2066 = vmatprep.subr.mxu0 0.0
    %2067 = vmatpush1.msra.mxu0 0.0
    %2068 = vmatprep.subr.mxu0 0.0
    %2069 = vmatpush1.msra.mxu0 0.0
    %2070 = vmatprep.subr.mxu0 0.0
    %2071 = vmatpush1.msra.mxu0 0.0
    %2072 = vmatprep.subr.mxu0 0.0
    %2073 = vmatpush1.msra.mxu0 0.0
    %2074 = vmatprep.subr.mxu0 0.0
    %2075 = vmatpush1.msra.mxu0 0.0
    %2076 = vmatprep.subr.mxu0 0.0
    %2077 = vmatpush1.msra.mxu0 0.0
    %2078 = vmatprep.subr.mxu0 0.0
    %2079 = vmatpush1.msra.mxu0 0.0
    %2080 = vmatprep.subr.mxu0 0.0
    %2081 = vmatpush1.msra.mxu0 0.0
    %2082 = vmatprep.subr.mxu0 0.0
    %2083 = vmatpush1.msra.mxu0 0.0
    %2084 = vmatprep.subr.mxu0 0.0
    %2085 = vmatpush1.msra.mxu0 0.0
    %2086 = vmatprep.subr.mxu0 0.0
    %2087 = vmatpush1.msra.mxu0 0.0
    %2088 = vmatprep.subr.mxu0 0.0
    %2089 = vmatpush1.msra.mxu0 0.0
    %2090 = vmatprep.subr.mxu0 0.0
    %2091 = vmatpush1.msra.mxu0 0.0
    %2092 = vmatprep.subr.mxu0 0.0
    %2093 = vmatpush1.msra.mxu0 0.0
    %2094 = vmatprep.subr.mxu0 0.0
    %2095 = vmatpush1.msra.mxu0 0.0
    %2096 = vmatprep.subr.mxu0 0.0
    %2097 = vmatpush1.msra.mxu0 0.0
    %2098 = vmatprep.subr.mxu0 0.0
    %2099 = vmatpush1.msra.mxu0 0.0
    %2100 = vmatprep.mubr.f32.mxu0 0.0
    %2101 = vmatmul.mubr.f32.gmra.mrb[0].mxu0 %v2031
    %v2102 = vpop.f32.mrb[0].mxu0
    %v2103 = vadd.f32 %v2029, %v2102
    %v2104 = vpop.f32.mrb[0].mxu0
    %2105 = vdwg.mxu0
    %vm2106 = vcmp.gt.f32.partialorder %v2103, 0.0
    %v2107 = vmin.f32 %v2103, 0.0
    %v2108 = vmul.f32 %v2107, 1.442695
    %v2109 = vpow.pop %v2108
    %v2110 = vsub.f32 %v2109, 1.0
    %v2111 = vsel %vm2106, %v2103, %v2110
    %v2112 = vld [vmem:[#allocation27] sm:$0xff]
    %v2113 = vld [vmem:[#allocation27 + $0x8] sm:$0xff]
    %v2114 = vld [vmem:[#allocation27 + $0x10] sm:$0xff]
    %v2115 = vld [vmem:[#allocation27 + $0x18] sm:$0xff]
    %v2116 = vld [vmem:[#allocation28] sm:$0x1]
    %v2118 = vlaneseq
    %v2119 = vshrl.u32 %v2118, 7
    %v2120 = vsub.s32 0, %v2119
    %v2121 = vrot.slane %v2116, %v2120
    %v2124 = vsel %vm450, %v2111, 0
    %2126 = vmatprep.subr.mxu0 0.0
    %2127 = vmatpush1.msra.mxu0 %v2112
    %2128 = vmatprep.subr.mxu0 0.0
    %2129 = vmatpush1.msra.mxu0 %v2113
    %2130 = vmatprep.subr.mxu0 0.0
    %2131 = vmatpush1.msra.mxu0 %v2114
    %2132 = vmatprep.subr.mxu0 0.0
    %2133 = vmatpush1.msra.mxu0 %v2115
    %2134 = vmatprep.subr.mxu0 0.0
    %2135 = vmatpush1.msra.mxu0 0.0
    %2136 = vmatprep.subr.mxu0 0.0
    %2137 = vmatpush1.msra.mxu0 0.0
    %2138 = vmatprep.subr.mxu0 0.0
    %2139 = vmatpush1.msra.mxu0 0.0
    %2140 = vmatprep.subr.mxu0 0.0
    %2141 = vmatpush1.msra.mxu0 0.0
    %2142 = vmatprep.subr.mxu0 0.0
    %2143 = vmatpush1.msra.mxu0 0.0
    %2144 = vmatprep.subr.mxu0 0.0
    %2145 = vmatpush1.msra.mxu0 0.0
    %2146 = vmatprep.subr.mxu0 0.0
    %2147 = vmatpush1.msra.mxu0 0.0
    %2148 = vmatprep.subr.mxu0 0.0
    %2149 = vmatpush1.msra.mxu0 0.0
    %2150 = vmatprep.subr.mxu0 0.0
    %2151 = vmatpush1.msra.mxu0 0.0
    %2152 = vmatprep.subr.mxu0 0.0
    %2153 = vmatpush1.msra.mxu0 0.0
    %2154 = vmatprep.subr.mxu0 0.0
    %2155 = vmatpush1.msra.mxu0 0.0
    %2156 = vmatprep.subr.mxu0 0.0
    %2157 = vmatpush1.msra.mxu0 0.0
    %2158 = vmatprep.subr.mxu0 0.0
    %2159 = vmatpush1.msra.mxu0 0.0
    %2160 = vmatprep.subr.mxu0 0.0
    %2161 = vmatpush1.msra.mxu0 0.0
    %2162 = vmatprep.subr.mxu0 0.0
    %2163 = vmatpush1.msra.mxu0 0.0
    %2164 = vmatprep.subr.mxu0 0.0
    %2165 = vmatpush1.msra.mxu0 0.0
    %2166 = vmatprep.subr.mxu0 0.0
    %2167 = vmatpush1.msra.mxu0 0.0
    %2168 = vmatprep.subr.mxu0 0.0
    %2169 = vmatpush1.msra.mxu0 0.0
    %2170 = vmatprep.subr.mxu0 0.0
    %2171 = vmatpush1.msra.mxu0 0.0
    %2172 = vmatprep.subr.mxu0 0.0
    %2173 = vmatpush1.msra.mxu0 0.0
    %2174 = vmatprep.subr.mxu0 0.0
    %2175 = vmatpush1.msra.mxu0 0.0
    %2176 = vmatprep.subr.mxu0 0.0
    %2177 = vmatpush1.msra.mxu0 0.0
    %2178 = vmatprep.subr.mxu0 0.0
    %2179 = vmatpush1.msra.mxu0 0.0
    %2180 = vmatprep.subr.mxu0 0.0
    %2181 = vmatpush1.msra.mxu0 0.0
    %2182 = vmatprep.subr.mxu0 0.0
    %2183 = vmatpush1.msra.mxu0 0.0
    %2184 = vmatprep.subr.mxu0 0.0
    %2185 = vmatpush1.msra.mxu0 0.0
    %2186 = vmatprep.subr.mxu0 0.0
    %2187 = vmatpush1.msra.mxu0 0.0
    %2188 = vmatprep.subr.mxu0 0.0
    %2189 = vmatpush1.msra.mxu0 0.0
    %2190 = vmatprep.mubr.f32.mxu0 0.0
    %2191 = vmatmul.mubr.f32.gmra.mrb[0].mxu0 %v2124
    %v2192 = vpop.f32.mrb[0].mxu0
    %v2193 = vadd.f32 %v2121, %v2192
    %v2194 = vpop.f32.mrb[0].mxu0
    %2195 = vdwg.mxu0
    %vm2196 = vcmp.gt.f32.partialorder %v2193, 0.0
    %v2197 = vmin.f32 %v2193, 0.0
    %v2198 = vmul.f32 %v2197, 1.442695
    %v2199 = vpow.pop %v2198
    %v2200 = vsub.f32 %v2199, 1.0
    %v2201 = vsel %vm2196, %v2193, %v2200
    %v2202 = vld [vmem:[%s1419] sm:$0xff]
    %v2203 = vld [vmem:[%s1419 + $0x8] sm:$0xff]
    %v2204 = vld [vmem:[%s1419 + $0x10] sm:$0xff]
    %v2205 = vld [vmem:[%s1419 + $0x18] sm:$0xff]
    %v2206 = vld [vmem:[%s1424] sm:$0x1]
    %v2208 = vlaneseq
    %v2209 = vshrl.u32 %v2208, 7
    %v2210 = vsub.s32 0, %v2209
    %v2211 = vrot.slane %v2206, %v2210
    %v2214 = vsel %vm450, %v2201, 0
    %2216 = vmatprep.subr.mxu0 0.0
    %2217 = vmatpush1.msra.mxu0 %v2202
    %2218 = vmatprep.subr.mxu0 0.0
    %2219 = vmatpush1.msra.mxu0 %v2203
    %2220 = vmatprep.subr.mxu0 0.0
    %2221 = vmatpush1.msra.mxu0 %v2204
    %2222 = vmatprep.subr.mxu0 0.0
    %2223 = vmatpush1.msra.mxu0 %v2205
    %2224 = vmatprep.subr.mxu0 0.0
    %2225 = vmatpush1.msra.mxu0 0.0
    %2226 = vmatprep.subr.mxu0 0.0
    %2227 = vmatpush1.msra.mxu0 0.0
    %2228 = vmatprep.subr.mxu0 0.0
    %2229 = vmatpush1.msra.mxu0 0.0
    %2230 = vmatprep.subr.mxu0 0.0
    %2231 = vmatpush1.msra.mxu0 0.0
    %2232 = vmatprep.subr.mxu0 0.0
    %2233 = vmatpush1.msra.mxu0 0.0
    %2234 = vmatprep.subr.mxu0 0.0
    %2235 = vmatpush1.msra.mxu0 0.0
    %2236 = vmatprep.subr.mxu0 0.0
    %2237 = vmatpush1.msra.mxu0 0.0
    %2238 = vmatprep.subr.mxu0 0.0
    %2239 = vmatpush1.msra.mxu0 0.0
    %2240 = vmatprep.subr.mxu0 0.0
    %2241 = vmatpush1.msra.mxu0 0.0
    %2242 = vmatprep.subr.mxu0 0.0
    %2243 = vmatpush1.msra.mxu0 0.0
    %2244 = vmatprep.subr.mxu0 0.0
    %2245 = vmatpush1.msra.mxu0 0.0
    %2246 = vmatprep.subr.mxu0 0.0
    %2247 = vmatpush1.msra.mxu0 0.0
    %2248 = vmatprep.subr.mxu0 0.0
    %2249 = vmatpush1.msra.mxu0 0.0
    %2250 = vmatprep.subr.mxu0 0.0
    %2251 = vmatpush1.msra.mxu0 0.0
    %2252 = vmatprep.subr.mxu0 0.0
    %2253 = vmatpush1.msra.mxu0 0.0
    %2254 = vmatprep.subr.mxu0 0.0
    %2255 = vmatpush1.msra.mxu0 0.0
    %2256 = vmatprep.subr.mxu0 0.0
    %2257 = vmatpush1.msra.mxu0 0.0
    %2258 = vmatprep.subr.mxu0 0.0
    %2259 = vmatpush1.msra.mxu0 0.0
    %2260 = vmatprep.subr.mxu0 0.0
    %2261 = vmatpush1.msra.mxu0 0.0
    %2262 = vmatprep.subr.mxu0 0.0
    %2263 = vmatpush1.msra.mxu0 0.0
    %2264 = vmatprep.subr.mxu0 0.0
    %2265 = vmatpush1.msra.mxu0 0.0
    %2266 = vmatprep.subr.mxu0 0.0
    %2267 = vmatpush1.msra.mxu0 0.0
    %2268 = vmatprep.subr.mxu0 0.0
    %2269 = vmatpush1.msra.mxu0 0.0
    %2270 = vmatprep.subr.mxu0 0.0
    %2271 = vmatpush1.msra.mxu0 0.0
    %2272 = vmatprep.subr.mxu0 0.0
    %2273 = vmatpush1.msra.mxu0 0.0
    %2274 = vmatprep.subr.mxu0 0.0
    %2275 = vmatpush1.msra.mxu0 0.0
    %2276 = vmatprep.subr.mxu0 0.0
    %2277 = vmatpush1.msra.mxu0 0.0
    %2278 = vmatprep.subr.mxu0 0.0
    %2279 = vmatpush1.msra.mxu0 0.0
    %2280 = vmatprep.mubr.f32.mxu0 0.0
    %2281 = vmatmul.mubr.f32.gmra.mrb[0].mxu0 %v2214
    %v2282 = vpop.f32.mrb[0].mxu0
    %v2283 = vadd.f32 %v2211, %v2282
    %v2284 = vpop.f32.mrb[0].mxu0
    %2285 = vdwg.mxu0
    %vm2286 = vcmp.gt.f32.partialorder %v2283, 0.0
    %v2287 = vmin.f32 %v2283, 0.0
    %v2288 = vmul.f32 %v2287, 1.442695
    %v2289 = vpow.pop %v2288
    %v2290 = vsub.f32 %v2289, 1.0
    %v2291 = vsel %vm2286, %v2283, %v2290
    %v2292 = vld [vmem:[%s1511] sm:$0xff]
    %v2293 = vld [vmem:[%s1511 + $0x8] sm:$0xff]
    %v2294 = vld [vmem:[%s1511 + $0x10] sm:$0xff]
    %v2295 = vld [vmem:[%s1511 + $0x18] sm:$0xff]
    %v2296 = vld [vmem:[%s1516] sm:$0x1]
    %v2298 = vlaneseq
    %v2299 = vshrl.u32 %v2298, 7
    %v2300 = vsub.s32 0, %v2299
    %v2301 = vrot.slane %v2296, %v2300
    %v2304 = vsel %vm450, %v2291, 0
    %2306 = vmatprep.subr.mxu0 0.0
    %2307 = vmatpush1.msra.mxu0 %v2292
    %2308 = vmatprep.subr.mxu0 0.0
    %2309 = vmatpush1.msra.mxu0 %v2293
    %2310 = vmatprep.subr.mxu0 0.0
    %2311 = vmatpush1.msra.mxu0 %v2294
    %2312 = vmatprep.subr.mxu0 0.0
    %2313 = vmatpush1.msra.mxu0 %v2295
    %2314 = vmatprep.subr.mxu0 0.0
    %2315 = vmatpush1.msra.mxu0 0.0
    %2316 = vmatprep.subr.mxu0 0.0
    %2317 = vmatpush1.msra.mxu0 0.0
    %2318 = vmatprep.subr.mxu0 0.0
    %2319 = vmatpush1.msra.mxu0 0.0
    %2320 = vmatprep.subr.mxu0 0.0
    %2321 = vmatpush1.msra.mxu0 0.0
    %2322 = vmatprep.subr.mxu0 0.0
    %2323 = vmatpush1.msra.mxu0 0.0
    %2324 = vmatprep.subr.mxu0 0.0
    %2325 = vmatpush1.msra.mxu0 0.0
    %2326 = vmatprep.subr.mxu0 0.0
    %2327 = vmatpush1.msra.mxu0 0.0
    %2328 = vmatprep.subr.mxu0 0.0
    %2329 = vmatpush1.msra.mxu0 0.0
    %2330 = vmatprep.subr.mxu0 0.0
    %2331 = vmatpush1.msra.mxu0 0.0
    %2332 = vmatprep.subr.mxu0 0.0
    %2333 = vmatpush1.msra.mxu0 0.0
    %2334 = vmatprep.subr.mxu0 0.0
    %2335 = vmatpush1.msra.mxu0 0.0
    %2336 = vmatprep.subr.mxu0 0.0
    %2337 = vmatpush1.msra.mxu0 0.0
    %2338 = vmatprep.subr.mxu0 0.0
    %2339 = vmatpush1.msra.mxu0 0.0
    %2340 = vmatprep.subr.mxu0 0.0
    %2341 = vmatpush1.msra.mxu0 0.0
    %2342 = vmatprep.subr.mxu0 0.0
    %2343 = vmatpush1.msra.mxu0 0.0
    %2344 = vmatprep.subr.mxu0 0.0
    %2345 = vmatpush1.msra.mxu0 0.0
    %2346 = vmatprep.subr.mxu0 0.0
    %2347 = vmatpush1.msra.mxu0 0.0
    %2348 = vmatprep.subr.mxu0 0.0
    %2349 = vmatpush1.msra.mxu0 0.0
    %2350 = vmatprep.subr.mxu0 0.0
    %2351 = vmatpush1.msra.mxu0 0.0
    %2352 = vmatprep.subr.mxu0 0.0
    %2353 = vmatpush1.msra.mxu0 0.0
    %2354 = vmatprep.subr.mxu0 0.0
    %2355 = vmatpush1.msra.mxu0 0.0
    %2356 = vmatprep.subr.mxu0 0.0
    %2357 = vmatpush1.msra.mxu0 0.0
    %2358 = vmatprep.subr.mxu0 0.0
    %2359 = vmatpush1.msra.mxu0 0.0
    %2360 = vmatprep.subr.mxu0 0.0
    %2361 = vmatpush1.msra.mxu0 0.0
    %2362 = vmatprep.subr.mxu0 0.0
    %2363 = vmatpush1.msra.mxu0 0.0
    %2364 = vmatprep.subr.mxu0 0.0
    %2365 = vmatpush1.msra.mxu0 0.0
    %2366 = vmatprep.subr.mxu0 0.0
    %2367 = vmatpush1.msra.mxu0 0.0
    %2368 = vmatprep.subr.mxu0 0.0
    %2369 = vmatpush1.msra.mxu0 0.0
    %2370 = vmatprep.mubr.f32.mxu0 0.0
    %2371 = vmatmul.mubr.f32.gmra.mrb[0].mxu0 %v2304
    %v2372 = vpop.f32.mrb[0].mxu0
    %v2373 = vadd.f32 %v2301, %v2372
    %v2374 = vpop.f32.mrb[0].mxu0
    %2375 = vdwg.mxu0
    %vm2376 = vcmp.gt.f32.partialorder %v2373, 0.0
    %v2377 = vmin.f32 %v2373, 0.0
    %v2378 = vmul.f32 %v2377, 1.442695
    %v2379 = vpow.pop %v2378
    %v2380 = vsub.f32 %v2379, 1.0
    %v2381 = vsel %vm2376, %v2373, %v2380
    %v2382 = vld [vmem:[%s1603] sm:$0xff]
    %v2383 = vld [vmem:[%s1603 + $0x8] sm:$0xff]
    %v2384 = vld [vmem:[%s1603 + $0x10] sm:$0xff]
    %v2385 = vld [vmem:[%s1603 + $0x18] sm:$0xff]
    %v2386 = vld [vmem:[%s1608] sm:$0x1]
    %v2388 = vlaneseq
    %v2389 = vshrl.u32 %v2388, 7
    %v2390 = vsub.s32 0, %v2389
    %v2391 = vrot.slane %v2386, %v2390
    %v2394 = vsel %vm450, %v2381, 0
    %2396 = vmatprep.subr.mxu0 0.0
    %2397 = vmatpush1.msra.mxu0 %v2382
    %2398 = vmatprep.subr.mxu0 0.0
    %2399 = vmatpush1.msra.mxu0 %v2383
    %2400 = vmatprep.subr.mxu0 0.0
    %2401 = vmatpush1.msra.mxu0 %v2384
    %2402 = vmatprep.subr.mxu0 0.0
    %2403 = vmatpush1.msra.mxu0 %v2385
    %2404 = vmatprep.subr.mxu0 0.0
    %2405 = vmatpush1.msra.mxu0 0.0
    %2406 = vmatprep.subr.mxu0 0.0
    %2407 = vmatpush1.msra.mxu0 0.0
    %2408 = vmatprep.subr.mxu0 0.0
    %2409 = vmatpush1.msra.mxu0 0.0
    %2410 = vmatprep.subr.mxu0 0.0
    %2411 = vmatpush1.msra.mxu0 0.0
    %2412 = vmatprep.subr.mxu0 0.0
    %2413 = vmatpush1.msra.mxu0 0.0
    %2414 = vmatprep.subr.mxu0 0.0
    %2415 = vmatpush1.msra.mxu0 0.0
    %2416 = vmatprep.subr.mxu0 0.0
    %2417 = vmatpush1.msra.mxu0 0.0
    %2418 = vmatprep.subr.mxu0 0.0
    %2419 = vmatpush1.msra.mxu0 0.0
    %2420 = vmatprep.subr.mxu0 0.0
    %2421 = vmatpush1.msra.mxu0 0.0
    %2422 = vmatprep.subr.mxu0 0.0
    %2423 = vmatpush1.msra.mxu0 0.0
    %2424 = vmatprep.subr.mxu0 0.0
    %2425 = vmatpush1.msra.mxu0 0.0
    %2426 = vmatprep.subr.mxu0 0.0
    %2427 = vmatpush1.msra.mxu0 0.0
    %2428 = vmatprep.subr.mxu0 0.0
    %2429 = vmatpush1.msra.mxu0 0.0
    %2430 = vmatprep.subr.mxu0 0.0
    %2431 = vmatpush1.msra.mxu0 0.0
    %2432 = vmatprep.subr.mxu0 0.0
    %2433 = vmatpush1.msra.mxu0 0.0
    %2434 = vmatprep.subr.mxu0 0.0
    %2435 = vmatpush1.msra.mxu0 0.0
    %2436 = vmatprep.subr.mxu0 0.0
    %2437 = vmatpush1.msra.mxu0 0.0
    %2438 = vmatprep.subr.mxu0 0.0
    %2439 = vmatpush1.msra.mxu0 0.0
    %2440 = vmatprep.subr.mxu0 0.0
    %2441 = vmatpush1.msra.mxu0 0.0
    %2442 = vmatprep.subr.mxu0 0.0
    %2443 = vmatpush1.msra.mxu0 0.0
    %2444 = vmatprep.subr.mxu0 0.0
    %2445 = vmatpush1.msra.mxu0 0.0
    %2446 = vmatprep.subr.mxu0 0.0
    %2447 = vmatpush1.msra.mxu0 0.0
    %2448 = vmatprep.subr.mxu0 0.0
    %2449 = vmatpush1.msra.mxu0 0.0
    %2450 = vmatprep.subr.mxu0 0.0
    %2451 = vmatpush1.msra.mxu0 0.0
    %2452 = vmatprep.subr.mxu0 0.0
    %2453 = vmatpush1.msra.mxu0 0.0
    %2454 = vmatprep.subr.mxu0 0.0
    %2455 = vmatpush1.msra.mxu0 0.0
    %2456 = vmatprep.subr.mxu0 0.0
    %2457 = vmatpush1.msra.mxu0 0.0
    %2458 = vmatprep.subr.mxu0 0.0
    %2459 = vmatpush1.msra.mxu0 0.0
    %2460 = vmatprep.mubr.f32.mxu0 0.0
    %2461 = vmatmul.mubr.f32.gmra.mrb[0].mxu0 %v2394
    %v2462 = vpop.f32.mrb[0].mxu0
    %v2463 = vadd.f32 %v2391, %v2462
    %v2464 = vpop.f32.mrb[0].mxu0
    %2465 = vdwg.mxu0
    %vm2466 = vcmp.gt.f32.partialorder %v2463, 0.0
    %v2467 = vmin.f32 %v2463, 0.0
    %v2468 = vmul.f32 %v2467, 1.442695
    %v2469 = vpow.pop %v2468
    %v2470 = vsub.f32 %v2469, 1.0
    %v2471 = vsel %vm2466, %v2463, %v2470
    %v2472 = vld [vmem:[%s49] sm:$0xff]
    %v2473 = vld [vmem:[%s49 + $0x8] sm:$0xff]
    %v2474 = vld [vmem:[%s49 + $0x10] sm:$0xff]
    %v2475 = vld [vmem:[%s49 + $0x18] sm:$0xff]
    %v2476 = vld [vmem:[#allocation30] sm:$0x1]
    %v2478 = vlaneseq
    %v2479 = vshrl.u32 %v2478, 7
    %v2480 = vsub.s32 0, %v2479
    %v2481 = vrot.slane %v2476, %v2480
    %v2484 = vsel %vm450, %v2471, 0
    %2486 = vmatprep.subr.mxu0 0.0
    %2487 = vmatpush1.msra.mxu0 %v2472
    %2488 = vmatprep.subr.mxu0 0.0
    %2489 = vmatpush1.msra.mxu0 %v2473
    %2490 = vmatprep.subr.mxu0 0.0
    %2491 = vmatpush1.msra.mxu0 %v2474
    %2492 = vmatprep.subr.mxu0 0.0
    %2493 = vmatpush1.msra.mxu0 %v2475
    %2494 = vmatprep.subr.mxu0 0.0
    %2495 = vmatpush1.msra.mxu0 0.0
    %2496 = vmatprep.subr.mxu0 0.0
    %2497 = vmatpush1.msra.mxu0 0.0
    %2498 = vmatprep.subr.mxu0 0.0
    %2499 = vmatpush1.msra.mxu0 0.0
    %2500 = vmatprep.subr.mxu0 0.0
    %2501 = vmatpush1.msra.mxu0 0.0
    %2502 = vmatprep.subr.mxu0 0.0
    %2503 = vmatpush1.msra.mxu0 0.0
    %2504 = vmatprep.subr.mxu0 0.0
    %2505 = vmatpush1.msra.mxu0 0.0
    %2506 = vmatprep.subr.mxu0 0.0
    %2507 = vmatpush1.msra.mxu0 0.0
    %2508 = vmatprep.subr.mxu0 0.0
    %2509 = vmatpush1.msra.mxu0 0.0
    %2510 = vmatprep.subr.mxu0 0.0
    %2511 = vmatpush1.msra.mxu0 0.0
    %2512 = vmatprep.subr.mxu0 0.0
    %2513 = vmatpush1.msra.mxu0 0.0
    %2514 = vmatprep.subr.mxu0 0.0
    %2515 = vmatpush1.msra.mxu0 0.0
    %2516 = vmatprep.subr.mxu0 0.0
    %2517 = vmatpush1.msra.mxu0 0.0
    %2518 = vmatprep.subr.mxu0 0.0
    %2519 = vmatpush1.msra.mxu0 0.0
    %2520 = vmatprep.subr.mxu0 0.0
    %2521 = vmatpush1.msra.mxu0 0.0
    %2522 = vmatprep.subr.mxu0 0.0
    %2523 = vmatpush1.msra.mxu0 0.0
    %2524 = vmatprep.subr.mxu0 0.0
    %2525 = vmatpush1.msra.mxu0 0.0
    %2526 = vmatprep.subr.mxu0 0.0
    %2527 = vmatpush1.msra.mxu0 0.0
    %2528 = vmatprep.subr.mxu0 0.0
    %2529 = vmatpush1.msra.mxu0 0.0
    %2530 = vmatprep.subr.mxu0 0.0
    %2531 = vmatpush1.msra.mxu0 0.0
    %2532 = vmatprep.subr.mxu0 0.0
    %2533 = vmatpush1.msra.mxu0 0.0
    %2534 = vmatprep.subr.mxu0 0.0
    %2535 = vmatpush1.msra.mxu0 0.0
    %2536 = vmatprep.subr.mxu0 0.0
    %2537 = vmatpush1.msra.mxu0 0.0
    %2538 = vmatprep.subr.mxu0 0.0
    %2539 = vmatpush1.msra.mxu0 0.0
    %2540 = vmatprep.subr.mxu0 0.0
    %2541 = vmatpush1.msra.mxu0 0.0
    %2542 = vmatprep.subr.mxu0 0.0
    %2543 = vmatpush1.msra.mxu0 0.0
    %2544 = vmatprep.subr.mxu0 0.0
    %2545 = vmatpush1.msra.mxu0 0.0
    %2546 = vmatprep.subr.mxu0 0.0
    %2547 = vmatpush1.msra.mxu0 0.0
    %2548 = vmatprep.subr.mxu0 0.0
    %2549 = vmatpush1.msra.mxu0 0.0
    %2550 = vmatprep.mubr.f32.mxu0 0.0
    %2551 = vmatmul.mubr.f32.gmra.mrb[0].mxu0 %v2484
    %v2552 = vpop.f32.mrb[0].mxu0
    %v2553 = vadd.f32 %v2481, %v2552
    %v2554 = vpop.f32.mrb[0].mxu0
    %2555 = vdwg.mxu0
    %2556 = vst.msk [vmem:[%s59 + $0x8] sm:$0xff] %vm1779, %v2553
    %v2557 = vlaneseq
    %v2558 = vshrl.u32 %v2557, 7
    %v2559 = vsub.s32 1, %v2558
    %v2560 = vrot.slane %v686, %v2559
    %v2561 = vsel %vm1785, %v2017, 0
    %2563 = vmatprep.subr.mxu0 0.0
    %2564 = vmatpush1.msra.mxu0 %v1790
    %2565 = vmatprep.subr.mxu0 0.0
    %2566 = vmatpush1.msra.mxu0 0.0
    %2567 = vmatprep.subr.mxu0 0.0
    %2568 = vmatpush1.msra.mxu0 0.0
    %2569 = vmatprep.subr.mxu0 0.0
    %2570 = vmatpush1.msra.mxu0 0.0
    %2571 = vmatprep.subr.mxu0 0.0
    %2572 = vmatpush1.msra.mxu0 0.0
    %2573 = vmatprep.subr.mxu0 0.0
    %2574 = vmatpush1.msra.mxu0 0.0
    %2575 = vmatprep.subr.mxu0 0.0
    %2576 = vmatpush1.msra.mxu0 0.0
    %2577 = vmatprep.subr.mxu0 0.0
    %2578 = vmatpush1.msra.mxu0 0.0
    %2579 = vmatprep.subr.mxu0 0.0
    %2580 = vmatpush1.msra.mxu0 0.0
    %2581 = vmatprep.subr.mxu0 0.0
    %2582 = vmatpush1.msra.mxu0 0.0
    %2583 = vmatprep.subr.mxu0 0.0
    %2584 = vmatpush1.msra.mxu0 0.0
    %2585 = vmatprep.subr.mxu0 0.0
    %2586 = vmatpush1.msra.mxu0 0.0
    %2587 = vmatprep.subr.mxu0 0.0
    %2588 = vmatpush1.msra.mxu0 0.0
    %2589 = vmatprep.subr.mxu0 0.0
    %2590 = vmatpush1.msra.mxu0 0.0
    %2591 = vmatprep.subr.mxu0 0.0
    %2592 = vmatpush1.msra.mxu0 0.0
    %2593 = vmatprep.subr.mxu0 0.0
    %2594 = vmatpush1.msra.mxu0 0.0
    %2595 = vmatprep.subr.mxu0 0.0
    %2596 = vmatpush1.msra.mxu0 0.0
    %2597 = vmatprep.subr.mxu0 0.0
    %2598 = vmatpush1.msra.mxu0 0.0
    %2599 = vmatprep.subr.mxu0 0.0
    %2600 = vmatpush1.msra.mxu0 0.0
    %2601 = vmatprep.subr.mxu0 0.0
    %2602 = vmatpush1.msra.mxu0 0.0
    %2603 = vmatprep.subr.mxu0 0.0
    %2604 = vmatpush1.msra.mxu0 0.0
    %2605 = vmatprep.subr.mxu0 0.0
    %2606 = vmatpush1.msra.mxu0 0.0
    %2607 = vmatprep.subr.mxu0 0.0
    %2608 = vmatpush1.msra.mxu0 0.0
    %2609 = vmatprep.subr.mxu0 0.0
    %2610 = vmatpush1.msra.mxu0 0.0
    %2611 = vmatprep.subr.mxu0 0.0
    %2612 = vmatpush1.msra.mxu0 0.0
    %2613 = vmatprep.subr.mxu0 0.0
    %2614 = vmatpush1.msra.mxu0 0.0
    %2615 = vmatprep.subr.mxu0 0.0
    %2616 = vmatpush1.msra.mxu0 0.0
    %2617 = vmatprep.subr.mxu0 0.0
    %2618 = vmatpush1.msra.mxu0 0.0
    %2619 = vmatprep.subr.mxu0 0.0
    %2620 = vmatpush1.msra.mxu0 0.0
    %2621 = vmatprep.subr.mxu0 0.0
    %2622 = vmatpush1.msra.mxu0 0.0
    %2623 = vmatprep.subr.mxu0 0.0
    %2624 = vmatpush1.msra.mxu0 0.0
    %2625 = vmatprep.subr.mxu0 0.0
    %2626 = vmatpush1.msra.mxu0 0.0
    %2627 = vmatprep.mubr.f32.mxu0 0.0
    %2628 = vmatmul.mubr.f32.gmra.mrb[0].mxu0 %v2561
    %v2629 = vpop.f32.mrb[0].mxu0
    %v2630 = vadd.f32 %v2560, %v2629
    %v2631 = vpop.f32.mrb[0].mxu0
    %2632 = vdwg.mxu0
    %v2633 = vlaneseq
    %v2634 = vshrl.u32 %v2633, 7
    %v2635 = vsub.s32 1, %v2634
    %v2636 = vrot.slane %v919, %v2635
    %2637 = vmatprep.subr.mxu0 0.0
    %2638 = vmatpush1.msra.mxu0 %v1867
    %2639 = vmatprep.subr.mxu0 0.0
    %2640 = vmatpush1.msra.mxu0 0.0
    %2641 = vmatprep.subr.mxu0 0.0
    %2642 = vmatpush1.msra.mxu0 0.0
    %2643 = vmatprep.subr.mxu0 0.0
    %2644 = vmatpush1.msra.mxu0 0.0
    %2645 = vmatprep.subr.mxu0 0.0
    %2646 = vmatpush1.msra.mxu0 0.0
    %2647 = vmatprep.subr.mxu0 0.0
    %2648 = vmatpush1.msra.mxu0 0.0
    %2649 = vmatprep.subr.mxu0 0.0
    %2650 = vmatpush1.msra.mxu0 0.0
    %2651 = vmatprep.subr.mxu0 0.0
    %2652 = vmatpush1.msra.mxu0 0.0
    %2653 = vmatprep.subr.mxu0 0.0
    %2654 = vmatpush1.msra.mxu0 0.0
    %2655 = vmatprep.subr.mxu0 0.0
    %2656 = vmatpush1.msra.mxu0 0.0
    %2657 = vmatprep.subr.mxu0 0.0
    %2658 = vmatpush1.msra.mxu0 0.0
    %2659 = vmatprep.subr.mxu0 0.0
    %2660 = vmatpush1.msra.mxu0 0.0
    %2661 = vmatprep.subr.mxu0 0.0
    %2662 = vmatpush1.msra.mxu0 0.0
    %2663 = vmatprep.subr.mxu0 0.0
    %2664 = vmatpush1.msra.mxu0 0.0
    %2665 = vmatprep.subr.mxu0 0.0
    %2666 = vmatpush1.msra.mxu0 0.0
    %2667 = vmatprep.subr.mxu0 0.0
    %2668 = vmatpush1.msra.mxu0 0.0
    %2669 = vmatprep.subr.mxu0 0.0
    %2670 = vmatpush1.msra.mxu0 0.0
    %2671 = vmatprep.subr.mxu0 0.0
    %2672 = vmatpush1.msra.mxu0 0.0
    %2673 = vmatprep.subr.mxu0 0.0
    %2674 = vmatpush1.msra.mxu0 0.0
    %2675 = vmatprep.subr.mxu0 0.0
    %2676 = vmatpush1.msra.mxu0 0.0
    %2677 = vmatprep.subr.mxu0 0.0
    %2678 = vmatpush1.msra.mxu0 0.0
    %2679 = vmatprep.subr.mxu0 0.0
    %2680 = vmatpush1.msra.mxu0 0.0
    %2681 = vmatprep.subr.mxu0 0.0
    %2682 = vmatpush1.msra.mxu0 0.0
    %2683 = vmatprep.subr.mxu0 0.0
    %2684 = vmatpush1.msra.mxu0 0.0
    %2685 = vmatprep.subr.mxu0 0.0
    %2686 = vmatpush1.msra.mxu0 0.0
    %2687 = vmatprep.subr.mxu0 0.0
    %2688 = vmatpush1.msra.mxu0 0.0
    %2689 = vmatprep.subr.mxu0 0.0
    %2690 = vmatpush1.msra.mxu0 0.0
    %2691 = vmatprep.subr.mxu0 0.0
    %2692 = vmatpush1.msra.mxu0 0.0
    %2693 = vmatprep.subr.mxu0 0.0
    %2694 = vmatpush1.msra.mxu0 0.0
    %2695 = vmatprep.subr.mxu0 0.0
    %2696 = vmatpush1.msra.mxu0 0.0
    %2697 = vmatprep.subr.mxu0 0.0
    %2698 = vmatpush1.msra.mxu0 0.0
    %2699 = vmatprep.subr.mxu0 0.0
    %2700 = vmatpush1.msra.mxu0 0.0
    %2701 = vmatprep.mubr.f32.mxu0 0.0
    %2702 = vmatmul.mubr.f32.gmra.mrb[0].mxu0 %v2561
    %v2703 = vpop.f32.mrb[0].mxu0
    %v2704 = vadd.f32 %v2636, %v2703
    %v2705 = vpop.f32.mrb[0].mxu0
    %2706 = vdwg.mxu0
    %v2707 = vlaneseq
    %v2708 = vshrl.u32 %v2707, 7
    %v2709 = vsub.s32 1, %v2708
    %v2710 = vrot.slane %v1152, %v2709
    %2711 = vmatprep.subr.mxu0 0.0
    %2712 = vmatpush1.msra.mxu0 %v1944
    %2713 = vmatprep.subr.mxu0 0.0
    %2714 = vmatpush1.msra.mxu0 0.0
    %2715 = vmatprep.subr.mxu0 0.0
    %2716 = vmatpush1.msra.mxu0 0.0
    %2717 = vmatprep.subr.mxu0 0.0
    %2718 = vmatpush1.msra.mxu0 0.0
    %2719 = vmatprep.subr.mxu0 0.0
    %2720 = vmatpush1.msra.mxu0 0.0
    %2721 = vmatprep.subr.mxu0 0.0
    %2722 = vmatpush1.msra.mxu0 0.0
    %2723 = vmatprep.subr.mxu0 0.0
    %2724 = vmatpush1.msra.mxu0 0.0
    %2725 = vmatprep.subr.mxu0 0.0
    %2726 = vmatpush1.msra.mxu0 0.0
    %2727 = vmatprep.subr.mxu0 0.0
    %2728 = vmatpush1.msra.mxu0 0.0
    %2729 = vmatprep.subr.mxu0 0.0
    %2730 = vmatpush1.msra.mxu0 0.0
    %2731 = vmatprep.subr.mxu0 0.0
    %2732 = vmatpush1.msra.mxu0 0.0
    %2733 = vmatprep.subr.mxu0 0.0
    %2734 = vmatpush1.msra.mxu0 0.0
    %2735 = vmatprep.subr.mxu0 0.0
    %2736 = vmatpush1.msra.mxu0 0.0
    %2737 = vmatprep.subr.mxu0 0.0
    %2738 = vmatpush1.msra.mxu0 0.0
    %2739 = vmatprep.subr.mxu0 0.0
    %2740 = vmatpush1.msra.mxu0 0.0
    %2741 = vmatprep.subr.mxu0 0.0
    %2742 = vmatpush1.msra.mxu0 0.0
    %2743 = vmatprep.subr.mxu0 0.0
    %2744 = vmatpush1.msra.mxu0 0.0
    %2745 = vmatprep.subr.mxu0 0.0
    %2746 = vmatpush1.msra.mxu0 0.0
    %2747 = vmatprep.subr.mxu0 0.0
    %2748 = vmatpush1.msra.mxu0 0.0
    %2749 = vmatprep.subr.mxu0 0.0
    %2750 = vmatpush1.msra.mxu0 0.0
    %2751 = vmatprep.subr.mxu0 0.0
    %2752 = vmatpush1.msra.mxu0 0.0
    %2753 = vmatprep.subr.mxu0 0.0
    %2754 = vmatpush1.msra.mxu0 0.0
    %2755 = vmatprep.subr.mxu0 0.0
    %2756 = vmatpush1.msra.mxu0 0.0
    %2757 = vmatprep.subr.mxu0 0.0
    %2758 = vmatpush1.msra.mxu0 0.0
    %2759 = vmatprep.subr.mxu0 0.0
    %2760 = vmatpush1.msra.mxu0 0.0
    %2761 = vmatprep.subr.mxu0 0.0
    %2762 = vmatpush1.msra.mxu0 0.0
    %2763 = vmatprep.subr.mxu0 0.0
    %2764 = vmatpush1.msra.mxu0 0.0
    %2765 = vmatprep.subr.mxu0 0.0
    %2766 = vmatpush1.msra.mxu0 0.0
    %2767 = vmatprep.subr.mxu0 0.0
    %2768 = vmatpush1.msra.mxu0 0.0
    %2769 = vmatprep.subr.mxu0 0.0
    %2770 = vmatpush1.msra.mxu0 0.0
    %2771 = vmatprep.subr.mxu0 0.0
    %2772 = vmatpush1.msra.mxu0 0.0
    %2773 = vmatprep.subr.mxu0 0.0
    %2774 = vmatpush1.msra.mxu0 0.0
    %2775 = vmatprep.mubr.f32.mxu0 0.0
    %2776 = vmatmul.mubr.f32.gmra.mrb[0].mxu0 %v2561
    %v2777 = vpop.f32.mrb[0].mxu0
    %v2778 = vadd.f32 %v2710, %v2777
    %v2779 = vpop.f32.mrb[0].mxu0
    %2780 = vdwg.mxu0
    %v2781 = vld [vmem:[#allocation12] sm:$0x1]
    %s2782 = scalar_lea.vmem [#allocation12], 1
    %v2783 = vld [vmem:[%s2782] sm:$0x1]
    %s2784 = scalar_lea.vmem [#allocation12], 2
    %v2785 = vld [vmem:[%s2784] sm:$0x1]
    %v2786 = vld [vmem:[#allocation16] sm:$0x1]
    %s2787 = scalar_lea.vmem [#allocation16], 1
    %v2788 = vld [vmem:[%s2787] sm:$0x1]
    %s2789 = scalar_lea.vmem [#allocation16], 2
    %v2790 = vld [vmem:[%s2789] sm:$0x1]
    %v2791 = vld [vmem:[#allocation18] sm:$0x1]
    %s2792 = scalar_lea.vmem [#allocation18], 1
    %v2793 = vld [vmem:[%s2792] sm:$0x1]
    %s2794 = scalar_lea.vmem [#allocation18], 2
    %v2795 = vld [vmem:[%s2794] sm:$0x1]
    %v2797 = vrot.slane %v2630, 7
    %vm2799 = vcmask 1040384
    %v2800 = vsel %vm2799, %v1859, %v2797
    %v2802 = vrot.slane %v2704, 7
    %v2804 = vsel %vm2799, %v1936, %v2802
    %v2806 = vrot.slane %v2778, 7
    %v2808 = vsel %vm2799, %v2013, %v2806
    %v2809 = vld [vmem:[%s17] sm:$0xff]
    %v2810 = vld [vmem:[%s17 + $0x8] sm:$0xff]
    %v2811 = vld [vmem:[%s17 + $0x10] sm:$0xff]
    %v2812 = vld [vmem:[%s17 + $0x18] sm:$0xff]
    %v2813 = vld [vmem:[%s17 + $0x20] sm:$0xff]
    %v2814 = vld [vmem:[%s17 + $0x28] sm:$0xff]
    %v2815 = vld [vmem:[%s17 + $0x30] sm:$0xff]
    %v2816 = vld [vmem:[%s17 + $0x38] sm:$0xff]
    %v2818 = vlaneseq
    %v2819 = vshrl.u32 %v2818, 7
    %v2820 = vsub.s32 0, %v2819
    %v2821 = vrot.slane %v2781, %v2820
    %vm2823 = vcmask 523264
    %v2825 = vsel %vm2823, 0.0, 0
    %2827 = vmatprep.subr.mxu0 0.0
    %2828 = vmatpush1.msra.mxu0 %v2809
    %2829 = vmatprep.subr.mxu0 0.0
    %2830 = vmatpush1.msra.mxu0 %v2810
    %2831 = vmatprep.subr.mxu0 0.0
    %2832 = vmatpush1.msra.mxu0 %v2811
    %2833 = vmatprep.subr.mxu0 0.0
    %2834 = vmatpush1.msra.mxu0 %v2812
    %2835 = vmatprep.subr.mxu0 0.0
    %2836 = vmatpush1.msra.mxu0 %v2813
    %2837 = vmatprep.subr.mxu0 0.0
    %2838 = vmatpush1.msra.mxu0 %v2814
    %2839 = vmatprep.subr.mxu0 0.0
    %2840 = vmatpush1.msra.mxu0 %v2815
    %2841 = vmatprep.subr.mxu0 0.0
    %2842 = vmatpush1.msra.mxu0 %v2816
    %2843 = vmatprep.subr.mxu0 0.0
    %2844 = vmatpush1.msra.mxu0 0.0
    %2845 = vmatprep.subr.mxu0 0.0
    %2846 = vmatpush1.msra.mxu0 0.0
    %2847 = vmatprep.subr.mxu0 0.0
    %2848 = vmatpush1.msra.mxu0 0.0
    %2849 = vmatprep.subr.mxu0 0.0
    %2850 = vmatpush1.msra.mxu0 0.0
    %2851 = vmatprep.subr.mxu0 0.0
    %2852 = vmatpush1.msra.mxu0 0.0
    %2853 = vmatprep.subr.mxu0 0.0
    %2854 = vmatpush1.msra.mxu0 0.0
    %2855 = vmatprep.subr.mxu0 0.0
    %2856 = vmatpush1.msra.mxu0 0.0
    %2857 = vmatprep.subr.mxu0 0.0
    %2858 = vmatpush1.msra.mxu0 0.0
    %2859 = vmatprep.subr.mxu0 0.0
    %2860 = vmatpush1.msra.mxu0 0.0
    %2861 = vmatprep.subr.mxu0 0.0
    %2862 = vmatpush1.msra.mxu0 0.0
    %2863 = vmatprep.subr.mxu0 0.0
    %2864 = vmatpush1.msra.mxu0 0.0
    %2865 = vmatprep.subr.mxu0 0.0
    %2866 = vmatpush1.msra.mxu0 0.0
    %2867 = vmatprep.subr.mxu0 0.0
    %2868 = vmatpush1.msra.mxu0 0.0
    %2869 = vmatprep.subr.mxu0 0.0
    %2870 = vmatpush1.msra.mxu0 0.0
    %2871 = vmatprep.subr.mxu0 0.0
    %2872 = vmatpush1.msra.mxu0 0.0
    %2873 = vmatprep.subr.mxu0 0.0
    %2874 = vmatpush1.msra.mxu0 0.0
    %2875 = vmatprep.subr.mxu0 0.0
    %2876 = vmatpush1.msra.mxu0 0.0
    %2877 = vmatprep.subr.mxu0 0.0
    %2878 = vmatpush1.msra.mxu0 0.0
    %2879 = vmatprep.subr.mxu0 0.0
    %2880 = vmatpush1.msra.mxu0 0.0
    %2881 = vmatprep.subr.mxu0 0.0
    %2882 = vmatpush1.msra.mxu0 0.0
    %2883 = vmatprep.subr.mxu0 0.0
    %2884 = vmatpush1.msra.mxu0 0.0
    %2885 = vmatprep.subr.mxu0 0.0
    %2886 = vmatpush1.msra.mxu0 0.0
    %2887 = vmatprep.subr.mxu0 0.0
    %2888 = vmatpush1.msra.mxu0 0.0
    %2889 = vmatprep.subr.mxu0 0.0
    %2890 = vmatpush1.msra.mxu0 0.0
    %2891 = vmatprep.mubr.f32.mxu0 0.0
    %2892 = vmatmul.mubr.f32.gmra.mrb[0].mxu0 %v2825
    %v2893 = vpop.f32.mrb[0].mxu0
    %v2894 = vadd.f32 %v2821, %v2893
    %v2895 = vpop.f32.mrb[0].mxu0
    %2896 = vdwg.mxu0
    %s2897 = scalar_lea.vmem %s17, 64
    %v2898 = vld [vmem:[%s2897] sm:$0xff]
    %v2899 = vld [vmem:[%s2897 + $0x8] sm:$0xff]
    %v2900 = vld [vmem:[%s2897 + $0x10] sm:$0xff]
    %v2901 = vld [vmem:[%s2897 + $0x18] sm:$0xff]
    %v2902 = vld [vmem:[%s2897 + $0x20] sm:$0xff]
    %v2903 = vld [vmem:[%s2897 + $0x28] sm:$0xff]
    %v2904 = vld [vmem:[%s2897 + $0x30] sm:$0xff]
    %v2905 = vld [vmem:[%s2897 + $0x38] sm:$0xff]
    %v2907 = vlaneseq
    %v2908 = vshrl.u32 %v2907, 7
    %v2909 = vsub.s32 0, %v2908
    %v2910 = vrot.slane %v2783, %v2909
    %2912 = vmatprep.subr.mxu0 0.0
    %2913 = vmatpush1.msra.mxu0 %v2898
    %2914 = vmatprep.subr.mxu0 0.0
    %2915 = vmatpush1.msra.mxu0 %v2899
    %2916 = vmatprep.subr.mxu0 0.0
    %2917 = vmatpush1.msra.mxu0 %v2900
    %2918 = vmatprep.subr.mxu0 0.0
    %2919 = vmatpush1.msra.mxu0 %v2901
    %2920 = vmatprep.subr.mxu0 0.0
    %2921 = vmatpush1.msra.mxu0 %v2902
    %2922 = vmatprep.subr.mxu0 0.0
    %2923 = vmatpush1.msra.mxu0 %v2903
    %2924 = vmatprep.subr.mxu0 0.0
    %2925 = vmatpush1.msra.mxu0 %v2904
    %2926 = vmatprep.subr.mxu0 0.0
    %2927 = vmatpush1.msra.mxu0 %v2905
    %2928 = vmatprep.subr.mxu0 0.0
    %2929 = vmatpush1.msra.mxu0 0.0
    %2930 = vmatprep.subr.mxu0 0.0
    %2931 = vmatpush1.msra.mxu0 0.0
    %2932 = vmatprep.subr.mxu0 0.0
    %2933 = vmatpush1.msra.mxu0 0.0
    %2934 = vmatprep.subr.mxu0 0.0
    %2935 = vmatpush1.msra.mxu0 0.0
    %2936 = vmatprep.subr.mxu0 0.0
    %2937 = vmatpush1.msra.mxu0 0.0
    %2938 = vmatprep.subr.mxu0 0.0
    %2939 = vmatpush1.msra.mxu0 0.0
    %2940 = vmatprep.subr.mxu0 0.0
    %2941 = vmatpush1.msra.mxu0 0.0
    %2942 = vmatprep.subr.mxu0 0.0
    %2943 = vmatpush1.msra.mxu0 0.0
    %2944 = vmatprep.subr.mxu0 0.0
    %2945 = vmatpush1.msra.mxu0 0.0
    %2946 = vmatprep.subr.mxu0 0.0
    %2947 = vmatpush1.msra.mxu0 0.0
    %2948 = vmatprep.subr.mxu0 0.0
    %2949 = vmatpush1.msra.mxu0 0.0
    %2950 = vmatprep.subr.mxu0 0.0
    %2951 = vmatpush1.msra.mxu0 0.0
    %2952 = vmatprep.subr.mxu0 0.0
    %2953 = vmatpush1.msra.mxu0 0.0
    %2954 = vmatprep.subr.mxu0 0.0
    %2955 = vmatpush1.msra.mxu0 0.0
    %2956 = vmatprep.subr.mxu0 0.0
    %2957 = vmatpush1.msra.mxu0 0.0
    %2958 = vmatprep.subr.mxu0 0.0
    %2959 = vmatpush1.msra.mxu0 0.0
    %2960 = vmatprep.subr.mxu0 0.0
    %2961 = vmatpush1.msra.mxu0 0.0
    %2962 = vmatprep.subr.mxu0 0.0
    %2963 = vmatpush1.msra.mxu0 0.0
    %2964 = vmatprep.subr.mxu0 0.0
    %2965 = vmatpush1.msra.mxu0 0.0
    %2966 = vmatprep.subr.mxu0 0.0
    %2967 = vmatpush1.msra.mxu0 0.0
    %2968 = vmatprep.subr.mxu0 0.0
    %2969 = vmatpush1.msra.mxu0 0.0
    %2970 = vmatprep.subr.mxu0 0.0
    %2971 = vmatpush1.msra.mxu0 0.0
    %2972 = vmatprep.subr.mxu0 0.0
    %2973 = vmatpush1.msra.mxu0 0.0
    %2974 = vmatprep.subr.mxu0 0.0
    %2975 = vmatpush1.msra.mxu0 0.0
    %2976 = vmatprep.mubr.f32.mxu0 0.0
    %2977 = vmatmul.mubr.f32.gmra.mrb[0].mxu0 %v2825
    %v2978 = vpop.f32.mrb[0].mxu0
    %v2979 = vadd.f32 %v2910, %v2978
    %v2980 = vpop.f32.mrb[0].mxu0
    %2981 = vdwg.mxu0
    %s2982 = scalar_lea.vmem %s17, 128
    %v2983 = vld [vmem:[%s2982] sm:$0xff]
    %v2984 = vld [vmem:[%s2982 + $0x8] sm:$0xff]
    %v2985 = vld [vmem:[%s2982 + $0x10] sm:$0xff]
    %v2986 = vld [vmem:[%s2982 + $0x18] sm:$0xff]
    %v2987 = vld [vmem:[%s2982 + $0x20] sm:$0xff]
    %v2988 = vld [vmem:[%s2982 + $0x28] sm:$0xff]
    %v2989 = vld [vmem:[%s2982 + $0x30] sm:$0xff]
    %v2990 = vld [vmem:[%s2982 + $0x38] sm:$0xff]
    %v2992 = vlaneseq
    %v2993 = vshrl.u32 %v2992, 7
    %v2994 = vsub.s32 0, %v2993
    %v2995 = vrot.slane %v2785, %v2994
    %2997 = vmatprep.subr.mxu0 0.0
    %2998 = vmatpush1.msra.mxu0 %v2983
    %2999 = vmatprep.subr.mxu0 0.0
    %3000 = vmatpush1.msra.mxu0 %v2984
    %3001 = vmatprep.subr.mxu0 0.0
    %3002 = vmatpush1.msra.mxu0 %v2985
    %3003 = vmatprep.subr.mxu0 0.0
    %3004 = vmatpush1.msra.mxu0 %v2986
    %3005 = vmatprep.subr.mxu0 0.0
    %3006 = vmatpush1.msra.mxu0 %v2987
    %3007 = vmatprep.subr.mxu0 0.0
    %3008 = vmatpush1.msra.mxu0 %v2988
    %3009 = vmatprep.subr.mxu0 0.0
    %3010 = vmatpush1.msra.mxu0 %v2989
    %3011 = vmatprep.subr.mxu0 0.0
    %3012 = vmatpush1.msra.mxu0 %v2990
    %3013 = vmatprep.subr.mxu0 0.0
    %3014 = vmatpush1.msra.mxu0 0.0
    %3015 = vmatprep.subr.mxu0 0.0
    %3016 = vmatpush1.msra.mxu0 0.0
    %3017 = vmatprep.subr.mxu0 0.0
    %3018 = vmatpush1.msra.mxu0 0.0
    %3019 = vmatprep.subr.mxu0 0.0
    %3020 = vmatpush1.msra.mxu0 0.0
    %3021 = vmatprep.subr.mxu0 0.0
    %3022 = vmatpush1.msra.mxu0 0.0
    %3023 = vmatprep.subr.mxu0 0.0
    %3024 = vmatpush1.msra.mxu0 0.0
    %3025 = vmatprep.subr.mxu0 0.0
    %3026 = vmatpush1.msra.mxu0 0.0
    %3027 = vmatprep.subr.mxu0 0.0
    %3028 = vmatpush1.msra.mxu0 0.0
    %3029 = vmatprep.subr.mxu0 0.0
    %3030 = vmatpush1.msra.mxu0 0.0
    %3031 = vmatprep.subr.mxu0 0.0
    %3032 = vmatpush1.msra.mxu0 0.0
    %3033 = vmatprep.subr.mxu0 0.0
    %3034 = vmatpush1.msra.mxu0 0.0
    %3035 = vmatprep.subr.mxu0 0.0
    %3036 = vmatpush1.msra.mxu0 0.0
    %3037 = vmatprep.subr.mxu0 0.0
    %3038 = vmatpush1.msra.mxu0 0.0
    %3039 = vmatprep.subr.mxu0 0.0
    %3040 = vmatpush1.msra.mxu0 0.0
    %3041 = vmatprep.subr.mxu0 0.0
    %3042 = vmatpush1.msra.mxu0 0.0
    %3043 = vmatprep.subr.mxu0 0.0
    %3044 = vmatpush1.msra.mxu0 0.0
    %3045 = vmatprep.subr.mxu0 0.0
    %3046 = vmatpush1.msra.mxu0 0.0
    %3047 = vmatprep.subr.mxu0 0.0
    %3048 = vmatpush1.msra.mxu0 0.0
    %3049 = vmatprep.subr.mxu0 0.0
    %3050 = vmatpush1.msra.mxu0 0.0
    %3051 = vmatprep.subr.mxu0 0.0
    %3052 = vmatpush1.msra.mxu0 0.0
    %3053 = vmatprep.subr.mxu0 0.0
    %3054 = vmatpush1.msra.mxu0 0.0
    %3055 = vmatprep.subr.mxu0 0.0
    %3056 = vmatpush1.msra.mxu0 0.0
    %3057 = vmatprep.subr.mxu0 0.0
    %3058 = vmatpush1.msra.mxu0 0.0
    %3059 = vmatprep.subr.mxu0 0.0
    %3060 = vmatpush1.msra.mxu0 0.0
    %3061 = vmatprep.mubr.f32.mxu0 0.0
    %3062 = vmatmul.mubr.f32.gmra.mrb[0].mxu0 %v2825
    %v3063 = vpop.f32.mrb[0].mxu0
    %v3064 = vadd.f32 %v2995, %v3063
    %v3065 = vpop.f32.mrb[0].mxu0
    %3066 = vdwg.mxu0
    %v3067 = vadd.f32 %v2800, %v2894
    %v3068 = vxor.u32 %v3067, 2147483648
    %v3069 = vmul.f32 %v3068, 1.442695
    %v3070 = vpow.pop %v3069
    %v3071 = vadd.f32 %v3070, 1.0
    %v3072 = vrcp.pop %v3071
    %v3073 = vmul.f32 1.0, %v3072
    %v3074 = vadd.f32 %v2804, %v2979
    %v3075 = vxor.u32 %v3074, 2147483648
    %v3076 = vmul.f32 %v3075, 1.442695
    %v3077 = vpow.pop %v3076
    %v3078 = vadd.f32 %v3077, 1.0
    %v3079 = vrcp.pop %v3078
    %v3080 = vmul.f32 1.0, %v3079
    %v3081 = vmul.f32 %v3073, %v3064
    %v3082 = vadd.f32 %v2808, %v3081
    %v3083 = vtanh.pop %v3082
    %v3084 = vsub.f32 1.0, %v3080
    %v3085 = vmul.f32 %v3084, %v3083
    %v3086 = vmul.f32 %v3080, 0.0
    %v3087 = vadd.f32 %v3085, %v3086
    %v3088 = vld [vmem:[#allocation13] sm:$0xff]
    %v3089 = vld [vmem:[#allocation13 + $0x8] sm:$0xff]
    %v3090 = vld [vmem:[#allocation13 + $0x10] sm:$0xff]
    %v3091 = vld [vmem:[#allocation13 + $0x18] sm:$0xff]
    %v3092 = vld [vmem:[#allocation13 + $0x20] sm:$0xff]
    %v3093 = vld [vmem:[#allocation13 + $0x28] sm:$0xff]
    %v3094 = vld [vmem:[#allocation13 + $0x30] sm:$0xff]
    %v3095 = vld [vmem:[#allocation13 + $0x38] sm:$0xff]
    %v3097 = vlaneseq
    %v3098 = vshrl.u32 %v3097, 7
    %v3099 = vsub.s32 0, %v3098
    %v3100 = vrot.slane %v2786, %v3099
    %v3103 = vsel %vm2823, %v3087, 0
    %3105 = vmatprep.subr.mxu0 0.0
    %3106 = vmatpush1.msra.mxu0 %v3088
    %3107 = vmatprep.subr.mxu0 0.0
    %3108 = vmatpush1.msra.mxu0 %v3089
    %3109 = vmatprep.subr.mxu0 0.0
    %3110 = vmatpush1.msra.mxu0 %v3090
    %3111 = vmatprep.subr.mxu0 0.0
    %3112 = vmatpush1.msra.mxu0 %v3091
    %3113 = vmatprep.subr.mxu0 0.0
    %3114 = vmatpush1.msra.mxu0 %v3092
    %3115 = vmatprep.subr.mxu0 0.0
    %3116 = vmatpush1.msra.mxu0 %v3093
    %3117 = vmatprep.subr.mxu0 0.0
    %3118 = vmatpush1.msra.mxu0 %v3094
    %3119 = vmatprep.subr.mxu0 0.0
    %3120 = vmatpush1.msra.mxu0 %v3095
    %3121 = vmatprep.subr.mxu0 0.0
    %3122 = vmatpush1.msra.mxu0 0.0
    %3123 = vmatprep.subr.mxu0 0.0
    %3124 = vmatpush1.msra.mxu0 0.0
    %3125 = vmatprep.subr.mxu0 0.0
    %3126 = vmatpush1.msra.mxu0 0.0
    %3127 = vmatprep.subr.mxu0 0.0
    %3128 = vmatpush1.msra.mxu0 0.0
    %3129 = vmatprep.subr.mxu0 0.0
    %3130 = vmatpush1.msra.mxu0 0.0
    %3131 = vmatprep.subr.mxu0 0.0
    %3132 = vmatpush1.msra.mxu0 0.0
    %3133 = vmatprep.subr.mxu0 0.0
    %3134 = vmatpush1.msra.mxu0 0.0
    %3135 = vmatprep.subr.mxu0 0.0
    %3136 = vmatpush1.msra.mxu0 0.0
    %3137 = vmatprep.subr.mxu0 0.0
    %3138 = vmatpush1.msra.mxu0 0.0
    %3139 = vmatprep.subr.mxu0 0.0
    %3140 = vmatpush1.msra.mxu0 0.0
    %3141 = vmatprep.subr.mxu0 0.0
    %3142 = vmatpush1.msra.mxu0 0.0
    %3143 = vmatprep.subr.mxu0 0.0
    %3144 = vmatpush1.msra.mxu0 0.0
    %3145 = vmatprep.subr.mxu0 0.0
    %3146 = vmatpush1.msra.mxu0 0.0
    %3147 = vmatprep.subr.mxu0 0.0
    %3148 = vmatpush1.msra.mxu0 0.0
    %3149 = vmatprep.subr.mxu0 0.0
    %3150 = vmatpush1.msra.mxu0 0.0
    %3151 = vmatprep.subr.mxu0 0.0
    %3152 = vmatpush1.msra.mxu0 0.0
    %3153 = vmatprep.subr.mxu0 0.0
    %3154 = vmatpush1.msra.mxu0 0.0
    %3155 = vmatprep.subr.mxu0 0.0
    %3156 = vmatpush1.msra.mxu0 0.0
    %3157 = vmatprep.subr.mxu0 0.0
    %3158 = vmatpush1.msra.mxu0 0.0
    %3159 = vmatprep.subr.mxu0 0.0
    %3160 = vmatpush1.msra.mxu0 0.0
    %3161 = vmatprep.subr.mxu0 0.0
    %3162 = vmatpush1.msra.mxu0 0.0
    %3163 = vmatprep.subr.mxu0 0.0
    %3164 = vmatpush1.msra.mxu0 0.0
    %3165 = vmatprep.subr.mxu0 0.0
    %3166 = vmatpush1.msra.mxu0 0.0
    %3167 = vmatprep.subr.mxu0 0.0
    %3168 = vmatpush1.msra.mxu0 0.0
    %3169 = vmatprep.mubr.f32.mxu0 0.0
    %3170 = vmatmul.mubr.f32.gmra.mrb[0].mxu0 %v3103
    %v3171 = vpop.f32.mrb[0].mxu0
    %v3172 = vadd.f32 %v3100, %v3171
    %v3173 = vpop.f32.mrb[0].mxu0
    %3174 = vdwg.mxu0
    %s3175 = scalar_lea.vmem [#allocation13], 64
    %v3176 = vld [vmem:[%s3175] sm:$0xff]
    %v3177 = vld [vmem:[%s3175 + $0x8] sm:$0xff]
    %v3178 = vld [vmem:[%s3175 + $0x10] sm:$0xff]
    %v3179 = vld [vmem:[%s3175 + $0x18] sm:$0xff]
    %v3180 = vld [vmem:[%s3175 + $0x20] sm:$0xff]
    %v3181 = vld [vmem:[%s3175 + $0x28] sm:$0xff]
    %v3182 = vld [vmem:[%s3175 + $0x30] sm:$0xff]
    %v3183 = vld [vmem:[%s3175 + $0x38] sm:$0xff]
    %v3185 = vlaneseq
    %v3186 = vshrl.u32 %v3185, 7
    %v3187 = vsub.s32 0, %v3186
    %v3188 = vrot.slane %v2788, %v3187
    %3190 = vmatprep.subr.mxu0 0.0
    %3191 = vmatpush1.msra.mxu0 %v3176
    %3192 = vmatprep.subr.mxu0 0.0
    %3193 = vmatpush1.msra.mxu0 %v3177
    %3194 = vmatprep.subr.mxu0 0.0
    %3195 = vmatpush1.msra.mxu0 %v3178
    %3196 = vmatprep.subr.mxu0 0.0
    %3197 = vmatpush1.msra.mxu0 %v3179
    %3198 = vmatprep.subr.mxu0 0.0
    %3199 = vmatpush1.msra.mxu0 %v3180
    %3200 = vmatprep.subr.mxu0 0.0
    %3201 = vmatpush1.msra.mxu0 %v3181
    %3202 = vmatprep.subr.mxu0 0.0
    %3203 = vmatpush1.msra.mxu0 %v3182
    %3204 = vmatprep.subr.mxu0 0.0
    %3205 = vmatpush1.msra.mxu0 %v3183
    %3206 = vmatprep.subr.mxu0 0.0
    %3207 = vmatpush1.msra.mxu0 0.0
    %3208 = vmatprep.subr.mxu0 0.0
    %3209 = vmatpush1.msra.mxu0 0.0
    %3210 = vmatprep.subr.mxu0 0.0
    %3211 = vmatpush1.msra.mxu0 0.0
    %3212 = vmatprep.subr.mxu0 0.0
    %3213 = vmatpush1.msra.mxu0 0.0
    %3214 = vmatprep.subr.mxu0 0.0
    %3215 = vmatpush1.msra.mxu0 0.0
    %3216 = vmatprep.subr.mxu0 0.0
    %3217 = vmatpush1.msra.mxu0 0.0
    %3218 = vmatprep.subr.mxu0 0.0
    %3219 = vmatpush1.msra.mxu0 0.0
    %3220 = vmatprep.subr.mxu0 0.0
    %3221 = vmatpush1.msra.mxu0 0.0
    %3222 = vmatprep.subr.mxu0 0.0
    %3223 = vmatpush1.msra.mxu0 0.0
    %3224 = vmatprep.subr.mxu0 0.0
    %3225 = vmatpush1.msra.mxu0 0.0
    %3226 = vmatprep.subr.mxu0 0.0
    %3227 = vmatpush1.msra.mxu0 0.0
    %3228 = vmatprep.subr.mxu0 0.0
    %3229 = vmatpush1.msra.mxu0 0.0
    %3230 = vmatprep.subr.mxu0 0.0
    %3231 = vmatpush1.msra.mxu0 0.0
    %3232 = vmatprep.subr.mxu0 0.0
    %3233 = vmatpush1.msra.mxu0 0.0
    %3234 = vmatprep.subr.mxu0 0.0
    %3235 = vmatpush1.msra.mxu0 0.0
    %3236 = vmatprep.subr.mxu0 0.0
    %3237 = vmatpush1.msra.mxu0 0.0
    %3238 = vmatprep.subr.mxu0 0.0
    %3239 = vmatpush1.msra.mxu0 0.0
    %3240 = vmatprep.subr.mxu0 0.0
    %3241 = vmatpush1.msra.mxu0 0.0
    %3242 = vmatprep.subr.mxu0 0.0
    %3243 = vmatpush1.msra.mxu0 0.0
    %3244 = vmatprep.subr.mxu0 0.0
    %3245 = vmatpush1.msra.mxu0 0.0
    %3246 = vmatprep.subr.mxu0 0.0
    %3247 = vmatpush1.msra.mxu0 0.0
    %3248 = vmatprep.subr.mxu0 0.0
    %3249 = vmatpush1.msra.mxu0 0.0
    %3250 = vmatprep.subr.mxu0 0.0
    %3251 = vmatpush1.msra.mxu0 0.0
    %3252 = vmatprep.subr.mxu0 0.0
    %3253 = vmatpush1.msra.mxu0 0.0
    %3254 = vmatprep.mubr.f32.mxu0 0.0
    %3255 = vmatmul.mubr.f32.gmra.mrb[0].mxu0 %v3103
    %v3256 = vpop.f32.mrb[0].mxu0
    %v3257 = vadd.f32 %v3188, %v3256
    %v3258 = vpop.f32.mrb[0].mxu0
    %3259 = vdwg.mxu0
    %s3260 = scalar_lea.vmem [#allocation13], 128
    %v3261 = vld [vmem:[%s3260] sm:$0xff]
    %v3262 = vld [vmem:[%s3260 + $0x8] sm:$0xff]
    %v3263 = vld [vmem:[%s3260 + $0x10] sm:$0xff]
    %v3264 = vld [vmem:[%s3260 + $0x18] sm:$0xff]
    %v3265 = vld [vmem:[%s3260 + $0x20] sm:$0xff]
    %v3266 = vld [vmem:[%s3260 + $0x28] sm:$0xff]
    %v3267 = vld [vmem:[%s3260 + $0x30] sm:$0xff]
    %v3268 = vld [vmem:[%s3260 + $0x38] sm:$0xff]
    %v3270 = vlaneseq
    %v3271 = vshrl.u32 %v3270, 7
    %v3272 = vsub.s32 0, %v3271
    %v3273 = vrot.slane %v2790, %v3272
    %3275 = vmatprep.subr.mxu0 0.0
    %3276 = vmatpush1.msra.mxu0 %v3261
    %3277 = vmatprep.subr.mxu0 0.0
    %3278 = vmatpush1.msra.mxu0 %v3262
    %3279 = vmatprep.subr.mxu0 0.0
    %3280 = vmatpush1.msra.mxu0 %v3263
    %3281 = vmatprep.subr.mxu0 0.0
    %3282 = vmatpush1.msra.mxu0 %v3264
    %3283 = vmatprep.subr.mxu0 0.0
    %3284 = vmatpush1.msra.mxu0 %v3265
    %3285 = vmatprep.subr.mxu0 0.0
    %3286 = vmatpush1.msra.mxu0 %v3266
    %3287 = vmatprep.subr.mxu0 0.0
    %3288 = vmatpush1.msra.mxu0 %v3267
    %3289 = vmatprep.subr.mxu0 0.0
    %3290 = vmatpush1.msra.mxu0 %v3268
    %3291 = vmatprep.subr.mxu0 0.0
    %3292 = vmatpush1.msra.mxu0 0.0
    %3293 = vmatprep.subr.mxu0 0.0
    %3294 = vmatpush1.msra.mxu0 0.0
    %3295 = vmatprep.subr.mxu0 0.0
    %3296 = vmatpush1.msra.mxu0 0.0
    %3297 = vmatprep.subr.mxu0 0.0
    %3298 = vmatpush1.msra.mxu0 0.0
    %3299 = vmatprep.subr.mxu0 0.0
    %3300 = vmatpush1.msra.mxu0 0.0
    %3301 = vmatprep.subr.mxu0 0.0
    %3302 = vmatpush1.msra.mxu0 0.0
    %3303 = vmatprep.subr.mxu0 0.0
    %3304 = vmatpush1.msra.mxu0 0.0
    %3305 = vmatprep.subr.mxu0 0.0
    %3306 = vmatpush1.msra.mxu0 0.0
    %3307 = vmatprep.subr.mxu0 0.0
    %3308 = vmatpush1.msra.mxu0 0.0
    %3309 = vmatprep.subr.mxu0 0.0
    %3310 = vmatpush1.msra.mxu0 0.0
    %3311 = vmatprep.subr.mxu0 0.0
    %3312 = vmatpush1.msra.mxu0 0.0
    %3313 = vmatprep.subr.mxu0 0.0
    %3314 = vmatpush1.msra.mxu0 0.0
    %3315 = vmatprep.subr.mxu0 0.0
    %3316 = vmatpush1.msra.mxu0 0.0
    %3317 = vmatprep.subr.mxu0 0.0
    %3318 = vmatpush1.msra.mxu0 0.0
    %3319 = vmatprep.subr.mxu0 0.0
    %3320 = vmatpush1.msra.mxu0 0.0
    %3321 = vmatprep.subr.mxu0 0.0
    %3322 = vmatpush1.msra.mxu0 0.0
    %3323 = vmatprep.subr.mxu0 0.0
    %3324 = vmatpush1.msra.mxu0 0.0
    %3325 = vmatprep.subr.mxu0 0.0
    %3326 = vmatpush1.msra.mxu0 0.0
    %3327 = vmatprep.subr.mxu0 0.0
    %3328 = vmatpush1.msra.mxu0 0.0
    %3329 = vmatprep.subr.mxu0 0.0
    %3330 = vmatpush1.msra.mxu0 0.0
    %3331 = vmatprep.subr.mxu0 0.0
    %3332 = vmatpush1.msra.mxu0 0.0
    %3333 = vmatprep.subr.mxu0 0.0
    %3334 = vmatpush1.msra.mxu0 0.0
    %3335 = vmatprep.subr.mxu0 0.0
    %3336 = vmatpush1.msra.mxu0 0.0
    %3337 = vmatprep.subr.mxu0 0.0
    %3338 = vmatpush1.msra.mxu0 0.0
    %3339 = vmatprep.mubr.f32.mxu0 0.0
    %3340 = vmatmul.mubr.f32.gmra.mrb[0].mxu0 %v3103
    %v3341 = vpop.f32.mrb[0].mxu0
    %v3342 = vadd.f32 %v3273, %v3341
    %v3343 = vpop.f32.mrb[0].mxu0
    %3344 = vdwg.mxu0
    %v3345 = vld [vmem:[#allocation15] sm:$0xff]
    %v3346 = vld [vmem:[#allocation15 + $0x8] sm:$0xff]
    %v3347 = vld [vmem:[#allocation15 + $0x10] sm:$0xff]
    %v3348 = vld [vmem:[#allocation15 + $0x18] sm:$0xff]
    %v3349 = vld [vmem:[#allocation15 + $0x20] sm:$0xff]
    %v3350 = vld [vmem:[#allocation15 + $0x28] sm:$0xff]
    %v3351 = vld [vmem:[#allocation15 + $0x30] sm:$0xff]
    %v3352 = vld [vmem:[#allocation15 + $0x38] sm:$0xff]
    %v3354 = vlaneseq
    %v3355 = vshrl.u32 %v3354, 7
    %v3356 = vsub.s32 0, %v3355
    %v3357 = vrot.slane %v2791, %v3356
    %3359 = vmatprep.subr.mxu0 0.0
    %3360 = vmatpush1.msra.mxu0 %v3345
    %3361 = vmatprep.subr.mxu0 0.0
    %3362 = vmatpush1.msra.mxu0 %v3346
    %3363 = vmatprep.subr.mxu0 0.0
    %3364 = vmatpush1.msra.mxu0 %v3347
    %3365 = vmatprep.subr.mxu0 0.0
    %3366 = vmatpush1.msra.mxu0 %v3348
    %3367 = vmatprep.subr.mxu0 0.0
    %3368 = vmatpush1.msra.mxu0 %v3349
    %3369 = vmatprep.subr.mxu0 0.0
    %3370 = vmatpush1.msra.mxu0 %v3350
    %3371 = vmatprep.subr.mxu0 0.0
    %3372 = vmatpush1.msra.mxu0 %v3351
    %3373 = vmatprep.subr.mxu0 0.0
    %3374 = vmatpush1.msra.mxu0 %v3352
    %3375 = vmatprep.subr.mxu0 0.0
    %3376 = vmatpush1.msra.mxu0 0.0
    %3377 = vmatprep.subr.mxu0 0.0
    %3378 = vmatpush1.msra.mxu0 0.0
    %3379 = vmatprep.subr.mxu0 0.0
    %3380 = vmatpush1.msra.mxu0 0.0
    %3381 = vmatprep.subr.mxu0 0.0
    %3382 = vmatpush1.msra.mxu0 0.0
    %3383 = vmatprep.subr.mxu0 0.0
    %3384 = vmatpush1.msra.mxu0 0.0
    %3385 = vmatprep.subr.mxu0 0.0
    %3386 = vmatpush1.msra.mxu0 0.0
    %3387 = vmatprep.subr.mxu0 0.0
    %3388 = vmatpush1.msra.mxu0 0.0
    %3389 = vmatprep.subr.mxu0 0.0
    %3390 = vmatpush1.msra.mxu0 0.0
    %3391 = vmatprep.subr.mxu0 0.0
    %3392 = vmatpush1.msra.mxu0 0.0
    %3393 = vmatprep.subr.mxu0 0.0
    %3394 = vmatpush1.msra.mxu0 0.0
    %3395 = vmatprep.subr.mxu0 0.0
    %3396 = vmatpush1.msra.mxu0 0.0
    %3397 = vmatprep.subr.mxu0 0.0
    %3398 = vmatpush1.msra.mxu0 0.0
    %3399 = vmatprep.subr.mxu0 0.0
    %3400 = vmatpush1.msra.mxu0 0.0
    %3401 = vmatprep.subr.mxu0 0.0
    %3402 = vmatpush1.msra.mxu0 0.0
    %3403 = vmatprep.subr.mxu0 0.0
    %3404 = vmatpush1.msra.mxu0 0.0
    %3405 = vmatprep.subr.mxu0 0.0
    %3406 = vmatpush1.msra.mxu0 0.0
    %3407 = vmatprep.subr.mxu0 0.0
    %3408 = vmatpush1.msra.mxu0 0.0
    %3409 = vmatprep.subr.mxu0 0.0
    %3410 = vmatpush1.msra.mxu0 0.0
    %3411 = vmatprep.subr.mxu0 0.0
    %3412 = vmatpush1.msra.mxu0 0.0
    %3413 = vmatprep.subr.mxu0 0.0
    %3414 = vmatpush1.msra.mxu0 0.0
    %3415 = vmatprep.subr.mxu0 0.0
    %3416 = vmatpush1.msra.mxu0 0.0
    %3417 = vmatprep.subr.mxu0 0.0
    %3418 = vmatpush1.msra.mxu0 0.0
    %3419 = vmatprep.subr.mxu0 0.0
    %3420 = vmatpush1.msra.mxu0 0.0
    %3421 = vmatprep.subr.mxu0 0.0
    %3422 = vmatpush1.msra.mxu0 0.0
    %3423 = vmatprep.mubr.f32.mxu0 0.0
    %3424 = vmatmul.mubr.f32.gmra.mrb[0].mxu0 %v2825
    %v3425 = vpop.f32.mrb[0].mxu0
    %v3426 = vadd.f32 %v3357, %v3425
    %v3427 = vpop.f32.mrb[0].mxu0
    %3428 = vdwg.mxu0
    %s3429 = scalar_lea.vmem [#allocation15], 64
    %v3430 = vld [vmem:[%s3429] sm:$0xff]
    %v3431 = vld [vmem:[%s3429 + $0x8] sm:$0xff]
    %v3432 = vld [vmem:[%s3429 + $0x10] sm:$0xff]
    %v3433 = vld [vmem:[%s3429 + $0x18] sm:$0xff]
    %v3434 = vld [vmem:[%s3429 + $0x20] sm:$0xff]
    %v3435 = vld [vmem:[%s3429 + $0x28] sm:$0xff]
    %v3436 = vld [vmem:[%s3429 + $0x30] sm:$0xff]
    %v3437 = vld [vmem:[%s3429 + $0x38] sm:$0xff]
    %v3439 = vlaneseq
    %v3440 = vshrl.u32 %v3439, 7
    %v3441 = vsub.s32 0, %v3440
    %v3442 = vrot.slane %v2793, %v3441
    %3444 = vmatprep.subr.mxu0 0.0
    %3445 = vmatpush1.msra.mxu0 %v3430
    %3446 = vmatprep.subr.mxu0 0.0
    %3447 = vmatpush1.msra.mxu0 %v3431
    %3448 = vmatprep.subr.mxu0 0.0
    %3449 = vmatpush1.msra.mxu0 %v3432
    %3450 = vmatprep.subr.mxu0 0.0
    %3451 = vmatpush1.msra.mxu0 %v3433
    %3452 = vmatprep.subr.mxu0 0.0
    %3453 = vmatpush1.msra.mxu0 %v3434
    %3454 = vmatprep.subr.mxu0 0.0
    %3455 = vmatpush1.msra.mxu0 %v3435
    %3456 = vmatprep.subr.mxu0 0.0
    %3457 = vmatpush1.msra.mxu0 %v3436
    %3458 = vmatprep.subr.mxu0 0.0
    %3459 = vmatpush1.msra.mxu0 %v3437
    %3460 = vmatprep.subr.mxu0 0.0
    %3461 = vmatpush1.msra.mxu0 0.0
    %3462 = vmatprep.subr.mxu0 0.0
    %3463 = vmatpush1.msra.mxu0 0.0
    %3464 = vmatprep.subr.mxu0 0.0
    %3465 = vmatpush1.msra.mxu0 0.0
    %3466 = vmatprep.subr.mxu0 0.0
    %3467 = vmatpush1.msra.mxu0 0.0
    %3468 = vmatprep.subr.mxu0 0.0
    %3469 = vmatpush1.msra.mxu0 0.0
    %3470 = vmatprep.subr.mxu0 0.0
    %3471 = vmatpush1.msra.mxu0 0.0
    %3472 = vmatprep.subr.mxu0 0.0
    %3473 = vmatpush1.msra.mxu0 0.0
    %3474 = vmatprep.subr.mxu0 0.0
    %3475 = vmatpush1.msra.mxu0 0.0
    %3476 = vmatprep.subr.mxu0 0.0
    %3477 = vmatpush1.msra.mxu0 0.0
    %3478 = vmatprep.subr.mxu0 0.0
    %3479 = vmatpush1.msra.mxu0 0.0
    %3480 = vmatprep.subr.mxu0 0.0
    %3481 = vmatpush1.msra.mxu0 0.0
    %3482 = vmatprep.subr.mxu0 0.0
    %3483 = vmatpush1.msra.mxu0 0.0
    %3484 = vmatprep.subr.mxu0 0.0
    %3485 = vmatpush1.msra.mxu0 0.0
    %3486 = vmatprep.subr.mxu0 0.0
    %3487 = vmatpush1.msra.mxu0 0.0
    %3488 = vmatprep.subr.mxu0 0.0
    %3489 = vmatpush1.msra.mxu0 0.0
    %3490 = vmatprep.subr.mxu0 0.0
    %3491 = vmatpush1.msra.mxu0 0.0
    %3492 = vmatprep.subr.mxu0 0.0
    %3493 = vmatpush1.msra.mxu0 0.0
    %3494 = vmatprep.subr.mxu0 0.0
    %3495 = vmatpush1.msra.mxu0 0.0
    %3496 = vmatprep.subr.mxu0 0.0
    %3497 = vmatpush1.msra.mxu0 0.0
    %3498 = vmatprep.subr.mxu0 0.0
    %3499 = vmatpush1.msra.mxu0 0.0
    %3500 = vmatprep.subr.mxu0 0.0
    %3501 = vmatpush1.msra.mxu0 0.0
    %3502 = vmatprep.subr.mxu0 0.0
    %3503 = vmatpush1.msra.mxu0 0.0
    %3504 = vmatprep.subr.mxu0 0.0
    %3505 = vmatpush1.msra.mxu0 0.0
    %3506 = vmatprep.subr.mxu0 0.0
    %3507 = vmatpush1.msra.mxu0 0.0
    %3508 = vmatprep.mubr.f32.mxu0 0.0
    %3509 = vmatmul.mubr.f32.gmra.mrb[0].mxu0 %v2825
    %v3510 = vpop.f32.mrb[0].mxu0
    %v3511 = vadd.f32 %v3442, %v3510
    %v3512 = vpop.f32.mrb[0].mxu0
    %3513 = vdwg.mxu0
    %s3514 = scalar_lea.vmem [#allocation15], 128
    %v3515 = vld [vmem:[%s3514] sm:$0xff]
    %v3516 = vld [vmem:[%s3514 + $0x8] sm:$0xff]
    %v3517 = vld [vmem:[%s3514 + $0x10] sm:$0xff]
    %v3518 = vld [vmem:[%s3514 + $0x18] sm:$0xff]
    %v3519 = vld [vmem:[%s3514 + $0x20] sm:$0xff]
    %v3520 = vld [vmem:[%s3514 + $0x28] sm:$0xff]
    %v3521 = vld [vmem:[%s3514 + $0x30] sm:$0xff]
    %v3522 = vld [vmem:[%s3514 + $0x38] sm:$0xff]
    %v3524 = vlaneseq
    %v3525 = vshrl.u32 %v3524, 7
    %v3526 = vsub.s32 0, %v3525
    %v3527 = vrot.slane %v2795, %v3526
    %3529 = vmatprep.subr.mxu0 0.0
    %3530 = vmatpush1.msra.mxu0 %v3515
    %3531 = vmatprep.subr.mxu0 0.0
    %3532 = vmatpush1.msra.mxu0 %v3516
    %3533 = vmatprep.subr.mxu0 0.0
    %3534 = vmatpush1.msra.mxu0 %v3517
    %3535 = vmatprep.subr.mxu0 0.0
    %3536 = vmatpush1.msra.mxu0 %v3518
    %3537 = vmatprep.subr.mxu0 0.0
    %3538 = vmatpush1.msra.mxu0 %v3519
    %3539 = vmatprep.subr.mxu0 0.0
    %3540 = vmatpush1.msra.mxu0 %v3520
    %3541 = vmatprep.subr.mxu0 0.0
    %3542 = vmatpush1.msra.mxu0 %v3521
    %3543 = vmatprep.subr.mxu0 0.0
    %3544 = vmatpush1.msra.mxu0 %v3522
    %3545 = vmatprep.subr.mxu0 0.0
    %3546 = vmatpush1.msra.mxu0 0.0
    %3547 = vmatprep.subr.mxu0 0.0
    %3548 = vmatpush1.msra.mxu0 0.0
    %3549 = vmatprep.subr.mxu0 0.0
    %3550 = vmatpush1.msra.mxu0 0.0
    %3551 = vmatprep.subr.mxu0 0.0
    %3552 = vmatpush1.msra.mxu0 0.0
    %3553 = vmatprep.subr.mxu0 0.0
    %3554 = vmatpush1.msra.mxu0 0.0
    %3555 = vmatprep.subr.mxu0 0.0
    %3556 = vmatpush1.msra.mxu0 0.0
    %3557 = vmatprep.subr.mxu0 0.0
    %3558 = vmatpush1.msra.mxu0 0.0
    %3559 = vmatprep.subr.mxu0 0.0
    %3560 = vmatpush1.msra.mxu0 0.0
    %3561 = vmatprep.subr.mxu0 0.0
    %3562 = vmatpush1.msra.mxu0 0.0
    %3563 = vmatprep.subr.mxu0 0.0
    %3564 = vmatpush1.msra.mxu0 0.0
    %3565 = vmatprep.subr.mxu0 0.0
    %3566 = vmatpush1.msra.mxu0 0.0
    %3567 = vmatprep.subr.mxu0 0.0
    %3568 = vmatpush1.msra.mxu0 0.0
    %3569 = vmatprep.subr.mxu0 0.0
    %3570 = vmatpush1.msra.mxu0 0.0
    %3571 = vmatprep.subr.mxu0 0.0
    %3572 = vmatpush1.msra.mxu0 0.0
    %3573 = vmatprep.subr.mxu0 0.0
    %3574 = vmatpush1.msra.mxu0 0.0
    %3575 = vmatprep.subr.mxu0 0.0
    %3576 = vmatpush1.msra.mxu0 0.0
    %3577 = vmatprep.subr.mxu0 0.0
    %3578 = vmatpush1.msra.mxu0 0.0
    %3579 = vmatprep.subr.mxu0 0.0
    %3580 = vmatpush1.msra.mxu0 0.0
    %3581 = vmatprep.subr.mxu0 0.0
    %3582 = vmatpush1.msra.mxu0 0.0
    %3583 = vmatprep.subr.mxu0 0.0
    %3584 = vmatpush1.msra.mxu0 0.0
    %3585 = vmatprep.subr.mxu0 0.0
    %3586 = vmatpush1.msra.mxu0 0.0
    %3587 = vmatprep.subr.mxu0 0.0
    %3588 = vmatpush1.msra.mxu0 0.0
    %3589 = vmatprep.subr.mxu0 0.0
    %3590 = vmatpush1.msra.mxu0 0.0
    %3591 = vmatprep.subr.mxu0 0.0
    %3592 = vmatpush1.msra.mxu0 0.0
    %3593 = vmatprep.mubr.f32.mxu0 0.0
    %3594 = vmatmul.mubr.f32.gmra.mrb[0].mxu0 %v2825
    %v3595 = vpop.f32.mrb[0].mxu0
    %v3596 = vadd.f32 %v3527, %v3595
    %v3597 = vpop.f32.mrb[0].mxu0
    %3598 = vdwg.mxu0
    %v3599 = vadd.f32 %v3172, %v3426
    %v3600 = vxor.u32 %v3599, 2147483648
    %v3601 = vmul.f32 %v3600, 1.442695
    %v3602 = vpow.pop %v3601
    %v3603 = vadd.f32 %v3602, 1.0
    %v3604 = vrcp.pop %v3603
    %v3605 = vmul.f32 1.0, %v3604
    %v3606 = vadd.f32 %v3257, %v3511
    %v3607 = vxor.u32 %v3606, 2147483648
    %v3608 = vmul.f32 %v3607, 1.442695
    %v3609 = vpow.pop %v3608
    %v3610 = vadd.f32 %v3609, 1.0
    %v3611 = vrcp.pop %v3610
    %v3612 = vmul.f32 1.0, %v3611
    %v3613 = vmul.f32 %v3605, %v3596
    %v3614 = vadd.f32 %v3342, %v3613
    %v3615 = vtanh.pop %v3614
    %v3616 = vsub.f32 1.0, %v3612
    %v3617 = vmul.f32 %v3616, %v3615
    %v3618 = vmul.f32 %v3612, 0.0
    %v3619 = vadd.f32 %v3617, %v3618
    %v3621 = vrot.slane %v1859, 1
    %v3623 = vsel %vm2799, %v3621, %v2630
    %v3625 = vrot.slane %v1936, 1
    %v3627 = vsel %vm2799, %v3625, %v2704
    %v3629 = vrot.slane %v2013, 1
    %v3631 = vsel %vm2799, %v3629, %v2778
    %3632 = vmatprep.subr.mxu0 0.0
    %3633 = vmatpush1.msra.mxu0 %v2809
    %3634 = vmatprep.subr.mxu0 0.0
    %3635 = vmatpush1.msra.mxu0 %v2810
    %3636 = vmatprep.subr.mxu0 0.0
    %3637 = vmatpush1.msra.mxu0 %v2811
    %3638 = vmatprep.subr.mxu0 0.0
    %3639 = vmatpush1.msra.mxu0 %v2812
    %3640 = vmatprep.subr.mxu0 0.0
    %3641 = vmatpush1.msra.mxu0 %v2813
    %3642 = vmatprep.subr.mxu0 0.0
    %3643 = vmatpush1.msra.mxu0 %v2814
    %3644 = vmatprep.subr.mxu0 0.0
    %3645 = vmatpush1.msra.mxu0 %v2815
    %3646 = vmatprep.subr.mxu0 0.0
    %3647 = vmatpush1.msra.mxu0 %v2816
    %3648 = vmatprep.subr.mxu0 0.0
    %3649 = vmatpush1.msra.mxu0 0.0
    %3650 = vmatprep.subr.mxu0 0.0
    %3651 = vmatpush1.msra.mxu0 0.0
    %3652 = vmatprep.subr.mxu0 0.0
    %3653 = vmatpush1.msra.mxu0 0.0
    %3654 = vmatprep.subr.mxu0 0.0
    %3655 = vmatpush1.msra.mxu0 0.0
    %3656 = vmatprep.subr.mxu0 0.0
    %3657 = vmatpush1.msra.mxu0 0.0
    %3658 = vmatprep.subr.mxu0 0.0
    %3659 = vmatpush1.msra.mxu0 0.0
    %3660 = vmatprep.subr.mxu0 0.0
    %3661 = vmatpush1.msra.mxu0 0.0
    %3662 = vmatprep.subr.mxu0 0.0
    %3663 = vmatpush1.msra.mxu0 0.0
    %3664 = vmatprep.subr.mxu0 0.0
    %3665 = vmatpush1.msra.mxu0 0.0
    %3666 = vmatprep.subr.mxu0 0.0
    %3667 = vmatpush1.msra.mxu0 0.0
    %3668 = vmatprep.subr.mxu0 0.0
    %3669 = vmatpush1.msra.mxu0 0.0
    %3670 = vmatprep.subr.mxu0 0.0
    %3671 = vmatpush1.msra.mxu0 0.0
    %3672 = vmatprep.subr.mxu0 0.0
    %3673 = vmatpush1.msra.mxu0 0.0
    %3674 = vmatprep.subr.mxu0 0.0
    %3675 = vmatpush1.msra.mxu0 0.0
    %3676 = vmatprep.subr.mxu0 0.0
    %3677 = vmatpush1.msra.mxu0 0.0
    %3678 = vmatprep.subr.mxu0 0.0
    %3679 = vmatpush1.msra.mxu0 0.0
    %3680 = vmatprep.subr.mxu0 0.0
    %3681 = vmatpush1.msra.mxu0 0.0
    %3682 = vmatprep.subr.mxu0 0.0
    %3683 = vmatpush1.msra.mxu0 0.0
    %3684 = vmatprep.subr.mxu0 0.0
    %3685 = vmatpush1.msra.mxu0 0.0
    %3686 = vmatprep.subr.mxu0 0.0
    %3687 = vmatpush1.msra.mxu0 0.0
    %3688 = vmatprep.subr.mxu0 0.0
    %3689 = vmatpush1.msra.mxu0 0.0
    %3690 = vmatprep.subr.mxu0 0.0
    %3691 = vmatpush1.msra.mxu0 0.0
    %3692 = vmatprep.subr.mxu0 0.0
    %3693 = vmatpush1.msra.mxu0 0.0
    %3694 = vmatprep.subr.mxu0 0.0
    %3695 = vmatpush1.msra.mxu0 0.0
    %3696 = vmatprep.mubr.f32.mxu0 0.0
    %3697 = vmatmul.mubr.f32.gmra.mrb[0].mxu0 %v3103
    %v3698 = vpop.f32.mrb[0].mxu0
    %v3699 = vadd.f32 %v2821, %v3698
    %v3700 = vpop.f32.mrb[0].mxu0
    %3701 = vdwg.mxu0
    %3702 = vmatprep.subr.mxu0 0.0
    %3703 = vmatpush1.msra.mxu0 %v2898
    %3704 = vmatprep.subr.mxu0 0.0
    %3705 = vmatpush1.msra.mxu0 %v2899
    %3706 = vmatprep.subr.mxu0 0.0
    %3707 = vmatpush1.msra.mxu0 %v2900
    %3708 = vmatprep.subr.mxu0 0.0
    %3709 = vmatpush1.msra.mxu0 %v2901
    %3710 = vmatprep.subr.mxu0 0.0
    %3711 = vmatpush1.msra.mxu0 %v2902
    %3712 = vmatprep.subr.mxu0 0.0
    %3713 = vmatpush1.msra.mxu0 %v2903
    %3714 = vmatprep.subr.mxu0 0.0
    %3715 = vmatpush1.msra.mxu0 %v2904
    %3716 = vmatprep.subr.mxu0 0.0
    %3717 = vmatpush1.msra.mxu0 %v2905
    %3718 = vmatprep.subr.mxu0 0.0
    %3719 = vmatpush1.msra.mxu0 0.0
    %3720 = vmatprep.subr.mxu0 0.0
    %3721 = vmatpush1.msra.mxu0 0.0
    %3722 = vmatprep.subr.mxu0 0.0
    %3723 = vmatpush1.msra.mxu0 0.0
    %3724 = vmatprep.subr.mxu0 0.0
    %3725 = vmatpush1.msra.mxu0 0.0
    %3726 = vmatprep.subr.mxu0 0.0
    %3727 = vmatpush1.msra.mxu0 0.0
    %3728 = vmatprep.subr.mxu0 0.0
    %3729 = vmatpush1.msra.mxu0 0.0
    %3730 = vmatprep.subr.mxu0 0.0
    %3731 = vmatpush1.msra.mxu0 0.0
    %3732 = vmatprep.subr.mxu0 0.0
    %3733 = vmatpush1.msra.mxu0 0.0
    %3734 = vmatprep.subr.mxu0 0.0
    %3735 = vmatpush1.msra.mxu0 0.0
    %3736 = vmatprep.subr.mxu0 0.0
    %3737 = vmatpush1.msra.mxu0 0.0
    %3738 = vmatprep.subr.mxu0 0.0
    %3739 = vmatpush1.msra.mxu0 0.0
    %3740 = vmatprep.subr.mxu0 0.0
    %3741 = vmatpush1.msra.mxu0 0.0
    %3742 = vmatprep.subr.mxu0 0.0
    %3743 = vmatpush1.msra.mxu0 0.0
    %3744 = vmatprep.subr.mxu0 0.0
    %3745 = vmatpush1.msra.mxu0 0.0
    %3746 = vmatprep.subr.mxu0 0.0
    %3747 = vmatpush1.msra.mxu0 0.0
    %3748 = vmatprep.subr.mxu0 0.0
    %3749 = vmatpush1.msra.mxu0 0.0
    %3750 = vmatprep.subr.mxu0 0.0
    %3751 = vmatpush1.msra.mxu0 0.0
    %3752 = vmatprep.subr.mxu0 0.0
    %3753 = vmatpush1.msra.mxu0 0.0
    %3754 = vmatprep.subr.mxu0 0.0
    %3755 = vmatpush1.msra.mxu0 0.0
    %3756 = vmatprep.subr.mxu0 0.0
    %3757 = vmatpush1.msra.mxu0 0.0
    %3758 = vmatprep.subr.mxu0 0.0
    %3759 = vmatpush1.msra.mxu0 0.0
    %3760 = vmatprep.subr.mxu0 0.0
    %3761 = vmatpush1.msra.mxu0 0.0
    %3762 = vmatprep.subr.mxu0 0.0
    %3763 = vmatpush1.msra.mxu0 0.0
    %3764 = vmatprep.subr.mxu0 0.0
    %3765 = vmatpush1.msra.mxu0 0.0
    %3766 = vmatprep.mubr.f32.mxu0 0.0
    %3767 = vmatmul.mubr.f32.gmra.mrb[0].mxu0 %v3103
    %v3768 = vpop.f32.mrb[0].mxu0
    %v3769 = vadd.f32 %v2910, %v3768
    %v3770 = vpop.f32.mrb[0].mxu0
    %3771 = vdwg.mxu0
    %3772 = vmatprep.subr.mxu0 0.0
    %3773 = vmatpush1.msra.mxu0 %v2983
    %3774 = vmatprep.subr.mxu0 0.0
    %3775 = vmatpush1.msra.mxu0 %v2984
    %3776 = vmatprep.subr.mxu0 0.0
    %3777 = vmatpush1.msra.mxu0 %v2985
    %3778 = vmatprep.subr.mxu0 0.0
    %3779 = vmatpush1.msra.mxu0 %v2986
    %3780 = vmatprep.subr.mxu0 0.0
    %3781 = vmatpush1.msra.mxu0 %v2987
    %3782 = vmatprep.subr.mxu0 0.0
    %3783 = vmatpush1.msra.mxu0 %v2988
    %3784 = vmatprep.subr.mxu0 0.0
    %3785 = vmatpush1.msra.mxu0 %v2989
    %3786 = vmatprep.subr.mxu0 0.0
    %3787 = vmatpush1.msra.mxu0 %v2990
    %3788 = vmatprep.subr.mxu0 0.0
    %3789 = vmatpush1.msra.mxu0 0.0
    %3790 = vmatprep.subr.mxu0 0.0
    %3791 = vmatpush1.msra.mxu0 0.0
    %3792 = vmatprep.subr.mxu0 0.0
    %3793 = vmatpush1.msra.mxu0 0.0
    %3794 = vmatprep.subr.mxu0 0.0
    %3795 = vmatpush1.msra.mxu0 0.0
    %3796 = vmatprep.subr.mxu0 0.0
    %3797 = vmatpush1.msra.mxu0 0.0
    %3798 = vmatprep.subr.mxu0 0.0
    %3799 = vmatpush1.msra.mxu0 0.0
    %3800 = vmatprep.subr.mxu0 0.0
    %3801 = vmatpush1.msra.mxu0 0.0
    %3802 = vmatprep.subr.mxu0 0.0
    %3803 = vmatpush1.msra.mxu0 0.0
    %3804 = vmatprep.subr.mxu0 0.0
    %3805 = vmatpush1.msra.mxu0 0.0
    %3806 = vmatprep.subr.mxu0 0.0
    %3807 = vmatpush1.msra.mxu0 0.0
    %3808 = vmatprep.subr.mxu0 0.0
    %3809 = vmatpush1.msra.mxu0 0.0
    %3810 = vmatprep.subr.mxu0 0.0
    %3811 = vmatpush1.msra.mxu0 0.0
    %3812 = vmatprep.subr.mxu0 0.0
    %3813 = vmatpush1.msra.mxu0 0.0
    %3814 = vmatprep.subr.mxu0 0.0
    %3815 = vmatpush1.msra.mxu0 0.0
    %3816 = vmatprep.subr.mxu0 0.0
    %3817 = vmatpush1.msra.mxu0 0.0
    %3818 = vmatprep.subr.mxu0 0.0
    %3819 = vmatpush1.msra.mxu0 0.0
    %3820 = vmatprep.subr.mxu0 0.0
    %3821 = vmatpush1.msra.mxu0 0.0
    %3822 = vmatprep.subr.mxu0 0.0
    %3823 = vmatpush1.msra.mxu0 0.0
    %3824 = vmatprep.subr.mxu0 0.0
    %3825 = vmatpush1.msra.mxu0 0.0
    %3826 = vmatprep.subr.mxu0 0.0
    %3827 = vmatpush1.msra.mxu0 0.0
    %3828 = vmatprep.subr.mxu0 0.0
    %3829 = vmatpush1.msra.mxu0 0.0
    %3830 = vmatprep.subr.mxu0 0.0
    %3831 = vmatpush1.msra.mxu0 0.0
    %3832 = vmatprep.subr.mxu0 0.0
    %3833 = vmatpush1.msra.mxu0 0.0
    %3834 = vmatprep.subr.mxu0 0.0
    %3835 = vmatpush1.msra.mxu0 0.0
    %3836 = vmatprep.mubr.f32.mxu0 0.0
    %3837 = vmatmul.mubr.f32.gmra.mrb[0].mxu0 %v3103
    %v3838 = vpop.f32.mrb[0].mxu0
    %v3839 = vadd.f32 %v2995, %v3838
    %v3840 = vpop.f32.mrb[0].mxu0
    %3841 = vdwg.mxu0
    %v3842 = vadd.f32 %v3623, %v3699
    %v3843 = vxor.u32 %v3842, 2147483648
    %v3844 = vmul.f32 %v3843, 1.442695
    %v3845 = vpow.pop %v3844
    %v3846 = vadd.f32 %v3845, 1.0
    %v3847 = vrcp.pop %v3846
    %v3848 = vmul.f32 1.0, %v3847
    %v3849 = vadd.f32 %v3627, %v3769
    %v3850 = vxor.u32 %v3849, 2147483648
    %v3851 = vmul.f32 %v3850, 1.442695
    %v3852 = vpow.pop %v3851
    %v3853 = vadd.f32 %v3852, 1.0
    %v3854 = vrcp.pop %v3853
    %v3855 = vmul.f32 1.0, %v3854
    %v3856 = vmul.f32 %v3848, %v3839
    %v3857 = vadd.f32 %v3631, %v3856
    %v3858 = vtanh.pop %v3857
    %v3859 = vsub.f32 1.0, %v3855
    %v3860 = vmul.f32 %v3859, %v3858
    %v3861 = vmul.f32 %v3855, %v3087
    %v3862 = vadd.f32 %v3860, %v3861
    %v3864 = vsel %vm2823, %v3862, 0
    %3866 = vmatprep.subr.mxu0 0.0
    %3867 = vmatpush1.msra.mxu0 %v3088
    %3868 = vmatprep.subr.mxu0 0.0
    %3869 = vmatpush1.msra.mxu0 %v3089
    %3870 = vmatprep.subr.mxu0 0.0
    %3871 = vmatpush1.msra.mxu0 %v3090
    %3872 = vmatprep.subr.mxu0 0.0
    %3873 = vmatpush1.msra.mxu0 %v3091
    %3874 = vmatprep.subr.mxu0 0.0
    %3875 = vmatpush1.msra.mxu0 %v3092
    %3876 = vmatprep.subr.mxu0 0.0
    %3877 = vmatpush1.msra.mxu0 %v3093
    %3878 = vmatprep.subr.mxu0 0.0
    %3879 = vmatpush1.msra.mxu0 %v3094
    %3880 = vmatprep.subr.mxu0 0.0
    %3881 = vmatpush1.msra.mxu0 %v3095
    %3882 = vmatprep.subr.mxu0 0.0
    %3883 = vmatpush1.msra.mxu0 0.0
    %3884 = vmatprep.subr.mxu0 0.0
    %3885 = vmatpush1.msra.mxu0 0.0
    %3886 = vmatprep.subr.mxu0 0.0
    %3887 = vmatpush1.msra.mxu0 0.0
    %3888 = vmatprep.subr.mxu0 0.0
    %3889 = vmatpush1.msra.mxu0 0.0
    %3890 = vmatprep.subr.mxu0 0.0
    %3891 = vmatpush1.msra.mxu0 0.0
    %3892 = vmatprep.subr.mxu0 0.0
    %3893 = vmatpush1.msra.mxu0 0.0
    %3894 = vmatprep.subr.mxu0 0.0
    %3895 = vmatpush1.msra.mxu0 0.0
    %3896 = vmatprep.subr.mxu0 0.0
    %3897 = vmatpush1.msra.mxu0 0.0
    %3898 = vmatprep.subr.mxu0 0.0
    %3899 = vmatpush1.msra.mxu0 0.0
    %3900 = vmatprep.subr.mxu0 0.0
    %3901 = vmatpush1.msra.mxu0 0.0
    %3902 = vmatprep.subr.mxu0 0.0
    %3903 = vmatpush1.msra.mxu0 0.0
    %3904 = vmatprep.subr.mxu0 0.0
    %3905 = vmatpush1.msra.mxu0 0.0
    %3906 = vmatprep.subr.mxu0 0.0
    %3907 = vmatpush1.msra.mxu0 0.0
    %3908 = vmatprep.subr.mxu0 0.0
    %3909 = vmatpush1.msra.mxu0 0.0
    %3910 = vmatprep.subr.mxu0 0.0
    %3911 = vmatpush1.msra.mxu0 0.0
    %3912 = vmatprep.subr.mxu0 0.0
    %3913 = vmatpush1.msra.mxu0 0.0
    %3914 = vmatprep.subr.mxu0 0.0
    %3915 = vmatpush1.msra.mxu0 0.0
    %3916 = vmatprep.subr.mxu0 0.0
    %3917 = vmatpush1.msra.mxu0 0.0
    %3918 = vmatprep.subr.mxu0 0.0
    %3919 = vmatpush1.msra.mxu0 0.0
    %3920 = vmatprep.subr.mxu0 0.0
    %3921 = vmatpush1.msra.mxu0 0.0
    %3922 = vmatprep.subr.mxu0 0.0
    %3923 = vmatpush1.msra.mxu0 0.0
    %3924 = vmatprep.subr.mxu0 0.0
    %3925 = vmatpush1.msra.mxu0 0.0
    %3926 = vmatprep.subr.mxu0 0.0
    %3927 = vmatpush1.msra.mxu0 0.0
    %3928 = vmatprep.subr.mxu0 0.0
    %3929 = vmatpush1.msra.mxu0 0.0
    %3930 = vmatprep.mubr.f32.mxu0 0.0
    %3931 = vmatmul.mubr.f32.gmra.mrb[0].mxu0 %v3864
    %v3932 = vpop.f32.mrb[0].mxu0
    %v3933 = vadd.f32 %v3100, %v3932
    %v3934 = vpop.f32.mrb[0].mxu0
    %3935 = vdwg.mxu0
    %3936 = vmatprep.subr.mxu0 0.0
    %3937 = vmatpush1.msra.mxu0 %v3176
    %3938 = vmatprep.subr.mxu0 0.0
    %3939 = vmatpush1.msra.mxu0 %v3177
    %3940 = vmatprep.subr.mxu0 0.0
    %3941 = vmatpush1.msra.mxu0 %v3178
    %3942 = vmatprep.subr.mxu0 0.0
    %3943 = vmatpush1.msra.mxu0 %v3179
    %3944 = vmatprep.subr.mxu0 0.0
    %3945 = vmatpush1.msra.mxu0 %v3180
    %3946 = vmatprep.subr.mxu0 0.0
    %3947 = vmatpush1.msra.mxu0 %v3181
    %3948 = vmatprep.subr.mxu0 0.0
    %3949 = vmatpush1.msra.mxu0 %v3182
    %3950 = vmatprep.subr.mxu0 0.0
    %3951 = vmatpush1.msra.mxu0 %v3183
    %3952 = vmatprep.subr.mxu0 0.0
    %3953 = vmatpush1.msra.mxu0 0.0
    %3954 = vmatprep.subr.mxu0 0.0
    %3955 = vmatpush1.msra.mxu0 0.0
    %3956 = vmatprep.subr.mxu0 0.0
    %3957 = vmatpush1.msra.mxu0 0.0
    %3958 = vmatprep.subr.mxu0 0.0
    %3959 = vmatpush1.msra.mxu0 0.0
    %3960 = vmatprep.subr.mxu0 0.0
    %3961 = vmatpush1.msra.mxu0 0.0
    %3962 = vmatprep.subr.mxu0 0.0
    %3963 = vmatpush1.msra.mxu0 0.0
    %3964 = vmatprep.subr.mxu0 0.0
    %3965 = vmatpush1.msra.mxu0 0.0
    %3966 = vmatprep.subr.mxu0 0.0
    %3967 = vmatpush1.msra.mxu0 0.0
    %3968 = vmatprep.subr.mxu0 0.0
    %3969 = vmatpush1.msra.mxu0 0.0
    %3970 = vmatprep.subr.mxu0 0.0
    %3971 = vmatpush1.msra.mxu0 0.0
    %3972 = vmatprep.subr.mxu0 0.0
    %3973 = vmatpush1.msra.mxu0 0.0
    %3974 = vmatprep.subr.mxu0 0.0
    %3975 = vmatpush1.msra.mxu0 0.0
    %3976 = vmatprep.subr.mxu0 0.0
    %3977 = vmatpush1.msra.mxu0 0.0
    %3978 = vmatprep.subr.mxu0 0.0
    %3979 = vmatpush1.msra.mxu0 0.0
    %3980 = vmatprep.subr.mxu0 0.0
    %3981 = vmatpush1.msra.mxu0 0.0
    %3982 = vmatprep.subr.mxu0 0.0
    %3983 = vmatpush1.msra.mxu0 0.0
    %3984 = vmatprep.subr.mxu0 0.0
    %3985 = vmatpush1.msra.mxu0 0.0
    %3986 = vmatprep.subr.mxu0 0.0
    %3987 = vmatpush1.msra.mxu0 0.0
    %3988 = vmatprep.subr.mxu0 0.0
    %3989 = vmatpush1.msra.mxu0 0.0
    %3990 = vmatprep.subr.mxu0 0.0
    %3991 = vmatpush1.msra.mxu0 0.0
    %3992 = vmatprep.subr.mxu0 0.0
    %3993 = vmatpush1.msra.mxu0 0.0
    %3994 = vmatprep.subr.mxu0 0.0
    %3995 = vmatpush1.msra.mxu0 0.0
    %3996 = vmatprep.subr.mxu0 0.0
    %3997 = vmatpush1.msra.mxu0 0.0
    %3998 = vmatprep.subr.mxu0 0.0
    %3999 = vmatpush1.msra.mxu0 0.0
    %4000 = vmatprep.mubr.f32.mxu0 0.0
    %4001 = vmatmul.mubr.f32.gmra.mrb[0].mxu0 %v3864
    %v4002 = vpop.f32.mrb[0].mxu0
    %v4003 = vadd.f32 %v3188, %v4002
    %v4004 = vpop.f32.mrb[0].mxu0
    %4005 = vdwg.mxu0
    %4006 = vmatprep.subr.mxu0 0.0
    %4007 = vmatpush1.msra.mxu0 %v3261
    %4008 = vmatprep.subr.mxu0 0.0
    %4009 = vmatpush1.msra.mxu0 %v3262
    %4010 = vmatprep.subr.mxu0 0.0
    %4011 = vmatpush1.msra.mxu0 %v3263
    %4012 = vmatprep.subr.mxu0 0.0
    %4013 = vmatpush1.msra.mxu0 %v3264
    %4014 = vmatprep.subr.mxu0 0.0
    %4015 = vmatpush1.msra.mxu0 %v3265
    %4016 = vmatprep.subr.mxu0 0.0
    %4017 = vmatpush1.msra.mxu0 %v3266
    %4018 = vmatprep.subr.mxu0 0.0
    %4019 = vmatpush1.msra.mxu0 %v3267
    %4020 = vmatprep.subr.mxu0 0.0
    %4021 = vmatpush1.msra.mxu0 %v3268
    %4022 = vmatprep.subr.mxu0 0.0
    %4023 = vmatpush1.msra.mxu0 0.0
    %4024 = vmatprep.subr.mxu0 0.0
    %4025 = vmatpush1.msra.mxu0 0.0
    %4026 = vmatprep.subr.mxu0 0.0
    %4027 = vmatpush1.msra.mxu0 0.0
    %4028 = vmatprep.subr.mxu0 0.0
    %4029 = vmatpush1.msra.mxu0 0.0
    %4030 = vmatprep.subr.mxu0 0.0
    %4031 = vmatpush1.msra.mxu0 0.0
    %4032 = vmatprep.subr.mxu0 0.0
    %4033 = vmatpush1.msra.mxu0 0.0
    %4034 = vmatprep.subr.mxu0 0.0
    %4035 = vmatpush1.msra.mxu0 0.0
    %4036 = vmatprep.subr.mxu0 0.0
    %4037 = vmatpush1.msra.mxu0 0.0
    %4038 = vmatprep.subr.mxu0 0.0
    %4039 = vmatpush1.msra.mxu0 0.0
    %4040 = vmatprep.subr.mxu0 0.0
    %4041 = vmatpush1.msra.mxu0 0.0
    %4042 = vmatprep.subr.mxu0 0.0
    %4043 = vmatpush1.msra.mxu0 0.0
    %4044 = vmatprep.subr.mxu0 0.0
    %4045 = vmatpush1.msra.mxu0 0.0
    %4046 = vmatprep.subr.mxu0 0.0
    %4047 = vmatpush1.msra.mxu0 0.0
    %4048 = vmatprep.subr.mxu0 0.0
    %4049 = vmatpush1.msra.mxu0 0.0
    %4050 = vmatprep.subr.mxu0 0.0
    %4051 = vmatpush1.msra.mxu0 0.0
    %4052 = vmatprep.subr.mxu0 0.0
    %4053 = vmatpush1.msra.mxu0 0.0
    %4054 = vmatprep.subr.mxu0 0.0
    %4055 = vmatpush1.msra.mxu0 0.0
    %4056 = vmatprep.subr.mxu0 0.0
    %4057 = vmatpush1.msra.mxu0 0.0
    %4058 = vmatprep.subr.mxu0 0.0
    %4059 = vmatpush1.msra.mxu0 0.0
    %4060 = vmatprep.subr.mxu0 0.0
    %4061 = vmatpush1.msra.mxu0 0.0
    %4062 = vmatprep.subr.mxu0 0.0
    %4063 = vmatpush1.msra.mxu0 0.0
    %4064 = vmatprep.subr.mxu0 0.0
    %4065 = vmatpush1.msra.mxu0 0.0
    %4066 = vmatprep.subr.mxu0 0.0
    %4067 = vmatpush1.msra.mxu0 0.0
    %4068 = vmatprep.subr.mxu0 0.0
    %4069 = vmatpush1.msra.mxu0 0.0
    %4070 = vmatprep.mubr.f32.mxu0 0.0
    %4071 = vmatmul.mubr.f32.gmra.mrb[0].mxu0 %v3864
    %v4072 = vpop.f32.mrb[0].mxu0
    %v4073 = vadd.f32 %v3273, %v4072
    %v4074 = vpop.f32.mrb[0].mxu0
    %4075 = vdwg.mxu0
    %v4077 = vsel %vm2823, %v3619, 0
    %4079 = vmatprep.subr.mxu0 0.0
    %4080 = vmatpush1.msra.mxu0 %v3345
    %4081 = vmatprep.subr.mxu0 0.0
    %4082 = vmatpush1.msra.mxu0 %v3346
    %4083 = vmatprep.subr.mxu0 0.0
    %4084 = vmatpush1.msra.mxu0 %v3347
    %4085 = vmatprep.subr.mxu0 0.0
    %4086 = vmatpush1.msra.mxu0 %v3348
    %4087 = vmatprep.subr.mxu0 0.0
    %4088 = vmatpush1.msra.mxu0 %v3349
    %4089 = vmatprep.subr.mxu0 0.0
    %4090 = vmatpush1.msra.mxu0 %v3350
    %4091 = vmatprep.subr.mxu0 0.0
    %4092 = vmatpush1.msra.mxu0 %v3351
    %4093 = vmatprep.subr.mxu0 0.0
    %4094 = vmatpush1.msra.mxu0 %v3352
    %4095 = vmatprep.subr.mxu0 0.0
    %4096 = vmatpush1.msra.mxu0 0.0
    %4097 = vmatprep.subr.mxu0 0.0
    %4098 = vmatpush1.msra.mxu0 0.0
    %4099 = vmatprep.subr.mxu0 0.0
    %4100 = vmatpush1.msra.mxu0 0.0
    %4101 = vmatprep.subr.mxu0 0.0
    %4102 = vmatpush1.msra.mxu0 0.0
    %4103 = vmatprep.subr.mxu0 0.0
    %4104 = vmatpush1.msra.mxu0 0.0
    %4105 = vmatprep.subr.mxu0 0.0
    %4106 = vmatpush1.msra.mxu0 0.0
    %4107 = vmatprep.subr.mxu0 0.0
    %4108 = vmatpush1.msra.mxu0 0.0
    %4109 = vmatprep.subr.mxu0 0.0
    %4110 = vmatpush1.msra.mxu0 0.0
    %4111 = vmatprep.subr.mxu0 0.0
    %4112 = vmatpush1.msra.mxu0 0.0
    %4113 = vmatprep.subr.mxu0 0.0
    %4114 = vmatpush1.msra.mxu0 0.0
    %4115 = vmatprep.subr.mxu0 0.0
    %4116 = vmatpush1.msra.mxu0 0.0
    %4117 = vmatprep.subr.mxu0 0.0
    %4118 = vmatpush1.msra.mxu0 0.0
    %4119 = vmatprep.subr.mxu0 0.0
    %4120 = vmatpush1.msra.mxu0 0.0
    %4121 = vmatprep.subr.mxu0 0.0
    %4122 = vmatpush1.msra.mxu0 0.0
    %4123 = vmatprep.subr.mxu0 0.0
    %4124 = vmatpush1.msra.mxu0 0.0
    %4125 = vmatprep.subr.mxu0 0.0
    %4126 = vmatpush1.msra.mxu0 0.0
    %4127 = vmatprep.subr.mxu0 0.0
    %4128 = vmatpush1.msra.mxu0 0.0
    %4129 = vmatprep.subr.mxu0 0.0
    %4130 = vmatpush1.msra.mxu0 0.0
    %4131 = vmatprep.subr.mxu0 0.0
    %4132 = vmatpush1.msra.mxu0 0.0
    %4133 = vmatprep.subr.mxu0 0.0
    %4134 = vmatpush1.msra.mxu0 0.0
    %4135 = vmatprep.subr.mxu0 0.0
    %4136 = vmatpush1.msra.mxu0 0.0
    %4137 = vmatprep.subr.mxu0 0.0
    %4138 = vmatpush1.msra.mxu0 0.0
    %4139 = vmatprep.subr.mxu0 0.0
    %4140 = vmatpush1.msra.mxu0 0.0
    %4141 = vmatprep.subr.mxu0 0.0
    %4142 = vmatpush1.msra.mxu0 0.0
    %4143 = vmatprep.mubr.f32.mxu0 0.0
    %4144 = vmatmul.mubr.f32.gmra.mrb[0].mxu0 %v4077
    %v4145 = vpop.f32.mrb[0].mxu0
    %v4146 = vadd.f32 %v3357, %v4145
    %v4147 = vpop.f32.mrb[0].mxu0
    %4148 = vdwg.mxu0
    %4149 = vmatprep.subr.mxu0 0.0
    %4150 = vmatpush1.msra.mxu0 %v3430
    %4151 = vmatprep.subr.mxu0 0.0
    %4152 = vmatpush1.msra.mxu0 %v3431
    %4153 = vmatprep.subr.mxu0 0.0
    %4154 = vmatpush1.msra.mxu0 %v3432
    %4155 = vmatprep.subr.mxu0 0.0
    %4156 = vmatpush1.msra.mxu0 %v3433
    %4157 = vmatprep.subr.mxu0 0.0
    %4158 = vmatpush1.msra.mxu0 %v3434
    %4159 = vmatprep.subr.mxu0 0.0
    %4160 = vmatpush1.msra.mxu0 %v3435
    %4161 = vmatprep.subr.mxu0 0.0
    %4162 = vmatpush1.msra.mxu0 %v3436
    %4163 = vmatprep.subr.mxu0 0.0
    %4164 = vmatpush1.msra.mxu0 %v3437
    %4165 = vmatprep.subr.mxu0 0.0
    %4166 = vmatpush1.msra.mxu0 0.0
    %4167 = vmatprep.subr.mxu0 0.0
    %4168 = vmatpush1.msra.mxu0 0.0
    %4169 = vmatprep.subr.mxu0 0.0
    %4170 = vmatpush1.msra.mxu0 0.0
    %4171 = vmatprep.subr.mxu0 0.0
    %4172 = vmatpush1.msra.mxu0 0.0
    %4173 = vmatprep.subr.mxu0 0.0
    %4174 = vmatpush1.msra.mxu0 0.0
    %4175 = vmatprep.subr.mxu0 0.0
    %4176 = vmatpush1.msra.mxu0 0.0
    %4177 = vmatprep.subr.mxu0 0.0
    %4178 = vmatpush1.msra.mxu0 0.0
    %4179 = vmatprep.subr.mxu0 0.0
    %4180 = vmatpush1.msra.mxu0 0.0
    %4181 = vmatprep.subr.mxu0 0.0
    %4182 = vmatpush1.msra.mxu0 0.0
    %4183 = vmatprep.subr.mxu0 0.0
    %4184 = vmatpush1.msra.mxu0 0.0
    %4185 = vmatprep.subr.mxu0 0.0
    %4186 = vmatpush1.msra.mxu0 0.0
    %4187 = vmatprep.subr.mxu0 0.0
    %4188 = vmatpush1.msra.mxu0 0.0
    %4189 = vmatprep.subr.mxu0 0.0
    %4190 = vmatpush1.msra.mxu0 0.0
    %4191 = vmatprep.subr.mxu0 0.0
    %4192 = vmatpush1.msra.mxu0 0.0
    %4193 = vmatprep.subr.mxu0 0.0
    %4194 = vmatpush1.msra.mxu0 0.0
    %4195 = vmatprep.subr.mxu0 0.0
    %4196 = vmatpush1.msra.mxu0 0.0
    %4197 = vmatprep.subr.mxu0 0.0
    %4198 = vmatpush1.msra.mxu0 0.0
    %4199 = vmatprep.subr.mxu0 0.0
    %4200 = vmatpush1.msra.mxu0 0.0
    %4201 = vmatprep.subr.mxu0 0.0
    %4202 = vmatpush1.msra.mxu0 0.0
    %4203 = vmatprep.subr.mxu0 0.0
    %4204 = vmatpush1.msra.mxu0 0.0
    %4205 = vmatprep.subr.mxu0 0.0
    %4206 = vmatpush1.msra.mxu0 0.0
    %4207 = vmatprep.subr.mxu0 0.0
    %4208 = vmatpush1.msra.mxu0 0.0
    %4209 = vmatprep.subr.mxu0 0.0
    %4210 = vmatpush1.msra.mxu0 0.0
    %4211 = vmatprep.subr.mxu0 0.0
    %4212 = vmatpush1.msra.mxu0 0.0
    %4213 = vmatprep.mubr.f32.mxu0 0.0
    %4214 = vmatmul.mubr.f32.gmra.mrb[0].mxu0 %v4077
    %v4215 = vpop.f32.mrb[0].mxu0
    %v4216 = vadd.f32 %v3442, %v4215
    %v4217 = vpop.f32.mrb[0].mxu0
    %4218 = vdwg.mxu0
    %4219 = vmatprep.subr.mxu0 0.0
    %4220 = vmatpush1.msra.mxu0 %v3515
    %4221 = vmatprep.subr.mxu0 0.0
    %4222 = vmatpush1.msra.mxu0 %v3516
    %4223 = vmatprep.subr.mxu0 0.0
    %4224 = vmatpush1.msra.mxu0 %v3517
    %4225 = vmatprep.subr.mxu0 0.0
    %4226 = vmatpush1.msra.mxu0 %v3518
    %4227 = vmatprep.subr.mxu0 0.0
    %4228 = vmatpush1.msra.mxu0 %v3519
    %4229 = vmatprep.subr.mxu0 0.0
    %4230 = vmatpush1.msra.mxu0 %v3520
    %4231 = vmatprep.subr.mxu0 0.0
    %4232 = vmatpush1.msra.mxu0 %v3521
    %4233 = vmatprep.subr.mxu0 0.0
    %4234 = vmatpush1.msra.mxu0 %v3522
    %4235 = vmatprep.subr.mxu0 0.0
    %4236 = vmatpush1.msra.mxu0 0.0
    %4237 = vmatprep.subr.mxu0 0.0
    %4238 = vmatpush1.msra.mxu0 0.0
    %4239 = vmatprep.subr.mxu0 0.0
    %4240 = vmatpush1.msra.mxu0 0.0
    %4241 = vmatprep.subr.mxu0 0.0
    %4242 = vmatpush1.msra.mxu0 0.0
    %4243 = vmatprep.subr.mxu0 0.0
    %4244 = vmatpush1.msra.mxu0 0.0
    %4245 = vmatprep.subr.mxu0 0.0
    %4246 = vmatpush1.msra.mxu0 0.0
    %4247 = vmatprep.subr.mxu0 0.0
    %4248 = vmatpush1.msra.mxu0 0.0
    %4249 = vmatprep.subr.mxu0 0.0
    %4250 = vmatpush1.msra.mxu0 0.0
    %4251 = vmatprep.subr.mxu0 0.0
    %4252 = vmatpush1.msra.mxu0 0.0
    %4253 = vmatprep.subr.mxu0 0.0
    %4254 = vmatpush1.msra.mxu0 0.0
    %4255 = vmatprep.subr.mxu0 0.0
    %4256 = vmatpush1.msra.mxu0 0.0
    %4257 = vmatprep.subr.mxu0 0.0
    %4258 = vmatpush1.msra.mxu0 0.0
    %4259 = vmatprep.subr.mxu0 0.0
    %4260 = vmatpush1.msra.mxu0 0.0
    %4261 = vmatprep.subr.mxu0 0.0
    %4262 = vmatpush1.msra.mxu0 0.0
    %4263 = vmatprep.subr.mxu0 0.0
    %4264 = vmatpush1.msra.mxu0 0.0
    %4265 = vmatprep.subr.mxu0 0.0
    %4266 = vmatpush1.msra.mxu0 0.0
    %4267 = vmatprep.subr.mxu0 0.0
    %4268 = vmatpush1.msra.mxu0 0.0
    %4269 = vmatprep.subr.mxu0 0.0
    %4270 = vmatpush1.msra.mxu0 0.0
    %4271 = vmatprep.subr.mxu0 0.0
    %4272 = vmatpush1.msra.mxu0 0.0
    %4273 = vmatprep.subr.mxu0 0.0
    %4274 = vmatpush1.msra.mxu0 0.0
    %4275 = vmatprep.subr.mxu0 0.0
    %4276 = vmatpush1.msra.mxu0 0.0
    %4277 = vmatprep.subr.mxu0 0.0
    %4278 = vmatpush1.msra.mxu0 0.0
    %4279 = vmatprep.subr.mxu0 0.0
    %4280 = vmatpush1.msra.mxu0 0.0
    %4281 = vmatprep.subr.mxu0 0.0
    %4282 = vmatpush1.msra.mxu0 0.0
    %4283 = vmatprep.mubr.f32.mxu0 0.0
    %4284 = vmatmul.mubr.f32.gmra.mrb[0].mxu0 %v4077
    %v4285 = vpop.f32.mrb[0].mxu0
    %v4286 = vadd.f32 %v3527, %v4285
    %v4287 = vpop.f32.mrb[0].mxu0
    %4288 = vdwg.mxu0
    %v4289 = vadd.f32 %v3933, %v4146
    %v4290 = vxor.u32 %v4289, 2147483648
    %v4291 = vmul.f32 %v4290, 1.442695
    %v4292 = vpow.pop %v4291
    %v4293 = vadd.f32 %v4292, 1.0
    %v4294 = vrcp.pop %v4293
    %v4295 = vmul.f32 1.0, %v4294
    %v4296 = vadd.f32 %v4003, %v4216
    %v4297 = vxor.u32 %v4296, 2147483648
    %v4298 = vmul.f32 %v4297, 1.442695
    %v4299 = vpow.pop %v4298
    %v4300 = vadd.f32 %v4299, 1.0
    %v4301 = vrcp.pop %v4300
    %v4302 = vmul.f32 1.0, %v4301
    %v4303 = vmul.f32 %v4295, %v4286
    %v4304 = vadd.f32 %v4073, %v4303
    %v4305 = vtanh.pop %v4304
    %v4306 = vsub.f32 1.0, %v4302
    %v4307 = vmul.f32 %v4306, %v4305
    %v4308 = vmul.f32 %v4302, %v3619
    %v4309 = vadd.f32 %v4307, %v4308
    %v4310 = vrot.slane %v1859, 2
    %v4312 = vrot.slane %v2630, 1
    %v4314 = vsel %vm2799, %v4310, %v4312
    %v4315 = vrot.slane %v1936, 2
    %v4317 = vrot.slane %v2704, 1
    %v4319 = vsel %vm2799, %v4315, %v4317
    %v4320 = vrot.slane %v2013, 2
    %v4322 = vrot.slane %v2778, 1
    %v4324 = vsel %vm2799, %v4320, %v4322
    %4325 = vmatprep.subr.mxu0 0.0
    %4326 = vmatpush1.msra.mxu0 %v2809
    %4327 = vmatprep.subr.mxu0 0.0
    %4328 = vmatpush1.msra.mxu0 %v2810
    %4329 = vmatprep.subr.mxu0 0.0
    %4330 = vmatpush1.msra.mxu0 %v2811
    %4331 = vmatprep.subr.mxu0 0.0
    %4332 = vmatpush1.msra.mxu0 %v2812
    %4333 = vmatprep.subr.mxu0 0.0
    %4334 = vmatpush1.msra.mxu0 %v2813
    %4335 = vmatprep.subr.mxu0 0.0
    %4336 = vmatpush1.msra.mxu0 %v2814
    %4337 = vmatprep.subr.mxu0 0.0
    %4338 = vmatpush1.msra.mxu0 %v2815
    %4339 = vmatprep.subr.mxu0 0.0
    %4340 = vmatpush1.msra.mxu0 %v2816
    %4341 = vmatprep.subr.mxu0 0.0
    %4342 = vmatpush1.msra.mxu0 0.0
    %4343 = vmatprep.subr.mxu0 0.0
    %4344 = vmatpush1.msra.mxu0 0.0
    %4345 = vmatprep.subr.mxu0 0.0
    %4346 = vmatpush1.msra.mxu0 0.0
    %4347 = vmatprep.subr.mxu0 0.0
    %4348 = vmatpush1.msra.mxu0 0.0
    %4349 = vmatprep.subr.mxu0 0.0
    %4350 = vmatpush1.msra.mxu0 0.0
    %4351 = vmatprep.subr.mxu0 0.0
    %4352 = vmatpush1.msra.mxu0 0.0
    %4353 = vmatprep.subr.mxu0 0.0
    %4354 = vmatpush1.msra.mxu0 0.0
    %4355 = vmatprep.subr.mxu0 0.0
    %4356 = vmatpush1.msra.mxu0 0.0
    %4357 = vmatprep.subr.mxu0 0.0
    %4358 = vmatpush1.msra.mxu0 0.0
    %4359 = vmatprep.subr.mxu0 0.0
    %4360 = vmatpush1.msra.mxu0 0.0
    %4361 = vmatprep.subr.mxu0 0.0
    %4362 = vmatpush1.msra.mxu0 0.0
    %4363 = vmatprep.subr.mxu0 0.0
    %4364 = vmatpush1.msra.mxu0 0.0
    %4365 = vmatprep.subr.mxu0 0.0
    %4366 = vmatpush1.msra.mxu0 0.0
    %4367 = vmatprep.subr.mxu0 0.0
    %4368 = vmatpush1.msra.mxu0 0.0
    %4369 = vmatprep.subr.mxu0 0.0
    %4370 = vmatpush1.msra.mxu0 0.0
    %4371 = vmatprep.subr.mxu0 0.0
    %4372 = vmatpush1.msra.mxu0 0.0
    %4373 = vmatprep.subr.mxu0 0.0
    %4374 = vmatpush1.msra.mxu0 0.0
    %4375 = vmatprep.subr.mxu0 0.0
    %4376 = vmatpush1.msra.mxu0 0.0
    %4377 = vmatprep.subr.mxu0 0.0
    %4378 = vmatpush1.msra.mxu0 0.0
    %4379 = vmatprep.subr.mxu0 0.0
    %4380 = vmatpush1.msra.mxu0 0.0
    %4381 = vmatprep.subr.mxu0 0.0
    %4382 = vmatpush1.msra.mxu0 0.0
    %4383 = vmatprep.subr.mxu0 0.0
    %4384 = vmatpush1.msra.mxu0 0.0
    %4385 = vmatprep.subr.mxu0 0.0
    %4386 = vmatpush1.msra.mxu0 0.0
    %4387 = vmatprep.subr.mxu0 0.0
    %4388 = vmatpush1.msra.mxu0 0.0
    %4389 = vmatprep.mubr.f32.mxu0 0.0
    %4390 = vmatmul.mubr.f32.gmra.mrb[0].mxu0 %v3864
    %v4391 = vpop.f32.mrb[0].mxu0
    %v4392 = vadd.f32 %v2821, %v4391
    %v4393 = vpop.f32.mrb[0].mxu0
    %4394 = vdwg.mxu0
    %4395 = vmatprep.subr.mxu0 0.0
    %4396 = vmatpush1.msra.mxu0 %v2898
    %4397 = vmatprep.subr.mxu0 0.0
    %4398 = vmatpush1.msra.mxu0 %v2899
    %4399 = vmatprep.subr.mxu0 0.0
    %4400 = vmatpush1.msra.mxu0 %v2900
    %4401 = vmatprep.subr.mxu0 0.0
    %4402 = vmatpush1.msra.mxu0 %v2901
    %4403 = vmatprep.subr.mxu0 0.0
    %4404 = vmatpush1.msra.mxu0 %v2902
    %4405 = vmatprep.subr.mxu0 0.0
    %4406 = vmatpush1.msra.mxu0 %v2903
    %4407 = vmatprep.subr.mxu0 0.0
    %4408 = vmatpush1.msra.mxu0 %v2904
    %4409 = vmatprep.subr.mxu0 0.0
    %4410 = vmatpush1.msra.mxu0 %v2905
    %4411 = vmatprep.subr.mxu0 0.0
    %4412 = vmatpush1.msra.mxu0 0.0
    %4413 = vmatprep.subr.mxu0 0.0
    %4414 = vmatpush1.msra.mxu0 0.0
    %4415 = vmatprep.subr.mxu0 0.0
    %4416 = vmatpush1.msra.mxu0 0.0
    %4417 = vmatprep.subr.mxu0 0.0
    %4418 = vmatpush1.msra.mxu0 0.0
    %4419 = vmatprep.subr.mxu0 0.0
    %4420 = vmatpush1.msra.mxu0 0.0
    %4421 = vmatprep.subr.mxu0 0.0
    %4422 = vmatpush1.msra.mxu0 0.0
    %4423 = vmatprep.subr.mxu0 0.0
    %4424 = vmatpush1.msra.mxu0 0.0
    %4425 = vmatprep.subr.mxu0 0.0
    %4426 = vmatpush1.msra.mxu0 0.0
    %4427 = vmatprep.subr.mxu0 0.0
    %4428 = vmatpush1.msra.mxu0 0.0
    %4429 = vmatprep.subr.mxu0 0.0
    %4430 = vmatpush1.msra.mxu0 0.0
    %4431 = vmatprep.subr.mxu0 0.0
    %4432 = vmatpush1.msra.mxu0 0.0
    %4433 = vmatprep.subr.mxu0 0.0
    %4434 = vmatpush1.msra.mxu0 0.0
    %4435 = vmatprep.subr.mxu0 0.0
    %4436 = vmatpush1.msra.mxu0 0.0
    %4437 = vmatprep.subr.mxu0 0.0
    %4438 = vmatpush1.msra.mxu0 0.0
    %4439 = vmatprep.subr.mxu0 0.0
    %4440 = vmatpush1.msra.mxu0 0.0
    %4441 = vmatprep.subr.mxu0 0.0
    %4442 = vmatpush1.msra.mxu0 0.0
    %4443 = vmatprep.subr.mxu0 0.0
    %4444 = vmatpush1.msra.mxu0 0.0
    %4445 = vmatprep.subr.mxu0 0.0
    %4446 = vmatpush1.msra.mxu0 0.0
    %4447 = vmatprep.subr.mxu0 0.0
    %4448 = vmatpush1.msra.mxu0 0.0
    %4449 = vmatprep.subr.mxu0 0.0
    %4450 = vmatpush1.msra.mxu0 0.0
    %4451 = vmatprep.subr.mxu0 0.0
    %4452 = vmatpush1.msra.mxu0 0.0
    %4453 = vmatprep.subr.mxu0 0.0
    %4454 = vmatpush1.msra.mxu0 0.0
    %4455 = vmatprep.subr.mxu0 0.0
    %4456 = vmatpush1.msra.mxu0 0.0
    %4457 = vmatprep.subr.mxu0 0.0
    %4458 = vmatpush1.msra.mxu0 0.0
    %4459 = vmatprep.mubr.f32.mxu0 0.0
    %4460 = vmatmul.mubr.f32.gmra.mrb[0].mxu0 %v3864
    %v4461 = vpop.f32.mrb[0].mxu0
    %v4462 = vadd.f32 %v2910, %v4461
    %v4463 = vpop.f32.mrb[0].mxu0
    %4464 = vdwg.mxu0
    %4465 = vmatprep.subr.mxu0 0.0
    %4466 = vmatpush1.msra.mxu0 %v2983
    %4467 = vmatprep.subr.mxu0 0.0
    %4468 = vmatpush1.msra.mxu0 %v2984
    %4469 = vmatprep.subr.mxu0 0.0
    %4470 = vmatpush1.msra.mxu0 %v2985
    %4471 = vmatprep.subr.mxu0 0.0
    %4472 = vmatpush1.msra.mxu0 %v2986
    %4473 = vmatprep.subr.mxu0 0.0
    %4474 = vmatpush1.msra.mxu0 %v2987
    %4475 = vmatprep.subr.mxu0 0.0
    %4476 = vmatpush1.msra.mxu0 %v2988
    %4477 = vmatprep.subr.mxu0 0.0
    %4478 = vmatpush1.msra.mxu0 %v2989
    %4479 = vmatprep.subr.mxu0 0.0
    %4480 = vmatpush1.msra.mxu0 %v2990
    %4481 = vmatprep.subr.mxu0 0.0
    %4482 = vmatpush1.msra.mxu0 0.0
    %4483 = vmatprep.subr.mxu0 0.0
    %4484 = vmatpush1.msra.mxu0 0.0
    %4485 = vmatprep.subr.mxu0 0.0
    %4486 = vmatpush1.msra.mxu0 0.0
    %4487 = vmatprep.subr.mxu0 0.0
    %4488 = vmatpush1.msra.mxu0 0.0
    %4489 = vmatprep.subr.mxu0 0.0
    %4490 = vmatpush1.msra.mxu0 0.0
    %4491 = vmatprep.subr.mxu0 0.0
    %4492 = vmatpush1.msra.mxu0 0.0
    %4493 = vmatprep.subr.mxu0 0.0
    %4494 = vmatpush1.msra.mxu0 0.0
    %4495 = vmatprep.subr.mxu0 0.0
    %4496 = vmatpush1.msra.mxu0 0.0
    %4497 = vmatprep.subr.mxu0 0.0
    %4498 = vmatpush1.msra.mxu0 0.0
    %4499 = vmatprep.subr.mxu0 0.0
    %4500 = vmatpush1.msra.mxu0 0.0
    %4501 = vmatprep.subr.mxu0 0.0
    %4502 = vmatpush1.msra.mxu0 0.0
    %4503 = vmatprep.subr.mxu0 0.0
    %4504 = vmatpush1.msra.mxu0 0.0
    %4505 = vmatprep.subr.mxu0 0.0
    %4506 = vmatpush1.msra.mxu0 0.0
    %4507 = vmatprep.subr.mxu0 0.0
    %4508 = vmatpush1.msra.mxu0 0.0
    %4509 = vmatprep.subr.mxu0 0.0
    %4510 = vmatpush1.msra.mxu0 0.0
    %4511 = vmatprep.subr.mxu0 0.0
    %4512 = vmatpush1.msra.mxu0 0.0
    %4513 = vmatprep.subr.mxu0 0.0
    %4514 = vmatpush1.msra.mxu0 0.0
    %4515 = vmatprep.subr.mxu0 0.0
    %4516 = vmatpush1.msra.mxu0 0.0
    %4517 = vmatprep.subr.mxu0 0.0
    %4518 = vmatpush1.msra.mxu0 0.0
    %4519 = vmatprep.subr.mxu0 0.0
    %4520 = vmatpush1.msra.mxu0 0.0
    %4521 = vmatprep.subr.mxu0 0.0
    %4522 = vmatpush1.msra.mxu0 0.0
    %4523 = vmatprep.subr.mxu0 0.0
    %4524 = vmatpush1.msra.mxu0 0.0
    %4525 = vmatprep.subr.mxu0 0.0
    %4526 = vmatpush1.msra.mxu0 0.0
    %4527 = vmatprep.subr.mxu0 0.0
    %4528 = vmatpush1.msra.mxu0 0.0
    %4529 = vmatprep.mubr.f32.mxu0 0.0
    %4530 = vmatmul.mubr.f32.gmra.mrb[0].mxu0 %v3864
    %v4531 = vpop.f32.mrb[0].mxu0
    %v4532 = vadd.f32 %v2995, %v4531
    %v4533 = vpop.f32.mrb[0].mxu0
    %4534 = vdwg.mxu0
    %v4535 = vadd.f32 %v4314, %v4392
    %v4536 = vxor.u32 %v4535, 2147483648
    %v4537 = vmul.f32 %v4536, 1.442695
    %v4538 = vpow.pop %v4537
    %v4539 = vadd.f32 %v4538, 1.0
    %v4540 = vrcp.pop %v4539
    %v4541 = vmul.f32 1.0, %v4540
    %v4542 = vadd.f32 %v4319, %v4462
    %v4543 = vxor.u32 %v4542, 2147483648
    %v4544 = vmul.f32 %v4543, 1.442695
    %v4545 = vpow.pop %v4544
    %v4546 = vadd.f32 %v4545, 1.0
    %v4547 = vrcp.pop %v4546
    %v4548 = vmul.f32 1.0, %v4547
    %v4549 = vmul.f32 %v4541, %v4532
    %v4550 = vadd.f32 %v4324, %v4549
    %v4551 = vtanh.pop %v4550
    %v4552 = vsub.f32 1.0, %v4548
    %v4553 = vmul.f32 %v4552, %v4551
    %v4554 = vmul.f32 %v4548, %v3862
    %v4555 = vadd.f32 %v4553, %v4554
    %v4557 = vsel %vm2823, %v4555, 0
    %4559 = vmatprep.subr.mxu0 0.0
    %4560 = vmatpush1.msra.mxu0 %v3088
    %4561 = vmatprep.subr.mxu0 0.0
    %4562 = vmatpush1.msra.mxu0 %v3089
    %4563 = vmatprep.subr.mxu0 0.0
    %4564 = vmatpush1.msra.mxu0 %v3090
    %4565 = vmatprep.subr.mxu0 0.0
    %4566 = vmatpush1.msra.mxu0 %v3091
    %4567 = vmatprep.subr.mxu0 0.0
    %4568 = vmatpush1.msra.mxu0 %v3092
    %4569 = vmatprep.subr.mxu0 0.0
    %4570 = vmatpush1.msra.mxu0 %v3093
    %4571 = vmatprep.subr.mxu0 0.0
    %4572 = vmatpush1.msra.mxu0 %v3094
    %4573 = vmatprep.subr.mxu0 0.0
    %4574 = vmatpush1.msra.mxu0 %v3095
    %4575 = vmatprep.subr.mxu0 0.0
    %4576 = vmatpush1.msra.mxu0 0.0
    %4577 = vmatprep.subr.mxu0 0.0
    %4578 = vmatpush1.msra.mxu0 0.0
    %4579 = vmatprep.subr.mxu0 0.0
    %4580 = vmatpush1.msra.mxu0 0.0
    %4581 = vmatprep.subr.mxu0 0.0
    %4582 = vmatpush1.msra.mxu0 0.0
    %4583 = vmatprep.subr.mxu0 0.0
    %4584 = vmatpush1.msra.mxu0 0.0
    %4585 = vmatprep.subr.mxu0 0.0
    %4586 = vmatpush1.msra.mxu0 0.0
    %4587 = vmatprep.subr.mxu0 0.0
    %4588 = vmatpush1.msra.mxu0 0.0
    %4589 = vmatprep.subr.mxu0 0.0
    %4590 = vmatpush1.msra.mxu0 0.0
    %4591 = vmatprep.subr.mxu0 0.0
    %4592 = vmatpush1.msra.mxu0 0.0
    %4593 = vmatprep.subr.mxu0 0.0
    %4594 = vmatpush1.msra.mxu0 0.0
    %4595 = vmatprep.subr.mxu0 0.0
    %4596 = vmatpush1.msra.mxu0 0.0
    %4597 = vmatprep.subr.mxu0 0.0
    %4598 = vmatpush1.msra.mxu0 0.0
    %4599 = vmatprep.subr.mxu0 0.0
    %4600 = vmatpush1.msra.mxu0 0.0
    %4601 = vmatprep.subr.mxu0 0.0
    %4602 = vmatpush1.msra.mxu0 0.0
    %4603 = vmatprep.subr.mxu0 0.0
    %4604 = vmatpush1.msra.mxu0 0.0
    %4605 = vmatprep.subr.mxu0 0.0
    %4606 = vmatpush1.msra.mxu0 0.0
    %4607 = vmatprep.subr.mxu0 0.0
    %4608 = vmatpush1.msra.mxu0 0.0
    %4609 = vmatprep.subr.mxu0 0.0
    %4610 = vmatpush1.msra.mxu0 0.0
    %4611 = vmatprep.subr.mxu0 0.0
    %4612 = vmatpush1.msra.mxu0 0.0
    %4613 = vmatprep.subr.mxu0 0.0
    %4614 = vmatpush1.msra.mxu0 0.0
    %4615 = vmatprep.subr.mxu0 0.0
    %4616 = vmatpush1.msra.mxu0 0.0
    %4617 = vmatprep.subr.mxu0 0.0
    %4618 = vmatpush1.msra.mxu0 0.0
    %4619 = vmatprep.subr.mxu0 0.0
    %4620 = vmatpush1.msra.mxu0 0.0
    %4621 = vmatprep.subr.mxu0 0.0
    %4622 = vmatpush1.msra.mxu0 0.0
    %4623 = vmatprep.mubr.f32.mxu0 0.0
    %4624 = vmatmul.mubr.f32.gmra.mrb[0].mxu0 %v4557
    %v4625 = vpop.f32.mrb[0].mxu0
    %v4626 = vadd.f32 %v3100, %v4625
    %v4627 = vpop.f32.mrb[0].mxu0
    %4628 = vdwg.mxu0
    %4629 = vmatprep.subr.mxu0 0.0
    %4630 = vmatpush1.msra.mxu0 %v3176
    %4631 = vmatprep.subr.mxu0 0.0
    %4632 = vmatpush1.msra.mxu0 %v3177
    %4633 = vmatprep.subr.mxu0 0.0
    %4634 = vmatpush1.msra.mxu0 %v3178
    %4635 = vmatprep.subr.mxu0 0.0
    %4636 = vmatpush1.msra.mxu0 %v3179
    %4637 = vmatprep.subr.mxu0 0.0
    %4638 = vmatpush1.msra.mxu0 %v3180
    %4639 = vmatprep.subr.mxu0 0.0
    %4640 = vmatpush1.msra.mxu0 %v3181
    %4641 = vmatprep.subr.mxu0 0.0
    %4642 = vmatpush1.msra.mxu0 %v3182
    %4643 = vmatprep.subr.mxu0 0.0
    %4644 = vmatpush1.msra.mxu0 %v3183
    %4645 = vmatprep.subr.mxu0 0.0
    %4646 = vmatpush1.msra.mxu0 0.0
    %4647 = vmatprep.subr.mxu0 0.0
    %4648 = vmatpush1.msra.mxu0 0.0
    %4649 = vmatprep.subr.mxu0 0.0
    %4650 = vmatpush1.msra.mxu0 0.0
    %4651 = vmatprep.subr.mxu0 0.0
    %4652 = vmatpush1.msra.mxu0 0.0
    %4653 = vmatprep.subr.mxu0 0.0
    %4654 = vmatpush1.msra.mxu0 0.0
    %4655 = vmatprep.subr.mxu0 0.0
    %4656 = vmatpush1.msra.mxu0 0.0
    %4657 = vmatprep.subr.mxu0 0.0
    %4658 = vmatpush1.msra.mxu0 0.0
    %4659 = vmatprep.subr.mxu0 0.0
    %4660 = vmatpush1.msra.mxu0 0.0
    %4661 = vmatprep.subr.mxu0 0.0
    %4662 = vmatpush1.msra.mxu0 0.0
    %4663 = vmatprep.subr.mxu0 0.0
    %4664 = vmatpush1.msra.mxu0 0.0
    %4665 = vmatprep.subr.mxu0 0.0
    %4666 = vmatpush1.msra.mxu0 0.0
    %4667 = vmatprep.subr.mxu0 0.0
    %4668 = vmatpush1.msra.mxu0 0.0
    %4669 = vmatprep.subr.mxu0 0.0
    %4670 = vmatpush1.msra.mxu0 0.0
    %4671 = vmatprep.subr.mxu0 0.0
    %4672 = vmatpush1.msra.mxu0 0.0
    %4673 = vmatprep.subr.mxu0 0.0
    %4674 = vmatpush1.msra.mxu0 0.0
    %4675 = vmatprep.subr.mxu0 0.0
    %4676 = vmatpush1.msra.mxu0 0.0
    %4677 = vmatprep.subr.mxu0 0.0
    %4678 = vmatpush1.msra.mxu0 0.0
    %4679 = vmatprep.subr.mxu0 0.0
    %4680 = vmatpush1.msra.mxu0 0.0
    %4681 = vmatprep.subr.mxu0 0.0
    %4682 = vmatpush1.msra.mxu0 0.0
    %4683 = vmatprep.subr.mxu0 0.0
    %4684 = vmatpush1.msra.mxu0 0.0
    %4685 = vmatprep.subr.mxu0 0.0
    %4686 = vmatpush1.msra.mxu0 0.0
    %4687 = vmatprep.subr.mxu0 0.0
    %4688 = vmatpush1.msra.mxu0 0.0
    %4689 = vmatprep.subr.mxu0 0.0
    %4690 = vmatpush1.msra.mxu0 0.0
    %4691 = vmatprep.subr.mxu0 0.0
    %4692 = vmatpush1.msra.mxu0 0.0
    %4693 = vmatprep.mubr.f32.mxu0 0.0
    %4694 = vmatmul.mubr.f32.gmra.mrb[0].mxu0 %v4557
    %v4695 = vpop.f32.mrb[0].mxu0
    %v4696 = vadd.f32 %v3188, %v4695
    %v4697 = vpop.f32.mrb[0].mxu0
    %4698 = vdwg.mxu0
    %4699 = vmatprep.subr.mxu0 0.0
    %4700 = vmatpush1.msra.mxu0 %v3261
    %4701 = vmatprep.subr.mxu0 0.0
    %4702 = vmatpush1.msra.mxu0 %v3262
    %4703 = vmatprep.subr.mxu0 0.0
    %4704 = vmatpush1.msra.mxu0 %v3263
    %4705 = vmatprep.subr.mxu0 0.0
    %4706 = vmatpush1.msra.mxu0 %v3264
    %4707 = vmatprep.subr.mxu0 0.0
    %4708 = vmatpush1.msra.mxu0 %v3265
    %4709 = vmatprep.subr.mxu0 0.0
    %4710 = vmatpush1.msra.mxu0 %v3266
    %4711 = vmatprep.subr.mxu0 0.0
    %4712 = vmatpush1.msra.mxu0 %v3267
    %4713 = vmatprep.subr.mxu0 0.0
    %4714 = vmatpush1.msra.mxu0 %v3268
    %4715 = vmatprep.subr.mxu0 0.0
    %4716 = vmatpush1.msra.mxu0 0.0
    %4717 = vmatprep.subr.mxu0 0.0
    %4718 = vmatpush1.msra.mxu0 0.0
    %4719 = vmatprep.subr.mxu0 0.0
    %4720 = vmatpush1.msra.mxu0 0.0
    %4721 = vmatprep.subr.mxu0 0.0
    %4722 = vmatpush1.msra.mxu0 0.0
    %4723 = vmatprep.subr.mxu0 0.0
    %4724 = vmatpush1.msra.mxu0 0.0
    %4725 = vmatprep.subr.mxu0 0.0
    %4726 = vmatpush1.msra.mxu0 0.0
    %4727 = vmatprep.subr.mxu0 0.0
    %4728 = vmatpush1.msra.mxu0 0.0
    %4729 = vmatprep.subr.mxu0 0.0
    %4730 = vmatpush1.msra.mxu0 0.0
    %4731 = vmatprep.subr.mxu0 0.0
    %4732 = vmatpush1.msra.mxu0 0.0
    %4733 = vmatprep.subr.mxu0 0.0
    %4734 = vmatpush1.msra.mxu0 0.0
    %4735 = vmatprep.subr.mxu0 0.0
    %4736 = vmatpush1.msra.mxu0 0.0
    %4737 = vmatprep.subr.mxu0 0.0
    %4738 = vmatpush1.msra.mxu0 0.0
    %4739 = vmatprep.subr.mxu0 0.0
    %4740 = vmatpush1.msra.mxu0 0.0
    %4741 = vmatprep.subr.mxu0 0.0
    %4742 = vmatpush1.msra.mxu0 0.0
    %4743 = vmatprep.subr.mxu0 0.0
    %4744 = vmatpush1.msra.mxu0 0.0
    %4745 = vmatprep.subr.mxu0 0.0
    %4746 = vmatpush1.msra.mxu0 0.0
    %4747 = vmatprep.subr.mxu0 0.0
    %4748 = vmatpush1.msra.mxu0 0.0
    %4749 = vmatprep.subr.mxu0 0.0
    %4750 = vmatpush1.msra.mxu0 0.0
    %4751 = vmatprep.subr.mxu0 0.0
    %4752 = vmatpush1.msra.mxu0 0.0
    %4753 = vmatprep.subr.mxu0 0.0
    %4754 = vmatpush1.msra.mxu0 0.0
    %4755 = vmatprep.subr.mxu0 0.0
    %4756 = vmatpush1.msra.mxu0 0.0
    %4757 = vmatprep.subr.mxu0 0.0
    %4758 = vmatpush1.msra.mxu0 0.0
    %4759 = vmatprep.subr.mxu0 0.0
    %4760 = vmatpush1.msra.mxu0 0.0
    %4761 = vmatprep.subr.mxu0 0.0
    %4762 = vmatpush1.msra.mxu0 0.0
    %4763 = vmatprep.mubr.f32.mxu0 0.0
    %4764 = vmatmul.mubr.f32.gmra.mrb[0].mxu0 %v4557
    %v4765 = vpop.f32.mrb[0].mxu0
    %v4766 = vadd.f32 %v3273, %v4765
    %v4767 = vpop.f32.mrb[0].mxu0
    %4768 = vdwg.mxu0
    %v4770 = vsel %vm2823, %v4309, 0
    %4772 = vmatprep.subr.mxu0 0.0
    %4773 = vmatpush1.msra.mxu0 %v3345
    %4774 = vmatprep.subr.mxu0 0.0
    %4775 = vmatpush1.msra.mxu0 %v3346
    %4776 = vmatprep.subr.mxu0 0.0
    %4777 = vmatpush1.msra.mxu0 %v3347
    %4778 = vmatprep.subr.mxu0 0.0
    %4779 = vmatpush1.msra.mxu0 %v3348
    %4780 = vmatprep.subr.mxu0 0.0
    %4781 = vmatpush1.msra.mxu0 %v3349
    %4782 = vmatprep.subr.mxu0 0.0
    %4783 = vmatpush1.msra.mxu0 %v3350
    %4784 = vmatprep.subr.mxu0 0.0
    %4785 = vmatpush1.msra.mxu0 %v3351
    %4786 = vmatprep.subr.mxu0 0.0
    %4787 = vmatpush1.msra.mxu0 %v3352
    %4788 = vmatprep.subr.mxu0 0.0
    %4789 = vmatpush1.msra.mxu0 0.0
    %4790 = vmatprep.subr.mxu0 0.0
    %4791 = vmatpush1.msra.mxu0 0.0
    %4792 = vmatprep.subr.mxu0 0.0
    %4793 = vmatpush1.msra.mxu0 0.0
    %4794 = vmatprep.subr.mxu0 0.0
    %4795 = vmatpush1.msra.mxu0 0.0
    %4796 = vmatprep.subr.mxu0 0.0
    %4797 = vmatpush1.msra.mxu0 0.0
    %4798 = vmatprep.subr.mxu0 0.0
    %4799 = vmatpush1.msra.mxu0 0.0
    %4800 = vmatprep.subr.mxu0 0.0
    %4801 = vmatpush1.msra.mxu0 0.0
    %4802 = vmatprep.subr.mxu0 0.0
    %4803 = vmatpush1.msra.mxu0 0.0
    %4804 = vmatprep.subr.mxu0 0.0
    %4805 = vmatpush1.msra.mxu0 0.0
    %4806 = vmatprep.subr.mxu0 0.0
    %4807 = vmatpush1.msra.mxu0 0.0
    %4808 = vmatprep.subr.mxu0 0.0
    %4809 = vmatpush1.msra.mxu0 0.0
    %4810 = vmatprep.subr.mxu0 0.0
    %4811 = vmatpush1.msra.mxu0 0.0
    %4812 = vmatprep.subr.mxu0 0.0
    %4813 = vmatpush1.msra.mxu0 0.0
    %4814 = vmatprep.subr.mxu0 0.0
    %4815 = vmatpush1.msra.mxu0 0.0
    %4816 = vmatprep.subr.mxu0 0.0
    %4817 = vmatpush1.msra.mxu0 0.0
    %4818 = vmatprep.subr.mxu0 0.0
    %4819 = vmatpush1.msra.mxu0 0.0
    %4820 = vmatprep.subr.mxu0 0.0
    %4821 = vmatpush1.msra.mxu0 0.0
    %4822 = vmatprep.subr.mxu0 0.0
    %4823 = vmatpush1.msra.mxu0 0.0
    %4824 = vmatprep.subr.mxu0 0.0
    %4825 = vmatpush1.msra.mxu0 0.0
    %4826 = vmatprep.subr.mxu0 0.0
    %4827 = vmatpush1.msra.mxu0 0.0
    %4828 = vmatprep.subr.mxu0 0.0
    %4829 = vmatpush1.msra.mxu0 0.0
    %4830 = vmatprep.subr.mxu0 0.0
    %4831 = vmatpush1.msra.mxu0 0.0
    %4832 = vmatprep.subr.mxu0 0.0
    %4833 = vmatpush1.msra.mxu0 0.0
    %4834 = vmatprep.subr.mxu0 0.0
    %4835 = vmatpush1.msra.mxu0 0.0
    %4836 = vmatprep.mubr.f32.mxu0 0.0
    %4837 = vmatmul.mubr.f32.gmra.mrb[0].mxu0 %v4770
    %v4838 = vpop.f32.mrb[0].mxu0
    %v4839 = vadd.f32 %v3357, %v4838
    %v4840 = vpop.f32.mrb[0].mxu0
    %4841 = vdwg.mxu0
    %4842 = vmatprep.subr.mxu0 0.0
    %4843 = vmatpush1.msra.mxu0 %v3430
    %4844 = vmatprep.subr.mxu0 0.0
    %4845 = vmatpush1.msra.mxu0 %v3431
    %4846 = vmatprep.subr.mxu0 0.0
    %4847 = vmatpush1.msra.mxu0 %v3432
    %4848 = vmatprep.subr.mxu0 0.0
    %4849 = vmatpush1.msra.mxu0 %v3433
    %4850 = vmatprep.subr.mxu0 0.0
    %4851 = vmatpush1.msra.mxu0 %v3434
    %4852 = vmatprep.subr.mxu0 0.0
    %4853 = vmatpush1.msra.mxu0 %v3435
    %4854 = vmatprep.subr.mxu0 0.0
    %4855 = vmatpush1.msra.mxu0 %v3436
    %4856 = vmatprep.subr.mxu0 0.0
    %4857 = vmatpush1.msra.mxu0 %v3437
    %4858 = vmatprep.subr.mxu0 0.0
    %4859 = vmatpush1.msra.mxu0 0.0
    %4860 = vmatprep.subr.mxu0 0.0
    %4861 = vmatpush1.msra.mxu0 0.0
    %4862 = vmatprep.subr.mxu0 0.0
    %4863 = vmatpush1.msra.mxu0 0.0
    %4864 = vmatprep.subr.mxu0 0.0
    %4865 = vmatpush1.msra.mxu0 0.0
    %4866 = vmatprep.subr.mxu0 0.0
    %4867 = vmatpush1.msra.mxu0 0.0
    %4868 = vmatprep.subr.mxu0 0.0
    %4869 = vmatpush1.msra.mxu0 0.0
    %4870 = vmatprep.subr.mxu0 0.0
    %4871 = vmatpush1.msra.mxu0 0.0
    %4872 = vmatprep.subr.mxu0 0.0
    %4873 = vmatpush1.msra.mxu0 0.0
    %4874 = vmatprep.subr.mxu0 0.0
    %4875 = vmatpush1.msra.mxu0 0.0
    %4876 = vmatprep.subr.mxu0 0.0
    %4877 = vmatpush1.msra.mxu0 0.0
    %4878 = vmatprep.subr.mxu0 0.0
    %4879 = vmatpush1.msra.mxu0 0.0
    %4880 = vmatprep.subr.mxu0 0.0
    %4881 = vmatpush1.msra.mxu0 0.0
    %4882 = vmatprep.subr.mxu0 0.0
    %4883 = vmatpush1.msra.mxu0 0.0
    %4884 = vmatprep.subr.mxu0 0.0
    %4885 = vmatpush1.msra.mxu0 0.0
    %4886 = vmatprep.subr.mxu0 0.0
    %4887 = vmatpush1.msra.mxu0 0.0
    %4888 = vmatprep.subr.mxu0 0.0
    %4889 = vmatpush1.msra.mxu0 0.0
    %4890 = vmatprep.subr.mxu0 0.0
    %4891 = vmatpush1.msra.mxu0 0.0
    %4892 = vmatprep.subr.mxu0 0.0
    %4893 = vmatpush1.msra.mxu0 0.0
    %4894 = vmatprep.subr.mxu0 0.0
    %4895 = vmatpush1.msra.mxu0 0.0
    %4896 = vmatprep.subr.mxu0 0.0
    %4897 = vmatpush1.msra.mxu0 0.0
    %4898 = vmatprep.subr.mxu0 0.0
    %4899 = vmatpush1.msra.mxu0 0.0
    %4900 = vmatprep.subr.mxu0 0.0
    %4901 = vmatpush1.msra.mxu0 0.0
    %4902 = vmatprep.subr.mxu0 0.0
    %4903 = vmatpush1.msra.mxu0 0.0
    %4904 = vmatprep.subr.mxu0 0.0
    %4905 = vmatpush1.msra.mxu0 0.0
    %4906 = vmatprep.mubr.f32.mxu0 0.0
    %4907 = vmatmul.mubr.f32.gmra.mrb[0].mxu0 %v4770
    %v4908 = vpop.f32.mrb[0].mxu0
    %v4909 = vadd.f32 %v3442, %v4908
    %v4910 = vpop.f32.mrb[0].mxu0
    %4911 = vdwg.mxu0
    %4912 = vmatprep.subr.mxu0 0.0
    %4913 = vmatpush1.msra.mxu0 %v3515
    %4914 = vmatprep.subr.mxu0 0.0
    %4915 = vmatpush1.msra.mxu0 %v3516
    %4916 = vmatprep.subr.mxu0 0.0
    %4917 = vmatpush1.msra.mxu0 %v3517
    %4918 = vmatprep.subr.mxu0 0.0
    %4919 = vmatpush1.msra.mxu0 %v3518
    %4920 = vmatprep.subr.mxu0 0.0
    %4921 = vmatpush1.msra.mxu0 %v3519
    %4922 = vmatprep.subr.mxu0 0.0
    %4923 = vmatpush1.msra.mxu0 %v3520
    %4924 = vmatprep.subr.mxu0 0.0
    %4925 = vmatpush1.msra.mxu0 %v3521
    %4926 = vmatprep.subr.mxu0 0.0
    %4927 = vmatpush1.msra.mxu0 %v3522
    %4928 = vmatprep.subr.mxu0 0.0
    %4929 = vmatpush1.msra.mxu0 0.0
    %4930 = vmatprep.subr.mxu0 0.0
    %4931 = vmatpush1.msra.mxu0 0.0
    %4932 = vmatprep.subr.mxu0 0.0
    %4933 = vmatpush1.msra.mxu0 0.0
    %4934 = vmatprep.subr.mxu0 0.0
    %4935 = vmatpush1.msra.mxu0 0.0
    %4936 = vmatprep.subr.mxu0 0.0
    %4937 = vmatpush1.msra.mxu0 0.0
    %4938 = vmatprep.subr.mxu0 0.0
    %4939 = vmatpush1.msra.mxu0 0.0
    %4940 = vmatprep.subr.mxu0 0.0
    %4941 = vmatpush1.msra.mxu0 0.0
    %4942 = vmatprep.subr.mxu0 0.0
    %4943 = vmatpush1.msra.mxu0 0.0
    %4944 = vmatprep.subr.mxu0 0.0
    %4945 = vmatpush1.msra.mxu0 0.0
    %4946 = vmatprep.subr.mxu0 0.0
    %4947 = vmatpush1.msra.mxu0 0.0
    %4948 = vmatprep.subr.mxu0 0.0
    %4949 = vmatpush1.msra.mxu0 0.0
    %4950 = vmatprep.subr.mxu0 0.0
    %4951 = vmatpush1.msra.mxu0 0.0
    %4952 = vmatprep.subr.mxu0 0.0
    %4953 = vmatpush1.msra.mxu0 0.0
    %4954 = vmatprep.subr.mxu0 0.0
    %4955 = vmatpush1.msra.mxu0 0.0
    %4956 = vmatprep.subr.mxu0 0.0
    %4957 = vmatpush1.msra.mxu0 0.0
    %4958 = vmatprep.subr.mxu0 0.0
    %4959 = vmatpush1.msra.mxu0 0.0
    %4960 = vmatprep.subr.mxu0 0.0
    %4961 = vmatpush1.msra.mxu0 0.0
    %4962 = vmatprep.subr.mxu0 0.0
    %4963 = vmatpush1.msra.mxu0 0.0
    %4964 = vmatprep.subr.mxu0 0.0
    %4965 = vmatpush1.msra.mxu0 0.0
    %4966 = vmatprep.subr.mxu0 0.0
    %4967 = vmatpush1.msra.mxu0 0.0
    %4968 = vmatprep.subr.mxu0 0.0
    %4969 = vmatpush1.msra.mxu0 0.0
    %4970 = vmatprep.subr.mxu0 0.0
    %4971 = vmatpush1.msra.mxu0 0.0
    %4972 = vmatprep.subr.mxu0 0.0
    %4973 = vmatpush1.msra.mxu0 0.0
    %4974 = vmatprep.subr.mxu0 0.0
    %4975 = vmatpush1.msra.mxu0 0.0
    %4976 = vmatprep.mubr.f32.mxu0 0.0
    %4977 = vmatmul.mubr.f32.gmra.mrb[0].mxu0 %v4770
    %v4978 = vpop.f32.mrb[0].mxu0
    %v4979 = vadd.f32 %v3527, %v4978
    %v4980 = vpop.f32.mrb[0].mxu0
    %4981 = vdwg.mxu0
    %v4982 = vadd.f32 %v4626, %v4839
    %v4983 = vxor.u32 %v4982, 2147483648
    %v4984 = vmul.f32 %v4983, 1.442695
    %v4985 = vpow.pop %v4984
    %v4986 = vadd.f32 %v4985, 1.0
    %v4987 = vrcp.pop %v4986
    %v4988 = vmul.f32 1.0, %v4987
    %v4989 = vadd.f32 %v4696, %v4909
    %v4990 = vxor.u32 %v4989, 2147483648
    %v4991 = vmul.f32 %v4990, 1.442695
    %v4992 = vpow.pop %v4991
    %v4993 = vadd.f32 %v4992, 1.0
    %v4994 = vrcp.pop %v4993
    %v4995 = vmul.f32 1.0, %v4994
    %v4996 = vmul.f32 %v4988, %v4979
    %v4997 = vadd.f32 %v4766, %v4996
    %v4998 = vtanh.pop %v4997
    %v4999 = vsub.f32 1.0, %v4995
    %v5000 = vmul.f32 %v4999, %v4998
    %v5001 = vmul.f32 %v4995, %v4309
    %v5002 = vadd.f32 %v5000, %v5001
    %v5003 = vrot.slane %v1859, 3
    %v5005 = vrot.slane %v2630, 2
    %v5007 = vsel %vm2799, %v5003, %v5005
    %v5008 = vrot.slane %v1936, 3
    %v5010 = vrot.slane %v2704, 2
    %v5012 = vsel %vm2799, %v5008, %v5010
    %v5013 = vrot.slane %v2013, 3
    %v5015 = vrot.slane %v2778, 2
    %v5017 = vsel %vm2799, %v5013, %v5015
    %5018 = vmatprep.subr.mxu0 0.0
    %5019 = vmatpush1.msra.mxu0 %v2809
    %5020 = vmatprep.subr.mxu0 0.0
    %5021 = vmatpush1.msra.mxu0 %v2810
    %5022 = vmatprep.subr.mxu0 0.0
    %5023 = vmatpush1.msra.mxu0 %v2811
    %5024 = vmatprep.subr.mxu0 0.0
    %5025 = vmatpush1.msra.mxu0 %v2812
    %5026 = vmatprep.subr.mxu0 0.0
    %5027 = vmatpush1.msra.mxu0 %v2813
    %5028 = vmatprep.subr.mxu0 0.0
    %5029 = vmatpush1.msra.mxu0 %v2814
    %5030 = vmatprep.subr.mxu0 0.0
    %5031 = vmatpush1.msra.mxu0 %v2815
    %5032 = vmatprep.subr.mxu0 0.0
    %5033 = vmatpush1.msra.mxu0 %v2816
    %5034 = vmatprep.subr.mxu0 0.0
    %5035 = vmatpush1.msra.mxu0 0.0
    %5036 = vmatprep.subr.mxu0 0.0
    %5037 = vmatpush1.msra.mxu0 0.0
    %5038 = vmatprep.subr.mxu0 0.0
    %5039 = vmatpush1.msra.mxu0 0.0
    %5040 = vmatprep.subr.mxu0 0.0
    %5041 = vmatpush1.msra.mxu0 0.0
    %5042 = vmatprep.subr.mxu0 0.0
    %5043 = vmatpush1.msra.mxu0 0.0
    %5044 = vmatprep.subr.mxu0 0.0
    %5045 = vmatpush1.msra.mxu0 0.0
    %5046 = vmatprep.subr.mxu0 0.0
    %5047 = vmatpush1.msra.mxu0 0.0
    %5048 = vmatprep.subr.mxu0 0.0
    %5049 = vmatpush1.msra.mxu0 0.0
    %5050 = vmatprep.subr.mxu0 0.0
    %5051 = vmatpush1.msra.mxu0 0.0
    %5052 = vmatprep.subr.mxu0 0.0
    %5053 = vmatpush1.msra.mxu0 0.0
    %5054 = vmatprep.subr.mxu0 0.0
    %5055 = vmatpush1.msra.mxu0 0.0
    %5056 = vmatprep.subr.mxu0 0.0
    %5057 = vmatpush1.msra.mxu0 0.0
    %5058 = vmatprep.subr.mxu0 0.0
    %5059 = vmatpush1.msra.mxu0 0.0
    %5060 = vmatprep.subr.mxu0 0.0
    %5061 = vmatpush1.msra.mxu0 0.0
    %5062 = vmatprep.subr.mxu0 0.0
    %5063 = vmatpush1.msra.mxu0 0.0
    %5064 = vmatprep.subr.mxu0 0.0
    %5065 = vmatpush1.msra.mxu0 0.0
    %5066 = vmatprep.subr.mxu0 0.0
    %5067 = vmatpush1.msra.mxu0 0.0
    %5068 = vmatprep.subr.mxu0 0.0
    %5069 = vmatpush1.msra.mxu0 0.0
    %5070 = vmatprep.subr.mxu0 0.0
    %5071 = vmatpush1.msra.mxu0 0.0
    %5072 = vmatprep.subr.mxu0 0.0
    %5073 = vmatpush1.msra.mxu0 0.0
    %5074 = vmatprep.subr.mxu0 0.0
    %5075 = vmatpush1.msra.mxu0 0.0
    %5076 = vmatprep.subr.mxu0 0.0
    %5077 = vmatpush1.msra.mxu0 0.0
    %5078 = vmatprep.subr.mxu0 0.0
    %5079 = vmatpush1.msra.mxu0 0.0
    %5080 = vmatprep.subr.mxu0 0.0
    %5081 = vmatpush1.msra.mxu0 0.0
    %5082 = vmatprep.mubr.f32.mxu0 0.0
    %5083 = vmatmul.mubr.f32.gmra.mrb[0].mxu0 %v4557
    %v5084 = vpop.f32.mrb[0].mxu0
    %v5085 = vadd.f32 %v2821, %v5084
    %v5086 = vpop.f32.mrb[0].mxu0
    %5087 = vdwg.mxu0
    %5088 = vmatprep.subr.mxu0 0.0
    %5089 = vmatpush1.msra.mxu0 %v2898
    %5090 = vmatprep.subr.mxu0 0.0
    %5091 = vmatpush1.msra.mxu0 %v2899
    %5092 = vmatprep.subr.mxu0 0.0
    %5093 = vmatpush1.msra.mxu0 %v2900
    %5094 = vmatprep.subr.mxu0 0.0
    %5095 = vmatpush1.msra.mxu0 %v2901
    %5096 = vmatprep.subr.mxu0 0.0
    %5097 = vmatpush1.msra.mxu0 %v2902
    %5098 = vmatprep.subr.mxu0 0.0
    %5099 = vmatpush1.msra.mxu0 %v2903
    %5100 = vmatprep.subr.mxu0 0.0
    %5101 = vmatpush1.msra.mxu0 %v2904
    %5102 = vmatprep.subr.mxu0 0.0
    %5103 = vmatpush1.msra.mxu0 %v2905
    %5104 = vmatprep.subr.mxu0 0.0
    %5105 = vmatpush1.msra.mxu0 0.0
    %5106 = vmatprep.subr.mxu0 0.0
    %5107 = vmatpush1.msra.mxu0 0.0
    %5108 = vmatprep.subr.mxu0 0.0
    %5109 = vmatpush1.msra.mxu0 0.0
    %5110 = vmatprep.subr.mxu0 0.0
    %5111 = vmatpush1.msra.mxu0 0.0
    %5112 = vmatprep.subr.mxu0 0.0
    %5113 = vmatpush1.msra.mxu0 0.0
    %5114 = vmatprep.subr.mxu0 0.0
    %5115 = vmatpush1.msra.mxu0 0.0
    %5116 = vmatprep.subr.mxu0 0.0
    %5117 = vmatpush1.msra.mxu0 0.0
    %5118 = vmatprep.subr.mxu0 0.0
    %5119 = vmatpush1.msra.mxu0 0.0
    %5120 = vmatprep.subr.mxu0 0.0
    %5121 = vmatpush1.msra.mxu0 0.0
    %5122 = vmatprep.subr.mxu0 0.0
    %5123 = vmatpush1.msra.mxu0 0.0
    %5124 = vmatprep.subr.mxu0 0.0
    %5125 = vmatpush1.msra.mxu0 0.0
    %5126 = vmatprep.subr.mxu0 0.0
    %5127 = vmatpush1.msra.mxu0 0.0
    %5128 = vmatprep.subr.mxu0 0.0
    %5129 = vmatpush1.msra.mxu0 0.0
    %5130 = vmatprep.subr.mxu0 0.0
    %5131 = vmatpush1.msra.mxu0 0.0
    %5132 = vmatprep.subr.mxu0 0.0
    %5133 = vmatpush1.msra.mxu0 0.0
    %5134 = vmatprep.subr.mxu0 0.0
    %5135 = vmatpush1.msra.mxu0 0.0
    %5136 = vmatprep.subr.mxu0 0.0
    %5137 = vmatpush1.msra.mxu0 0.0
    %5138 = vmatprep.subr.mxu0 0.0
    %5139 = vmatpush1.msra.mxu0 0.0
    %5140 = vmatprep.subr.mxu0 0.0
    %5141 = vmatpush1.msra.mxu0 0.0
    %5142 = vmatprep.subr.mxu0 0.0
    %5143 = vmatpush1.msra.mxu0 0.0
    %5144 = vmatprep.subr.mxu0 0.0
    %5145 = vmatpush1.msra.mxu0 0.0
    %5146 = vmatprep.subr.mxu0 0.0
    %5147 = vmatpush1.msra.mxu0 0.0
    %5148 = vmatprep.subr.mxu0 0.0
    %5149 = vmatpush1.msra.mxu0 0.0
    %5150 = vmatprep.subr.mxu0 0.0
    %5151 = vmatpush1.msra.mxu0 0.0
    %5152 = vmatprep.mubr.f32.mxu0 0.0
    %5153 = vmatmul.mubr.f32.gmra.mrb[0].mxu0 %v4557
    %v5154 = vpop.f32.mrb[0].mxu0
    %v5155 = vadd.f32 %v2910, %v5154
    %v5156 = vpop.f32.mrb[0].mxu0
    %5157 = vdwg.mxu0
    %5158 = vmatprep.subr.mxu0 0.0
    %5159 = vmatpush1.msra.mxu0 %v2983
    %5160 = vmatprep.subr.mxu0 0.0
    %5161 = vmatpush1.msra.mxu0 %v2984
    %5162 = vmatprep.subr.mxu0 0.0
    %5163 = vmatpush1.msra.mxu0 %v2985
    %5164 = vmatprep.subr.mxu0 0.0
    %5165 = vmatpush1.msra.mxu0 %v2986
    %5166 = vmatprep.subr.mxu0 0.0
    %5167 = vmatpush1.msra.mxu0 %v2987
    %5168 = vmatprep.subr.mxu0 0.0
    %5169 = vmatpush1.msra.mxu0 %v2988
    %5170 = vmatprep.subr.mxu0 0.0
    %5171 = vmatpush1.msra.mxu0 %v2989
    %5172 = vmatprep.subr.mxu0 0.0
    %5173 = vmatpush1.msra.mxu0 %v2990
    %5174 = vmatprep.subr.mxu0 0.0
    %5175 = vmatpush1.msra.mxu0 0.0
    %5176 = vmatprep.subr.mxu0 0.0
    %5177 = vmatpush1.msra.mxu0 0.0
    %5178 = vmatprep.subr.mxu0 0.0
    %5179 = vmatpush1.msra.mxu0 0.0
    %5180 = vmatprep.subr.mxu0 0.0
    %5181 = vmatpush1.msra.mxu0 0.0
    %5182 = vmatprep.subr.mxu0 0.0
    %5183 = vmatpush1.msra.mxu0 0.0
    %5184 = vmatprep.subr.mxu0 0.0
    %5185 = vmatpush1.msra.mxu0 0.0
    %5186 = vmatprep.subr.mxu0 0.0
    %5187 = vmatpush1.msra.mxu0 0.0
    %5188 = vmatprep.subr.mxu0 0.0
    %5189 = vmatpush1.msra.mxu0 0.0
    %5190 = vmatprep.subr.mxu0 0.0
    %5191 = vmatpush1.msra.mxu0 0.0
    %5192 = vmatprep.subr.mxu0 0.0
    %5193 = vmatpush1.msra.mxu0 0.0
    %5194 = vmatprep.subr.mxu0 0.0
    %5195 = vmatpush1.msra.mxu0 0.0
    %5196 = vmatprep.subr.mxu0 0.0
    %5197 = vmatpush1.msra.mxu0 0.0
    %5198 = vmatprep.subr.mxu0 0.0
    %5199 = vmatpush1.msra.mxu0 0.0
    %5200 = vmatprep.subr.mxu0 0.0
    %5201 = vmatpush1.msra.mxu0 0.0
    %5202 = vmatprep.subr.mxu0 0.0
    %5203 = vmatpush1.msra.mxu0 0.0
    %5204 = vmatprep.subr.mxu0 0.0
    %5205 = vmatpush1.msra.mxu0 0.0
    %5206 = vmatprep.subr.mxu0 0.0
    %5207 = vmatpush1.msra.mxu0 0.0
    %5208 = vmatprep.subr.mxu0 0.0
    %5209 = vmatpush1.msra.mxu0 0.0
    %5210 = vmatprep.subr.mxu0 0.0
    %5211 = vmatpush1.msra.mxu0 0.0
    %5212 = vmatprep.subr.mxu0 0.0
    %5213 = vmatpush1.msra.mxu0 0.0
    %5214 = vmatprep.subr.mxu0 0.0
    %5215 = vmatpush1.msra.mxu0 0.0
    %5216 = vmatprep.subr.mxu0 0.0
    %5217 = vmatpush1.msra.mxu0 0.0
    %5218 = vmatprep.subr.mxu0 0.0
    %5219 = vmatpush1.msra.mxu0 0.0
    %5220 = vmatprep.subr.mxu0 0.0
    %5221 = vmatpush1.msra.mxu0 0.0
    %5222 = vmatprep.mubr.f32.mxu0 0.0
    %5223 = vmatmul.mubr.f32.gmra.mrb[0].mxu0 %v4557
    %v5224 = vpop.f32.mrb[0].mxu0
    %v5225 = vadd.f32 %v2995, %v5224
    %v5226 = vpop.f32.mrb[0].mxu0
    %5227 = vdwg.mxu0
    %v5228 = vadd.f32 %v5007, %v5085
    %v5229 = vxor.u32 %v5228, 2147483648
    %v5230 = vmul.f32 %v5229, 1.442695
    %v5231 = vpow.pop %v5230
    %v5232 = vadd.f32 %v5231, 1.0
    %v5233 = vrcp.pop %v5232
    %v5234 = vmul.f32 1.0, %v5233
    %v5235 = vadd.f32 %v5012, %v5155
    %v5236 = vxor.u32 %v5235, 2147483648
    %v5237 = vmul.f32 %v5236, 1.442695
    %v5238 = vpow.pop %v5237
    %v5239 = vadd.f32 %v5238, 1.0
    %v5240 = vrcp.pop %v5239
    %v5241 = vmul.f32 1.0, %v5240
    %v5242 = vmul.f32 %v5234, %v5225
    %v5243 = vadd.f32 %v5017, %v5242
    %v5244 = vtanh.pop %v5243
    %v5245 = vsub.f32 1.0, %v5241
    %v5246 = vmul.f32 %v5245, %v5244
    %v5247 = vmul.f32 %v5241, %v4555
    %v5248 = vadd.f32 %v5246, %v5247
    %v5250 = vsel %vm2823, %v5248, 0
    %5252 = vmatprep.subr.mxu0 0.0
    %5253 = vmatpush1.msra.mxu0 %v3088
    %5254 = vmatprep.subr.mxu0 0.0
    %5255 = vmatpush1.msra.mxu0 %v3089
    %5256 = vmatprep.subr.mxu0 0.0
    %5257 = vmatpush1.msra.mxu0 %v3090
    %5258 = vmatprep.subr.mxu0 0.0
    %5259 = vmatpush1.msra.mxu0 %v3091
    %5260 = vmatprep.subr.mxu0 0.0
    %5261 = vmatpush1.msra.mxu0 %v3092
    %5262 = vmatprep.subr.mxu0 0.0
    %5263 = vmatpush1.msra.mxu0 %v3093
    %5264 = vmatprep.subr.mxu0 0.0
    %5265 = vmatpush1.msra.mxu0 %v3094
    %5266 = vmatprep.subr.mxu0 0.0
    %5267 = vmatpush1.msra.mxu0 %v3095
    %5268 = vmatprep.subr.mxu0 0.0
    %5269 = vmatpush1.msra.mxu0 0.0
    %5270 = vmatprep.subr.mxu0 0.0
    %5271 = vmatpush1.msra.mxu0 0.0
    %5272 = vmatprep.subr.mxu0 0.0
    %5273 = vmatpush1.msra.mxu0 0.0
    %5274 = vmatprep.subr.mxu0 0.0
    %5275 = vmatpush1.msra.mxu0 0.0
    %5276 = vmatprep.subr.mxu0 0.0
    %5277 = vmatpush1.msra.mxu0 0.0
    %5278 = vmatprep.subr.mxu0 0.0
    %5279 = vmatpush1.msra.mxu0 0.0
    %5280 = vmatprep.subr.mxu0 0.0
    %5281 = vmatpush1.msra.mxu0 0.0
    %5282 = vmatprep.subr.mxu0 0.0
    %5283 = vmatpush1.msra.mxu0 0.0
    %5284 = vmatprep.subr.mxu0 0.0
    %5285 = vmatpush1.msra.mxu0 0.0
    %5286 = vmatprep.subr.mxu0 0.0
    %5287 = vmatpush1.msra.mxu0 0.0
    %5288 = vmatprep.subr.mxu0 0.0
    %5289 = vmatpush1.msra.mxu0 0.0
    %5290 = vmatprep.subr.mxu0 0.0
    %5291 = vmatpush1.msra.mxu0 0.0
    %5292 = vmatprep.subr.mxu0 0.0
    %5293 = vmatpush1.msra.mxu0 0.0
    %5294 = vmatprep.subr.mxu0 0.0
    %5295 = vmatpush1.msra.mxu0 0.0
    %5296 = vmatprep.subr.mxu0 0.0
    %5297 = vmatpush1.msra.mxu0 0.0
    %5298 = vmatprep.subr.mxu0 0.0
    %5299 = vmatpush1.msra.mxu0 0.0
    %5300 = vmatprep.subr.mxu0 0.0
    %5301 = vmatpush1.msra.mxu0 0.0
    %5302 = vmatprep.subr.mxu0 0.0
    %5303 = vmatpush1.msra.mxu0 0.0
    %5304 = vmatprep.subr.mxu0 0.0
    %5305 = vmatpush1.msra.mxu0 0.0
    %5306 = vmatprep.subr.mxu0 0.0
    %5307 = vmatpush1.msra.mxu0 0.0
    %5308 = vmatprep.subr.mxu0 0.0
    %5309 = vmatpush1.msra.mxu0 0.0
    %5310 = vmatprep.subr.mxu0 0.0
    %5311 = vmatpush1.msra.mxu0 0.0
    %5312 = vmatprep.subr.mxu0 0.0
    %5313 = vmatpush1.msra.mxu0 0.0
    %5314 = vmatprep.subr.mxu0 0.0
    %5315 = vmatpush1.msra.mxu0 0.0
    %5316 = vmatprep.mubr.f32.mxu0 0.0
    %5317 = vmatmul.mubr.f32.gmra.mrb[0].mxu0 %v5250
    %v5318 = vpop.f32.mrb[0].mxu0
    %v5319 = vadd.f32 %v3100, %v5318
    %v5320 = vpop.f32.mrb[0].mxu0
    %5321 = vdwg.mxu0
    %5322 = vmatprep.subr.mxu0 0.0
    %5323 = vmatpush1.msra.mxu0 %v3176
    %5324 = vmatprep.subr.mxu0 0.0
    %5325 = vmatpush1.msra.mxu0 %v3177
    %5326 = vmatprep.subr.mxu0 0.0
    %5327 = vmatpush1.msra.mxu0 %v3178
    %5328 = vmatprep.subr.mxu0 0.0
    %5329 = vmatpush1.msra.mxu0 %v3179
    %5330 = vmatprep.subr.mxu0 0.0
    %5331 = vmatpush1.msra.mxu0 %v3180
    %5332 = vmatprep.subr.mxu0 0.0
    %5333 = vmatpush1.msra.mxu0 %v3181
    %5334 = vmatprep.subr.mxu0 0.0
    %5335 = vmatpush1.msra.mxu0 %v3182
    %5336 = vmatprep.subr.mxu0 0.0
    %5337 = vmatpush1.msra.mxu0 %v3183
    %5338 = vmatprep.subr.mxu0 0.0
    %5339 = vmatpush1.msra.mxu0 0.0
    %5340 = vmatprep.subr.mxu0 0.0
    %5341 = vmatpush1.msra.mxu0 0.0
    %5342 = vmatprep.subr.mxu0 0.0
    %5343 = vmatpush1.msra.mxu0 0.0
    %5344 = vmatprep.subr.mxu0 0.0
    %5345 = vmatpush1.msra.mxu0 0.0
    %5346 = vmatprep.subr.mxu0 0.0
    %5347 = vmatpush1.msra.mxu0 0.0
    %5348 = vmatprep.subr.mxu0 0.0
    %5349 = vmatpush1.msra.mxu0 0.0
    %5350 = vmatprep.subr.mxu0 0.0
    %5351 = vmatpush1.msra.mxu0 0.0
    %5352 = vmatprep.subr.mxu0 0.0
    %5353 = vmatpush1.msra.mxu0 0.0
    %5354 = vmatprep.subr.mxu0 0.0
    %5355 = vmatpush1.msra.mxu0 0.0
    %5356 = vmatprep.subr.mxu0 0.0
    %5357 = vmatpush1.msra.mxu0 0.0
    %5358 = vmatprep.subr.mxu0 0.0
    %5359 = vmatpush1.msra.mxu0 0.0
    %5360 = vmatprep.subr.mxu0 0.0
    %5361 = vmatpush1.msra.mxu0 0.0
    %5362 = vmatprep.subr.mxu0 0.0
    %5363 = vmatpush1.msra.mxu0 0.0
    %5364 = vmatprep.subr.mxu0 0.0
    %5365 = vmatpush1.msra.mxu0 0.0
    %5366 = vmatprep.subr.mxu0 0.0
    %5367 = vmatpush1.msra.mxu0 0.0
    %5368 = vmatprep.subr.mxu0 0.0
    %5369 = vmatpush1.msra.mxu0 0.0
    %5370 = vmatprep.subr.mxu0 0.0
    %5371 = vmatpush1.msra.mxu0 0.0
    %5372 = vmatprep.subr.mxu0 0.0
    %5373 = vmatpush1.msra.mxu0 0.0
    %5374 = vmatprep.subr.mxu0 0.0
    %5375 = vmatpush1.msra.mxu0 0.0
    %5376 = vmatprep.subr.mxu0 0.0
    %5377 = vmatpush1.msra.mxu0 0.0
    %5378 = vmatprep.subr.mxu0 0.0
    %5379 = vmatpush1.msra.mxu0 0.0
    %5380 = vmatprep.subr.mxu0 0.0
    %5381 = vmatpush1.msra.mxu0 0.0
    %5382 = vmatprep.subr.mxu0 0.0
    %5383 = vmatpush1.msra.mxu0 0.0
    %5384 = vmatprep.subr.mxu0 0.0
    %5385 = vmatpush1.msra.mxu0 0.0
    %5386 = vmatprep.mubr.f32.mxu0 0.0
    %5387 = vmatmul.mubr.f32.gmra.mrb[0].mxu0 %v5250
    %v5388 = vpop.f32.mrb[0].mxu0
    %v5389 = vadd.f32 %v3188, %v5388
    %v5390 = vpop.f32.mrb[0].mxu0
    %5391 = vdwg.mxu0
    %5392 = vmatprep.subr.mxu0 0.0
    %5393 = vmatpush1.msra.mxu0 %v3261
    %5394 = vmatprep.subr.mxu0 0.0
    %5395 = vmatpush1.msra.mxu0 %v3262
    %5396 = vmatprep.subr.mxu0 0.0
    %5397 = vmatpush1.msra.mxu0 %v3263
    %5398 = vmatprep.subr.mxu0 0.0
    %5399 = vmatpush1.msra.mxu0 %v3264
    %5400 = vmatprep.subr.mxu0 0.0
    %5401 = vmatpush1.msra.mxu0 %v3265
    %5402 = vmatprep.subr.mxu0 0.0
    %5403 = vmatpush1.msra.mxu0 %v3266
    %5404 = vmatprep.subr.mxu0 0.0
    %5405 = vmatpush1.msra.mxu0 %v3267
    %5406 = vmatprep.subr.mxu0 0.0
    %5407 = vmatpush1.msra.mxu0 %v3268
    %5408 = vmatprep.subr.mxu0 0.0
    %5409 = vmatpush1.msra.mxu0 0.0
    %5410 = vmatprep.subr.mxu0 0.0
    %5411 = vmatpush1.msra.mxu0 0.0
    %5412 = vmatprep.subr.mxu0 0.0
    %5413 = vmatpush1.msra.mxu0 0.0
    %5414 = vmatprep.subr.mxu0 0.0
    %5415 = vmatpush1.msra.mxu0 0.0
    %5416 = vmatprep.subr.mxu0 0.0
    %5417 = vmatpush1.msra.mxu0 0.0
    %5418 = vmatprep.subr.mxu0 0.0
    %5419 = vmatpush1.msra.mxu0 0.0
    %5420 = vmatprep.subr.mxu0 0.0
    %5421 = vmatpush1.msra.mxu0 0.0
    %5422 = vmatprep.subr.mxu0 0.0
    %5423 = vmatpush1.msra.mxu0 0.0
    %5424 = vmatprep.subr.mxu0 0.0
    %5425 = vmatpush1.msra.mxu0 0.0
    %5426 = vmatprep.subr.mxu0 0.0
    %5427 = vmatpush1.msra.mxu0 0.0
    %5428 = vmatprep.subr.mxu0 0.0
    %5429 = vmatpush1.msra.mxu0 0.0
    %5430 = vmatprep.subr.mxu0 0.0
    %5431 = vmatpush1.msra.mxu0 0.0
    %5432 = vmatprep.subr.mxu0 0.0
    %5433 = vmatpush1.msra.mxu0 0.0
    %5434 = vmatprep.subr.mxu0 0.0
    %5435 = vmatpush1.msra.mxu0 0.0
    %5436 = vmatprep.subr.mxu0 0.0
    %5437 = vmatpush1.msra.mxu0 0.0
    %5438 = vmatprep.subr.mxu0 0.0
    %5439 = vmatpush1.msra.mxu0 0.0
    %5440 = vmatprep.subr.mxu0 0.0
    %5441 = vmatpush1.msra.mxu0 0.0
    %5442 = vmatprep.subr.mxu0 0.0
    %5443 = vmatpush1.msra.mxu0 0.0
    %5444 = vmatprep.subr.mxu0 0.0
    %5445 = vmatpush1.msra.mxu0 0.0
    %5446 = vmatprep.subr.mxu0 0.0
    %5447 = vmatpush1.msra.mxu0 0.0
    %5448 = vmatprep.subr.mxu0 0.0
    %5449 = vmatpush1.msra.mxu0 0.0
    %5450 = vmatprep.subr.mxu0 0.0
    %5451 = vmatpush1.msra.mxu0 0.0
    %5452 = vmatprep.subr.mxu0 0.0
    %5453 = vmatpush1.msra.mxu0 0.0
    %5454 = vmatprep.subr.mxu0 0.0
    %5455 = vmatpush1.msra.mxu0 0.0
    %5456 = vmatprep.mubr.f32.mxu0 0.0
    %5457 = vmatmul.mubr.f32.gmra.mrb[0].mxu0 %v5250
    %v5458 = vpop.f32.mrb[0].mxu0
    %v5459 = vadd.f32 %v3273, %v5458
    %v5460 = vpop.f32.mrb[0].mxu0
    %5461 = vdwg.mxu0
    %v5463 = vsel %vm2823, %v5002, 0
    %5465 = vmatprep.subr.mxu0 0.0
    %5466 = vmatpush1.msra.mxu0 %v3345
    %5467 = vmatprep.subr.mxu0 0.0
    %5468 = vmatpush1.msra.mxu0 %v3346
    %5469 = vmatprep.subr.mxu0 0.0
    %5470 = vmatpush1.msra.mxu0 %v3347
    %5471 = vmatprep.subr.mxu0 0.0
    %5472 = vmatpush1.msra.mxu0 %v3348
    %5473 = vmatprep.subr.mxu0 0.0
    %5474 = vmatpush1.msra.mxu0 %v3349
    %5475 = vmatprep.subr.mxu0 0.0
    %5476 = vmatpush1.msra.mxu0 %v3350
    %5477 = vmatprep.subr.mxu0 0.0
    %5478 = vmatpush1.msra.mxu0 %v3351
    %5479 = vmatprep.subr.mxu0 0.0
    %5480 = vmatpush1.msra.mxu0 %v3352
    %5481 = vmatprep.subr.mxu0 0.0
    %5482 = vmatpush1.msra.mxu0 0.0
    %5483 = vmatprep.subr.mxu0 0.0
    %5484 = vmatpush1.msra.mxu0 0.0
    %5485 = vmatprep.subr.mxu0 0.0
    %5486 = vmatpush1.msra.mxu0 0.0
    %5487 = vmatprep.subr.mxu0 0.0
    %5488 = vmatpush1.msra.mxu0 0.0
    %5489 = vmatprep.subr.mxu0 0.0
    %5490 = vmatpush1.msra.mxu0 0.0
    %5491 = vmatprep.subr.mxu0 0.0
    %5492 = vmatpush1.msra.mxu0 0.0
    %5493 = vmatprep.subr.mxu0 0.0
    %5494 = vmatpush1.msra.mxu0 0.0
    %5495 = vmatprep.subr.mxu0 0.0
    %5496 = vmatpush1.msra.mxu0 0.0
    %5497 = vmatprep.subr.mxu0 0.0
    %5498 = vmatpush1.msra.mxu0 0.0
    %5499 = vmatprep.subr.mxu0 0.0
    %5500 = vmatpush1.msra.mxu0 0.0
    %5501 = vmatprep.subr.mxu0 0.0
    %5502 = vmatpush1.msra.mxu0 0.0
    %5503 = vmatprep.subr.mxu0 0.0
    %5504 = vmatpush1.msra.mxu0 0.0
    %5505 = vmatprep.subr.mxu0 0.0
    %5506 = vmatpush1.msra.mxu0 0.0
    %5507 = vmatprep.subr.mxu0 0.0
    %5508 = vmatpush1.msra.mxu0 0.0
    %5509 = vmatprep.subr.mxu0 0.0
    %5510 = vmatpush1.msra.mxu0 0.0
    %5511 = vmatprep.subr.mxu0 0.0
    %5512 = vmatpush1.msra.mxu0 0.0
    %5513 = vmatprep.subr.mxu0 0.0
    %5514 = vmatpush1.msra.mxu0 0.0
    %5515 = vmatprep.subr.mxu0 0.0
    %5516 = vmatpush1.msra.mxu0 0.0
    %5517 = vmatprep.subr.mxu0 0.0
    %5518 = vmatpush1.msra.mxu0 0.0
    %5519 = vmatprep.subr.mxu0 0.0
    %5520 = vmatpush1.msra.mxu0 0.0
    %5521 = vmatprep.subr.mxu0 0.0
    %5522 = vmatpush1.msra.mxu0 0.0
    %5523 = vmatprep.subr.mxu0 0.0
    %5524 = vmatpush1.msra.mxu0 0.0
    %5525 = vmatprep.subr.mxu0 0.0
    %5526 = vmatpush1.msra.mxu0 0.0
    %5527 = vmatprep.subr.mxu0 0.0
    %5528 = vmatpush1.msra.mxu0 0.0
    %5529 = vmatprep.mubr.f32.mxu0 0.0
    %5530 = vmatmul.mubr.f32.gmra.mrb[0].mxu0 %v5463
    %v5531 = vpop.f32.mrb[0].mxu0
    %v5532 = vadd.f32 %v3357, %v5531
    %v5533 = vpop.f32.mrb[0].mxu0
    %5534 = vdwg.mxu0
    %5535 = vmatprep.subr.mxu0 0.0
    %5536 = vmatpush1.msra.mxu0 %v3430
    %5537 = vmatprep.subr.mxu0 0.0
    %5538 = vmatpush1.msra.mxu0 %v3431
    %5539 = vmatprep.subr.mxu0 0.0
    %5540 = vmatpush1.msra.mxu0 %v3432
    %5541 = vmatprep.subr.mxu0 0.0
    %5542 = vmatpush1.msra.mxu0 %v3433
    %5543 = vmatprep.subr.mxu0 0.0
    %5544 = vmatpush1.msra.mxu0 %v3434
    %5545 = vmatprep.subr.mxu0 0.0
    %5546 = vmatpush1.msra.mxu0 %v3435
    %5547 = vmatprep.subr.mxu0 0.0
    %5548 = vmatpush1.msra.mxu0 %v3436
    %5549 = vmatprep.subr.mxu0 0.0
    %5550 = vmatpush1.msra.mxu0 %v3437
    %5551 = vmatprep.subr.mxu0 0.0
    %5552 = vmatpush1.msra.mxu0 0.0
    %5553 = vmatprep.subr.mxu0 0.0
    %5554 = vmatpush1.msra.mxu0 0.0
    %5555 = vmatprep.subr.mxu0 0.0
    %5556 = vmatpush1.msra.mxu0 0.0
    %5557 = vmatprep.subr.mxu0 0.0
    %5558 = vmatpush1.msra.mxu0 0.0
    %5559 = vmatprep.subr.mxu0 0.0
    %5560 = vmatpush1.msra.mxu0 0.0
    %5561 = vmatprep.subr.mxu0 0.0
    %5562 = vmatpush1.msra.mxu0 0.0
    %5563 = vmatprep.subr.mxu0 0.0
    %5564 = vmatpush1.msra.mxu0 0.0
    %5565 = vmatprep.subr.mxu0 0.0
    %5566 = vmatpush1.msra.mxu0 0.0
    %5567 = vmatprep.subr.mxu0 0.0
    %5568 = vmatpush1.msra.mxu0 0.0
    %5569 = vmatprep.subr.mxu0 0.0
    %5570 = vmatpush1.msra.mxu0 0.0
    %5571 = vmatprep.subr.mxu0 0.0
    %5572 = vmatpush1.msra.mxu0 0.0
    %5573 = vmatprep.subr.mxu0 0.0
    %5574 = vmatpush1.msra.mxu0 0.0
    %5575 = vmatprep.subr.mxu0 0.0
    %5576 = vmatpush1.msra.mxu0 0.0
    %5577 = vmatprep.subr.mxu0 0.0
    %5578 = vmatpush1.msra.mxu0 0.0
    %5579 = vmatprep.subr.mxu0 0.0
    %5580 = vmatpush1.msra.mxu0 0.0
    %5581 = vmatprep.subr.mxu0 0.0
    %5582 = vmatpush1.msra.mxu0 0.0
    %5583 = vmatprep.subr.mxu0 0.0
    %5584 = vmatpush1.msra.mxu0 0.0
    %5585 = vmatprep.subr.mxu0 0.0
    %5586 = vmatpush1.msra.mxu0 0.0
    %5587 = vmatprep.subr.mxu0 0.0
    %5588 = vmatpush1.msra.mxu0 0.0
    %5589 = vmatprep.subr.mxu0 0.0
    %5590 = vmatpush1.msra.mxu0 0.0
    %5591 = vmatprep.subr.mxu0 0.0
    %5592 = vmatpush1.msra.mxu0 0.0
    %5593 = vmatprep.subr.mxu0 0.0
    %5594 = vmatpush1.msra.mxu0 0.0
    %5595 = vmatprep.subr.mxu0 0.0
    %5596 = vmatpush1.msra.mxu0 0.0
    %5597 = vmatprep.subr.mxu0 0.0
    %5598 = vmatpush1.msra.mxu0 0.0
    %5599 = vmatprep.mubr.f32.mxu0 0.0
    %5600 = vmatmul.mubr.f32.gmra.mrb[0].mxu0 %v5463
    %v5601 = vpop.f32.mrb[0].mxu0
    %v5602 = vadd.f32 %v3442, %v5601
    %v5603 = vpop.f32.mrb[0].mxu0
    %5604 = vdwg.mxu0
    %5605 = vmatprep.subr.mxu0 0.0
    %5606 = vmatpush1.msra.mxu0 %v3515
    %5607 = vmatprep.subr.mxu0 0.0
    %5608 = vmatpush1.msra.mxu0 %v3516
    %5609 = vmatprep.subr.mxu0 0.0
    %5610 = vmatpush1.msra.mxu0 %v3517
    %5611 = vmatprep.subr.mxu0 0.0
    %5612 = vmatpush1.msra.mxu0 %v3518
    %5613 = vmatprep.subr.mxu0 0.0
    %5614 = vmatpush1.msra.mxu0 %v3519
    %5615 = vmatprep.subr.mxu0 0.0
    %5616 = vmatpush1.msra.mxu0 %v3520
    %5617 = vmatprep.subr.mxu0 0.0
    %5618 = vmatpush1.msra.mxu0 %v3521
    %5619 = vmatprep.subr.mxu0 0.0
    %5620 = vmatpush1.msra.mxu0 %v3522
    %5621 = vmatprep.subr.mxu0 0.0
    %5622 = vmatpush1.msra.mxu0 0.0
    %5623 = vmatprep.subr.mxu0 0.0
    %5624 = vmatpush1.msra.mxu0 0.0
    %5625 = vmatprep.subr.mxu0 0.0
    %5626 = vmatpush1.msra.mxu0 0.0
    %5627 = vmatprep.subr.mxu0 0.0
    %5628 = vmatpush1.msra.mxu0 0.0
    %5629 = vmatprep.subr.mxu0 0.0
    %5630 = vmatpush1.msra.mxu0 0.0
    %5631 = vmatprep.subr.mxu0 0.0
    %5632 = vmatpush1.msra.mxu0 0.0
    %5633 = vmatprep.subr.mxu0 0.0
    %5634 = vmatpush1.msra.mxu0 0.0
    %5635 = vmatprep.subr.mxu0 0.0
    %5636 = vmatpush1.msra.mxu0 0.0
    %5637 = vmatprep.subr.mxu0 0.0
    %5638 = vmatpush1.msra.mxu0 0.0
    %5639 = vmatprep.subr.mxu0 0.0
    %5640 = vmatpush1.msra.mxu0 0.0
    %5641 = vmatprep.subr.mxu0 0.0
    %5642 = vmatpush1.msra.mxu0 0.0
    %5643 = vmatprep.subr.mxu0 0.0
    %5644 = vmatpush1.msra.mxu0 0.0
    %5645 = vmatprep.subr.mxu0 0.0
    %5646 = vmatpush1.msra.mxu0 0.0
    %5647 = vmatprep.subr.mxu0 0.0
    %5648 = vmatpush1.msra.mxu0 0.0
    %5649 = vmatprep.subr.mxu0 0.0
    %5650 = vmatpush1.msra.mxu0 0.0
    %5651 = vmatprep.subr.mxu0 0.0
    %5652 = vmatpush1.msra.mxu0 0.0
    %5653 = vmatprep.subr.mxu0 0.0
    %5654 = vmatpush1.msra.mxu0 0.0
    %5655 = vmatprep.subr.mxu0 0.0
    %5656 = vmatpush1.msra.mxu0 0.0
    %5657 = vmatprep.subr.mxu0 0.0
    %5658 = vmatpush1.msra.mxu0 0.0
    %5659 = vmatprep.subr.mxu0 0.0
    %5660 = vmatpush1.msra.mxu0 0.0
    %5661 = vmatprep.subr.mxu0 0.0
    %5662 = vmatpush1.msra.mxu0 0.0
    %5663 = vmatprep.subr.mxu0 0.0
    %5664 = vmatpush1.msra.mxu0 0.0
    %5665 = vmatprep.subr.mxu0 0.0
    %5666 = vmatpush1.msra.mxu0 0.0
    %5667 = vmatprep.subr.mxu0 0.0
    %5668 = vmatpush1.msra.mxu0 0.0
    %5669 = vmatprep.mubr.f32.mxu0 0.0
    %5670 = vmatmul.mubr.f32.gmra.mrb[0].mxu0 %v5463
    %v5671 = vpop.f32.mrb[0].mxu0
    %v5672 = vadd.f32 %v3527, %v5671
    %v5673 = vpop.f32.mrb[0].mxu0
    %5674 = vdwg.mxu0
    %v5675 = vadd.f32 %v5319, %v5532
    %v5676 = vxor.u32 %v5675, 2147483648
    %v5677 = vmul.f32 %v5676, 1.442695
    %v5678 = vpow.pop %v5677
    %v5679 = vadd.f32 %v5678, 1.0
    %v5680 = vrcp.pop %v5679
    %v5681 = vmul.f32 1.0, %v5680
    %v5682 = vadd.f32 %v5389, %v5602
    %v5683 = vxor.u32 %v5682, 2147483648
    %v5684 = vmul.f32 %v5683, 1.442695
    %v5685 = vpow.pop %v5684
    %v5686 = vadd.f32 %v5685, 1.0
    %v5687 = vrcp.pop %v5686
    %v5688 = vmul.f32 1.0, %v5687
    %v5689 = vmul.f32 %v5681, %v5672
    %v5690 = vadd.f32 %v5459, %v5689
    %v5691 = vtanh.pop %v5690
    %v5692 = vsub.f32 1.0, %v5688
    %v5693 = vmul.f32 %v5692, %v5691
    %v5694 = vmul.f32 %v5688, %v5002
    %v5695 = vadd.f32 %v5693, %v5694
    %v5696 = vrot.slane %v1859, 4
    %v5698 = vrot.slane %v2630, 3
    %v5700 = vsel %vm2799, %v5696, %v5698
    %v5701 = vrot.slane %v1936, 4
    %v5703 = vrot.slane %v2704, 3
    %v5705 = vsel %vm2799, %v5701, %v5703
    %v5706 = vrot.slane %v2013, 4
    %v5708 = vrot.slane %v2778, 3
    %v5710 = vsel %vm2799, %v5706, %v5708
    %5711 = vmatprep.subr.mxu0 0.0
    %5712 = vmatpush1.msra.mxu0 %v2809
    %5713 = vmatprep.subr.mxu0 0.0
    %5714 = vmatpush1.msra.mxu0 %v2810
    %5715 = vmatprep.subr.mxu0 0.0
    %5716 = vmatpush1.msra.mxu0 %v2811
    %5717 = vmatprep.subr.mxu0 0.0
    %5718 = vmatpush1.msra.mxu0 %v2812
    %5719 = vmatprep.subr.mxu0 0.0
    %5720 = vmatpush1.msra.mxu0 %v2813
    %5721 = vmatprep.subr.mxu0 0.0
    %5722 = vmatpush1.msra.mxu0 %v2814
    %5723 = vmatprep.subr.mxu0 0.0
    %5724 = vmatpush1.msra.mxu0 %v2815
    %5725 = vmatprep.subr.mxu0 0.0
    %5726 = vmatpush1.msra.mxu0 %v2816
    %5727 = vmatprep.subr.mxu0 0.0
    %5728 = vmatpush1.msra.mxu0 0.0
    %5729 = vmatprep.subr.mxu0 0.0
    %5730 = vmatpush1.msra.mxu0 0.0
    %5731 = vmatprep.subr.mxu0 0.0
    %5732 = vmatpush1.msra.mxu0 0.0
    %5733 = vmatprep.subr.mxu0 0.0
    %5734 = vmatpush1.msra.mxu0 0.0
    %5735 = vmatprep.subr.mxu0 0.0
    %5736 = vmatpush1.msra.mxu0 0.0
    %5737 = vmatprep.subr.mxu0 0.0
    %5738 = vmatpush1.msra.mxu0 0.0
    %5739 = vmatprep.subr.mxu0 0.0
    %5740 = vmatpush1.msra.mxu0 0.0
    %5741 = vmatprep.subr.mxu0 0.0
    %5742 = vmatpush1.msra.mxu0 0.0
    %5743 = vmatprep.subr.mxu0 0.0
    %5744 = vmatpush1.msra.mxu0 0.0
    %5745 = vmatprep.subr.mxu0 0.0
    %5746 = vmatpush1.msra.mxu0 0.0
    %5747 = vmatprep.subr.mxu0 0.0
    %5748 = vmatpush1.msra.mxu0 0.0
    %5749 = vmatprep.subr.mxu0 0.0
    %5750 = vmatpush1.msra.mxu0 0.0
    %5751 = vmatprep.subr.mxu0 0.0
    %5752 = vmatpush1.msra.mxu0 0.0
    %5753 = vmatprep.subr.mxu0 0.0
    %5754 = vmatpush1.msra.mxu0 0.0
    %5755 = vmatprep.subr.mxu0 0.0
    %5756 = vmatpush1.msra.mxu0 0.0
    %5757 = vmatprep.subr.mxu0 0.0
    %5758 = vmatpush1.msra.mxu0 0.0
    %5759 = vmatprep.subr.mxu0 0.0
    %5760 = vmatpush1.msra.mxu0 0.0
    %5761 = vmatprep.subr.mxu0 0.0
    %5762 = vmatpush1.msra.mxu0 0.0
    %5763 = vmatprep.subr.mxu0 0.0
    %5764 = vmatpush1.msra.mxu0 0.0
    %5765 = vmatprep.subr.mxu0 0.0
    %5766 = vmatpush1.msra.mxu0 0.0
    %5767 = vmatprep.subr.mxu0 0.0
    %5768 = vmatpush1.msra.mxu0 0.0
    %5769 = vmatprep.subr.mxu0 0.0
    %5770 = vmatpush1.msra.mxu0 0.0
    %5771 = vmatprep.subr.mxu0 0.0
    %5772 = vmatpush1.msra.mxu0 0.0
    %5773 = vmatprep.subr.mxu0 0.0
    %5774 = vmatpush1.msra.mxu0 0.0
    %5775 = vmatprep.mubr.f32.mxu0 0.0
    %5776 = vmatmul.mubr.f32.gmra.mrb[0].mxu0 %v5250
    %v5777 = vpop.f32.mrb[0].mxu0
    %v5778 = vadd.f32 %v2821, %v5777
    %v5779 = vpop.f32.mrb[0].mxu0
    %5780 = vdwg.mxu0
    %5781 = vmatprep.subr.mxu0 0.0
    %5782 = vmatpush1.msra.mxu0 %v2898
    %5783 = vmatprep.subr.mxu0 0.0
    %5784 = vmatpush1.msra.mxu0 %v2899
    %5785 = vmatprep.subr.mxu0 0.0
    %5786 = vmatpush1.msra.mxu0 %v2900
    %5787 = vmatprep.subr.mxu0 0.0
    %5788 = vmatpush1.msra.mxu0 %v2901
    %5789 = vmatprep.subr.mxu0 0.0
    %5790 = vmatpush1.msra.mxu0 %v2902
    %5791 = vmatprep.subr.mxu0 0.0
    %5792 = vmatpush1.msra.mxu0 %v2903
    %5793 = vmatprep.subr.mxu0 0.0
    %5794 = vmatpush1.msra.mxu0 %v2904
    %5795 = vmatprep.subr.mxu0 0.0
    %5796 = vmatpush1.msra.mxu0 %v2905
    %5797 = vmatprep.subr.mxu0 0.0
    %5798 = vmatpush1.msra.mxu0 0.0
    %5799 = vmatprep.subr.mxu0 0.0
    %5800 = vmatpush1.msra.mxu0 0.0
    %5801 = vmatprep.subr.mxu0 0.0
    %5802 = vmatpush1.msra.mxu0 0.0
    %5803 = vmatprep.subr.mxu0 0.0
    %5804 = vmatpush1.msra.mxu0 0.0
    %5805 = vmatprep.subr.mxu0 0.0
    %5806 = vmatpush1.msra.mxu0 0.0
    %5807 = vmatprep.subr.mxu0 0.0
    %5808 = vmatpush1.msra.mxu0 0.0
    %5809 = vmatprep.subr.mxu0 0.0
    %5810 = vmatpush1.msra.mxu0 0.0
    %5811 = vmatprep.subr.mxu0 0.0
    %5812 = vmatpush1.msra.mxu0 0.0
    %5813 = vmatprep.subr.mxu0 0.0
    %5814 = vmatpush1.msra.mxu0 0.0
    %5815 = vmatprep.subr.mxu0 0.0
    %5816 = vmatpush1.msra.mxu0 0.0
    %5817 = vmatprep.subr.mxu0 0.0
    %5818 = vmatpush1.msra.mxu0 0.0
    %5819 = vmatprep.subr.mxu0 0.0
    %5820 = vmatpush1.msra.mxu0 0.0
    %5821 = vmatprep.subr.mxu0 0.0
    %5822 = vmatpush1.msra.mxu0 0.0
    %5823 = vmatprep.subr.mxu0 0.0
    %5824 = vmatpush1.msra.mxu0 0.0
    %5825 = vmatprep.subr.mxu0 0.0
    %5826 = vmatpush1.msra.mxu0 0.0
    %5827 = vmatprep.subr.mxu0 0.0
    %5828 = vmatpush1.msra.mxu0 0.0
    %5829 = vmatprep.subr.mxu0 0.0
    %5830 = vmatpush1.msra.mxu0 0.0
    %5831 = vmatprep.subr.mxu0 0.0
    %5832 = vmatpush1.msra.mxu0 0.0
    %5833 = vmatprep.subr.mxu0 0.0
    %5834 = vmatpush1.msra.mxu0 0.0
    %5835 = vmatprep.subr.mxu0 0.0
    %5836 = vmatpush1.msra.mxu0 0.0
    %5837 = vmatprep.subr.mxu0 0.0
    %5838 = vmatpush1.msra.mxu0 0.0
    %5839 = vmatprep.subr.mxu0 0.0
    %5840 = vmatpush1.msra.mxu0 0.0
    %5841 = vmatprep.subr.mxu0 0.0
    %5842 = vmatpush1.msra.mxu0 0.0
    %5843 = vmatprep.subr.mxu0 0.0
    %5844 = vmatpush1.msra.mxu0 0.0
    %5845 = vmatprep.mubr.f32.mxu0 0.0
    %5846 = vmatmul.mubr.f32.gmra.mrb[0].mxu0 %v5250
    %v5847 = vpop.f32.mrb[0].mxu0
    %v5848 = vadd.f32 %v2910, %v5847
    %v5849 = vpop.f32.mrb[0].mxu0
    %5850 = vdwg.mxu0
    %5851 = vmatprep.subr.mxu0 0.0
    %5852 = vmatpush1.msra.mxu0 %v2983
    %5853 = vmatprep.subr.mxu0 0.0
    %5854 = vmatpush1.msra.mxu0 %v2984
    %5855 = vmatprep.subr.mxu0 0.0
    %5856 = vmatpush1.msra.mxu0 %v2985
    %5857 = vmatprep.subr.mxu0 0.0
    %5858 = vmatpush1.msra.mxu0 %v2986
    %5859 = vmatprep.subr.mxu0 0.0
    %5860 = vmatpush1.msra.mxu0 %v2987
    %5861 = vmatprep.subr.mxu0 0.0
    %5862 = vmatpush1.msra.mxu0 %v2988
    %5863 = vmatprep.subr.mxu0 0.0
    %5864 = vmatpush1.msra.mxu0 %v2989
    %5865 = vmatprep.subr.mxu0 0.0
    %5866 = vmatpush1.msra.mxu0 %v2990
    %5867 = vmatprep.subr.mxu0 0.0
    %5868 = vmatpush1.msra.mxu0 0.0
    %5869 = vmatprep.subr.mxu0 0.0
    %5870 = vmatpush1.msra.mxu0 0.0
    %5871 = vmatprep.subr.mxu0 0.0
    %5872 = vmatpush1.msra.mxu0 0.0
    %5873 = vmatprep.subr.mxu0 0.0
    %5874 = vmatpush1.msra.mxu0 0.0
    %5875 = vmatprep.subr.mxu0 0.0
    %5876 = vmatpush1.msra.mxu0 0.0
    %5877 = vmatprep.subr.mxu0 0.0
    %5878 = vmatpush1.msra.mxu0 0.0
    %5879 = vmatprep.subr.mxu0 0.0
    %5880 = vmatpush1.msra.mxu0 0.0
    %5881 = vmatprep.subr.mxu0 0.0
    %5882 = vmatpush1.msra.mxu0 0.0
    %5883 = vmatprep.subr.mxu0 0.0
    %5884 = vmatpush1.msra.mxu0 0.0
    %5885 = vmatprep.subr.mxu0 0.0
    %5886 = vmatpush1.msra.mxu0 0.0
    %5887 = vmatprep.subr.mxu0 0.0
    %5888 = vmatpush1.msra.mxu0 0.0
    %5889 = vmatprep.subr.mxu0 0.0
    %5890 = vmatpush1.msra.mxu0 0.0
    %5891 = vmatprep.subr.mxu0 0.0
    %5892 = vmatpush1.msra.mxu0 0.0
    %5893 = vmatprep.subr.mxu0 0.0
    %5894 = vmatpush1.msra.mxu0 0.0
    %5895 = vmatprep.subr.mxu0 0.0
    %5896 = vmatpush1.msra.mxu0 0.0
    %5897 = vmatprep.subr.mxu0 0.0
    %5898 = vmatpush1.msra.mxu0 0.0
    %5899 = vmatprep.subr.mxu0 0.0
    %5900 = vmatpush1.msra.mxu0 0.0
    %5901 = vmatprep.subr.mxu0 0.0
    %5902 = vmatpush1.msra.mxu0 0.0
    %5903 = vmatprep.subr.mxu0 0.0
    %5904 = vmatpush1.msra.mxu0 0.0
    %5905 = vmatprep.subr.mxu0 0.0
    %5906 = vmatpush1.msra.mxu0 0.0
    %5907 = vmatprep.subr.mxu0 0.0
    %5908 = vmatpush1.msra.mxu0 0.0
    %5909 = vmatprep.subr.mxu0 0.0
    %5910 = vmatpush1.msra.mxu0 0.0
    %5911 = vmatprep.subr.mxu0 0.0
    %5912 = vmatpush1.msra.mxu0 0.0
    %5913 = vmatprep.subr.mxu0 0.0
    %5914 = vmatpush1.msra.mxu0 0.0
    %5915 = vmatprep.mubr.f32.mxu0 0.0
    %5916 = vmatmul.mubr.f32.gmra.mrb[0].mxu0 %v5250
    %v5917 = vpop.f32.mrb[0].mxu0
    %v5918 = vadd.f32 %v2995, %v5917
    %v5919 = vpop.f32.mrb[0].mxu0
    %5920 = vdwg.mxu0
    %v5921 = vadd.f32 %v5700, %v5778
    %v5922 = vxor.u32 %v5921, 2147483648
    %v5923 = vmul.f32 %v5922, 1.442695
    %v5924 = vpow.pop %v5923
    %v5925 = vadd.f32 %v5924, 1.0
    %v5926 = vrcp.pop %v5925
    %v5927 = vmul.f32 1.0, %v5926
    %v5928 = vadd.f32 %v5705, %v5848
    %v5929 = vxor.u32 %v5928, 2147483648
    %v5930 = vmul.f32 %v5929, 1.442695
    %v5931 = vpow.pop %v5930
    %v5932 = vadd.f32 %v5931, 1.0
    %v5933 = vrcp.pop %v5932
    %v5934 = vmul.f32 1.0, %v5933
    %v5935 = vmul.f32 %v5927, %v5918
    %v5936 = vadd.f32 %v5710, %v5935
    %v5937 = vtanh.pop %v5936
    %v5938 = vsub.f32 1.0, %v5934
    %v5939 = vmul.f32 %v5938, %v5937
    %v5940 = vmul.f32 %v5934, %v5248
    %v5941 = vadd.f32 %v5939, %v5940
    %v5943 = vsel %vm2823, %v5941, 0
    %5945 = vmatprep.subr.mxu0 0.0
    %5946 = vmatpush1.msra.mxu0 %v3088
    %5947 = vmatprep.subr.mxu0 0.0
    %5948 = vmatpush1.msra.mxu0 %v3089
    %5949 = vmatprep.subr.mxu0 0.0
    %5950 = vmatpush1.msra.mxu0 %v3090
    %5951 = vmatprep.subr.mxu0 0.0
    %5952 = vmatpush1.msra.mxu0 %v3091
    %5953 = vmatprep.subr.mxu0 0.0
    %5954 = vmatpush1.msra.mxu0 %v3092
    %5955 = vmatprep.subr.mxu0 0.0
    %5956 = vmatpush1.msra.mxu0 %v3093
    %5957 = vmatprep.subr.mxu0 0.0
    %5958 = vmatpush1.msra.mxu0 %v3094
    %5959 = vmatprep.subr.mxu0 0.0
    %5960 = vmatpush1.msra.mxu0 %v3095
    %5961 = vmatprep.subr.mxu0 0.0
    %5962 = vmatpush1.msra.mxu0 0.0
    %5963 = vmatprep.subr.mxu0 0.0
    %5964 = vmatpush1.msra.mxu0 0.0
    %5965 = vmatprep.subr.mxu0 0.0
    %5966 = vmatpush1.msra.mxu0 0.0
    %5967 = vmatprep.subr.mxu0 0.0
    %5968 = vmatpush1.msra.mxu0 0.0
    %5969 = vmatprep.subr.mxu0 0.0
    %5970 = vmatpush1.msra.mxu0 0.0
    %5971 = vmatprep.subr.mxu0 0.0
    %5972 = vmatpush1.msra.mxu0 0.0
    %5973 = vmatprep.subr.mxu0 0.0
    %5974 = vmatpush1.msra.mxu0 0.0
    %5975 = vmatprep.subr.mxu0 0.0
    %5976 = vmatpush1.msra.mxu0 0.0
    %5977 = vmatprep.subr.mxu0 0.0
    %5978 = vmatpush1.msra.mxu0 0.0
    %5979 = vmatprep.subr.mxu0 0.0
    %5980 = vmatpush1.msra.mxu0 0.0
    %5981 = vmatprep.subr.mxu0 0.0
    %5982 = vmatpush1.msra.mxu0 0.0
    %5983 = vmatprep.subr.mxu0 0.0
    %5984 = vmatpush1.msra.mxu0 0.0
    %5985 = vmatprep.subr.mxu0 0.0
    %5986 = vmatpush1.msra.mxu0 0.0
    %5987 = vmatprep.subr.mxu0 0.0
    %5988 = vmatpush1.msra.mxu0 0.0
    %5989 = vmatprep.subr.mxu0 0.0
    %5990 = vmatpush1.msra.mxu0 0.0
    %5991 = vmatprep.subr.mxu0 0.0
    %5992 = vmatpush1.msra.mxu0 0.0
    %5993 = vmatprep.subr.mxu0 0.0
    %5994 = vmatpush1.msra.mxu0 0.0
    %5995 = vmatprep.subr.mxu0 0.0
    %5996 = vmatpush1.msra.mxu0 0.0
    %5997 = vmatprep.subr.mxu0 0.0
    %5998 = vmatpush1.msra.mxu0 0.0
    %5999 = vmatprep.subr.mxu0 0.0
    %6000 = vmatpush1.msra.mxu0 0.0
    %6001 = vmatprep.subr.mxu0 0.0
    %6002 = vmatpush1.msra.mxu0 0.0
    %6003 = vmatprep.subr.mxu0 0.0
    %6004 = vmatpush1.msra.mxu0 0.0
    %6005 = vmatprep.subr.mxu0 0.0
    %6006 = vmatpush1.msra.mxu0 0.0
    %6007 = vmatprep.subr.mxu0 0.0
    %6008 = vmatpush1.msra.mxu0 0.0
    %6009 = vmatprep.mubr.f32.mxu0 0.0
    %6010 = vmatmul.mubr.f32.gmra.mrb[0].mxu0 %v5943
    %v6011 = vpop.f32.mrb[0].mxu0
    %v6012 = vadd.f32 %v3100, %v6011
    %v6013 = vpop.f32.mrb[0].mxu0
    %6014 = vdwg.mxu0
    %6015 = vmatprep.subr.mxu0 0.0
    %6016 = vmatpush1.msra.mxu0 %v3176
    %6017 = vmatprep.subr.mxu0 0.0
    %6018 = vmatpush1.msra.mxu0 %v3177
    %6019 = vmatprep.subr.mxu0 0.0
    %6020 = vmatpush1.msra.mxu0 %v3178
    %6021 = vmatprep.subr.mxu0 0.0
    %6022 = vmatpush1.msra.mxu0 %v3179
    %6023 = vmatprep.subr.mxu0 0.0
    %6024 = vmatpush1.msra.mxu0 %v3180
    %6025 = vmatprep.subr.mxu0 0.0
    %6026 = vmatpush1.msra.mxu0 %v3181
    %6027 = vmatprep.subr.mxu0 0.0
    %6028 = vmatpush1.msra.mxu0 %v3182
    %6029 = vmatprep.subr.mxu0 0.0
    %6030 = vmatpush1.msra.mxu0 %v3183
    %6031 = vmatprep.subr.mxu0 0.0
    %6032 = vmatpush1.msra.mxu0 0.0
    %6033 = vmatprep.subr.mxu0 0.0
    %6034 = vmatpush1.msra.mxu0 0.0
    %6035 = vmatprep.subr.mxu0 0.0
    %6036 = vmatpush1.msra.mxu0 0.0
    %6037 = vmatprep.subr.mxu0 0.0
    %6038 = vmatpush1.msra.mxu0 0.0
    %6039 = vmatprep.subr.mxu0 0.0
    %6040 = vmatpush1.msra.mxu0 0.0
    %6041 = vmatprep.subr.mxu0 0.0
    %6042 = vmatpush1.msra.mxu0 0.0
    %6043 = vmatprep.subr.mxu0 0.0
    %6044 = vmatpush1.msra.mxu0 0.0
    %6045 = vmatprep.subr.mxu0 0.0
    %6046 = vmatpush1.msra.mxu0 0.0
    %6047 = vmatprep.subr.mxu0 0.0
    %6048 = vmatpush1.msra.mxu0 0.0
    %6049 = vmatprep.subr.mxu0 0.0
    %6050 = vmatpush1.msra.mxu0 0.0
    %6051 = vmatprep.subr.mxu0 0.0
    %6052 = vmatpush1.msra.mxu0 0.0
    %6053 = vmatprep.subr.mxu0 0.0
    %6054 = vmatpush1.msra.mxu0 0.0
    %6055 = vmatprep.subr.mxu0 0.0
    %6056 = vmatpush1.msra.mxu0 0.0
    %6057 = vmatprep.subr.mxu0 0.0
    %6058 = vmatpush1.msra.mxu0 0.0
    %6059 = vmatprep.subr.mxu0 0.0
    %6060 = vmatpush1.msra.mxu0 0.0
    %6061 = vmatprep.subr.mxu0 0.0
    %6062 = vmatpush1.msra.mxu0 0.0
    %6063 = vmatprep.subr.mxu0 0.0
    %6064 = vmatpush1.msra.mxu0 0.0
    %6065 = vmatprep.subr.mxu0 0.0
    %6066 = vmatpush1.msra.mxu0 0.0
    %6067 = vmatprep.subr.mxu0 0.0
    %6068 = vmatpush1.msra.mxu0 0.0
    %6069 = vmatprep.subr.mxu0 0.0
    %6070 = vmatpush1.msra.mxu0 0.0
    %6071 = vmatprep.subr.mxu0 0.0
    %6072 = vmatpush1.msra.mxu0 0.0
    %6073 = vmatprep.subr.mxu0 0.0
    %6074 = vmatpush1.msra.mxu0 0.0
    %6075 = vmatprep.subr.mxu0 0.0
    %6076 = vmatpush1.msra.mxu0 0.0
    %6077 = vmatprep.subr.mxu0 0.0
    %6078 = vmatpush1.msra.mxu0 0.0
    %6079 = vmatprep.mubr.f32.mxu0 0.0
    %6080 = vmatmul.mubr.f32.gmra.mrb[0].mxu0 %v5943
    %v6081 = vpop.f32.mrb[0].mxu0
    %v6082 = vadd.f32 %v3188, %v6081
    %v6083 = vpop.f32.mrb[0].mxu0
    %6084 = vdwg.mxu0
    %6085 = vmatprep.subr.mxu0 0.0
    %6086 = vmatpush1.msra.mxu0 %v3261
    %6087 = vmatprep.subr.mxu0 0.0
    %6088 = vmatpush1.msra.mxu0 %v3262
    %6089 = vmatprep.subr.mxu0 0.0
    %6090 = vmatpush1.msra.mxu0 %v3263
    %6091 = vmatprep.subr.mxu0 0.0
    %6092 = vmatpush1.msra.mxu0 %v3264
    %6093 = vmatprep.subr.mxu0 0.0
    %6094 = vmatpush1.msra.mxu0 %v3265
    %6095 = vmatprep.subr.mxu0 0.0
    %6096 = vmatpush1.msra.mxu0 %v3266
    %6097 = vmatprep.subr.mxu0 0.0
    %6098 = vmatpush1.msra.mxu0 %v3267
    %6099 = vmatprep.subr.mxu0 0.0
    %6100 = vmatpush1.msra.mxu0 %v3268
    %6101 = vmatprep.subr.mxu0 0.0
    %6102 = vmatpush1.msra.mxu0 0.0
    %6103 = vmatprep.subr.mxu0 0.0
    %6104 = vmatpush1.msra.mxu0 0.0
    %6105 = vmatprep.subr.mxu0 0.0
    %6106 = vmatpush1.msra.mxu0 0.0
    %6107 = vmatprep.subr.mxu0 0.0
    %6108 = vmatpush1.msra.mxu0 0.0
    %6109 = vmatprep.subr.mxu0 0.0
    %6110 = vmatpush1.msra.mxu0 0.0
    %6111 = vmatprep.subr.mxu0 0.0
    %6112 = vmatpush1.msra.mxu0 0.0
    %6113 = vmatprep.subr.mxu0 0.0
    %6114 = vmatpush1.msra.mxu0 0.0
    %6115 = vmatprep.subr.mxu0 0.0
    %6116 = vmatpush1.msra.mxu0 0.0
    %6117 = vmatprep.subr.mxu0 0.0
    %6118 = vmatpush1.msra.mxu0 0.0
    %6119 = vmatprep.subr.mxu0 0.0
    %6120 = vmatpush1.msra.mxu0 0.0
    %6121 = vmatprep.subr.mxu0 0.0
    %6122 = vmatpush1.msra.mxu0 0.0
    %6123 = vmatprep.subr.mxu0 0.0
    %6124 = vmatpush1.msra.mxu0 0.0
    %6125 = vmatprep.subr.mxu0 0.0
    %6126 = vmatpush1.msra.mxu0 0.0
    %6127 = vmatprep.subr.mxu0 0.0
    %6128 = vmatpush1.msra.mxu0 0.0
    %6129 = vmatprep.subr.mxu0 0.0
    %6130 = vmatpush1.msra.mxu0 0.0
    %6131 = vmatprep.subr.mxu0 0.0
    %6132 = vmatpush1.msra.mxu0 0.0
    %6133 = vmatprep.subr.mxu0 0.0
    %6134 = vmatpush1.msra.mxu0 0.0
    %6135 = vmatprep.subr.mxu0 0.0
    %6136 = vmatpush1.msra.mxu0 0.0
    %6137 = vmatprep.subr.mxu0 0.0
    %6138 = vmatpush1.msra.mxu0 0.0
    %6139 = vmatprep.subr.mxu0 0.0
    %6140 = vmatpush1.msra.mxu0 0.0
    %6141 = vmatprep.subr.mxu0 0.0
    %6142 = vmatpush1.msra.mxu0 0.0
    %6143 = vmatprep.subr.mxu0 0.0
    %6144 = vmatpush1.msra.mxu0 0.0
    %6145 = vmatprep.subr.mxu0 0.0
    %6146 = vmatpush1.msra.mxu0 0.0
    %6147 = vmatprep.subr.mxu0 0.0
    %6148 = vmatpush1.msra.mxu0 0.0
    %6149 = vmatprep.mubr.f32.mxu0 0.0
    %6150 = vmatmul.mubr.f32.gmra.mrb[0].mxu0 %v5943
    %v6151 = vpop.f32.mrb[0].mxu0
    %v6152 = vadd.f32 %v3273, %v6151
    %v6153 = vpop.f32.mrb[0].mxu0
    %6154 = vdwg.mxu0
    %v6156 = vsel %vm2823, %v5695, 0
    %6158 = vmatprep.subr.mxu0 0.0
    %6159 = vmatpush1.msra.mxu0 %v3345
    %6160 = vmatprep.subr.mxu0 0.0
    %6161 = vmatpush1.msra.mxu0 %v3346
    %6162 = vmatprep.subr.mxu0 0.0
    %6163 = vmatpush1.msra.mxu0 %v3347
    %6164 = vmatprep.subr.mxu0 0.0
    %6165 = vmatpush1.msra.mxu0 %v3348
    %6166 = vmatprep.subr.mxu0 0.0
    %6167 = vmatpush1.msra.mxu0 %v3349
    %6168 = vmatprep.subr.mxu0 0.0
    %6169 = vmatpush1.msra.mxu0 %v3350
    %6170 = vmatprep.subr.mxu0 0.0
    %6171 = vmatpush1.msra.mxu0 %v3351
    %6172 = vmatprep.subr.mxu0 0.0
    %6173 = vmatpush1.msra.mxu0 %v3352
    %6174 = vmatprep.subr.mxu0 0.0
    %6175 = vmatpush1.msra.mxu0 0.0
    %6176 = vmatprep.subr.mxu0 0.0
    %6177 = vmatpush1.msra.mxu0 0.0
    %6178 = vmatprep.subr.mxu0 0.0
    %6179 = vmatpush1.msra.mxu0 0.0
    %6180 = vmatprep.subr.mxu0 0.0
    %6181 = vmatpush1.msra.mxu0 0.0
    %6182 = vmatprep.subr.mxu0 0.0
    %6183 = vmatpush1.msra.mxu0 0.0
    %6184 = vmatprep.subr.mxu0 0.0
    %6185 = vmatpush1.msra.mxu0 0.0
    %6186 = vmatprep.subr.mxu0 0.0
    %6187 = vmatpush1.msra.mxu0 0.0
    %6188 = vmatprep.subr.mxu0 0.0
    %6189 = vmatpush1.msra.mxu0 0.0
    %6190 = vmatprep.subr.mxu0 0.0
    %6191 = vmatpush1.msra.mxu0 0.0
    %6192 = vmatprep.subr.mxu0 0.0
    %6193 = vmatpush1.msra.mxu0 0.0
    %6194 = vmatprep.subr.mxu0 0.0
    %6195 = vmatpush1.msra.mxu0 0.0
    %6196 = vmatprep.subr.mxu0 0.0
    %6197 = vmatpush1.msra.mxu0 0.0
    %6198 = vmatprep.subr.mxu0 0.0
    %6199 = vmatpush1.msra.mxu0 0.0
    %6200 = vmatprep.subr.mxu0 0.0
    %6201 = vmatpush1.msra.mxu0 0.0
    %6202 = vmatprep.subr.mxu0 0.0
    %6203 = vmatpush1.msra.mxu0 0.0
    %6204 = vmatprep.subr.mxu0 0.0
    %6205 = vmatpush1.msra.mxu0 0.0
    %6206 = vmatprep.subr.mxu0 0.0
    %6207 = vmatpush1.msra.mxu0 0.0
    %6208 = vmatprep.subr.mxu0 0.0
    %6209 = vmatpush1.msra.mxu0 0.0
    %6210 = vmatprep.subr.mxu0 0.0
    %6211 = vmatpush1.msra.mxu0 0.0
    %6212 = vmatprep.subr.mxu0 0.0
    %6213 = vmatpush1.msra.mxu0 0.0
    %6214 = vmatprep.subr.mxu0 0.0
    %6215 = vmatpush1.msra.mxu0 0.0
    %6216 = vmatprep.subr.mxu0 0.0
    %6217 = vmatpush1.msra.mxu0 0.0
    %6218 = vmatprep.subr.mxu0 0.0
    %6219 = vmatpush1.msra.mxu0 0.0
    %6220 = vmatprep.subr.mxu0 0.0
    %6221 = vmatpush1.msra.mxu0 0.0
    %6222 = vmatprep.mubr.f32.mxu0 0.0
    %6223 = vmatmul.mubr.f32.gmra.mrb[0].mxu0 %v6156
    %v6224 = vpop.f32.mrb[0].mxu0
    %v6225 = vadd.f32 %v3357, %v6224
    %v6226 = vpop.f32.mrb[0].mxu0
    %6227 = vdwg.mxu0
    %6228 = vmatprep.subr.mxu0 0.0
    %6229 = vmatpush1.msra.mxu0 %v3430
    %6230 = vmatprep.subr.mxu0 0.0
    %6231 = vmatpush1.msra.mxu0 %v3431
    %6232 = vmatprep.subr.mxu0 0.0
    %6233 = vmatpush1.msra.mxu0 %v3432
    %6234 = vmatprep.subr.mxu0 0.0
    %6235 = vmatpush1.msra.mxu0 %v3433
    %6236 = vmatprep.subr.mxu0 0.0
    %6237 = vmatpush1.msra.mxu0 %v3434
    %6238 = vmatprep.subr.mxu0 0.0
    %6239 = vmatpush1.msra.mxu0 %v3435
    %6240 = vmatprep.subr.mxu0 0.0
    %6241 = vmatpush1.msra.mxu0 %v3436
    %6242 = vmatprep.subr.mxu0 0.0
    %6243 = vmatpush1.msra.mxu0 %v3437
    %6244 = vmatprep.subr.mxu0 0.0
    %6245 = vmatpush1.msra.mxu0 0.0
    %6246 = vmatprep.subr.mxu0 0.0
    %6247 = vmatpush1.msra.mxu0 0.0
    %6248 = vmatprep.subr.mxu0 0.0
    %6249 = vmatpush1.msra.mxu0 0.0
    %6250 = vmatprep.subr.mxu0 0.0
    %6251 = vmatpush1.msra.mxu0 0.0
    %6252 = vmatprep.subr.mxu0 0.0
    %6253 = vmatpush1.msra.mxu0 0.0
    %6254 = vmatprep.subr.mxu0 0.0
    %6255 = vmatpush1.msra.mxu0 0.0
    %6256 = vmatprep.subr.mxu0 0.0
    %6257 = vmatpush1.msra.mxu0 0.0
    %6258 = vmatprep.subr.mxu0 0.0
    %6259 = vmatpush1.msra.mxu0 0.0
    %6260 = vmatprep.subr.mxu0 0.0
    %6261 = vmatpush1.msra.mxu0 0.0
    %6262 = vmatprep.subr.mxu0 0.0
    %6263 = vmatpush1.msra.mxu0 0.0
    %6264 = vmatprep.subr.mxu0 0.0
    %6265 = vmatpush1.msra.mxu0 0.0
    %6266 = vmatprep.subr.mxu0 0.0
    %6267 = vmatpush1.msra.mxu0 0.0
    %6268 = vmatprep.subr.mxu0 0.0
    %6269 = vmatpush1.msra.mxu0 0.0
    %6270 = vmatprep.subr.mxu0 0.0
    %6271 = vmatpush1.msra.mxu0 0.0
    %6272 = vmatprep.subr.mxu0 0.0
    %6273 = vmatpush1.msra.mxu0 0.0
    %6274 = vmatprep.subr.mxu0 0.0
    %6275 = vmatpush1.msra.mxu0 0.0
    %6276 = vmatprep.subr.mxu0 0.0
    %6277 = vmatpush1.msra.mxu0 0.0
    %6278 = vmatprep.subr.mxu0 0.0
    %6279 = vmatpush1.msra.mxu0 0.0
    %6280 = vmatprep.subr.mxu0 0.0
    %6281 = vmatpush1.msra.mxu0 0.0
    %6282 = vmatprep.subr.mxu0 0.0
    %6283 = vmatpush1.msra.mxu0 0.0
    %6284 = vmatprep.subr.mxu0 0.0
    %6285 = vmatpush1.msra.mxu0 0.0
    %6286 = vmatprep.subr.mxu0 0.0
    %6287 = vmatpush1.msra.mxu0 0.0
    %6288 = vmatprep.subr.mxu0 0.0
    %6289 = vmatpush1.msra.mxu0 0.0
    %6290 = vmatprep.subr.mxu0 0.0
    %6291 = vmatpush1.msra.mxu0 0.0
    %6292 = vmatprep.mubr.f32.mxu0 0.0
    %6293 = vmatmul.mubr.f32.gmra.mrb[0].mxu0 %v6156
    %v6294 = vpop.f32.mrb[0].mxu0
    %v6295 = vadd.f32 %v3442, %v6294
    %v6296 = vpop.f32.mrb[0].mxu0
    %6297 = vdwg.mxu0
    %6298 = vmatprep.subr.mxu0 0.0
    %6299 = vmatpush1.msra.mxu0 %v3515
    %6300 = vmatprep.subr.mxu0 0.0
    %6301 = vmatpush1.msra.mxu0 %v3516
    %6302 = vmatprep.subr.mxu0 0.0
    %6303 = vmatpush1.msra.mxu0 %v3517
    %6304 = vmatprep.subr.mxu0 0.0
    %6305 = vmatpush1.msra.mxu0 %v3518
    %6306 = vmatprep.subr.mxu0 0.0
    %6307 = vmatpush1.msra.mxu0 %v3519
    %6308 = vmatprep.subr.mxu0 0.0
    %6309 = vmatpush1.msra.mxu0 %v3520
    %6310 = vmatprep.subr.mxu0 0.0
    %6311 = vmatpush1.msra.mxu0 %v3521
    %6312 = vmatprep.subr.mxu0 0.0
    %6313 = vmatpush1.msra.mxu0 %v3522
    %6314 = vmatprep.subr.mxu0 0.0
    %6315 = vmatpush1.msra.mxu0 0.0
    %6316 = vmatprep.subr.mxu0 0.0
    %6317 = vmatpush1.msra.mxu0 0.0
    %6318 = vmatprep.subr.mxu0 0.0
    %6319 = vmatpush1.msra.mxu0 0.0
    %6320 = vmatprep.subr.mxu0 0.0
    %6321 = vmatpush1.msra.mxu0 0.0
    %6322 = vmatprep.subr.mxu0 0.0
    %6323 = vmatpush1.msra.mxu0 0.0
    %6324 = vmatprep.subr.mxu0 0.0
    %6325 = vmatpush1.msra.mxu0 0.0
    %6326 = vmatprep.subr.mxu0 0.0
    %6327 = vmatpush1.msra.mxu0 0.0
    %6328 = vmatprep.subr.mxu0 0.0
    %6329 = vmatpush1.msra.mxu0 0.0
    %6330 = vmatprep.subr.mxu0 0.0
    %6331 = vmatpush1.msra.mxu0 0.0
    %6332 = vmatprep.subr.mxu0 0.0
    %6333 = vmatpush1.msra.mxu0 0.0
    %6334 = vmatprep.subr.mxu0 0.0
    %6335 = vmatpush1.msra.mxu0 0.0
    %6336 = vmatprep.subr.mxu0 0.0
    %6337 = vmatpush1.msra.mxu0 0.0
    %6338 = vmatprep.subr.mxu0 0.0
    %6339 = vmatpush1.msra.mxu0 0.0
    %6340 = vmatprep.subr.mxu0 0.0
    %6341 = vmatpush1.msra.mxu0 0.0
    %6342 = vmatprep.subr.mxu0 0.0
    %6343 = vmatpush1.msra.mxu0 0.0
    %6344 = vmatprep.subr.mxu0 0.0
    %6345 = vmatpush1.msra.mxu0 0.0
    %6346 = vmatprep.subr.mxu0 0.0
    %6347 = vmatpush1.msra.mxu0 0.0
    %6348 = vmatprep.subr.mxu0 0.0
    %6349 = vmatpush1.msra.mxu0 0.0
    %6350 = vmatprep.subr.mxu0 0.0
    %6351 = vmatpush1.msra.mxu0 0.0
    %6352 = vmatprep.subr.mxu0 0.0
    %6353 = vmatpush1.msra.mxu0 0.0
    %6354 = vmatprep.subr.mxu0 0.0
    %6355 = vmatpush1.msra.mxu0 0.0
    %6356 = vmatprep.subr.mxu0 0.0
    %6357 = vmatpush1.msra.mxu0 0.0
    %6358 = vmatprep.subr.mxu0 0.0
    %6359 = vmatpush1.msra.mxu0 0.0
    %6360 = vmatprep.subr.mxu0 0.0
    %6361 = vmatpush1.msra.mxu0 0.0
    %6362 = vmatprep.mubr.f32.mxu0 0.0
    %6363 = vmatmul.mubr.f32.gmra.mrb[0].mxu0 %v6156
    %v6364 = vpop.f32.mrb[0].mxu0
    %v6365 = vadd.f32 %v3527, %v6364
    %v6366 = vpop.f32.mrb[0].mxu0
    %6367 = vdwg.mxu0
    %v6368 = vadd.f32 %v6012, %v6225
    %v6369 = vxor.u32 %v6368, 2147483648
    %v6370 = vmul.f32 %v6369, 1.442695
    %v6371 = vpow.pop %v6370
    %v6372 = vadd.f32 %v6371, 1.0
    %v6373 = vrcp.pop %v6372
    %v6374 = vmul.f32 1.0, %v6373
    %v6375 = vadd.f32 %v6082, %v6295
    %v6376 = vxor.u32 %v6375, 2147483648
    %v6377 = vmul.f32 %v6376, 1.442695
    %v6378 = vpow.pop %v6377
    %v6379 = vadd.f32 %v6378, 1.0
    %v6380 = vrcp.pop %v6379
    %v6381 = vmul.f32 1.0, %v6380
    %v6382 = vmul.f32 %v6374, %v6365
    %v6383 = vadd.f32 %v6152, %v6382
    %v6384 = vtanh.pop %v6383
    %v6385 = vsub.f32 1.0, %v6381
    %v6386 = vmul.f32 %v6385, %v6384
    %v6387 = vmul.f32 %v6381, %v5695
    %v6388 = vadd.f32 %v6386, %v6387
    %v6389 = vrot.slane %v1859, 5
    %v6391 = vrot.slane %v2630, 4
    %v6393 = vsel %vm2799, %v6389, %v6391
    %v6394 = vrot.slane %v1936, 5
    %v6396 = vrot.slane %v2704, 4
    %v6398 = vsel %vm2799, %v6394, %v6396
    %v6399 = vrot.slane %v2013, 5
    %v6401 = vrot.slane %v2778, 4
    %v6403 = vsel %vm2799, %v6399, %v6401
    %6404 = vmatprep.subr.mxu0 0.0
    %6405 = vmatpush1.msra.mxu0 %v2809
    %6406 = vmatprep.subr.mxu0 0.0
    %6407 = vmatpush1.msra.mxu0 %v2810
    %6408 = vmatprep.subr.mxu0 0.0
    %6409 = vmatpush1.msra.mxu0 %v2811
    %6410 = vmatprep.subr.mxu0 0.0
    %6411 = vmatpush1.msra.mxu0 %v2812
    %6412 = vmatprep.subr.mxu0 0.0
    %6413 = vmatpush1.msra.mxu0 %v2813
    %6414 = vmatprep.subr.mxu0 0.0
    %6415 = vmatpush1.msra.mxu0 %v2814
    %6416 = vmatprep.subr.mxu0 0.0
    %6417 = vmatpush1.msra.mxu0 %v2815
    %6418 = vmatprep.subr.mxu0 0.0
    %6419 = vmatpush1.msra.mxu0 %v2816
    %6420 = vmatprep.subr.mxu0 0.0
    %6421 = vmatpush1.msra.mxu0 0.0
    %6422 = vmatprep.subr.mxu0 0.0
    %6423 = vmatpush1.msra.mxu0 0.0
    %6424 = vmatprep.subr.mxu0 0.0
    %6425 = vmatpush1.msra.mxu0 0.0
    %6426 = vmatprep.subr.mxu0 0.0
    %6427 = vmatpush1.msra.mxu0 0.0
    %6428 = vmatprep.subr.mxu0 0.0
    %6429 = vmatpush1.msra.mxu0 0.0
    %6430 = vmatprep.subr.mxu0 0.0
    %6431 = vmatpush1.msra.mxu0 0.0
    %6432 = vmatprep.subr.mxu0 0.0
    %6433 = vmatpush1.msra.mxu0 0.0
    %6434 = vmatprep.subr.mxu0 0.0
    %6435 = vmatpush1.msra.mxu0 0.0
    %6436 = vmatprep.subr.mxu0 0.0
    %6437 = vmatpush1.msra.mxu0 0.0
    %6438 = vmatprep.subr.mxu0 0.0
    %6439 = vmatpush1.msra.mxu0 0.0
    %6440 = vmatprep.subr.mxu0 0.0
    %6441 = vmatpush1.msra.mxu0 0.0
    %6442 = vmatprep.subr.mxu0 0.0
    %6443 = vmatpush1.msra.mxu0 0.0
    %6444 = vmatprep.subr.mxu0 0.0
    %6445 = vmatpush1.msra.mxu0 0.0
    %6446 = vmatprep.subr.mxu0 0.0
    %6447 = vmatpush1.msra.mxu0 0.0
    %6448 = vmatprep.subr.mxu0 0.0
    %6449 = vmatpush1.msra.mxu0 0.0
    %6450 = vmatprep.subr.mxu0 0.0
    %6451 = vmatpush1.msra.mxu0 0.0
    %6452 = vmatprep.subr.mxu0 0.0
    %6453 = vmatpush1.msra.mxu0 0.0
    %6454 = vmatprep.subr.mxu0 0.0
    %6455 = vmatpush1.msra.mxu0 0.0
    %6456 = vmatprep.subr.mxu0 0.0
    %6457 = vmatpush1.msra.mxu0 0.0
    %6458 = vmatprep.subr.mxu0 0.0
    %6459 = vmatpush1.msra.mxu0 0.0
    %6460 = vmatprep.subr.mxu0 0.0
    %6461 = vmatpush1.msra.mxu0 0.0
    %6462 = vmatprep.subr.mxu0 0.0
    %6463 = vmatpush1.msra.mxu0 0.0
    %6464 = vmatprep.subr.mxu0 0.0
    %6465 = vmatpush1.msra.mxu0 0.0
    %6466 = vmatprep.subr.mxu0 0.0
    %6467 = vmatpush1.msra.mxu0 0.0
    %6468 = vmatprep.mubr.f32.mxu0 0.0
    %6469 = vmatmul.mubr.f32.gmra.mrb[0].mxu0 %v5943
    %v6470 = vpop.f32.mrb[0].mxu0
    %v6471 = vadd.f32 %v2821, %v6470
    %v6472 = vpop.f32.mrb[0].mxu0
    %6473 = vdwg.mxu0
    %6474 = vmatprep.subr.mxu0 0.0
    %6475 = vmatpush1.msra.mxu0 %v2898
    %6476 = vmatprep.subr.mxu0 0.0
    %6477 = vmatpush1.msra.mxu0 %v2899
    %6478 = vmatprep.subr.mxu0 0.0
    %6479 = vmatpush1.msra.mxu0 %v2900
    %6480 = vmatprep.subr.mxu0 0.0
    %6481 = vmatpush1.msra.mxu0 %v2901
    %6482 = vmatprep.subr.mxu0 0.0
    %6483 = vmatpush1.msra.mxu0 %v2902
    %6484 = vmatprep.subr.mxu0 0.0
    %6485 = vmatpush1.msra.mxu0 %v2903
    %6486 = vmatprep.subr.mxu0 0.0
    %6487 = vmatpush1.msra.mxu0 %v2904
    %6488 = vmatprep.subr.mxu0 0.0
    %6489 = vmatpush1.msra.mxu0 %v2905
    %6490 = vmatprep.subr.mxu0 0.0
    %6491 = vmatpush1.msra.mxu0 0.0
    %6492 = vmatprep.subr.mxu0 0.0
    %6493 = vmatpush1.msra.mxu0 0.0
    %6494 = vmatprep.subr.mxu0 0.0
    %6495 = vmatpush1.msra.mxu0 0.0
    %6496 = vmatprep.subr.mxu0 0.0
    %6497 = vmatpush1.msra.mxu0 0.0
    %6498 = vmatprep.subr.mxu0 0.0
    %6499 = vmatpush1.msra.mxu0 0.0
    %6500 = vmatprep.subr.mxu0 0.0
    %6501 = vmatpush1.msra.mxu0 0.0
    %6502 = vmatprep.subr.mxu0 0.0
    %6503 = vmatpush1.msra.mxu0 0.0
    %6504 = vmatprep.subr.mxu0 0.0
    %6505 = vmatpush1.msra.mxu0 0.0
    %6506 = vmatprep.subr.mxu0 0.0
    %6507 = vmatpush1.msra.mxu0 0.0
    %6508 = vmatprep.subr.mxu0 0.0
    %6509 = vmatpush1.msra.mxu0 0.0
    %6510 = vmatprep.subr.mxu0 0.0
    %6511 = vmatpush1.msra.mxu0 0.0
    %6512 = vmatprep.subr.mxu0 0.0
    %6513 = vmatpush1.msra.mxu0 0.0
    %6514 = vmatprep.subr.mxu0 0.0
    %6515 = vmatpush1.msra.mxu0 0.0
    %6516 = vmatprep.subr.mxu0 0.0
    %6517 = vmatpush1.msra.mxu0 0.0
    %6518 = vmatprep.subr.mxu0 0.0
    %6519 = vmatpush1.msra.mxu0 0.0
    %6520 = vmatprep.subr.mxu0 0.0
    %6521 = vmatpush1.msra.mxu0 0.0
    %6522 = vmatprep.subr.mxu0 0.0
    %6523 = vmatpush1.msra.mxu0 0.0
    %6524 = vmatprep.subr.mxu0 0.0
    %6525 = vmatpush1.msra.mxu0 0.0
    %6526 = vmatprep.subr.mxu0 0.0
    %6527 = vmatpush1.msra.mxu0 0.0
    %6528 = vmatprep.subr.mxu0 0.0
    %6529 = vmatpush1.msra.mxu0 0.0
    %6530 = vmatprep.subr.mxu0 0.0
    %6531 = vmatpush1.msra.mxu0 0.0
    %6532 = vmatprep.subr.mxu0 0.0
    %6533 = vmatpush1.msra.mxu0 0.0
    %6534 = vmatprep.subr.mxu0 0.0
    %6535 = vmatpush1.msra.mxu0 0.0
    %6536 = vmatprep.subr.mxu0 0.0
    %6537 = vmatpush1.msra.mxu0 0.0
    %6538 = vmatprep.mubr.f32.mxu0 0.0
    %6539 = vmatmul.mubr.f32.gmra.mrb[0].mxu0 %v5943
    %v6540 = vpop.f32.mrb[0].mxu0
    %v6541 = vadd.f32 %v2910, %v6540
    %v6542 = vpop.f32.mrb[0].mxu0
    %6543 = vdwg.mxu0
    %6544 = vmatprep.subr.mxu0 0.0
    %6545 = vmatpush1.msra.mxu0 %v2983
    %6546 = vmatprep.subr.mxu0 0.0
    %6547 = vmatpush1.msra.mxu0 %v2984
    %6548 = vmatprep.subr.mxu0 0.0
    %6549 = vmatpush1.msra.mxu0 %v2985
    %6550 = vmatprep.subr.mxu0 0.0
    %6551 = vmatpush1.msra.mxu0 %v2986
    %6552 = vmatprep.subr.mxu0 0.0
    %6553 = vmatpush1.msra.mxu0 %v2987
    %6554 = vmatprep.subr.mxu0 0.0
    %6555 = vmatpush1.msra.mxu0 %v2988
    %6556 = vmatprep.subr.mxu0 0.0
    %6557 = vmatpush1.msra.mxu0 %v2989
    %6558 = vmatprep.subr.mxu0 0.0
    %6559 = vmatpush1.msra.mxu0 %v2990
    %6560 = vmatprep.subr.mxu0 0.0
    %6561 = vmatpush1.msra.mxu0 0.0
    %6562 = vmatprep.subr.mxu0 0.0
    %6563 = vmatpush1.msra.mxu0 0.0
    %6564 = vmatprep.subr.mxu0 0.0
    %6565 = vmatpush1.msra.mxu0 0.0
    %6566 = vmatprep.subr.mxu0 0.0
    %6567 = vmatpush1.msra.mxu0 0.0
    %6568 = vmatprep.subr.mxu0 0.0
    %6569 = vmatpush1.msra.mxu0 0.0
    %6570 = vmatprep.subr.mxu0 0.0
    %6571 = vmatpush1.msra.mxu0 0.0
    %6572 = vmatprep.subr.mxu0 0.0
    %6573 = vmatpush1.msra.mxu0 0.0
    %6574 = vmatprep.subr.mxu0 0.0
    %6575 = vmatpush1.msra.mxu0 0.0
    %6576 = vmatprep.subr.mxu0 0.0
    %6577 = vmatpush1.msra.mxu0 0.0
    %6578 = vmatprep.subr.mxu0 0.0
    %6579 = vmatpush1.msra.mxu0 0.0
    %6580 = vmatprep.subr.mxu0 0.0
    %6581 = vmatpush1.msra.mxu0 0.0
    %6582 = vmatprep.subr.mxu0 0.0
    %6583 = vmatpush1.msra.mxu0 0.0
    %6584 = vmatprep.subr.mxu0 0.0
    %6585 = vmatpush1.msra.mxu0 0.0
    %6586 = vmatprep.subr.mxu0 0.0
    %6587 = vmatpush1.msra.mxu0 0.0
    %6588 = vmatprep.subr.mxu0 0.0
    %6589 = vmatpush1.msra.mxu0 0.0
    %6590 = vmatprep.subr.mxu0 0.0
    %6591 = vmatpush1.msra.mxu0 0.0
    %6592 = vmatprep.subr.mxu0 0.0
    %6593 = vmatpush1.msra.mxu0 0.0
    %6594 = vmatprep.subr.mxu0 0.0
    %6595 = vmatpush1.msra.mxu0 0.0
    %6596 = vmatprep.subr.mxu0 0.0
    %6597 = vmatpush1.msra.mxu0 0.0
    %6598 = vmatprep.subr.mxu0 0.0
    %6599 = vmatpush1.msra.mxu0 0.0
    %6600 = vmatprep.subr.mxu0 0.0
    %6601 = vmatpush1.msra.mxu0 0.0
    %6602 = vmatprep.subr.mxu0 0.0
    %6603 = vmatpush1.msra.mxu0 0.0
    %6604 = vmatprep.subr.mxu0 0.0
    %6605 = vmatpush1.msra.mxu0 0.0
    %6606 = vmatprep.subr.mxu0 0.0
    %6607 = vmatpush1.msra.mxu0 0.0
    %6608 = vmatprep.mubr.f32.mxu0 0.0
    %6609 = vmatmul.mubr.f32.gmra.mrb[0].mxu0 %v5943
    %v6610 = vpop.f32.mrb[0].mxu0
    %v6611 = vadd.f32 %v2995, %v6610
    %v6612 = vpop.f32.mrb[0].mxu0
    %6613 = vdwg.mxu0
    %v6614 = vadd.f32 %v6393, %v6471
    %v6615 = vxor.u32 %v6614, 2147483648
    %v6616 = vmul.f32 %v6615, 1.442695
    %v6617 = vpow.pop %v6616
    %v6618 = vadd.f32 %v6617, 1.0
    %v6619 = vrcp.pop %v6618
    %v6620 = vmul.f32 1.0, %v6619
    %v6621 = vadd.f32 %v6398, %v6541
    %v6622 = vxor.u32 %v6621, 2147483648
    %v6623 = vmul.f32 %v6622, 1.442695
    %v6624 = vpow.pop %v6623
    %v6625 = vadd.f32 %v6624, 1.0
    %v6626 = vrcp.pop %v6625
    %v6627 = vmul.f32 1.0, %v6626
    %v6628 = vmul.f32 %v6620, %v6611
    %v6629 = vadd.f32 %v6403, %v6628
    %v6630 = vtanh.pop %v6629
    %v6631 = vsub.f32 1.0, %v6627
    %v6632 = vmul.f32 %v6631, %v6630
    %v6633 = vmul.f32 %v6627, %v5941
    %v6634 = vadd.f32 %v6632, %v6633
    %v6636 = vsel %vm2823, %v6634, 0
    %6638 = vmatprep.subr.mxu0 0.0
    %6639 = vmatpush1.msra.mxu0 %v3088
    %6640 = vmatprep.subr.mxu0 0.0
    %6641 = vmatpush1.msra.mxu0 %v3089
    %6642 = vmatprep.subr.mxu0 0.0
    %6643 = vmatpush1.msra.mxu0 %v3090
    %6644 = vmatprep.subr.mxu0 0.0
    %6645 = vmatpush1.msra.mxu0 %v3091
    %6646 = vmatprep.subr.mxu0 0.0
    %6647 = vmatpush1.msra.mxu0 %v3092
    %6648 = vmatprep.subr.mxu0 0.0
    %6649 = vmatpush1.msra.mxu0 %v3093
    %6650 = vmatprep.subr.mxu0 0.0
    %6651 = vmatpush1.msra.mxu0 %v3094
    %6652 = vmatprep.subr.mxu0 0.0
    %6653 = vmatpush1.msra.mxu0 %v3095
    %6654 = vmatprep.subr.mxu0 0.0
    %6655 = vmatpush1.msra.mxu0 0.0
    %6656 = vmatprep.subr.mxu0 0.0
    %6657 = vmatpush1.msra.mxu0 0.0
    %6658 = vmatprep.subr.mxu0 0.0
    %6659 = vmatpush1.msra.mxu0 0.0
    %6660 = vmatprep.subr.mxu0 0.0
    %6661 = vmatpush1.msra.mxu0 0.0
    %6662 = vmatprep.subr.mxu0 0.0
    %6663 = vmatpush1.msra.mxu0 0.0
    %6664 = vmatprep.subr.mxu0 0.0
    %6665 = vmatpush1.msra.mxu0 0.0
    %6666 = vmatprep.subr.mxu0 0.0
    %6667 = vmatpush1.msra.mxu0 0.0
    %6668 = vmatprep.subr.mxu0 0.0
    %6669 = vmatpush1.msra.mxu0 0.0
    %6670 = vmatprep.subr.mxu0 0.0
    %6671 = vmatpush1.msra.mxu0 0.0
    %6672 = vmatprep.subr.mxu0 0.0
    %6673 = vmatpush1.msra.mxu0 0.0
    %6674 = vmatprep.subr.mxu0 0.0
    %6675 = vmatpush1.msra.mxu0 0.0
    %6676 = vmatprep.subr.mxu0 0.0
    %6677 = vmatpush1.msra.mxu0 0.0
    %6678 = vmatprep.subr.mxu0 0.0
    %6679 = vmatpush1.msra.mxu0 0.0
    %6680 = vmatprep.subr.mxu0 0.0
    %6681 = vmatpush1.msra.mxu0 0.0
    %6682 = vmatprep.subr.mxu0 0.0
    %6683 = vmatpush1.msra.mxu0 0.0
    %6684 = vmatprep.subr.mxu0 0.0
    %6685 = vmatpush1.msra.mxu0 0.0
    %6686 = vmatprep.subr.mxu0 0.0
    %6687 = vmatpush1.msra.mxu0 0.0
    %6688 = vmatprep.subr.mxu0 0.0
    %6689 = vmatpush1.msra.mxu0 0.0
    %6690 = vmatprep.subr.mxu0 0.0
    %6691 = vmatpush1.msra.mxu0 0.0
    %6692 = vmatprep.subr.mxu0 0.0
    %6693 = vmatpush1.msra.mxu0 0.0
    %6694 = vmatprep.subr.mxu0 0.0
    %6695 = vmatpush1.msra.mxu0 0.0
    %6696 = vmatprep.subr.mxu0 0.0
    %6697 = vmatpush1.msra.mxu0 0.0
    %6698 = vmatprep.subr.mxu0 0.0
    %6699 = vmatpush1.msra.mxu0 0.0
    %6700 = vmatprep.subr.mxu0 0.0
    %6701 = vmatpush1.msra.mxu0 0.0
    %6702 = vmatprep.mubr.f32.mxu0 0.0
    %6703 = vmatmul.mubr.f32.gmra.mrb[0].mxu0 %v6636
    %v6704 = vpop.f32.mrb[0].mxu0
    %v6705 = vadd.f32 %v3100, %v6704
    %v6706 = vpop.f32.mrb[0].mxu0
    %6707 = vdwg.mxu0
    %6708 = vmatprep.subr.mxu0 0.0
    %6709 = vmatpush1.msra.mxu0 %v3176
    %6710 = vmatprep.subr.mxu0 0.0
    %6711 = vmatpush1.msra.mxu0 %v3177
    %6712 = vmatprep.subr.mxu0 0.0
    %6713 = vmatpush1.msra.mxu0 %v3178
    %6714 = vmatprep.subr.mxu0 0.0
    %6715 = vmatpush1.msra.mxu0 %v3179
    %6716 = vmatprep.subr.mxu0 0.0
    %6717 = vmatpush1.msra.mxu0 %v3180
    %6718 = vmatprep.subr.mxu0 0.0
    %6719 = vmatpush1.msra.mxu0 %v3181
    %6720 = vmatprep.subr.mxu0 0.0
    %6721 = vmatpush1.msra.mxu0 %v3182
    %6722 = vmatprep.subr.mxu0 0.0
    %6723 = vmatpush1.msra.mxu0 %v3183
    %6724 = vmatprep.subr.mxu0 0.0
    %6725 = vmatpush1.msra.mxu0 0.0
    %6726 = vmatprep.subr.mxu0 0.0
    %6727 = vmatpush1.msra.mxu0 0.0
    %6728 = vmatprep.subr.mxu0 0.0
    %6729 = vmatpush1.msra.mxu0 0.0
    %6730 = vmatprep.subr.mxu0 0.0
    %6731 = vmatpush1.msra.mxu0 0.0
    %6732 = vmatprep.subr.mxu0 0.0
    %6733 = vmatpush1.msra.mxu0 0.0
    %6734 = vmatprep.subr.mxu0 0.0
    %6735 = vmatpush1.msra.mxu0 0.0
    %6736 = vmatprep.subr.mxu0 0.0
    %6737 = vmatpush1.msra.mxu0 0.0
    %6738 = vmatprep.subr.mxu0 0.0
    %6739 = vmatpush1.msra.mxu0 0.0
    %6740 = vmatprep.subr.mxu0 0.0
    %6741 = vmatpush1.msra.mxu0 0.0
    %6742 = vmatprep.subr.mxu0 0.0
    %6743 = vmatpush1.msra.mxu0 0.0
    %6744 = vmatprep.subr.mxu0 0.0
    %6745 = vmatpush1.msra.mxu0 0.0
    %6746 = vmatprep.subr.mxu0 0.0
    %6747 = vmatpush1.msra.mxu0 0.0
    %6748 = vmatprep.subr.mxu0 0.0
    %6749 = vmatpush1.msra.mxu0 0.0
    %6750 = vmatprep.subr.mxu0 0.0
    %6751 = vmatpush1.msra.mxu0 0.0
    %6752 = vmatprep.subr.mxu0 0.0
    %6753 = vmatpush1.msra.mxu0 0.0
    %6754 = vmatprep.subr.mxu0 0.0
    %6755 = vmatpush1.msra.mxu0 0.0
    %6756 = vmatprep.subr.mxu0 0.0
    %6757 = vmatpush1.msra.mxu0 0.0
    %6758 = vmatprep.subr.mxu0 0.0
    %6759 = vmatpush1.msra.mxu0 0.0
    %6760 = vmatprep.subr.mxu0 0.0
    %6761 = vmatpush1.msra.mxu0 0.0
    %6762 = vmatprep.subr.mxu0 0.0
    %6763 = vmatpush1.msra.mxu0 0.0
    %6764 = vmatprep.subr.mxu0 0.0
    %6765 = vmatpush1.msra.mxu0 0.0
    %6766 = vmatprep.subr.mxu0 0.0
    %6767 = vmatpush1.msra.mxu0 0.0
    %6768 = vmatprep.subr.mxu0 0.0
    %6769 = vmatpush1.msra.mxu0 0.0
    %6770 = vmatprep.subr.mxu0 0.0
    %6771 = vmatpush1.msra.mxu0 0.0
    %6772 = vmatprep.mubr.f32.mxu0 0.0
    %6773 = vmatmul.mubr.f32.gmra.mrb[0].mxu0 %v6636
    %v6774 = vpop.f32.mrb[0].mxu0
    %v6775 = vadd.f32 %v3188, %v6774
    %v6776 = vpop.f32.mrb[0].mxu0
    %6777 = vdwg.mxu0
    %6778 = vmatprep.subr.mxu0 0.0
    %6779 = vmatpush1.msra.mxu0 %v3261
    %6780 = vmatprep.subr.mxu0 0.0
    %6781 = vmatpush1.msra.mxu0 %v3262
    %6782 = vmatprep.subr.mxu0 0.0
    %6783 = vmatpush1.msra.mxu0 %v3263
    %6784 = vmatprep.subr.mxu0 0.0
    %6785 = vmatpush1.msra.mxu0 %v3264
    %6786 = vmatprep.subr.mxu0 0.0
    %6787 = vmatpush1.msra.mxu0 %v3265
    %6788 = vmatprep.subr.mxu0 0.0
    %6789 = vmatpush1.msra.mxu0 %v3266
    %6790 = vmatprep.subr.mxu0 0.0
    %6791 = vmatpush1.msra.mxu0 %v3267
    %6792 = vmatprep.subr.mxu0 0.0
    %6793 = vmatpush1.msra.mxu0 %v3268
    %6794 = vmatprep.subr.mxu0 0.0
    %6795 = vmatpush1.msra.mxu0 0.0
    %6796 = vmatprep.subr.mxu0 0.0
    %6797 = vmatpush1.msra.mxu0 0.0
    %6798 = vmatprep.subr.mxu0 0.0
    %6799 = vmatpush1.msra.mxu0 0.0
    %6800 = vmatprep.subr.mxu0 0.0
    %6801 = vmatpush1.msra.mxu0 0.0
    %6802 = vmatprep.subr.mxu0 0.0
    %6803 = vmatpush1.msra.mxu0 0.0
    %6804 = vmatprep.subr.mxu0 0.0
    %6805 = vmatpush1.msra.mxu0 0.0
    %6806 = vmatprep.subr.mxu0 0.0
    %6807 = vmatpush1.msra.mxu0 0.0
    %6808 = vmatprep.subr.mxu0 0.0
    %6809 = vmatpush1.msra.mxu0 0.0
    %6810 = vmatprep.subr.mxu0 0.0
    %6811 = vmatpush1.msra.mxu0 0.0
    %6812 = vmatprep.subr.mxu0 0.0
    %6813 = vmatpush1.msra.mxu0 0.0
    %6814 = vmatprep.subr.mxu0 0.0
    %6815 = vmatpush1.msra.mxu0 0.0
    %6816 = vmatprep.subr.mxu0 0.0
    %6817 = vmatpush1.msra.mxu0 0.0
    %6818 = vmatprep.subr.mxu0 0.0
    %6819 = vmatpush1.msra.mxu0 0.0
    %6820 = vmatprep.subr.mxu0 0.0
    %6821 = vmatpush1.msra.mxu0 0.0
    %6822 = vmatprep.subr.mxu0 0.0
    %6823 = vmatpush1.msra.mxu0 0.0
    %6824 = vmatprep.subr.mxu0 0.0
    %6825 = vmatpush1.msra.mxu0 0.0
    %6826 = vmatprep.subr.mxu0 0.0
    %6827 = vmatpush1.msra.mxu0 0.0
    %6828 = vmatprep.subr.mxu0 0.0
    %6829 = vmatpush1.msra.mxu0 0.0
    %6830 = vmatprep.subr.mxu0 0.0
    %6831 = vmatpush1.msra.mxu0 0.0
    %6832 = vmatprep.subr.mxu0 0.0
    %6833 = vmatpush1.msra.mxu0 0.0
    %6834 = vmatprep.subr.mxu0 0.0
    %6835 = vmatpush1.msra.mxu0 0.0
    %6836 = vmatprep.subr.mxu0 0.0
    %6837 = vmatpush1.msra.mxu0 0.0
    %6838 = vmatprep.subr.mxu0 0.0
    %6839 = vmatpush1.msra.mxu0 0.0
    %6840 = vmatprep.subr.mxu0 0.0
    %6841 = vmatpush1.msra.mxu0 0.0
    %6842 = vmatprep.mubr.f32.mxu0 0.0
    %6843 = vmatmul.mubr.f32.gmra.mrb[0].mxu0 %v6636
    %v6844 = vpop.f32.mrb[0].mxu0
    %v6845 = vadd.f32 %v3273, %v6844
    %v6846 = vpop.f32.mrb[0].mxu0
    %6847 = vdwg.mxu0
    %v6849 = vsel %vm2823, %v6388, 0
    %6851 = vmatprep.subr.mxu0 0.0
    %6852 = vmatpush1.msra.mxu0 %v3345
    %6853 = vmatprep.subr.mxu0 0.0
    %6854 = vmatpush1.msra.mxu0 %v3346
    %6855 = vmatprep.subr.mxu0 0.0
    %6856 = vmatpush1.msra.mxu0 %v3347
    %6857 = vmatprep.subr.mxu0 0.0
    %6858 = vmatpush1.msra.mxu0 %v3348
    %6859 = vmatprep.subr.mxu0 0.0
    %6860 = vmatpush1.msra.mxu0 %v3349
    %6861 = vmatprep.subr.mxu0 0.0
    %6862 = vmatpush1.msra.mxu0 %v3350
    %6863 = vmatprep.subr.mxu0 0.0
    %6864 = vmatpush1.msra.mxu0 %v3351
    %6865 = vmatprep.subr.mxu0 0.0
    %6866 = vmatpush1.msra.mxu0 %v3352
    %6867 = vmatprep.subr.mxu0 0.0
    %6868 = vmatpush1.msra.mxu0 0.0
    %6869 = vmatprep.subr.mxu0 0.0
    %6870 = vmatpush1.msra.mxu0 0.0
    %6871 = vmatprep.subr.mxu0 0.0
    %6872 = vmatpush1.msra.mxu0 0.0
    %6873 = vmatprep.subr.mxu0 0.0
    %6874 = vmatpush1.msra.mxu0 0.0
    %6875 = vmatprep.subr.mxu0 0.0
    %6876 = vmatpush1.msra.mxu0 0.0
    %6877 = vmatprep.subr.mxu0 0.0
    %6878 = vmatpush1.msra.mxu0 0.0
    %6879 = vmatprep.subr.mxu0 0.0
    %6880 = vmatpush1.msra.mxu0 0.0
    %6881 = vmatprep.subr.mxu0 0.0
    %6882 = vmatpush1.msra.mxu0 0.0
    %6883 = vmatprep.subr.mxu0 0.0
    %6884 = vmatpush1.msra.mxu0 0.0
    %6885 = vmatprep.subr.mxu0 0.0
    %6886 = vmatpush1.msra.mxu0 0.0
    %6887 = vmatprep.subr.mxu0 0.0
    %6888 = vmatpush1.msra.mxu0 0.0
    %6889 = vmatprep.subr.mxu0 0.0
    %6890 = vmatpush1.msra.mxu0 0.0
    %6891 = vmatprep.subr.mxu0 0.0
    %6892 = vmatpush1.msra.mxu0 0.0
    %6893 = vmatprep.subr.mxu0 0.0
    %6894 = vmatpush1.msra.mxu0 0.0
    %6895 = vmatprep.subr.mxu0 0.0
    %6896 = vmatpush1.msra.mxu0 0.0
    %6897 = vmatprep.subr.mxu0 0.0
    %6898 = vmatpush1.msra.mxu0 0.0
    %6899 = vmatprep.subr.mxu0 0.0
    %6900 = vmatpush1.msra.mxu0 0.0
    %6901 = vmatprep.subr.mxu0 0.0
    %6902 = vmatpush1.msra.mxu0 0.0
    %6903 = vmatprep.subr.mxu0 0.0
    %6904 = vmatpush1.msra.mxu0 0.0
    %6905 = vmatprep.subr.mxu0 0.0
    %6906 = vmatpush1.msra.mxu0 0.0
    %6907 = vmatprep.subr.mxu0 0.0
    %6908 = vmatpush1.msra.mxu0 0.0
    %6909 = vmatprep.subr.mxu0 0.0
    %6910 = vmatpush1.msra.mxu0 0.0
    %6911 = vmatprep.subr.mxu0 0.0
    %6912 = vmatpush1.msra.mxu0 0.0
    %6913 = vmatprep.subr.mxu0 0.0
    %6914 = vmatpush1.msra.mxu0 0.0
    %6915 = vmatprep.mubr.f32.mxu0 0.0
    %6916 = vmatmul.mubr.f32.gmra.mrb[0].mxu0 %v6849
    %v6917 = vpop.f32.mrb[0].mxu0
    %v6918 = vadd.f32 %v3357, %v6917
    %v6919 = vpop.f32.mrb[0].mxu0
    %6920 = vdwg.mxu0
    %6921 = vmatprep.subr.mxu0 0.0
    %6922 = vmatpush1.msra.mxu0 %v3430
    %6923 = vmatprep.subr.mxu0 0.0
    %6924 = vmatpush1.msra.mxu0 %v3431
    %6925 = vmatprep.subr.mxu0 0.0
    %6926 = vmatpush1.msra.mxu0 %v3432
    %6927 = vmatprep.subr.mxu0 0.0
    %6928 = vmatpush1.msra.mxu0 %v3433
    %6929 = vmatprep.subr.mxu0 0.0
    %6930 = vmatpush1.msra.mxu0 %v3434
    %6931 = vmatprep.subr.mxu0 0.0
    %6932 = vmatpush1.msra.mxu0 %v3435
    %6933 = vmatprep.subr.mxu0 0.0
    %6934 = vmatpush1.msra.mxu0 %v3436
    %6935 = vmatprep.subr.mxu0 0.0
    %6936 = vmatpush1.msra.mxu0 %v3437
    %6937 = vmatprep.subr.mxu0 0.0
    %6938 = vmatpush1.msra.mxu0 0.0
    %6939 = vmatprep.subr.mxu0 0.0
    %6940 = vmatpush1.msra.mxu0 0.0
    %6941 = vmatprep.subr.mxu0 0.0
    %6942 = vmatpush1.msra.mxu0 0.0
    %6943 = vmatprep.subr.mxu0 0.0
    %6944 = vmatpush1.msra.mxu0 0.0
    %6945 = vmatprep.subr.mxu0 0.0
    %6946 = vmatpush1.msra.mxu0 0.0
    %6947 = vmatprep.subr.mxu0 0.0
    %6948 = vmatpush1.msra.mxu0 0.0
    %6949 = vmatprep.subr.mxu0 0.0
    %6950 = vmatpush1.msra.mxu0 0.0
    %6951 = vmatprep.subr.mxu0 0.0
    %6952 = vmatpush1.msra.mxu0 0.0
    %6953 = vmatprep.subr.mxu0 0.0
    %6954 = vmatpush1.msra.mxu0 0.0
    %6955 = vmatprep.subr.mxu0 0.0
    %6956 = vmatpush1.msra.mxu0 0.0
    %6957 = vmatprep.subr.mxu0 0.0
    %6958 = vmatpush1.msra.mxu0 0.0
    %6959 = vmatprep.subr.mxu0 0.0
    %6960 = vmatpush1.msra.mxu0 0.0
    %6961 = vmatprep.subr.mxu0 0.0
    %6962 = vmatpush1.msra.mxu0 0.0
    %6963 = vmatprep.subr.mxu0 0.0
    %6964 = vmatpush1.msra.mxu0 0.0
    %6965 = vmatprep.subr.mxu0 0.0
    %6966 = vmatpush1.msra.mxu0 0.0
    %6967 = vmatprep.subr.mxu0 0.0
    %6968 = vmatpush1.msra.mxu0 0.0
    %6969 = vmatprep.subr.mxu0 0.0
    %6970 = vmatpush1.msra.mxu0 0.0
    %6971 = vmatprep.subr.mxu0 0.0
    %6972 = vmatpush1.msra.mxu0 0.0
    %6973 = vmatprep.subr.mxu0 0.0
    %6974 = vmatpush1.msra.mxu0 0.0
    %6975 = vmatprep.subr.mxu0 0.0
    %6976 = vmatpush1.msra.mxu0 0.0
    %6977 = vmatprep.subr.mxu0 0.0
    %6978 = vmatpush1.msra.mxu0 0.0
    %6979 = vmatprep.subr.mxu0 0.0
    %6980 = vmatpush1.msra.mxu0 0.0
    %6981 = vmatprep.subr.mxu0 0.0
    %6982 = vmatpush1.msra.mxu0 0.0
    %6983 = vmatprep.subr.mxu0 0.0
    %6984 = vmatpush1.msra.mxu0 0.0
    %6985 = vmatprep.mubr.f32.mxu0 0.0
    %6986 = vmatmul.mubr.f32.gmra.mrb[0].mxu0 %v6849
    %v6987 = vpop.f32.mrb[0].mxu0
    %v6988 = vadd.f32 %v3442, %v6987
    %v6989 = vpop.f32.mrb[0].mxu0
    %6990 = vdwg.mxu0
    %6991 = vmatprep.subr.mxu0 0.0
    %6992 = vmatpush1.msra.mxu0 %v3515
    %6993 = vmatprep.subr.mxu0 0.0
    %6994 = vmatpush1.msra.mxu0 %v3516
    %6995 = vmatprep.subr.mxu0 0.0
    %6996 = vmatpush1.msra.mxu0 %v3517
    %6997 = vmatprep.subr.mxu0 0.0
    %6998 = vmatpush1.msra.mxu0 %v3518
    %6999 = vmatprep.subr.mxu0 0.0
    %7000 = vmatpush1.msra.mxu0 %v3519
    %7001 = vmatprep.subr.mxu0 0.0
    %7002 = vmatpush1.msra.mxu0 %v3520
    %7003 = vmatprep.subr.mxu0 0.0
    %7004 = vmatpush1.msra.mxu0 %v3521
    %7005 = vmatprep.subr.mxu0 0.0
    %7006 = vmatpush1.msra.mxu0 %v3522
    %7007 = vmatprep.subr.mxu0 0.0
    %7008 = vmatpush1.msra.mxu0 0.0
    %7009 = vmatprep.subr.mxu0 0.0
    %7010 = vmatpush1.msra.mxu0 0.0
    %7011 = vmatprep.subr.mxu0 0.0
    %7012 = vmatpush1.msra.mxu0 0.0
    %7013 = vmatprep.subr.mxu0 0.0
    %7014 = vmatpush1.msra.mxu0 0.0
    %7015 = vmatprep.subr.mxu0 0.0
    %7016 = vmatpush1.msra.mxu0 0.0
    %7017 = vmatprep.subr.mxu0 0.0
    %7018 = vmatpush1.msra.mxu0 0.0
    %7019 = vmatprep.subr.mxu0 0.0
    %7020 = vmatpush1.msra.mxu0 0.0
    %7021 = vmatprep.subr.mxu0 0.0
    %7022 = vmatpush1.msra.mxu0 0.0
    %7023 = vmatprep.subr.mxu0 0.0
    %7024 = vmatpush1.msra.mxu0 0.0
    %7025 = vmatprep.subr.mxu0 0.0
    %7026 = vmatpush1.msra.mxu0 0.0
    %7027 = vmatprep.subr.mxu0 0.0
    %7028 = vmatpush1.msra.mxu0 0.0
    %7029 = vmatprep.subr.mxu0 0.0
    %7030 = vmatpush1.msra.mxu0 0.0
    %7031 = vmatprep.subr.mxu0 0.0
    %7032 = vmatpush1.msra.mxu0 0.0
    %7033 = vmatprep.subr.mxu0 0.0
    %7034 = vmatpush1.msra.mxu0 0.0
    %7035 = vmatprep.subr.mxu0 0.0
    %7036 = vmatpush1.msra.mxu0 0.0
    %7037 = vmatprep.subr.mxu0 0.0
    %7038 = vmatpush1.msra.mxu0 0.0
    %7039 = vmatprep.subr.mxu0 0.0
    %7040 = vmatpush1.msra.mxu0 0.0
    %7041 = vmatprep.subr.mxu0 0.0
    %7042 = vmatpush1.msra.mxu0 0.0
    %7043 = vmatprep.subr.mxu0 0.0
    %7044 = vmatpush1.msra.mxu0 0.0
    %7045 = vmatprep.subr.mxu0 0.0
    %7046 = vmatpush1.msra.mxu0 0.0
    %7047 = vmatprep.subr.mxu0 0.0
    %7048 = vmatpush1.msra.mxu0 0.0
    %7049 = vmatprep.subr.mxu0 0.0
    %7050 = vmatpush1.msra.mxu0 0.0
    %7051 = vmatprep.subr.mxu0 0.0
    %7052 = vmatpush1.msra.mxu0 0.0
    %7053 = vmatprep.subr.mxu0 0.0
    %7054 = vmatpush1.msra.mxu0 0.0
    %7055 = vmatprep.mubr.f32.mxu0 0.0
    %7056 = vmatmul.mubr.f32.gmra.mrb[0].mxu0 %v6849
    %v7057 = vpop.f32.mrb[0].mxu0
    %v7058 = vadd.f32 %v3527, %v7057
    %v7059 = vpop.f32.mrb[0].mxu0
    %7060 = vdwg.mxu0
    %v7061 = vadd.f32 %v6705, %v6918
    %v7062 = vxor.u32 %v7061, 2147483648
    %v7063 = vmul.f32 %v7062, 1.442695
    %v7064 = vpow.pop %v7063
    %v7065 = vadd.f32 %v7064, 1.0
    %v7066 = vrcp.pop %v7065
    %v7067 = vmul.f32 1.0, %v7066
    %v7068 = vadd.f32 %v6775, %v6988
    %v7069 = vxor.u32 %v7068, 2147483648
    %v7070 = vmul.f32 %v7069, 1.442695
    %v7071 = vpow.pop %v7070
    %v7072 = vadd.f32 %v7071, 1.0
    %v7073 = vrcp.pop %v7072
    %v7074 = vmul.f32 1.0, %v7073
    %v7075 = vmul.f32 %v7067, %v7058
    %v7076 = vadd.f32 %v6845, %v7075
    %v7077 = vtanh.pop %v7076
    %v7078 = vsub.f32 1.0, %v7074
    %v7079 = vmul.f32 %v7078, %v7077
    %v7080 = vmul.f32 %v7074, %v6388
    %v7081 = vadd.f32 %v7079, %v7080
    %v7082 = vrot.slane %v1859, 6
    %v7084 = vrot.slane %v2630, 5
    %v7086 = vsel %vm2799, %v7082, %v7084
    %v7087 = vrot.slane %v1936, 6
    %v7089 = vrot.slane %v2704, 5
    %v7091 = vsel %vm2799, %v7087, %v7089
    %v7092 = vrot.slane %v2013, 6
    %v7094 = vrot.slane %v2778, 5
    %v7096 = vsel %vm2799, %v7092, %v7094
    %7097 = vmatprep.subr.mxu0 0.0
    %7098 = vmatpush1.msra.mxu0 %v2809
    %7099 = vmatprep.subr.mxu0 0.0
    %7100 = vmatpush1.msra.mxu0 %v2810
    %7101 = vmatprep.subr.mxu0 0.0
    %7102 = vmatpush1.msra.mxu0 %v2811
    %7103 = vmatprep.subr.mxu0 0.0
    %7104 = vmatpush1.msra.mxu0 %v2812
    %7105 = vmatprep.subr.mxu0 0.0
    %7106 = vmatpush1.msra.mxu0 %v2813
    %7107 = vmatprep.subr.mxu0 0.0
    %7108 = vmatpush1.msra.mxu0 %v2814
    %7109 = vmatprep.subr.mxu0 0.0
    %7110 = vmatpush1.msra.mxu0 %v2815
    %7111 = vmatprep.subr.mxu0 0.0
    %7112 = vmatpush1.msra.mxu0 %v2816
    %7113 = vmatprep.subr.mxu0 0.0
    %7114 = vmatpush1.msra.mxu0 0.0
    %7115 = vmatprep.subr.mxu0 0.0
    %7116 = vmatpush1.msra.mxu0 0.0
    %7117 = vmatprep.subr.mxu0 0.0
    %7118 = vmatpush1.msra.mxu0 0.0
    %7119 = vmatprep.subr.mxu0 0.0
    %7120 = vmatpush1.msra.mxu0 0.0
    %7121 = vmatprep.subr.mxu0 0.0
    %7122 = vmatpush1.msra.mxu0 0.0
    %7123 = vmatprep.subr.mxu0 0.0
    %7124 = vmatpush1.msra.mxu0 0.0
    %7125 = vmatprep.subr.mxu0 0.0
    %7126 = vmatpush1.msra.mxu0 0.0
    %7127 = vmatprep.subr.mxu0 0.0
    %7128 = vmatpush1.msra.mxu0 0.0
    %7129 = vmatprep.subr.mxu0 0.0
    %7130 = vmatpush1.msra.mxu0 0.0
    %7131 = vmatprep.subr.mxu0 0.0
    %7132 = vmatpush1.msra.mxu0 0.0
    %7133 = vmatprep.subr.mxu0 0.0
    %7134 = vmatpush1.msra.mxu0 0.0
    %7135 = vmatprep.subr.mxu0 0.0
    %7136 = vmatpush1.msra.mxu0 0.0
    %7137 = vmatprep.subr.mxu0 0.0
    %7138 = vmatpush1.msra.mxu0 0.0
    %7139 = vmatprep.subr.mxu0 0.0
    %7140 = vmatpush1.msra.mxu0 0.0
    %7141 = vmatprep.subr.mxu0 0.0
    %7142 = vmatpush1.msra.mxu0 0.0
    %7143 = vmatprep.subr.mxu0 0.0
    %7144 = vmatpush1.msra.mxu0 0.0
    %7145 = vmatprep.subr.mxu0 0.0
    %7146 = vmatpush1.msra.mxu0 0.0
    %7147 = vmatprep.subr.mxu0 0.0
    %7148 = vmatpush1.msra.mxu0 0.0
    %7149 = vmatprep.subr.mxu0 0.0
    %7150 = vmatpush1.msra.mxu0 0.0
    %7151 = vmatprep.subr.mxu0 0.0
    %7152 = vmatpush1.msra.mxu0 0.0
    %7153 = vmatprep.subr.mxu0 0.0
    %7154 = vmatpush1.msra.mxu0 0.0
    %7155 = vmatprep.subr.mxu0 0.0
    %7156 = vmatpush1.msra.mxu0 0.0
    %7157 = vmatprep.subr.mxu0 0.0
    %7158 = vmatpush1.msra.mxu0 0.0
    %7159 = vmatprep.subr.mxu0 0.0
    %7160 = vmatpush1.msra.mxu0 0.0
    %7161 = vmatprep.mubr.f32.mxu0 0.0
    %7162 = vmatmul.mubr.f32.gmra.mrb[0].mxu0 %v6636
    %v7163 = vpop.f32.mrb[0].mxu0
    %v7164 = vadd.f32 %v2821, %v7163
    %v7165 = vpop.f32.mrb[0].mxu0
    %7166 = vdwg.mxu0
    %7167 = vmatprep.subr.mxu0 0.0
    %7168 = vmatpush1.msra.mxu0 %v2898
    %7169 = vmatprep.subr.mxu0 0.0
    %7170 = vmatpush1.msra.mxu0 %v2899
    %7171 = vmatprep.subr.mxu0 0.0
    %7172 = vmatpush1.msra.mxu0 %v2900
    %7173 = vmatprep.subr.mxu0 0.0
    %7174 = vmatpush1.msra.mxu0 %v2901
    %7175 = vmatprep.subr.mxu0 0.0
    %7176 = vmatpush1.msra.mxu0 %v2902
    %7177 = vmatprep.subr.mxu0 0.0
    %7178 = vmatpush1.msra.mxu0 %v2903
    %7179 = vmatprep.subr.mxu0 0.0
    %7180 = vmatpush1.msra.mxu0 %v2904
    %7181 = vmatprep.subr.mxu0 0.0
    %7182 = vmatpush1.msra.mxu0 %v2905
    %7183 = vmatprep.subr.mxu0 0.0
    %7184 = vmatpush1.msra.mxu0 0.0
    %7185 = vmatprep.subr.mxu0 0.0
    %7186 = vmatpush1.msra.mxu0 0.0
    %7187 = vmatprep.subr.mxu0 0.0
    %7188 = vmatpush1.msra.mxu0 0.0
    %7189 = vmatprep.subr.mxu0 0.0
    %7190 = vmatpush1.msra.mxu0 0.0
    %7191 = vmatprep.subr.mxu0 0.0
    %7192 = vmatpush1.msra.mxu0 0.0
    %7193 = vmatprep.subr.mxu0 0.0
    %7194 = vmatpush1.msra.mxu0 0.0
    %7195 = vmatprep.subr.mxu0 0.0
    %7196 = vmatpush1.msra.mxu0 0.0
    %7197 = vmatprep.subr.mxu0 0.0
    %7198 = vmatpush1.msra.mxu0 0.0
    %7199 = vmatprep.subr.mxu0 0.0
    %7200 = vmatpush1.msra.mxu0 0.0
    %7201 = vmatprep.subr.mxu0 0.0
    %7202 = vmatpush1.msra.mxu0 0.0
    %7203 = vmatprep.subr.mxu0 0.0
    %7204 = vmatpush1.msra.mxu0 0.0
    %7205 = vmatprep.subr.mxu0 0.0
    %7206 = vmatpush1.msra.mxu0 0.0
    %7207 = vmatprep.subr.mxu0 0.0
    %7208 = vmatpush1.msra.mxu0 0.0
    %7209 = vmatprep.subr.mxu0 0.0
    %7210 = vmatpush1.msra.mxu0 0.0
    %7211 = vmatprep.subr.mxu0 0.0
    %7212 = vmatpush1.msra.mxu0 0.0
    %7213 = vmatprep.subr.mxu0 0.0
    %7214 = vmatpush1.msra.mxu0 0.0
    %7215 = vmatprep.subr.mxu0 0.0
    %7216 = vmatpush1.msra.mxu0 0.0
    %7217 = vmatprep.subr.mxu0 0.0
    %7218 = vmatpush1.msra.mxu0 0.0
    %7219 = vmatprep.subr.mxu0 0.0
    %7220 = vmatpush1.msra.mxu0 0.0
    %7221 = vmatprep.subr.mxu0 0.0
    %7222 = vmatpush1.msra.mxu0 0.0
    %7223 = vmatprep.subr.mxu0 0.0
    %7224 = vmatpush1.msra.mxu0 0.0
    %7225 = vmatprep.subr.mxu0 0.0
    %7226 = vmatpush1.msra.mxu0 0.0
    %7227 = vmatprep.subr.mxu0 0.0
    %7228 = vmatpush1.msra.mxu0 0.0
    %7229 = vmatprep.subr.mxu0 0.0
    %7230 = vmatpush1.msra.mxu0 0.0
    %7231 = vmatprep.mubr.f32.mxu0 0.0
    %7232 = vmatmul.mubr.f32.gmra.mrb[0].mxu0 %v6636
    %v7233 = vpop.f32.mrb[0].mxu0
    %v7234 = vadd.f32 %v2910, %v7233
    %v7235 = vpop.f32.mrb[0].mxu0
    %7236 = vdwg.mxu0
    %7237 = vmatprep.subr.mxu0 0.0
    %7238 = vmatpush1.msra.mxu0 %v2983
    %7239 = vmatprep.subr.mxu0 0.0
    %7240 = vmatpush1.msra.mxu0 %v2984
    %7241 = vmatprep.subr.mxu0 0.0
    %7242 = vmatpush1.msra.mxu0 %v2985
    %7243 = vmatprep.subr.mxu0 0.0
    %7244 = vmatpush1.msra.mxu0 %v2986
    %7245 = vmatprep.subr.mxu0 0.0
    %7246 = vmatpush1.msra.mxu0 %v2987
    %7247 = vmatprep.subr.mxu0 0.0
    %7248 = vmatpush1.msra.mxu0 %v2988
    %7249 = vmatprep.subr.mxu0 0.0
    %7250 = vmatpush1.msra.mxu0 %v2989
    %7251 = vmatprep.subr.mxu0 0.0
    %7252 = vmatpush1.msra.mxu0 %v2990
    %7253 = vmatprep.subr.mxu0 0.0
    %7254 = vmatpush1.msra.mxu0 0.0
    %7255 = vmatprep.subr.mxu0 0.0
    %7256 = vmatpush1.msra.mxu0 0.0
    %7257 = vmatprep.subr.mxu0 0.0
    %7258 = vmatpush1.msra.mxu0 0.0
    %7259 = vmatprep.subr.mxu0 0.0
    %7260 = vmatpush1.msra.mxu0 0.0
    %7261 = vmatprep.subr.mxu0 0.0
    %7262 = vmatpush1.msra.mxu0 0.0
    %7263 = vmatprep.subr.mxu0 0.0
    %7264 = vmatpush1.msra.mxu0 0.0
    %7265 = vmatprep.subr.mxu0 0.0
    %7266 = vmatpush1.msra.mxu0 0.0
    %7267 = vmatprep.subr.mxu0 0.0
    %7268 = vmatpush1.msra.mxu0 0.0
    %7269 = vmatprep.subr.mxu0 0.0
    %7270 = vmatpush1.msra.mxu0 0.0
    %7271 = vmatprep.subr.mxu0 0.0
    %7272 = vmatpush1.msra.mxu0 0.0
    %7273 = vmatprep.subr.mxu0 0.0
    %7274 = vmatpush1.msra.mxu0 0.0
    %7275 = vmatprep.subr.mxu0 0.0
    %7276 = vmatpush1.msra.mxu0 0.0
    %7277 = vmatprep.subr.mxu0 0.0
    %7278 = vmatpush1.msra.mxu0 0.0
    %7279 = vmatprep.subr.mxu0 0.0
    %7280 = vmatpush1.msra.mxu0 0.0
    %7281 = vmatprep.subr.mxu0 0.0
    %7282 = vmatpush1.msra.mxu0 0.0
    %7283 = vmatprep.subr.mxu0 0.0
    %7284 = vmatpush1.msra.mxu0 0.0
    %7285 = vmatprep.subr.mxu0 0.0
    %7286 = vmatpush1.msra.mxu0 0.0
    %7287 = vmatprep.subr.mxu0 0.0
    %7288 = vmatpush1.msra.mxu0 0.0
    %7289 = vmatprep.subr.mxu0 0.0
    %7290 = vmatpush1.msra.mxu0 0.0
    %7291 = vmatprep.subr.mxu0 0.0
    %7292 = vmatpush1.msra.mxu0 0.0
    %7293 = vmatprep.subr.mxu0 0.0
    %7294 = vmatpush1.msra.mxu0 0.0
    %7295 = vmatprep.subr.mxu0 0.0
    %7296 = vmatpush1.msra.mxu0 0.0
    %7297 = vmatprep.subr.mxu0 0.0
    %7298 = vmatpush1.msra.mxu0 0.0
    %7299 = vmatprep.subr.mxu0 0.0
    %7300 = vmatpush1.msra.mxu0 0.0
    %7301 = vmatprep.mubr.f32.mxu0 0.0
    %7302 = vmatmul.mubr.f32.gmra.mrb[0].mxu0 %v6636
    %v7303 = vpop.f32.mrb[0].mxu0
    %v7304 = vadd.f32 %v2995, %v7303
    %v7305 = vpop.f32.mrb[0].mxu0
    %7306 = vdwg.mxu0
    %v7307 = vadd.f32 %v7086, %v7164
    %v7308 = vxor.u32 %v7307, 2147483648
    %v7309 = vmul.f32 %v7308, 1.442695
    %v7310 = vpow.pop %v7309
    %v7311 = vadd.f32 %v7310, 1.0
    %v7312 = vrcp.pop %v7311
    %v7313 = vmul.f32 1.0, %v7312
    %v7314 = vadd.f32 %v7091, %v7234
    %v7315 = vxor.u32 %v7314, 2147483648
    %v7316 = vmul.f32 %v7315, 1.442695
    %v7317 = vpow.pop %v7316
    %v7318 = vadd.f32 %v7317, 1.0
    %v7319 = vrcp.pop %v7318
    %v7320 = vmul.f32 1.0, %v7319
    %v7321 = vmul.f32 %v7313, %v7304
    %v7322 = vadd.f32 %v7096, %v7321
    %v7323 = vtanh.pop %v7322
    %v7324 = vsub.f32 1.0, %v7320
    %v7325 = vmul.f32 %v7324, %v7323
    %v7326 = vmul.f32 %v7320, %v6634
    %v7327 = vadd.f32 %v7325, %v7326
    %v7329 = vsel %vm2823, %v7327, 0
    %7331 = vmatprep.subr.mxu0 0.0
    %7332 = vmatpush1.msra.mxu0 %v3088
    %7333 = vmatprep.subr.mxu0 0.0
    %7334 = vmatpush1.msra.mxu0 %v3089
    %7335 = vmatprep.subr.mxu0 0.0
    %7336 = vmatpush1.msra.mxu0 %v3090
    %7337 = vmatprep.subr.mxu0 0.0
    %7338 = vmatpush1.msra.mxu0 %v3091
    %7339 = vmatprep.subr.mxu0 0.0
    %7340 = vmatpush1.msra.mxu0 %v3092
    %7341 = vmatprep.subr.mxu0 0.0
    %7342 = vmatpush1.msra.mxu0 %v3093
    %7343 = vmatprep.subr.mxu0 0.0
    %7344 = vmatpush1.msra.mxu0 %v3094
    %7345 = vmatprep.subr.mxu0 0.0
    %7346 = vmatpush1.msra.mxu0 %v3095
    %7347 = vmatprep.subr.mxu0 0.0
    %7348 = vmatpush1.msra.mxu0 0.0
    %7349 = vmatprep.subr.mxu0 0.0
    %7350 = vmatpush1.msra.mxu0 0.0
    %7351 = vmatprep.subr.mxu0 0.0
    %7352 = vmatpush1.msra.mxu0 0.0
    %7353 = vmatprep.subr.mxu0 0.0
    %7354 = vmatpush1.msra.mxu0 0.0
    %7355 = vmatprep.subr.mxu0 0.0
    %7356 = vmatpush1.msra.mxu0 0.0
    %7357 = vmatprep.subr.mxu0 0.0
    %7358 = vmatpush1.msra.mxu0 0.0
    %7359 = vmatprep.subr.mxu0 0.0
    %7360 = vmatpush1.msra.mxu0 0.0
    %7361 = vmatprep.subr.mxu0 0.0
    %7362 = vmatpush1.msra.mxu0 0.0
    %7363 = vmatprep.subr.mxu0 0.0
    %7364 = vmatpush1.msra.mxu0 0.0
    %7365 = vmatprep.subr.mxu0 0.0
    %7366 = vmatpush1.msra.mxu0 0.0
    %7367 = vmatprep.subr.mxu0 0.0
    %7368 = vmatpush1.msra.mxu0 0.0
    %7369 = vmatprep.subr.mxu0 0.0
    %7370 = vmatpush1.msra.mxu0 0.0
    %7371 = vmatprep.subr.mxu0 0.0
    %7372 = vmatpush1.msra.mxu0 0.0
    %7373 = vmatprep.subr.mxu0 0.0
    %7374 = vmatpush1.msra.mxu0 0.0
    %7375 = vmatprep.subr.mxu0 0.0
    %7376 = vmatpush1.msra.mxu0 0.0
    %7377 = vmatprep.subr.mxu0 0.0
    %7378 = vmatpush1.msra.mxu0 0.0
    %7379 = vmatprep.subr.mxu0 0.0
    %7380 = vmatpush1.msra.mxu0 0.0
    %7381 = vmatprep.subr.mxu0 0.0
    %7382 = vmatpush1.msra.mxu0 0.0
    %7383 = vmatprep.subr.mxu0 0.0
    %7384 = vmatpush1.msra.mxu0 0.0
    %7385 = vmatprep.subr.mxu0 0.0
    %7386 = vmatpush1.msra.mxu0 0.0
    %7387 = vmatprep.subr.mxu0 0.0
    %7388 = vmatpush1.msra.mxu0 0.0
    %7389 = vmatprep.subr.mxu0 0.0
    %7390 = vmatpush1.msra.mxu0 0.0
    %7391 = vmatprep.subr.mxu0 0.0
    %7392 = vmatpush1.msra.mxu0 0.0
    %7393 = vmatprep.subr.mxu0 0.0
    %7394 = vmatpush1.msra.mxu0 0.0
    %7395 = vmatprep.mubr.f32.mxu0 0.0
    %7396 = vmatmul.mubr.f32.gmra.mrb[0].mxu0 %v7329
    %v7397 = vpop.f32.mrb[0].mxu0
    %v7398 = vadd.f32 %v3100, %v7397
    %v7399 = vpop.f32.mrb[0].mxu0
    %7400 = vdwg.mxu0
    %7401 = vmatprep.subr.mxu0 0.0
    %7402 = vmatpush1.msra.mxu0 %v3176
    %7403 = vmatprep.subr.mxu0 0.0
    %7404 = vmatpush1.msra.mxu0 %v3177
    %7405 = vmatprep.subr.mxu0 0.0
    %7406 = vmatpush1.msra.mxu0 %v3178
    %7407 = vmatprep.subr.mxu0 0.0
    %7408 = vmatpush1.msra.mxu0 %v3179
    %7409 = vmatprep.subr.mxu0 0.0
    %7410 = vmatpush1.msra.mxu0 %v3180
    %7411 = vmatprep.subr.mxu0 0.0
    %7412 = vmatpush1.msra.mxu0 %v3181
    %7413 = vmatprep.subr.mxu0 0.0
    %7414 = vmatpush1.msra.mxu0 %v3182
    %7415 = vmatprep.subr.mxu0 0.0
    %7416 = vmatpush1.msra.mxu0 %v3183
    %7417 = vmatprep.subr.mxu0 0.0
    %7418 = vmatpush1.msra.mxu0 0.0
    %7419 = vmatprep.subr.mxu0 0.0
    %7420 = vmatpush1.msra.mxu0 0.0
    %7421 = vmatprep.subr.mxu0 0.0
    %7422 = vmatpush1.msra.mxu0 0.0
    %7423 = vmatprep.subr.mxu0 0.0
    %7424 = vmatpush1.msra.mxu0 0.0
    %7425 = vmatprep.subr.mxu0 0.0
    %7426 = vmatpush1.msra.mxu0 0.0
    %7427 = vmatprep.subr.mxu0 0.0
    %7428 = vmatpush1.msra.mxu0 0.0
    %7429 = vmatprep.subr.mxu0 0.0
    %7430 = vmatpush1.msra.mxu0 0.0
    %7431 = vmatprep.subr.mxu0 0.0
    %7432 = vmatpush1.msra.mxu0 0.0
    %7433 = vmatprep.subr.mxu0 0.0
    %7434 = vmatpush1.msra.mxu0 0.0
    %7435 = vmatprep.subr.mxu0 0.0
    %7436 = vmatpush1.msra.mxu0 0.0
    %7437 = vmatprep.subr.mxu0 0.0
    %7438 = vmatpush1.msra.mxu0 0.0
    %7439 = vmatprep.subr.mxu0 0.0
    %7440 = vmatpush1.msra.mxu0 0.0
    %7441 = vmatprep.subr.mxu0 0.0
    %7442 = vmatpush1.msra.mxu0 0.0
    %7443 = vmatprep.subr.mxu0 0.0
    %7444 = vmatpush1.msra.mxu0 0.0
    %7445 = vmatprep.subr.mxu0 0.0
    %7446 = vmatpush1.msra.mxu0 0.0
    %7447 = vmatprep.subr.mxu0 0.0
    %7448 = vmatpush1.msra.mxu0 0.0
    %7449 = vmatprep.subr.mxu0 0.0
    %7450 = vmatpush1.msra.mxu0 0.0
    %7451 = vmatprep.subr.mxu0 0.0
    %7452 = vmatpush1.msra.mxu0 0.0
    %7453 = vmatprep.subr.mxu0 0.0
    %7454 = vmatpush1.msra.mxu0 0.0
    %7455 = vmatprep.subr.mxu0 0.0
    %7456 = vmatpush1.msra.mxu0 0.0
    %7457 = vmatprep.subr.mxu0 0.0
    %7458 = vmatpush1.msra.mxu0 0.0
    %7459 = vmatprep.subr.mxu0 0.0
    %7460 = vmatpush1.msra.mxu0 0.0
    %7461 = vmatprep.subr.mxu0 0.0
    %7462 = vmatpush1.msra.mxu0 0.0
    %7463 = vmatprep.subr.mxu0 0.0
    %7464 = vmatpush1.msra.mxu0 0.0
    %7465 = vmatprep.mubr.f32.mxu0 0.0
    %7466 = vmatmul.mubr.f32.gmra.mrb[0].mxu0 %v7329
    %v7467 = vpop.f32.mrb[0].mxu0
    %v7468 = vadd.f32 %v3188, %v7467
    %v7469 = vpop.f32.mrb[0].mxu0
    %7470 = vdwg.mxu0
    %7471 = vmatprep.subr.mxu0 0.0
    %7472 = vmatpush1.msra.mxu0 %v3261
    %7473 = vmatprep.subr.mxu0 0.0
    %7474 = vmatpush1.msra.mxu0 %v3262
    %7475 = vmatprep.subr.mxu0 0.0
    %7476 = vmatpush1.msra.mxu0 %v3263
    %7477 = vmatprep.subr.mxu0 0.0
    %7478 = vmatpush1.msra.mxu0 %v3264
    %7479 = vmatprep.subr.mxu0 0.0
    %7480 = vmatpush1.msra.mxu0 %v3265
    %7481 = vmatprep.subr.mxu0 0.0
    %7482 = vmatpush1.msra.mxu0 %v3266
    %7483 = vmatprep.subr.mxu0 0.0
    %7484 = vmatpush1.msra.mxu0 %v3267
    %7485 = vmatprep.subr.mxu0 0.0
    %7486 = vmatpush1.msra.mxu0 %v3268
    %7487 = vmatprep.subr.mxu0 0.0
    %7488 = vmatpush1.msra.mxu0 0.0
    %7489 = vmatprep.subr.mxu0 0.0
    %7490 = vmatpush1.msra.mxu0 0.0
    %7491 = vmatprep.subr.mxu0 0.0
    %7492 = vmatpush1.msra.mxu0 0.0
    %7493 = vmatprep.subr.mxu0 0.0
    %7494 = vmatpush1.msra.mxu0 0.0
    %7495 = vmatprep.subr.mxu0 0.0
    %7496 = vmatpush1.msra.mxu0 0.0
    %7497 = vmatprep.subr.mxu0 0.0
    %7498 = vmatpush1.msra.mxu0 0.0
    %7499 = vmatprep.subr.mxu0 0.0
    %7500 = vmatpush1.msra.mxu0 0.0
    %7501 = vmatprep.subr.mxu0 0.0
    %7502 = vmatpush1.msra.mxu0 0.0
    %7503 = vmatprep.subr.mxu0 0.0
    %7504 = vmatpush1.msra.mxu0 0.0
    %7505 = vmatprep.subr.mxu0 0.0
    %7506 = vmatpush1.msra.mxu0 0.0
    %7507 = vmatprep.subr.mxu0 0.0
    %7508 = vmatpush1.msra.mxu0 0.0
    %7509 = vmatprep.subr.mxu0 0.0
    %7510 = vmatpush1.msra.mxu0 0.0
    %7511 = vmatprep.subr.mxu0 0.0
    %7512 = vmatpush1.msra.mxu0 0.0
    %7513 = vmatprep.subr.mxu0 0.0
    %7514 = vmatpush1.msra.mxu0 0.0
    %7515 = vmatprep.subr.mxu0 0.0
    %7516 = vmatpush1.msra.mxu0 0.0
    %7517 = vmatprep.subr.mxu0 0.0
    %7518 = vmatpush1.msra.mxu0 0.0
    %7519 = vmatprep.subr.mxu0 0.0
    %7520 = vmatpush1.msra.mxu0 0.0
    %7521 = vmatprep.subr.mxu0 0.0
    %7522 = vmatpush1.msra.mxu0 0.0
    %7523 = vmatprep.subr.mxu0 0.0
    %7524 = vmatpush1.msra.mxu0 0.0
    %7525 = vmatprep.subr.mxu0 0.0
    %7526 = vmatpush1.msra.mxu0 0.0
    %7527 = vmatprep.subr.mxu0 0.0
    %7528 = vmatpush1.msra.mxu0 0.0
    %7529 = vmatprep.subr.mxu0 0.0
    %7530 = vmatpush1.msra.mxu0 0.0
    %7531 = vmatprep.subr.mxu0 0.0
    %7532 = vmatpush1.msra.mxu0 0.0
    %7533 = vmatprep.subr.mxu0 0.0
    %7534 = vmatpush1.msra.mxu0 0.0
    %7535 = vmatprep.mubr.f32.mxu0 0.0
    %7536 = vmatmul.mubr.f32.gmra.mrb[0].mxu0 %v7329
    %v7537 = vpop.f32.mrb[0].mxu0
    %v7538 = vadd.f32 %v3273, %v7537
    %v7539 = vpop.f32.mrb[0].mxu0
    %7540 = vdwg.mxu0
    %v7542 = vsel %vm2823, %v7081, 0
    %7544 = vmatprep.subr.mxu0 0.0
    %7545 = vmatpush1.msra.mxu0 %v3345
    %7546 = vmatprep.subr.mxu0 0.0
    %7547 = vmatpush1.msra.mxu0 %v3346
    %7548 = vmatprep.subr.mxu0 0.0
    %7549 = vmatpush1.msra.mxu0 %v3347
    %7550 = vmatprep.subr.mxu0 0.0
    %7551 = vmatpush1.msra.mxu0 %v3348
    %7552 = vmatprep.subr.mxu0 0.0
    %7553 = vmatpush1.msra.mxu0 %v3349
    %7554 = vmatprep.subr.mxu0 0.0
    %7555 = vmatpush1.msra.mxu0 %v3350
    %7556 = vmatprep.subr.mxu0 0.0
    %7557 = vmatpush1.msra.mxu0 %v3351
    %7558 = vmatprep.subr.mxu0 0.0
    %7559 = vmatpush1.msra.mxu0 %v3352
    %7560 = vmatprep.subr.mxu0 0.0
    %7561 = vmatpush1.msra.mxu0 0.0
    %7562 = vmatprep.subr.mxu0 0.0
    %7563 = vmatpush1.msra.mxu0 0.0
    %7564 = vmatprep.subr.mxu0 0.0
    %7565 = vmatpush1.msra.mxu0 0.0
    %7566 = vmatprep.subr.mxu0 0.0
    %7567 = vmatpush1.msra.mxu0 0.0
    %7568 = vmatprep.subr.mxu0 0.0
    %7569 = vmatpush1.msra.mxu0 0.0
    %7570 = vmatprep.subr.mxu0 0.0
    %7571 = vmatpush1.msra.mxu0 0.0
    %7572 = vmatprep.subr.mxu0 0.0
    %7573 = vmatpush1.msra.mxu0 0.0
    %7574 = vmatprep.subr.mxu0 0.0
    %7575 = vmatpush1.msra.mxu0 0.0
    %7576 = vmatprep.subr.mxu0 0.0
    %7577 = vmatpush1.msra.mxu0 0.0
    %7578 = vmatprep.subr.mxu0 0.0
    %7579 = vmatpush1.msra.mxu0 0.0
    %7580 = vmatprep.subr.mxu0 0.0
    %7581 = vmatpush1.msra.mxu0 0.0
    %7582 = vmatprep.subr.mxu0 0.0
    %7583 = vmatpush1.msra.mxu0 0.0
    %7584 = vmatprep.subr.mxu0 0.0
    %7585 = vmatpush1.msra.mxu0 0.0
    %7586 = vmatprep.subr.mxu0 0.0
    %7587 = vmatpush1.msra.mxu0 0.0
    %7588 = vmatprep.subr.mxu0 0.0
    %7589 = vmatpush1.msra.mxu0 0.0
    %7590 = vmatprep.subr.mxu0 0.0
    %7591 = vmatpush1.msra.mxu0 0.0
    %7592 = vmatprep.subr.mxu0 0.0
    %7593 = vmatpush1.msra.mxu0 0.0
    %7594 = vmatprep.subr.mxu0 0.0
    %7595 = vmatpush1.msra.mxu0 0.0
    %7596 = vmatprep.subr.mxu0 0.0
    %7597 = vmatpush1.msra.mxu0 0.0
    %7598 = vmatprep.subr.mxu0 0.0
    %7599 = vmatpush1.msra.mxu0 0.0
    %7600 = vmatprep.subr.mxu0 0.0
    %7601 = vmatpush1.msra.mxu0 0.0
    %7602 = vmatprep.subr.mxu0 0.0
    %7603 = vmatpush1.msra.mxu0 0.0
    %7604 = vmatprep.subr.mxu0 0.0
    %7605 = vmatpush1.msra.mxu0 0.0
    %7606 = vmatprep.subr.mxu0 0.0
    %7607 = vmatpush1.msra.mxu0 0.0
    %7608 = vmatprep.mubr.f32.mxu0 0.0
    %7609 = vmatmul.mubr.f32.gmra.mrb[0].mxu0 %v7542
    %v7610 = vpop.f32.mrb[0].mxu0
    %v7611 = vadd.f32 %v3357, %v7610
    %v7612 = vpop.f32.mrb[0].mxu0
    %7613 = vdwg.mxu0
    %7614 = vmatprep.subr.mxu0 0.0
    %7615 = vmatpush1.msra.mxu0 %v3430
    %7616 = vmatprep.subr.mxu0 0.0
    %7617 = vmatpush1.msra.mxu0 %v3431
    %7618 = vmatprep.subr.mxu0 0.0
    %7619 = vmatpush1.msra.mxu0 %v3432
    %7620 = vmatprep.subr.mxu0 0.0
    %7621 = vmatpush1.msra.mxu0 %v3433
    %7622 = vmatprep.subr.mxu0 0.0
    %7623 = vmatpush1.msra.mxu0 %v3434
    %7624 = vmatprep.subr.mxu0 0.0
    %7625 = vmatpush1.msra.mxu0 %v3435
    %7626 = vmatprep.subr.mxu0 0.0
    %7627 = vmatpush1.msra.mxu0 %v3436
    %7628 = vmatprep.subr.mxu0 0.0
    %7629 = vmatpush1.msra.mxu0 %v3437
    %7630 = vmatprep.subr.mxu0 0.0
    %7631 = vmatpush1.msra.mxu0 0.0
    %7632 = vmatprep.subr.mxu0 0.0
    %7633 = vmatpush1.msra.mxu0 0.0
    %7634 = vmatprep.subr.mxu0 0.0
    %7635 = vmatpush1.msra.mxu0 0.0
    %7636 = vmatprep.subr.mxu0 0.0
    %7637 = vmatpush1.msra.mxu0 0.0
    %7638 = vmatprep.subr.mxu0 0.0
    %7639 = vmatpush1.msra.mxu0 0.0
    %7640 = vmatprep.subr.mxu0 0.0
    %7641 = vmatpush1.msra.mxu0 0.0
    %7642 = vmatprep.subr.mxu0 0.0
    %7643 = vmatpush1.msra.mxu0 0.0
    %7644 = vmatprep.subr.mxu0 0.0
    %7645 = vmatpush1.msra.mxu0 0.0
    %7646 = vmatprep.subr.mxu0 0.0
    %7647 = vmatpush1.msra.mxu0 0.0
    %7648 = vmatprep.subr.mxu0 0.0
    %7649 = vmatpush1.msra.mxu0 0.0
    %7650 = vmatprep.subr.mxu0 0.0
    %7651 = vmatpush1.msra.mxu0 0.0
    %7652 = vmatprep.subr.mxu0 0.0
    %7653 = vmatpush1.msra.mxu0 0.0
    %7654 = vmatprep.subr.mxu0 0.0
    %7655 = vmatpush1.msra.mxu0 0.0
    %7656 = vmatprep.subr.mxu0 0.0
    %7657 = vmatpush1.msra.mxu0 0.0
    %7658 = vmatprep.subr.mxu0 0.0
    %7659 = vmatpush1.msra.mxu0 0.0
    %7660 = vmatprep.subr.mxu0 0.0
    %7661 = vmatpush1.msra.mxu0 0.0
    %7662 = vmatprep.subr.mxu0 0.0
    %7663 = vmatpush1.msra.mxu0 0.0
    %7664 = vmatprep.subr.mxu0 0.0
    %7665 = vmatpush1.msra.mxu0 0.0
    %7666 = vmatprep.subr.mxu0 0.0
    %7667 = vmatpush1.msra.mxu0 0.0
    %7668 = vmatprep.subr.mxu0 0.0
    %7669 = vmatpush1.msra.mxu0 0.0
    %7670 = vmatprep.subr.mxu0 0.0
    %7671 = vmatpush1.msra.mxu0 0.0
    %7672 = vmatprep.subr.mxu0 0.0
    %7673 = vmatpush1.msra.mxu0 0.0
    %7674 = vmatprep.subr.mxu0 0.0
    %7675 = vmatpush1.msra.mxu0 0.0
    %7676 = vmatprep.subr.mxu0 0.0
    %7677 = vmatpush1.msra.mxu0 0.0
    %7678 = vmatprep.mubr.f32.mxu0 0.0
    %7679 = vmatmul.mubr.f32.gmra.mrb[0].mxu0 %v7542
    %v7680 = vpop.f32.mrb[0].mxu0
    %v7681 = vadd.f32 %v3442, %v7680
    %v7682 = vpop.f32.mrb[0].mxu0
    %7683 = vdwg.mxu0
    %7684 = vmatprep.subr.mxu0 0.0
    %7685 = vmatpush1.msra.mxu0 %v3515
    %7686 = vmatprep.subr.mxu0 0.0
    %7687 = vmatpush1.msra.mxu0 %v3516
    %7688 = vmatprep.subr.mxu0 0.0
    %7689 = vmatpush1.msra.mxu0 %v3517
    %7690 = vmatprep.subr.mxu0 0.0
    %7691 = vmatpush1.msra.mxu0 %v3518
    %7692 = vmatprep.subr.mxu0 0.0
    %7693 = vmatpush1.msra.mxu0 %v3519
    %7694 = vmatprep.subr.mxu0 0.0
    %7695 = vmatpush1.msra.mxu0 %v3520
    %7696 = vmatprep.subr.mxu0 0.0
    %7697 = vmatpush1.msra.mxu0 %v3521
    %7698 = vmatprep.subr.mxu0 0.0
    %7699 = vmatpush1.msra.mxu0 %v3522
    %7700 = vmatprep.subr.mxu0 0.0
    %7701 = vmatpush1.msra.mxu0 0.0
    %7702 = vmatprep.subr.mxu0 0.0
    %7703 = vmatpush1.msra.mxu0 0.0
    %7704 = vmatprep.subr.mxu0 0.0
    %7705 = vmatpush1.msra.mxu0 0.0
    %7706 = vmatprep.subr.mxu0 0.0
    %7707 = vmatpush1.msra.mxu0 0.0
    %7708 = vmatprep.subr.mxu0 0.0
    %7709 = vmatpush1.msra.mxu0 0.0
    %7710 = vmatprep.subr.mxu0 0.0
    %7711 = vmatpush1.msra.mxu0 0.0
    %7712 = vmatprep.subr.mxu0 0.0
    %7713 = vmatpush1.msra.mxu0 0.0
    %7714 = vmatprep.subr.mxu0 0.0
    %7715 = vmatpush1.msra.mxu0 0.0
    %7716 = vmatprep.subr.mxu0 0.0
    %7717 = vmatpush1.msra.mxu0 0.0
    %7718 = vmatprep.subr.mxu0 0.0
    %7719 = vmatpush1.msra.mxu0 0.0
    %7720 = vmatprep.subr.mxu0 0.0
    %7721 = vmatpush1.msra.mxu0 0.0
    %7722 = vmatprep.subr.mxu0 0.0
    %7723 = vmatpush1.msra.mxu0 0.0
    %7724 = vmatprep.subr.mxu0 0.0
    %7725 = vmatpush1.msra.mxu0 0.0
    %7726 = vmatprep.subr.mxu0 0.0
    %7727 = vmatpush1.msra.mxu0 0.0
    %7728 = vmatprep.subr.mxu0 0.0
    %7729 = vmatpush1.msra.mxu0 0.0
    %7730 = vmatprep.subr.mxu0 0.0
    %7731 = vmatpush1.msra.mxu0 0.0
    %7732 = vmatprep.subr.mxu0 0.0
    %7733 = vmatpush1.msra.mxu0 0.0
    %7734 = vmatprep.subr.mxu0 0.0
    %7735 = vmatpush1.msra.mxu0 0.0
    %7736 = vmatprep.subr.mxu0 0.0
    %7737 = vmatpush1.msra.mxu0 0.0
    %7738 = vmatprep.subr.mxu0 0.0
    %7739 = vmatpush1.msra.mxu0 0.0
    %7740 = vmatprep.subr.mxu0 0.0
    %7741 = vmatpush1.msra.mxu0 0.0
    %7742 = vmatprep.subr.mxu0 0.0
    %7743 = vmatpush1.msra.mxu0 0.0
    %7744 = vmatprep.subr.mxu0 0.0
    %7745 = vmatpush1.msra.mxu0 0.0
    %7746 = vmatprep.subr.mxu0 0.0
    %7747 = vmatpush1.msra.mxu0 0.0
    %7748 = vmatprep.mubr.f32.mxu0 0.0
    %7749 = vmatmul.mubr.f32.gmra.mrb[0].mxu0 %v7542
    %v7750 = vpop.f32.mrb[0].mxu0
    %v7751 = vadd.f32 %v3527, %v7750
    %v7752 = vpop.f32.mrb[0].mxu0
    %7753 = vdwg.mxu0
    %v7754 = vadd.f32 %v7398, %v7611
    %v7755 = vxor.u32 %v7754, 2147483648
    %v7756 = vmul.f32 %v7755, 1.442695
    %v7757 = vpow.pop %v7756
    %v7758 = vadd.f32 %v7757, 1.0
    %v7759 = vrcp.pop %v7758
    %v7760 = vmul.f32 1.0, %v7759
    %v7761 = vadd.f32 %v7468, %v7681
    %v7762 = vxor.u32 %v7761, 2147483648
    %v7763 = vmul.f32 %v7762, 1.442695
    %v7764 = vpow.pop %v7763
    %v7765 = vadd.f32 %v7764, 1.0
    %v7766 = vrcp.pop %v7765
    %v7767 = vmul.f32 1.0, %v7766
    %v7768 = vmul.f32 %v7760, %v7751
    %v7769 = vadd.f32 %v7538, %v7768
    %v7770 = vtanh.pop %v7769
    %v7771 = vsub.f32 1.0, %v7767
    %v7772 = vmul.f32 %v7771, %v7770
    %v7773 = vmul.f32 %v7767, %v7081
    %v7774 = vadd.f32 %v7772, %v7773
    %v7775 = vrot.slane %v1859, 7
    %v7777 = vrot.slane %v2630, 6
    %v7779 = vsel %vm2799, %v7775, %v7777
    %v7780 = vrot.slane %v1936, 7
    %v7782 = vrot.slane %v2704, 6
    %v7784 = vsel %vm2799, %v7780, %v7782
    %v7785 = vrot.slane %v2013, 7
    %v7787 = vrot.slane %v2778, 6
    %v7789 = vsel %vm2799, %v7785, %v7787
    %7790 = vmatprep.subr.mxu0 0.0
    %7791 = vmatpush1.msra.mxu0 %v2809
    %7792 = vmatprep.subr.mxu0 0.0
    %7793 = vmatpush1.msra.mxu0 %v2810
    %7794 = vmatprep.subr.mxu0 0.0
    %7795 = vmatpush1.msra.mxu0 %v2811
    %7796 = vmatprep.subr.mxu0 0.0
    %7797 = vmatpush1.msra.mxu0 %v2812
    %7798 = vmatprep.subr.mxu0 0.0
    %7799 = vmatpush1.msra.mxu0 %v2813
    %7800 = vmatprep.subr.mxu0 0.0
    %7801 = vmatpush1.msra.mxu0 %v2814
    %7802 = vmatprep.subr.mxu0 0.0
    %7803 = vmatpush1.msra.mxu0 %v2815
    %7804 = vmatprep.subr.mxu0 0.0
    %7805 = vmatpush1.msra.mxu0 %v2816
    %7806 = vmatprep.subr.mxu0 0.0
    %7807 = vmatpush1.msra.mxu0 0.0
    %7808 = vmatprep.subr.mxu0 0.0
    %7809 = vmatpush1.msra.mxu0 0.0
    %7810 = vmatprep.subr.mxu0 0.0
    %7811 = vmatpush1.msra.mxu0 0.0
    %7812 = vmatprep.subr.mxu0 0.0
    %7813 = vmatpush1.msra.mxu0 0.0
    %7814 = vmatprep.subr.mxu0 0.0
    %7815 = vmatpush1.msra.mxu0 0.0
    %7816 = vmatprep.subr.mxu0 0.0
    %7817 = vmatpush1.msra.mxu0 0.0
    %7818 = vmatprep.subr.mxu0 0.0
    %7819 = vmatpush1.msra.mxu0 0.0
    %7820 = vmatprep.subr.mxu0 0.0
    %7821 = vmatpush1.msra.mxu0 0.0
    %7822 = vmatprep.subr.mxu0 0.0
    %7823 = vmatpush1.msra.mxu0 0.0
    %7824 = vmatprep.subr.mxu0 0.0
    %7825 = vmatpush1.msra.mxu0 0.0
    %7826 = vmatprep.subr.mxu0 0.0
    %7827 = vmatpush1.msra.mxu0 0.0
    %7828 = vmatprep.subr.mxu0 0.0
    %7829 = vmatpush1.msra.mxu0 0.0
    %7830 = vmatprep.subr.mxu0 0.0
    %7831 = vmatpush1.msra.mxu0 0.0
    %7832 = vmatprep.subr.mxu0 0.0
    %7833 = vmatpush1.msra.mxu0 0.0
    %7834 = vmatprep.subr.mxu0 0.0
    %7835 = vmatpush1.msra.mxu0 0.0
    %7836 = vmatprep.subr.mxu0 0.0
    %7837 = vmatpush1.msra.mxu0 0.0
    %7838 = vmatprep.subr.mxu0 0.0
    %7839 = vmatpush1.msra.mxu0 0.0
    %7840 = vmatprep.subr.mxu0 0.0
    %7841 = vmatpush1.msra.mxu0 0.0
    %7842 = vmatprep.subr.mxu0 0.0
    %7843 = vmatpush1.msra.mxu0 0.0
    %7844 = vmatprep.subr.mxu0 0.0
    %7845 = vmatpush1.msra.mxu0 0.0
    %7846 = vmatprep.subr.mxu0 0.0
    %7847 = vmatpush1.msra.mxu0 0.0
    %7848 = vmatprep.subr.mxu0 0.0
    %7849 = vmatpush1.msra.mxu0 0.0
    %7850 = vmatprep.subr.mxu0 0.0
    %7851 = vmatpush1.msra.mxu0 0.0
    %7852 = vmatprep.subr.mxu0 0.0
    %7853 = vmatpush1.msra.mxu0 0.0
    %7854 = vmatprep.mubr.f32.mxu0 0.0
    %7855 = vmatmul.mubr.f32.gmra.mrb[0].mxu0 %v7329
    %v7856 = vpop.f32.mrb[0].mxu0
    %v7857 = vadd.f32 %v2821, %v7856
    %v7858 = vpop.f32.mrb[0].mxu0
    %7859 = vdwg.mxu0
    %7860 = vmatprep.subr.mxu0 0.0
    %7861 = vmatpush1.msra.mxu0 %v2898
    %7862 = vmatprep.subr.mxu0 0.0
    %7863 = vmatpush1.msra.mxu0 %v2899
    %7864 = vmatprep.subr.mxu0 0.0
    %7865 = vmatpush1.msra.mxu0 %v2900
    %7866 = vmatprep.subr.mxu0 0.0
    %7867 = vmatpush1.msra.mxu0 %v2901
    %7868 = vmatprep.subr.mxu0 0.0
    %7869 = vmatpush1.msra.mxu0 %v2902
    %7870 = vmatprep.subr.mxu0 0.0
    %7871 = vmatpush1.msra.mxu0 %v2903
    %7872 = vmatprep.subr.mxu0 0.0
    %7873 = vmatpush1.msra.mxu0 %v2904
    %7874 = vmatprep.subr.mxu0 0.0
    %7875 = vmatpush1.msra.mxu0 %v2905
    %7876 = vmatprep.subr.mxu0 0.0
    %7877 = vmatpush1.msra.mxu0 0.0
    %7878 = vmatprep.subr.mxu0 0.0
    %7879 = vmatpush1.msra.mxu0 0.0
    %7880 = vmatprep.subr.mxu0 0.0
    %7881 = vmatpush1.msra.mxu0 0.0
    %7882 = vmatprep.subr.mxu0 0.0
    %7883 = vmatpush1.msra.mxu0 0.0
    %7884 = vmatprep.subr.mxu0 0.0
    %7885 = vmatpush1.msra.mxu0 0.0
    %7886 = vmatprep.subr.mxu0 0.0
    %7887 = vmatpush1.msra.mxu0 0.0
    %7888 = vmatprep.subr.mxu0 0.0
    %7889 = vmatpush1.msra.mxu0 0.0
    %7890 = vmatprep.subr.mxu0 0.0
    %7891 = vmatpush1.msra.mxu0 0.0
    %7892 = vmatprep.subr.mxu0 0.0
    %7893 = vmatpush1.msra.mxu0 0.0
    %7894 = vmatprep.subr.mxu0 0.0
    %7895 = vmatpush1.msra.mxu0 0.0
    %7896 = vmatprep.subr.mxu0 0.0
    %7897 = vmatpush1.msra.mxu0 0.0
    %7898 = vmatprep.subr.mxu0 0.0
    %7899 = vmatpush1.msra.mxu0 0.0
    %7900 = vmatprep.subr.mxu0 0.0
    %7901 = vmatpush1.msra.mxu0 0.0
    %7902 = vmatprep.subr.mxu0 0.0
    %7903 = vmatpush1.msra.mxu0 0.0
    %7904 = vmatprep.subr.mxu0 0.0
    %7905 = vmatpush1.msra.mxu0 0.0
    %7906 = vmatprep.subr.mxu0 0.0
    %7907 = vmatpush1.msra.mxu0 0.0
    %7908 = vmatprep.subr.mxu0 0.0
    %7909 = vmatpush1.msra.mxu0 0.0
    %7910 = vmatprep.subr.mxu0 0.0
    %7911 = vmatpush1.msra.mxu0 0.0
    %7912 = vmatprep.subr.mxu0 0.0
    %7913 = vmatpush1.msra.mxu0 0.0
    %7914 = vmatprep.subr.mxu0 0.0
    %7915 = vmatpush1.msra.mxu0 0.0
    %7916 = vmatprep.subr.mxu0 0.0
    %7917 = vmatpush1.msra.mxu0 0.0
    %7918 = vmatprep.subr.mxu0 0.0
    %7919 = vmatpush1.msra.mxu0 0.0
    %7920 = vmatprep.subr.mxu0 0.0
    %7921 = vmatpush1.msra.mxu0 0.0
    %7922 = vmatprep.subr.mxu0 0.0
    %7923 = vmatpush1.msra.mxu0 0.0
    %7924 = vmatprep.mubr.f32.mxu0 0.0
    %7925 = vmatmul.mubr.f32.gmra.mrb[0].mxu0 %v7329
    %v7926 = vpop.f32.mrb[0].mxu0
    %v7927 = vadd.f32 %v2910, %v7926
    %v7928 = vpop.f32.mrb[0].mxu0
    %7929 = vdwg.mxu0
    %7930 = vmatprep.subr.mxu0 0.0
    %7931 = vmatpush1.msra.mxu0 %v2983
    %7932 = vmatprep.subr.mxu0 0.0
    %7933 = vmatpush1.msra.mxu0 %v2984
    %7934 = vmatprep.subr.mxu0 0.0
    %7935 = vmatpush1.msra.mxu0 %v2985
    %7936 = vmatprep.subr.mxu0 0.0
    %7937 = vmatpush1.msra.mxu0 %v2986
    %7938 = vmatprep.subr.mxu0 0.0
    %7939 = vmatpush1.msra.mxu0 %v2987
    %7940 = vmatprep.subr.mxu0 0.0
    %7941 = vmatpush1.msra.mxu0 %v2988
    %7942 = vmatprep.subr.mxu0 0.0
    %7943 = vmatpush1.msra.mxu0 %v2989
    %7944 = vmatprep.subr.mxu0 0.0
    %7945 = vmatpush1.msra.mxu0 %v2990
    %7946 = vmatprep.subr.mxu0 0.0
    %7947 = vmatpush1.msra.mxu0 0.0
    %7948 = vmatprep.subr.mxu0 0.0
    %7949 = vmatpush1.msra.mxu0 0.0
    %7950 = vmatprep.subr.mxu0 0.0
    %7951 = vmatpush1.msra.mxu0 0.0
    %7952 = vmatprep.subr.mxu0 0.0
    %7953 = vmatpush1.msra.mxu0 0.0
    %7954 = vmatprep.subr.mxu0 0.0
    %7955 = vmatpush1.msra.mxu0 0.0
    %7956 = vmatprep.subr.mxu0 0.0
    %7957 = vmatpush1.msra.mxu0 0.0
    %7958 = vmatprep.subr.mxu0 0.0
    %7959 = vmatpush1.msra.mxu0 0.0
    %7960 = vmatprep.subr.mxu0 0.0
    %7961 = vmatpush1.msra.mxu0 0.0
    %7962 = vmatprep.subr.mxu0 0.0
    %7963 = vmatpush1.msra.mxu0 0.0
    %7964 = vmatprep.subr.mxu0 0.0
    %7965 = vmatpush1.msra.mxu0 0.0
    %7966 = vmatprep.subr.mxu0 0.0
    %7967 = vmatpush1.msra.mxu0 0.0
    %7968 = vmatprep.subr.mxu0 0.0
    %7969 = vmatpush1.msra.mxu0 0.0
    %7970 = vmatprep.subr.mxu0 0.0
    %7971 = vmatpush1.msra.mxu0 0.0
    %7972 = vmatprep.subr.mxu0 0.0
    %7973 = vmatpush1.msra.mxu0 0.0
    %7974 = vmatprep.subr.mxu0 0.0
    %7975 = vmatpush1.msra.mxu0 0.0
    %7976 = vmatprep.subr.mxu0 0.0
    %7977 = vmatpush1.msra.mxu0 0.0
    %7978 = vmatprep.subr.mxu0 0.0
    %7979 = vmatpush1.msra.mxu0 0.0
    %7980 = vmatprep.subr.mxu0 0.0
    %7981 = vmatpush1.msra.mxu0 0.0
    %7982 = vmatprep.subr.mxu0 0.0
    %7983 = vmatpush1.msra.mxu0 0.0
    %7984 = vmatprep.subr.mxu0 0.0
    %7985 = vmatpush1.msra.mxu0 0.0
    %7986 = vmatprep.subr.mxu0 0.0
    %7987 = vmatpush1.msra.mxu0 0.0
    %7988 = vmatprep.subr.mxu0 0.0
    %7989 = vmatpush1.msra.mxu0 0.0
    %7990 = vmatprep.subr.mxu0 0.0
    %7991 = vmatpush1.msra.mxu0 0.0
    %7992 = vmatprep.subr.mxu0 0.0
    %7993 = vmatpush1.msra.mxu0 0.0
    %7994 = vmatprep.mubr.f32.mxu0 0.0
    %7995 = vmatmul.mubr.f32.gmra.mrb[0].mxu0 %v7329
    %v7996 = vpop.f32.mrb[0].mxu0
    %v7997 = vadd.f32 %v2995, %v7996
    %v7998 = vpop.f32.mrb[0].mxu0
    %7999 = vdwg.mxu0
    %v8000 = vadd.f32 %v7779, %v7857
    %v8001 = vxor.u32 %v8000, 2147483648
    %v8002 = vmul.f32 %v8001, 1.442695
    %v8003 = vpow.pop %v8002
    %v8004 = vadd.f32 %v8003, 1.0
    %v8005 = vrcp.pop %v8004
    %v8006 = vmul.f32 1.0, %v8005
    %v8007 = vadd.f32 %v7784, %v7927
    %v8008 = vxor.u32 %v8007, 2147483648
    %v8009 = vmul.f32 %v8008, 1.442695
    %v8010 = vpow.pop %v8009
    %v8011 = vadd.f32 %v8010, 1.0
    %v8012 = vrcp.pop %v8011
    %v8013 = vmul.f32 1.0, %v8012
    %v8014 = vmul.f32 %v8006, %v7997
    %v8015 = vadd.f32 %v7789, %v8014
    %v8016 = vtanh.pop %v8015
    %v8017 = vsub.f32 1.0, %v8013
    %v8018 = vmul.f32 %v8017, %v8016
    %v8019 = vmul.f32 %v8013, %v7327
    %v8020 = vadd.f32 %v8018, %v8019
    %v8022 = vsel %vm2823, %v8020, 0
    %8024 = vmatprep.subr.mxu0 0.0
    %8025 = vmatpush1.msra.mxu0 %v3088
    %8026 = vmatprep.subr.mxu0 0.0
    %8027 = vmatpush1.msra.mxu0 %v3089
    %8028 = vmatprep.subr.mxu0 0.0
    %8029 = vmatpush1.msra.mxu0 %v3090
    %8030 = vmatprep.subr.mxu0 0.0
    %8031 = vmatpush1.msra.mxu0 %v3091
    %8032 = vmatprep.subr.mxu0 0.0
    %8033 = vmatpush1.msra.mxu0 %v3092
    %8034 = vmatprep.subr.mxu0 0.0
    %8035 = vmatpush1.msra.mxu0 %v3093
    %8036 = vmatprep.subr.mxu0 0.0
    %8037 = vmatpush1.msra.mxu0 %v3094
    %8038 = vmatprep.subr.mxu0 0.0
    %8039 = vmatpush1.msra.mxu0 %v3095
    %8040 = vmatprep.subr.mxu0 0.0
    %8041 = vmatpush1.msra.mxu0 0.0
    %8042 = vmatprep.subr.mxu0 0.0
    %8043 = vmatpush1.msra.mxu0 0.0
    %8044 = vmatprep.subr.mxu0 0.0
    %8045 = vmatpush1.msra.mxu0 0.0
    %8046 = vmatprep.subr.mxu0 0.0
    %8047 = vmatpush1.msra.mxu0 0.0
    %8048 = vmatprep.subr.mxu0 0.0
    %8049 = vmatpush1.msra.mxu0 0.0
    %8050 = vmatprep.subr.mxu0 0.0
    %8051 = vmatpush1.msra.mxu0 0.0
    %8052 = vmatprep.subr.mxu0 0.0
    %8053 = vmatpush1.msra.mxu0 0.0
    %8054 = vmatprep.subr.mxu0 0.0
    %8055 = vmatpush1.msra.mxu0 0.0
    %8056 = vmatprep.subr.mxu0 0.0
    %8057 = vmatpush1.msra.mxu0 0.0
    %8058 = vmatprep.subr.mxu0 0.0
    %8059 = vmatpush1.msra.mxu0 0.0
    %8060 = vmatprep.subr.mxu0 0.0
    %8061 = vmatpush1.msra.mxu0 0.0
    %8062 = vmatprep.subr.mxu0 0.0
    %8063 = vmatpush1.msra.mxu0 0.0
    %8064 = vmatprep.subr.mxu0 0.0
    %8065 = vmatpush1.msra.mxu0 0.0
    %8066 = vmatprep.subr.mxu0 0.0
    %8067 = vmatpush1.msra.mxu0 0.0
    %8068 = vmatprep.subr.mxu0 0.0
    %8069 = vmatpush1.msra.mxu0 0.0
    %8070 = vmatprep.subr.mxu0 0.0
    %8071 = vmatpush1.msra.mxu0 0.0
    %8072 = vmatprep.subr.mxu0 0.0
    %8073 = vmatpush1.msra.mxu0 0.0
    %8074 = vmatprep.subr.mxu0 0.0
    %8075 = vmatpush1.msra.mxu0 0.0
    %8076 = vmatprep.subr.mxu0 0.0
    %8077 = vmatpush1.msra.mxu0 0.0
    %8078 = vmatprep.subr.mxu0 0.0
    %8079 = vmatpush1.msra.mxu0 0.0
    %8080 = vmatprep.subr.mxu0 0.0
    %8081 = vmatpush1.msra.mxu0 0.0
    %8082 = vmatprep.subr.mxu0 0.0
    %8083 = vmatpush1.msra.mxu0 0.0
    %8084 = vmatprep.subr.mxu0 0.0
    %8085 = vmatpush1.msra.mxu0 0.0
    %8086 = vmatprep.subr.mxu0 0.0
    %8087 = vmatpush1.msra.mxu0 0.0
    %8088 = vmatprep.mubr.f32.mxu0 0.0
    %8089 = vmatmul.mubr.f32.gmra.mrb[0].mxu0 %v8022
    %v8090 = vpop.f32.mrb[0].mxu0
    %v8091 = vadd.f32 %v3100, %v8090
    %v8092 = vpop.f32.mrb[0].mxu0
    %8093 = vdwg.mxu0
    %8094 = vmatprep.subr.mxu0 0.0
    %8095 = vmatpush1.msra.mxu0 %v3176
    %8096 = vmatprep.subr.mxu0 0.0
    %8097 = vmatpush1.msra.mxu0 %v3177
    %8098 = vmatprep.subr.mxu0 0.0
    %8099 = vmatpush1.msra.mxu0 %v3178
    %8100 = vmatprep.subr.mxu0 0.0
    %8101 = vmatpush1.msra.mxu0 %v3179
    %8102 = vmatprep.subr.mxu0 0.0
    %8103 = vmatpush1.msra.mxu0 %v3180
    %8104 = vmatprep.subr.mxu0 0.0
    %8105 = vmatpush1.msra.mxu0 %v3181
    %8106 = vmatprep.subr.mxu0 0.0
    %8107 = vmatpush1.msra.mxu0 %v3182
    %8108 = vmatprep.subr.mxu0 0.0
    %8109 = vmatpush1.msra.mxu0 %v3183
    %8110 = vmatprep.subr.mxu0 0.0
    %8111 = vmatpush1.msra.mxu0 0.0
    %8112 = vmatprep.subr.mxu0 0.0
    %8113 = vmatpush1.msra.mxu0 0.0
    %8114 = vmatprep.subr.mxu0 0.0
    %8115 = vmatpush1.msra.mxu0 0.0
    %8116 = vmatprep.subr.mxu0 0.0
    %8117 = vmatpush1.msra.mxu0 0.0
    %8118 = vmatprep.subr.mxu0 0.0
    %8119 = vmatpush1.msra.mxu0 0.0
    %8120 = vmatprep.subr.mxu0 0.0
    %8121 = vmatpush1.msra.mxu0 0.0
    %8122 = vmatprep.subr.mxu0 0.0
    %8123 = vmatpush1.msra.mxu0 0.0
    %8124 = vmatprep.subr.mxu0 0.0
    %8125 = vmatpush1.msra.mxu0 0.0
    %8126 = vmatprep.subr.mxu0 0.0
    %8127 = vmatpush1.msra.mxu0 0.0
    %8128 = vmatprep.subr.mxu0 0.0
    %8129 = vmatpush1.msra.mxu0 0.0
    %8130 = vmatprep.subr.mxu0 0.0
    %8131 = vmatpush1.msra.mxu0 0.0
    %8132 = vmatprep.subr.mxu0 0.0
    %8133 = vmatpush1.msra.mxu0 0.0
    %8134 = vmatprep.subr.mxu0 0.0
    %8135 = vmatpush1.msra.mxu0 0.0
    %8136 = vmatprep.subr.mxu0 0.0
    %8137 = vmatpush1.msra.mxu0 0.0
    %8138 = vmatprep.subr.mxu0 0.0
    %8139 = vmatpush1.msra.mxu0 0.0
    %8140 = vmatprep.subr.mxu0 0.0
    %8141 = vmatpush1.msra.mxu0 0.0
    %8142 = vmatprep.subr.mxu0 0.0
    %8143 = vmatpush1.msra.mxu0 0.0
    %8144 = vmatprep.subr.mxu0 0.0
    %8145 = vmatpush1.msra.mxu0 0.0
    %8146 = vmatprep.subr.mxu0 0.0
    %8147 = vmatpush1.msra.mxu0 0.0
    %8148 = vmatprep.subr.mxu0 0.0
    %8149 = vmatpush1.msra.mxu0 0.0
    %8150 = vmatprep.subr.mxu0 0.0
    %8151 = vmatpush1.msra.mxu0 0.0
    %8152 = vmatprep.subr.mxu0 0.0
    %8153 = vmatpush1.msra.mxu0 0.0
    %8154 = vmatprep.subr.mxu0 0.0
    %8155 = vmatpush1.msra.mxu0 0.0
    %8156 = vmatprep.subr.mxu0 0.0
    %8157 = vmatpush1.msra.mxu0 0.0
    %8158 = vmatprep.mubr.f32.mxu0 0.0
    %8159 = vmatmul.mubr.f32.gmra.mrb[0].mxu0 %v8022
    %v8160 = vpop.f32.mrb[0].mxu0
    %v8161 = vadd.f32 %v3188, %v8160
    %v8162 = vpop.f32.mrb[0].mxu0
    %8163 = vdwg.mxu0
    %8164 = vmatprep.subr.mxu0 0.0
    %8165 = vmatpush1.msra.mxu0 %v3261
    %8166 = vmatprep.subr.mxu0 0.0
    %8167 = vmatpush1.msra.mxu0 %v3262
    %8168 = vmatprep.subr.mxu0 0.0
    %8169 = vmatpush1.msra.mxu0 %v3263
    %8170 = vmatprep.subr.mxu0 0.0
    %8171 = vmatpush1.msra.mxu0 %v3264
    %8172 = vmatprep.subr.mxu0 0.0
    %8173 = vmatpush1.msra.mxu0 %v3265
    %8174 = vmatprep.subr.mxu0 0.0
    %8175 = vmatpush1.msra.mxu0 %v3266
    %8176 = vmatprep.subr.mxu0 0.0
    %8177 = vmatpush1.msra.mxu0 %v3267
    %8178 = vmatprep.subr.mxu0 0.0
    %8179 = vmatpush1.msra.mxu0 %v3268
    %8180 = vmatprep.subr.mxu0 0.0
    %8181 = vmatpush1.msra.mxu0 0.0
    %8182 = vmatprep.subr.mxu0 0.0
    %8183 = vmatpush1.msra.mxu0 0.0
    %8184 = vmatprep.subr.mxu0 0.0
    %8185 = vmatpush1.msra.mxu0 0.0
    %8186 = vmatprep.subr.mxu0 0.0
    %8187 = vmatpush1.msra.mxu0 0.0
    %8188 = vmatprep.subr.mxu0 0.0
    %8189 = vmatpush1.msra.mxu0 0.0
    %8190 = vmatprep.subr.mxu0 0.0
    %8191 = vmatpush1.msra.mxu0 0.0
    %8192 = vmatprep.subr.mxu0 0.0
    %8193 = vmatpush1.msra.mxu0 0.0
    %8194 = vmatprep.subr.mxu0 0.0
    %8195 = vmatpush1.msra.mxu0 0.0
    %8196 = vmatprep.subr.mxu0 0.0
    %8197 = vmatpush1.msra.mxu0 0.0
    %8198 = vmatprep.subr.mxu0 0.0
    %8199 = vmatpush1.msra.mxu0 0.0
    %8200 = vmatprep.subr.mxu0 0.0
    %8201 = vmatpush1.msra.mxu0 0.0
    %8202 = vmatprep.subr.mxu0 0.0
    %8203 = vmatpush1.msra.mxu0 0.0
    %8204 = vmatprep.subr.mxu0 0.0
    %8205 = vmatpush1.msra.mxu0 0.0
    %8206 = vmatprep.subr.mxu0 0.0
    %8207 = vmatpush1.msra.mxu0 0.0
    %8208 = vmatprep.subr.mxu0 0.0
    %8209 = vmatpush1.msra.mxu0 0.0
    %8210 = vmatprep.subr.mxu0 0.0
    %8211 = vmatpush1.msra.mxu0 0.0
    %8212 = vmatprep.subr.mxu0 0.0
    %8213 = vmatpush1.msra.mxu0 0.0
    %8214 = vmatprep.subr.mxu0 0.0
    %8215 = vmatpush1.msra.mxu0 0.0
    %8216 = vmatprep.subr.mxu0 0.0
    %8217 = vmatpush1.msra.mxu0 0.0
    %8218 = vmatprep.subr.mxu0 0.0
    %8219 = vmatpush1.msra.mxu0 0.0
    %8220 = vmatprep.subr.mxu0 0.0
    %8221 = vmatpush1.msra.mxu0 0.0
    %8222 = vmatprep.subr.mxu0 0.0
    %8223 = vmatpush1.msra.mxu0 0.0
    %8224 = vmatprep.subr.mxu0 0.0
    %8225 = vmatpush1.msra.mxu0 0.0
    %8226 = vmatprep.subr.mxu0 0.0
    %8227 = vmatpush1.msra.mxu0 0.0
    %8228 = vmatprep.mubr.f32.mxu0 0.0
    %8229 = vmatmul.mubr.f32.gmra.mrb[0].mxu0 %v8022
    %v8230 = vpop.f32.mrb[0].mxu0
    %v8231 = vadd.f32 %v3273, %v8230
    %v8232 = vpop.f32.mrb[0].mxu0
    %8233 = vdwg.mxu0
    %v8235 = vsel %vm2823, %v7774, 0
    %8237 = vmatprep.subr.mxu0 0.0
    %8238 = vmatpush1.msra.mxu0 %v3345
    %8239 = vmatprep.subr.mxu0 0.0
    %8240 = vmatpush1.msra.mxu0 %v3346
    %8241 = vmatprep.subr.mxu0 0.0
    %8242 = vmatpush1.msra.mxu0 %v3347
    %8243 = vmatprep.subr.mxu0 0.0
    %8244 = vmatpush1.msra.mxu0 %v3348
    %8245 = vmatprep.subr.mxu0 0.0
    %8246 = vmatpush1.msra.mxu0 %v3349
    %8247 = vmatprep.subr.mxu0 0.0
    %8248 = vmatpush1.msra.mxu0 %v3350
    %8249 = vmatprep.subr.mxu0 0.0
    %8250 = vmatpush1.msra.mxu0 %v3351
    %8251 = vmatprep.subr.mxu0 0.0
    %8252 = vmatpush1.msra.mxu0 %v3352
    %8253 = vmatprep.subr.mxu0 0.0
    %8254 = vmatpush1.msra.mxu0 0.0
    %8255 = vmatprep.subr.mxu0 0.0
    %8256 = vmatpush1.msra.mxu0 0.0
    %8257 = vmatprep.subr.mxu0 0.0
    %8258 = vmatpush1.msra.mxu0 0.0
    %8259 = vmatprep.subr.mxu0 0.0
    %8260 = vmatpush1.msra.mxu0 0.0
    %8261 = vmatprep.subr.mxu0 0.0
    %8262 = vmatpush1.msra.mxu0 0.0
    %8263 = vmatprep.subr.mxu0 0.0
    %8264 = vmatpush1.msra.mxu0 0.0
    %8265 = vmatprep.subr.mxu0 0.0
    %8266 = vmatpush1.msra.mxu0 0.0
    %8267 = vmatprep.subr.mxu0 0.0
    %8268 = vmatpush1.msra.mxu0 0.0
    %8269 = vmatprep.subr.mxu0 0.0
    %8270 = vmatpush1.msra.mxu0 0.0
    %8271 = vmatprep.subr.mxu0 0.0
    %8272 = vmatpush1.msra.mxu0 0.0
    %8273 = vmatprep.subr.mxu0 0.0
    %8274 = vmatpush1.msra.mxu0 0.0
    %8275 = vmatprep.subr.mxu0 0.0
    %8276 = vmatpush1.msra.mxu0 0.0
    %8277 = vmatprep.subr.mxu0 0.0
    %8278 = vmatpush1.msra.mxu0 0.0
    %8279 = vmatprep.subr.mxu0 0.0
    %8280 = vmatpush1.msra.mxu0 0.0
    %8281 = vmatprep.subr.mxu0 0.0
    %8282 = vmatpush1.msra.mxu0 0.0
    %8283 = vmatprep.subr.mxu0 0.0
    %8284 = vmatpush1.msra.mxu0 0.0
    %8285 = vmatprep.subr.mxu0 0.0
    %8286 = vmatpush1.msra.mxu0 0.0
    %8287 = vmatprep.subr.mxu0 0.0
    %8288 = vmatpush1.msra.mxu0 0.0
    %8289 = vmatprep.subr.mxu0 0.0
    %8290 = vmatpush1.msra.mxu0 0.0
    %8291 = vmatprep.subr.mxu0 0.0
    %8292 = vmatpush1.msra.mxu0 0.0
    %8293 = vmatprep.subr.mxu0 0.0
    %8294 = vmatpush1.msra.mxu0 0.0
    %8295 = vmatprep.subr.mxu0 0.0
    %8296 = vmatpush1.msra.mxu0 0.0
    %8297 = vmatprep.subr.mxu0 0.0
    %8298 = vmatpush1.msra.mxu0 0.0
    %8299 = vmatprep.subr.mxu0 0.0
    %8300 = vmatpush1.msra.mxu0 0.0
    %8301 = vmatprep.mubr.f32.mxu0 0.0
    %8302 = vmatmul.mubr.f32.gmra.mrb[0].mxu0 %v8235
    %v8303 = vpop.f32.mrb[0].mxu0
    %v8304 = vadd.f32 %v3357, %v8303
    %v8305 = vpop.f32.mrb[0].mxu0
    %8306 = vdwg.mxu0
    %8307 = vmatprep.subr.mxu0 0.0
    %8308 = vmatpush1.msra.mxu0 %v3430
    %8309 = vmatprep.subr.mxu0 0.0
    %8310 = vmatpush1.msra.mxu0 %v3431
    %8311 = vmatprep.subr.mxu0 0.0
    %8312 = vmatpush1.msra.mxu0 %v3432
    %8313 = vmatprep.subr.mxu0 0.0
    %8314 = vmatpush1.msra.mxu0 %v3433
    %8315 = vmatprep.subr.mxu0 0.0
    %8316 = vmatpush1.msra.mxu0 %v3434
    %8317 = vmatprep.subr.mxu0 0.0
    %8318 = vmatpush1.msra.mxu0 %v3435
    %8319 = vmatprep.subr.mxu0 0.0
    %8320 = vmatpush1.msra.mxu0 %v3436
    %8321 = vmatprep.subr.mxu0 0.0
    %8322 = vmatpush1.msra.mxu0 %v3437
    %8323 = vmatprep.subr.mxu0 0.0
    %8324 = vmatpush1.msra.mxu0 0.0
    %8325 = vmatprep.subr.mxu0 0.0
    %8326 = vmatpush1.msra.mxu0 0.0
    %8327 = vmatprep.subr.mxu0 0.0
    %8328 = vmatpush1.msra.mxu0 0.0
    %8329 = vmatprep.subr.mxu0 0.0
    %8330 = vmatpush1.msra.mxu0 0.0
    %8331 = vmatprep.subr.mxu0 0.0
    %8332 = vmatpush1.msra.mxu0 0.0
    %8333 = vmatprep.subr.mxu0 0.0
    %8334 = vmatpush1.msra.mxu0 0.0
    %8335 = vmatprep.subr.mxu0 0.0
    %8336 = vmatpush1.msra.mxu0 0.0
    %8337 = vmatprep.subr.mxu0 0.0
    %8338 = vmatpush1.msra.mxu0 0.0
    %8339 = vmatprep.subr.mxu0 0.0
    %8340 = vmatpush1.msra.mxu0 0.0
    %8341 = vmatprep.subr.mxu0 0.0
    %8342 = vmatpush1.msra.mxu0 0.0
    %8343 = vmatprep.subr.mxu0 0.0
    %8344 = vmatpush1.msra.mxu0 0.0
    %8345 = vmatprep.subr.mxu0 0.0
    %8346 = vmatpush1.msra.mxu0 0.0
    %8347 = vmatprep.subr.mxu0 0.0
    %8348 = vmatpush1.msra.mxu0 0.0
    %8349 = vmatprep.subr.mxu0 0.0
    %8350 = vmatpush1.msra.mxu0 0.0
    %8351 = vmatprep.subr.mxu0 0.0
    %8352 = vmatpush1.msra.mxu0 0.0
    %8353 = vmatprep.subr.mxu0 0.0
    %8354 = vmatpush1.msra.mxu0 0.0
    %8355 = vmatprep.subr.mxu0 0.0
    %8356 = vmatpush1.msra.mxu0 0.0
    %8357 = vmatprep.subr.mxu0 0.0
    %8358 = vmatpush1.msra.mxu0 0.0
    %8359 = vmatprep.subr.mxu0 0.0
    %8360 = vmatpush1.msra.mxu0 0.0
    %8361 = vmatprep.subr.mxu0 0.0
    %8362 = vmatpush1.msra.mxu0 0.0
    %8363 = vmatprep.subr.mxu0 0.0
    %8364 = vmatpush1.msra.mxu0 0.0
    %8365 = vmatprep.subr.mxu0 0.0
    %8366 = vmatpush1.msra.mxu0 0.0
    %8367 = vmatprep.subr.mxu0 0.0
    %8368 = vmatpush1.msra.mxu0 0.0
    %8369 = vmatprep.subr.mxu0 0.0
    %8370 = vmatpush1.msra.mxu0 0.0
    %8371 = vmatprep.mubr.f32.mxu0 0.0
    %8372 = vmatmul.mubr.f32.gmra.mrb[0].mxu0 %v8235
    %v8373 = vpop.f32.mrb[0].mxu0
    %v8374 = vadd.f32 %v3442, %v8373
    %v8375 = vpop.f32.mrb[0].mxu0
    %8376 = vdwg.mxu0
    %8377 = vmatprep.subr.mxu0 0.0
    %8378 = vmatpush1.msra.mxu0 %v3515
    %8379 = vmatprep.subr.mxu0 0.0
    %8380 = vmatpush1.msra.mxu0 %v3516
    %8381 = vmatprep.subr.mxu0 0.0
    %8382 = vmatpush1.msra.mxu0 %v3517
    %8383 = vmatprep.subr.mxu0 0.0
    %8384 = vmatpush1.msra.mxu0 %v3518
    %8385 = vmatprep.subr.mxu0 0.0
    %8386 = vmatpush1.msra.mxu0 %v3519
    %8387 = vmatprep.subr.mxu0 0.0
    %8388 = vmatpush1.msra.mxu0 %v3520
    %8389 = vmatprep.subr.mxu0 0.0
    %8390 = vmatpush1.msra.mxu0 %v3521
    %8391 = vmatprep.subr.mxu0 0.0
    %8392 = vmatpush1.msra.mxu0 %v3522
    %8393 = vmatprep.subr.mxu0 0.0
    %8394 = vmatpush1.msra.mxu0 0.0
    %8395 = vmatprep.subr.mxu0 0.0
    %8396 = vmatpush1.msra.mxu0 0.0
    %8397 = vmatprep.subr.mxu0 0.0
    %8398 = vmatpush1.msra.mxu0 0.0
    %8399 = vmatprep.subr.mxu0 0.0
    %8400 = vmatpush1.msra.mxu0 0.0
    %8401 = vmatprep.subr.mxu0 0.0
    %8402 = vmatpush1.msra.mxu0 0.0
    %8403 = vmatprep.subr.mxu0 0.0
    %8404 = vmatpush1.msra.mxu0 0.0
    %8405 = vmatprep.subr.mxu0 0.0
    %8406 = vmatpush1.msra.mxu0 0.0
    %8407 = vmatprep.subr.mxu0 0.0
    %8408 = vmatpush1.msra.mxu0 0.0
    %8409 = vmatprep.subr.mxu0 0.0
    %8410 = vmatpush1.msra.mxu0 0.0
    %8411 = vmatprep.subr.mxu0 0.0
    %8412 = vmatpush1.msra.mxu0 0.0
    %8413 = vmatprep.subr.mxu0 0.0
    %8414 = vmatpush1.msra.mxu0 0.0
    %8415 = vmatprep.subr.mxu0 0.0
    %8416 = vmatpush1.msra.mxu0 0.0
    %8417 = vmatprep.subr.mxu0 0.0
    %8418 = vmatpush1.msra.mxu0 0.0
    %8419 = vmatprep.subr.mxu0 0.0
    %8420 = vmatpush1.msra.mxu0 0.0
    %8421 = vmatprep.subr.mxu0 0.0
    %8422 = vmatpush1.msra.mxu0 0.0
    %8423 = vmatprep.subr.mxu0 0.0
    %8424 = vmatpush1.msra.mxu0 0.0
    %8425 = vmatprep.subr.mxu0 0.0
    %8426 = vmatpush1.msra.mxu0 0.0
    %8427 = vmatprep.subr.mxu0 0.0
    %8428 = vmatpush1.msra.mxu0 0.0
    %8429 = vmatprep.subr.mxu0 0.0
    %8430 = vmatpush1.msra.mxu0 0.0
    %8431 = vmatprep.subr.mxu0 0.0
    %8432 = vmatpush1.msra.mxu0 0.0
    %8433 = vmatprep.subr.mxu0 0.0
    %8434 = vmatpush1.msra.mxu0 0.0
    %8435 = vmatprep.subr.mxu0 0.0
    %8436 = vmatpush1.msra.mxu0 0.0
    %8437 = vmatprep.subr.mxu0 0.0
    %8438 = vmatpush1.msra.mxu0 0.0
    %8439 = vmatprep.subr.mxu0 0.0
    %8440 = vmatpush1.msra.mxu0 0.0
    %8441 = vmatprep.mubr.f32.mxu0 0.0
    %8442 = vmatmul.mubr.f32.gmra.mrb[0].mxu0 %v8235
    %v8443 = vpop.f32.mrb[0].mxu0
    %v8444 = vadd.f32 %v3527, %v8443
    %v8445 = vpop.f32.mrb[0].mxu0
    %8446 = vdwg.mxu0
    %v8447 = vadd.f32 %v8091, %v8304
    %v8448 = vxor.u32 %v8447, 2147483648
    %v8449 = vmul.f32 %v8448, 1.442695
    %v8450 = vpow.pop %v8449
    %v8451 = vadd.f32 %v8450, 1.0
    %v8452 = vrcp.pop %v8451
    %v8453 = vmul.f32 1.0, %v8452
    %v8454 = vadd.f32 %v8161, %v8374
    %v8455 = vxor.u32 %v8454, 2147483648
    %v8456 = vmul.f32 %v8455, 1.442695
    %v8457 = vpow.pop %v8456
    %v8458 = vadd.f32 %v8457, 1.0
    %v8459 = vrcp.pop %v8458
    %v8460 = vmul.f32 1.0, %v8459
    %v8461 = vmul.f32 %v8453, %v8444
    %v8462 = vadd.f32 %v8231, %v8461
    %v8463 = vtanh.pop %v8462
    %v8464 = vsub.f32 1.0, %v8460
    %v8465 = vmul.f32 %v8464, %v8463
    %v8466 = vmul.f32 %v8460, %v7774
    %v8467 = vadd.f32 %v8465, %v8466
    %v8468 = vrot.slane %v4309, 7
    %v8470 = vrot.slane %v5002, 6
    %v8472 = vrot.slane %v5695, 5
    %v8474 = vrot.slane %v6388, 4
    %v8476 = vrot.slane %v7081, 3
    %v8478 = vrot.slane %v7774, 2
    %v8481 = vrot.slane %v8467, 1
    %v8483 = vsel %vm2799, %v3619, %v8468
    %vm8484 = vcmask 1041408
    %v8485 = vsel %vm8484, %v8483, %v8470
    %vm8486 = vcmask 1042432
    %v8487 = vsel %vm8486, %v8485, %v8472
    %v8488 = vsel %vm1249, %v8487, %v8474
    %vm8489 = vcmask 1044480
    %v8490 = vsel %vm8489, %v8488, %v8476
    %v8491 = vsel %vm1788, %v8490, %v8478
    %vm8492 = vcmask 1046528
    %v8493 = vsel %vm8492, %v8491, %v8481
    %v8494 = vld [vmem:[#allocation19] sm:$0xff]
    %v8495 = vld [vmem:[#allocation19 + $0x8] sm:$0xff]
    %v8496 = vld [vmem:[#allocation19 + $0x10] sm:$0xff]
    %v8497 = vld [vmem:[#allocation19 + $0x18] sm:$0xff]
    %v8498 = vld [vmem:[#allocation19 + $0x20] sm:$0xff]
    %v8499 = vld [vmem:[#allocation19 + $0x28] sm:$0xff]
    %v8500 = vld [vmem:[#allocation19 + $0x30] sm:$0xff]
    %v8501 = vld [vmem:[#allocation19 + $0x38] sm:$0xff]
    %v8502 = vld [vmem:[#allocation21] sm:$0x1]
    %v8504 = vlaneseq
    %v8505 = vshrl.u32 %v8504, 7
    %v8506 = vsub.s32 0, %v8505
    %v8507 = vrot.slane %v8502, %v8506
    %v8510 = vsel %vm2823, %v8493, 0
    %8512 = vmatprep.subr.mxu0 0.0
    %8513 = vmatpush1.msra.mxu0 %v8494
    %8514 = vmatprep.subr.mxu0 0.0
    %8515 = vmatpush1.msra.mxu0 %v8495
    %8516 = vmatprep.subr.mxu0 0.0
    %8517 = vmatpush1.msra.mxu0 %v8496
    %8518 = vmatprep.subr.mxu0 0.0
    %8519 = vmatpush1.msra.mxu0 %v8497
    %8520 = vmatprep.subr.mxu0 0.0
    %8521 = vmatpush1.msra.mxu0 %v8498
    %8522 = vmatprep.subr.mxu0 0.0
    %8523 = vmatpush1.msra.mxu0 %v8499
    %8524 = vmatprep.subr.mxu0 0.0
    %8525 = vmatpush1.msra.mxu0 %v8500
    %8526 = vmatprep.subr.mxu0 0.0
    %8527 = vmatpush1.msra.mxu0 %v8501
    %8528 = vmatprep.subr.mxu0 0.0
    %8529 = vmatpush1.msra.mxu0 0.0
    %8530 = vmatprep.subr.mxu0 0.0
    %8531 = vmatpush1.msra.mxu0 0.0
    %8532 = vmatprep.subr.mxu0 0.0
    %8533 = vmatpush1.msra.mxu0 0.0
    %8534 = vmatprep.subr.mxu0 0.0
    %8535 = vmatpush1.msra.mxu0 0.0
    %8536 = vmatprep.subr.mxu0 0.0
    %8537 = vmatpush1.msra.mxu0 0.0
    %8538 = vmatprep.subr.mxu0 0.0
    %8539 = vmatpush1.msra.mxu0 0.0
    %8540 = vmatprep.subr.mxu0 0.0
    %8541 = vmatpush1.msra.mxu0 0.0
    %8542 = vmatprep.subr.mxu0 0.0
    %8543 = vmatpush1.msra.mxu0 0.0
    %8544 = vmatprep.subr.mxu0 0.0
    %8545 = vmatpush1.msra.mxu0 0.0
    %8546 = vmatprep.subr.mxu0 0.0
    %8547 = vmatpush1.msra.mxu0 0.0
    %8548 = vmatprep.subr.mxu0 0.0
    %8549 = vmatpush1.msra.mxu0 0.0
    %8550 = vmatprep.subr.mxu0 0.0
    %8551 = vmatpush1.msra.mxu0 0.0
    %8552 = vmatprep.subr.mxu0 0.0
    %8553 = vmatpush1.msra.mxu0 0.0
    %8554 = vmatprep.subr.mxu0 0.0
    %8555 = vmatpush1.msra.mxu0 0.0
    %8556 = vmatprep.subr.mxu0 0.0
    %8557 = vmatpush1.msra.mxu0 0.0
    %8558 = vmatprep.subr.mxu0 0.0
    %8559 = vmatpush1.msra.mxu0 0.0
    %8560 = vmatprep.subr.mxu0 0.0
    %8561 = vmatpush1.msra.mxu0 0.0
    %8562 = vmatprep.subr.mxu0 0.0
    %8563 = vmatpush1.msra.mxu0 0.0
    %8564 = vmatprep.subr.mxu0 0.0
    %8565 = vmatpush1.msra.mxu0 0.0
    %8566 = vmatprep.subr.mxu0 0.0
    %8567 = vmatpush1.msra.mxu0 0.0
    %8568 = vmatprep.subr.mxu0 0.0
    %8569 = vmatpush1.msra.mxu0 0.0
    %8570 = vmatprep.subr.mxu0 0.0
    %8571 = vmatpush1.msra.mxu0 0.0
    %8572 = vmatprep.subr.mxu0 0.0
    %8573 = vmatpush1.msra.mxu0 0.0
    %8574 = vmatprep.subr.mxu0 0.0
    %8575 = vmatpush1.msra.mxu0 0.0
    %8576 = vmatprep.mubr.f32.mxu0 0.0
    %8577 = vmatmul.mubr.f32.gmra.mrb[0].mxu0 %v8510
    %v8578 = vpop.f32.mrb[0].mxu0
    %v8579 = vadd.f32 %v8507, %v8578
    %v8580 = vpop.f32.mrb[0].mxu0
    %8581 = vdwg.mxu0
    %v8582 = vmax.f32 %v8579, 0.0
    %v8583 = vld [vmem:[%s35] sm:$0xff]
    %v8584 = vld [vmem:[%s35 + $0x8] sm:$0xff]
    %v8585 = vld [vmem:[%s35 + $0x10] sm:$0xff]
    %v8586 = vld [vmem:[%s35 + $0x18] sm:$0xff]
    %v8587 = vld [vmem:[%s35 + $0x20] sm:$0xff]
    %v8588 = vld [vmem:[%s35 + $0x28] sm:$0xff]
    %v8589 = vld [vmem:[%s35 + $0x30] sm:$0xff]
    %v8590 = vld [vmem:[%s35 + $0x38] sm:$0xff]
    %v8591 = vld [vmem:[#allocation22] sm:$0x1]
    %v8593 = vlaneseq
    %v8594 = vshrl.u32 %v8593, 7
    %v8595 = vsub.s32 0, %v8594
    %v8596 = vrot.slane %v8591, %v8595
    %v8599 = vsel %vm2823, %v8582, 0
    %8601 = vmatprep.subr.mxu0 0.0
    %8602 = vmatpush1.msra.mxu0 %v8583
    %8603 = vmatprep.subr.mxu0 0.0
    %8604 = vmatpush1.msra.mxu0 %v8584
    %8605 = vmatprep.subr.mxu0 0.0
    %8606 = vmatpush1.msra.mxu0 %v8585
    %8607 = vmatprep.subr.mxu0 0.0
    %8608 = vmatpush1.msra.mxu0 %v8586
    %8609 = vmatprep.subr.mxu0 0.0
    %8610 = vmatpush1.msra.mxu0 %v8587
    %8611 = vmatprep.subr.mxu0 0.0
    %8612 = vmatpush1.msra.mxu0 %v8588
    %8613 = vmatprep.subr.mxu0 0.0
    %8614 = vmatpush1.msra.mxu0 %v8589
    %8615 = vmatprep.subr.mxu0 0.0
    %8616 = vmatpush1.msra.mxu0 %v8590
    %8617 = vmatprep.subr.mxu0 0.0
    %8618 = vmatpush1.msra.mxu0 0.0
    %8619 = vmatprep.subr.mxu0 0.0
    %8620 = vmatpush1.msra.mxu0 0.0
    %8621 = vmatprep.subr.mxu0 0.0
    %8622 = vmatpush1.msra.mxu0 0.0
    %8623 = vmatprep.subr.mxu0 0.0
    %8624 = vmatpush1.msra.mxu0 0.0
    %8625 = vmatprep.subr.mxu0 0.0
    %8626 = vmatpush1.msra.mxu0 0.0
    %8627 = vmatprep.subr.mxu0 0.0
    %8628 = vmatpush1.msra.mxu0 0.0
    %8629 = vmatprep.subr.mxu0 0.0
    %8630 = vmatpush1.msra.mxu0 0.0
    %8631 = vmatprep.subr.mxu0 0.0
    %8632 = vmatpush1.msra.mxu0 0.0
    %8633 = vmatprep.subr.mxu0 0.0
    %8634 = vmatpush1.msra.mxu0 0.0
    %8635 = vmatprep.subr.mxu0 0.0
    %8636 = vmatpush1.msra.mxu0 0.0
    %8637 = vmatprep.subr.mxu0 0.0
    %8638 = vmatpush1.msra.mxu0 0.0
    %8639 = vmatprep.subr.mxu0 0.0
    %8640 = vmatpush1.msra.mxu0 0.0
    %8641 = vmatprep.subr.mxu0 0.0
    %8642 = vmatpush1.msra.mxu0 0.0
    %8643 = vmatprep.subr.mxu0 0.0
    %8644 = vmatpush1.msra.mxu0 0.0
    %8645 = vmatprep.subr.mxu0 0.0
    %8646 = vmatpush1.msra.mxu0 0.0
    %8647 = vmatprep.subr.mxu0 0.0
    %8648 = vmatpush1.msra.mxu0 0.0
    %8649 = vmatprep.subr.mxu0 0.0
    %8650 = vmatpush1.msra.mxu0 0.0
    %8651 = vmatprep.subr.mxu0 0.0
    %8652 = vmatpush1.msra.mxu0 0.0
    %8653 = vmatprep.subr.mxu0 0.0
    %8654 = vmatpush1.msra.mxu0 0.0
    %8655 = vmatprep.subr.mxu0 0.0
    %8656 = vmatpush1.msra.mxu0 0.0
    %8657 = vmatprep.subr.mxu0 0.0
    %8658 = vmatpush1.msra.mxu0 0.0
    %8659 = vmatprep.subr.mxu0 0.0
    %8660 = vmatpush1.msra.mxu0 0.0
    %8661 = vmatprep.subr.mxu0 0.0
    %8662 = vmatpush1.msra.mxu0 0.0
    %8663 = vmatprep.subr.mxu0 0.0
    %8664 = vmatpush1.msra.mxu0 0.0
    %8665 = vmatprep.mubr.f32.mxu0 0.0
    %8666 = vmatmul.mubr.f32.gmra.mrb[0].mxu0 %v8599
    %v8667 = vpop.f32.mrb[0].mxu0
    %v8668 = vadd.f32 %v8596, %v8667
    %v8669 = vpop.f32.mrb[0].mxu0
    %8670 = vdwg.mxu0
    %vm8671 = vcmask 15360
    %8672 = vst.msk [vmem:[%s53] sm:$0xff] %vm8671, %v8668
    %8674 = vrot.lane.b32.xlu0 %v8668, 126
    %v8675 = vpop.permute.xlu0 %8674
    %8677 = vst.msk [vmem:[%s55] sm:$0xff] %vm8671, %v8675
    %v8678 = vrot.slane %v3619, 1
    %v8680 = vrot.slane %v5002, 7
    %v8682 = vrot.slane %v5695, 6
    %v8684 = vrot.slane %v6388, 5
    %v8686 = vrot.slane %v7081, 4
    %v8688 = vrot.slane %v7774, 3
    %v8690 = vrot.slane %v8467, 2
    %v8692 = vsel %vm2799, %v8678, %v4309
    %v8693 = vsel %vm8484, %v8692, %v8680
    %v8694 = vsel %vm8486, %v8693, %v8682
    %v8695 = vsel %vm1249, %v8694, %v8684
    %v8696 = vsel %vm8489, %v8695, %v8686
    %v8697 = vsel %vm1788, %v8696, %v8688
    %v8698 = vsel %vm8492, %v8697, %v8690
    %v8699 = vld [vmem:[#allocation19] sm:$0xff]
    %v8700 = vld [vmem:[#allocation19 + $0x8] sm:$0xff]
    %v8701 = vld [vmem:[#allocation19 + $0x10] sm:$0xff]
    %v8702 = vld [vmem:[#allocation19 + $0x18] sm:$0xff]
    %v8703 = vld [vmem:[#allocation19 + $0x20] sm:$0xff]
    %v8704 = vld [vmem:[#allocation19 + $0x28] sm:$0xff]
    %v8705 = vld [vmem:[#allocation19 + $0x30] sm:$0xff]
    %v8706 = vld [vmem:[#allocation19 + $0x38] sm:$0xff]
    %v8707 = vld [vmem:[#allocation21] sm:$0x1]
    %v8709 = vlaneseq
    %v8710 = vshrl.u32 %v8709, 7
    %v8711 = vsub.s32 0, %v8710
    %v8712 = vrot.slane %v8707, %v8711
    %v8715 = vsel %vm2823, %v8698, 0
    %8717 = vmatprep.subr.mxu0 0.0
    %8718 = vmatpush1.msra.mxu0 %v8699
    %8719 = vmatprep.subr.mxu0 0.0
    %8720 = vmatpush1.msra.mxu0 %v8700
    %8721 = vmatprep.subr.mxu0 0.0
    %8722 = vmatpush1.msra.mxu0 %v8701
    %8723 = vmatprep.subr.mxu0 0.0
    %8724 = vmatpush1.msra.mxu0 %v8702
    %8725 = vmatprep.subr.mxu0 0.0
    %8726 = vmatpush1.msra.mxu0 %v8703
    %8727 = vmatprep.subr.mxu0 0.0
    %8728 = vmatpush1.msra.mxu0 %v8704
    %8729 = vmatprep.subr.mxu0 0.0
    %8730 = vmatpush1.msra.mxu0 %v8705
    %8731 = vmatprep.subr.mxu0 0.0
    %8732 = vmatpush1.msra.mxu0 %v8706
    %8733 = vmatprep.subr.mxu0 0.0
    %8734 = vmatpush1.msra.mxu0 0.0
    %8735 = vmatprep.subr.mxu0 0.0
    %8736 = vmatpush1.msra.mxu0 0.0
    %8737 = vmatprep.subr.mxu0 0.0
    %8738 = vmatpush1.msra.mxu0 0.0
    %8739 = vmatprep.subr.mxu0 0.0
    %8740 = vmatpush1.msra.mxu0 0.0
    %8741 = vmatprep.subr.mxu0 0.0
    %8742 = vmatpush1.msra.mxu0 0.0
    %8743 = vmatprep.subr.mxu0 0.0
    %8744 = vmatpush1.msra.mxu0 0.0
    %8745 = vmatprep.subr.mxu0 0.0
    %8746 = vmatpush1.msra.mxu0 0.0
    %8747 = vmatprep.subr.mxu0 0.0
    %8748 = vmatpush1.msra.mxu0 0.0
    %8749 = vmatprep.subr.mxu0 0.0
    %8750 = vmatpush1.msra.mxu0 0.0
    %8751 = vmatprep.subr.mxu0 0.0
    %8752 = vmatpush1.msra.mxu0 0.0
    %8753 = vmatprep.subr.mxu0 0.0
    %8754 = vmatpush1.msra.mxu0 0.0
    %8755 = vmatprep.subr.mxu0 0.0
    %8756 = vmatpush1.msra.mxu0 0.0
    %8757 = vmatprep.subr.mxu0 0.0
    %8758 = vmatpush1.msra.mxu0 0.0
    %8759 = vmatprep.subr.mxu0 0.0
    %8760 = vmatpush1.msra.mxu0 0.0
    %8761 = vmatprep.subr.mxu0 0.0
    %8762 = vmatpush1.msra.mxu0 0.0
    %8763 = vmatprep.subr.mxu0 0.0
    %8764 = vmatpush1.msra.mxu0 0.0
    %8765 = vmatprep.subr.mxu0 0.0
    %8766 = vmatpush1.msra.mxu0 0.0
    %8767 = vmatprep.subr.mxu0 0.0
    %8768 = vmatpush1.msra.mxu0 0.0
    %8769 = vmatprep.subr.mxu0 0.0
    %8770 = vmatpush1.msra.mxu0 0.0
    %8771 = vmatprep.subr.mxu0 0.0
    %8772 = vmatpush1.msra.mxu0 0.0
    %8773 = vmatprep.subr.mxu0 0.0
    %8774 = vmatpush1.msra.mxu0 0.0
    %8775 = vmatprep.subr.mxu0 0.0
    %8776 = vmatpush1.msra.mxu0 0.0
    %8777 = vmatprep.subr.mxu0 0.0
    %8778 = vmatpush1.msra.mxu0 0.0
    %8779 = vmatprep.subr.mxu0 0.0
    %8780 = vmatpush1.msra.mxu0 0.0
    %8781 = vmatprep.mubr.f32.mxu0 0.0
    %8782 = vmatmul.mubr.f32.gmra.mrb[0].mxu0 %v8715
    %v8783 = vpop.f32.mrb[0].mxu0
    %v8784 = vadd.f32 %v8712, %v8783
    %v8785 = vpop.f32.mrb[0].mxu0
    %8786 = vdwg.mxu0
    %v8787 = vmax.f32 %v8784, 0.0
    %v8788 = vld [vmem:[%s35] sm:$0xff]
    %v8789 = vld [vmem:[%s35 + $0x8] sm:$0xff]
    %v8790 = vld [vmem:[%s35 + $0x10] sm:$0xff]
    %v8791 = vld [vmem:[%s35 + $0x18] sm:$0xff]
    %v8792 = vld [vmem:[%s35 + $0x20] sm:$0xff]
    %v8793 = vld [vmem:[%s35 + $0x28] sm:$0xff]
    %v8794 = vld [vmem:[%s35 + $0x30] sm:$0xff]
    %v8795 = vld [vmem:[%s35 + $0x38] sm:$0xff]
    %v8796 = vld [vmem:[#allocation22] sm:$0x1]
    %v8798 = vlaneseq
    %v8799 = vshrl.u32 %v8798, 7
    %v8800 = vsub.s32 0, %v8799
    %v8801 = vrot.slane %v8796, %v8800
    %v8804 = vsel %vm2823, %v8787, 0
    %8806 = vmatprep.subr.mxu0 0.0
    %8807 = vmatpush1.msra.mxu0 %v8788
    %8808 = vmatprep.subr.mxu0 0.0
    %8809 = vmatpush1.msra.mxu0 %v8789
    %8810 = vmatprep.subr.mxu0 0.0
    %8811 = vmatpush1.msra.mxu0 %v8790
    %8812 = vmatprep.subr.mxu0 0.0
    %8813 = vmatpush1.msra.mxu0 %v8791
    %8814 = vmatprep.subr.mxu0 0.0
    %8815 = vmatpush1.msra.mxu0 %v8792
    %8816 = vmatprep.subr.mxu0 0.0
    %8817 = vmatpush1.msra.mxu0 %v8793
    %8818 = vmatprep.subr.mxu0 0.0
    %8819 = vmatpush1.msra.mxu0 %v8794
    %8820 = vmatprep.subr.mxu0 0.0
    %8821 = vmatpush1.msra.mxu0 %v8795
    %8822 = vmatprep.subr.mxu0 0.0
    %8823 = vmatpush1.msra.mxu0 0.0
    %8824 = vmatprep.subr.mxu0 0.0
    %8825 = vmatpush1.msra.mxu0 0.0
    %8826 = vmatprep.subr.mxu0 0.0
    %8827 = vmatpush1.msra.mxu0 0.0
    %8828 = vmatprep.subr.mxu0 0.0
    %8829 = vmatpush1.msra.mxu0 0.0
    %8830 = vmatprep.subr.mxu0 0.0
    %8831 = vmatpush1.msra.mxu0 0.0
    %8832 = vmatprep.subr.mxu0 0.0
    %8833 = vmatpush1.msra.mxu0 0.0
    %8834 = vmatprep.subr.mxu0 0.0
    %8835 = vmatpush1.msra.mxu0 0.0
    %8836 = vmatprep.subr.mxu0 0.0
    %8837 = vmatpush1.msra.mxu0 0.0
    %8838 = vmatprep.subr.mxu0 0.0
    %8839 = vmatpush1.msra.mxu0 0.0
    %8840 = vmatprep.subr.mxu0 0.0
    %8841 = vmatpush1.msra.mxu0 0.0
    %8842 = vmatprep.subr.mxu0 0.0
    %8843 = vmatpush1.msra.mxu0 0.0
    %8844 = vmatprep.subr.mxu0 0.0
    %8845 = vmatpush1.msra.mxu0 0.0
    %8846 = vmatprep.subr.mxu0 0.0
    %8847 = vmatpush1.msra.mxu0 0.0
    %8848 = vmatprep.subr.mxu0 0.0
    %8849 = vmatpush1.msra.mxu0 0.0
    %8850 = vmatprep.subr.mxu0 0.0
    %8851 = vmatpush1.msra.mxu0 0.0
    %8852 = vmatprep.subr.mxu0 0.0
    %8853 = vmatpush1.msra.mxu0 0.0
    %8854 = vmatprep.subr.mxu0 0.0
    %8855 = vmatpush1.msra.mxu0 0.0
    %8856 = vmatprep.subr.mxu0 0.0
    %8857 = vmatpush1.msra.mxu0 0.0
    %8858 = vmatprep.subr.mxu0 0.0
    %8859 = vmatpush1.msra.mxu0 0.0
    %8860 = vmatprep.subr.mxu0 0.0
    %8861 = vmatpush1.msra.mxu0 0.0
    %8862 = vmatprep.subr.mxu0 0.0
    %8863 = vmatpush1.msra.mxu0 0.0
    %8864 = vmatprep.subr.mxu0 0.0
    %8865 = vmatpush1.msra.mxu0 0.0
    %8866 = vmatprep.subr.mxu0 0.0
    %8867 = vmatpush1.msra.mxu0 0.0
    %8868 = vmatprep.subr.mxu0 0.0
    %8869 = vmatpush1.msra.mxu0 0.0
    %8870 = vmatprep.mubr.f32.mxu0 0.0
    %8871 = vmatmul.mubr.f32.gmra.mrb[0].mxu0 %v8804
    %v8872 = vpop.f32.mrb[0].mxu0
    %v8873 = vadd.f32 %v8801, %v8872
    %v8874 = vpop.f32.mrb[0].mxu0
    %8875 = vdwg.mxu0
    %s8876 = scalar_lea.vmem %s53, 8
    %8877 = vst.msk [vmem:[%s8876] sm:$0xff] %vm8671, %v8873
    %8879 = vrot.lane.b32.xlu0 %v8873, 126
    %v8880 = vpop.permute.xlu0 %8879
    %s8882 = scalar_lea.vmem %s55, 8
    %8883 = vst.msk [vmem:[%s8882] sm:$0xff] %vm8671, %v8880
    // Predicated region
    $region182: #{gru_predictor_forward.1} parent=1 // pred_check
      _
    $region183: #{gru_predictor_forward.1} parent=1 // pred_check_branch
      %8885 = sbr.rel (0) target = $region185
    $region184: #{gru_predictor_forward.1} parent=1 // pred_region
      _
    $region185: #{gru_predictor_forward.1} parent=1 // pred_fallthru
      _
    // Predicated region
    $region186: #{gru_predictor_forward.1} parent=1 // pred_check
      _
    $region187: #{gru_predictor_forward.1} parent=1 // pred_check_branch
      %8887 = sbr.rel (0) target = $region189
    $region188: #{gru_predictor_forward.1} parent=1 // pred_region
      _
    $region189: #{gru_predictor_forward.1} parent=1 // pred_fallthru
      _
    // Predicated region
    $region190: #{gru_predictor_forward.1} parent=1 // pred_check
      _
    $region191: #{gru_predictor_forward.1} parent=1 // pred_check_branch
      %8889 = sbr.rel (0) target = $region193
    $region192: #{gru_predictor_forward.1} parent=1 // pred_region
      _
    $region193: #{gru_predictor_forward.1} parent=1 // pred_fallthru
      _
    // Predicated region
    $region194: #{gru_predictor_forward.1} parent=1 // pred_check
      _
    $region195: #{gru_predictor_forward.1} parent=1 // pred_check_branch
      %8891 = sbr.rel (0) target = $region197
    $region196: #{gru_predictor_forward.1} parent=1 // pred_region
      _
    $region197: #{gru_predictor_forward.1} parent=1 // pred_fallthru
      _
    // Predicated region
    $region198: #{gru_predictor_forward.1} parent=1 // pred_check
      _
    $region199: #{gru_predictor_forward.1} parent=1 // pred_check_branch
      %8893 = sbr.rel (0) target = $region201
    $region200: #{gru_predictor_forward.1} parent=1 // pred_region
      _
    $region201: #{gru_predictor_forward.1} parent=1 // pred_fallthru
      _
    // Predicated region
    $region202: #{gru_predictor_forward.1} parent=1 // pred_check
      _
    $region203: #{gru_predictor_forward.1} parent=1 // pred_check_branch
      %8895 = sbr.rel (0) target = $region205
    $region204: #{gru_predictor_forward.1} parent=1 // pred_region
      _
    $region205: #{gru_predictor_forward.1} parent=1 // pred_fallthru
      _
    // Predicated region
    $region206: #{gru_predictor_forward.1} parent=1 // pred_check
      _
    $region207: #{gru_predictor_forward.1} parent=1 // pred_check_branch
      %8897 = sbr.rel (0) target = $region209
    $region208: #{gru_predictor_forward.1} parent=1 // pred_region
      _
    $region209: #{gru_predictor_forward.1} parent=1 // pred_fallthru
      _
    // Predicated region
    $region210: #{gru_predictor_forward.1} parent=1 // pred_check
      _
    $region211: #{gru_predictor_forward.1} parent=1 // pred_check_branch
      %8899 = sbr.rel (0) target = $region213
    $region212: #{gru_predictor_forward.1} parent=1 // pred_region
      _
    $region213: #{gru_predictor_forward.1} parent=1 // pred_fallthru
      _
    %8900 = vsyncpa [#allocation3], 1
    %8901 = vsyncpa [#allocation5], 1
    %8902 = vsyncpa [#allocation8], 1
    %8903 = vsyncpa [#allocation11], 1
    %8904 = vsyncpa [#allocation14], 1
    %8905 = vsyncpa [#allocation17], 1
    %8906 = vsyncpa [#allocation20], 1
    %8907 = vsyncpa [#allocation23], 1
    %8908 = vsyncpa [#allocation26], 1
    %8909 = vsyncpa [#allocation29], 1

</llo_original>
